<compile_context>
chip_gen: v5e
topology: v5e:2x2
jax: 0.10.0
libtpu: 0.0.40
codegen_flags: <defaults>
</compile_context>

<pallas_src>
import functools

import jax
import jax.numpy as jnp
from jax.experimental import pallas as pl
from jax.experimental.pallas import tpu as pltpu

LEAK = 0.2     # LeakyReLU slope in a_node_layers / a_edge_layers
EPS = 1e-5     # group-norm epsilon

# per-batch (grid-blocked) inputs; everything else is a grid-constant weight
_DATA_NAMES = (
    'a_node', 'a_edge', 'v_node', 'v_edge',
    'gsrc', 'gdst', 'gsrcT', 'gdstT', 'adj', 'tfeat',
)


def _round_up(x, m):
    return ((x + m - 1) // m) * m


# --------------------------------------------------------------------------- #
# The single fused Block kernel                                               #
# --------------------------------------------------------------------------- #
def _make_block_kernel(arg_names, rpad):
    n_in = len(arg_names)

    def kernel(*refs):
        d = dict(zip(arg_names, refs[:n_in]))
        oan_ref, ovn_ref, oae_ref, ove_ref = refs[n_in:]
        f32 = jnp.float32

        # ---- helpers ------------------------------------------------------ #
        def bf(x):
            return x.astype(jnp.bfloat16)

        def vec(name):
            return d[name][...]

        def mm(x_bf, wname):
            # learned matmul: bf16 x bf16 operands, f32 accumulation on MXU
            return jnp.dot(x_bf, d[wname][...], preferred_element_type=f32)

        def gmm(gname, x_bf):
            # structural (gather / adjacency / scatter-add) matmul, bf16 exact
            return jnp.dot(d[gname][...], x_bf, preferred_element_type=f32)

        def gmm3(gname, v_bf, nin):
            # apply the structural matrix to each xyz chunk of the vector slab
            g = d[gname][...]
            return jnp.concatenate(
                [jnp.dot(g, v_bf[i * nin:(i + 1) * nin],
                         preferred_element_type=f32) for i in range(3)],
                axis=0)

        def rep3(x):
            # replicate rows for the 3 xyz chunks (was an MXU matmul in v2)
            return jnp.concatenate([x, x, x], axis=0)

        def leaky(h):
            return jnp.where(h > 0, h, LEAK * h)

        def mlp3(x_bf, w1, b1, w2, b2, w3, b3):
            h = leaky(mm(x_bf, w1) + vec(b1))
            h = leaky(mm(bf(h), w2) + vec(b2))
            return mm(bf(h), w3) + vec(b3)

        def vec_mlp(v_bf, w1, w2, n):
            # VecLinear -> VecRootS -> VecLinear on the (3n, V) slab
            h = mm(v_bf, w1)
            n2 = h[0:n] ** 2 + h[n:2 * n] ** 2 + h[2 * n:3 * n] ** 2
            # TODO(synk): VecRootS source not provided; reconstructed as the
            #             direction-preserving squash v * (1 + |v|^2)^(-1/4).
            s = jax.lax.rsqrt(jnp.sqrt(1.0 + n2))
            return mm(bf(h * rep3(s)), w2)

        def av_prod(a_bf, v_bf, n):
            # TODO(synk): ScalVecProducts reconstructed as a rank-r bilinear
            #             invariant/equivariant coupling.
            ar = mm(a_bf, 'w_pa') + vec('b_pa')            # (n, Rpad)
            plr = mm(v_bf, 'w_plr')                        # (3n, 2*Rpad) fused
            vl = plr[:, 0:rpad]
            vr = plr[:, rpad:2 * rpad]
            dots = (vl[0:n] * vr[0:n] + vl[n:2 * n] * vr[n:2 * n]
                    + vl[2 * n:3 * n] * vr[2 * n:3 * n])   # (n, Rpad)
            a_out = mm(bf(dots), 'w_pao') + vec('b_pao')
            v_out = mm(bf(rep3(ar) * vl), 'w_pvo')
            return a_out, v_out

        def scal_gn(x, gname, bname):
            # TODO(synk): ScalGroupNorm reconstructed as per-row channel-group
            #             norm with affine params.  Group means/vars come from
            #             ONE matmul against a constant group-averaging matrix
            #             (exact for power-of-two group sizes) on the MXU.
            gm = d['gm_a'][...]
            mean = jnp.dot(bf(x), gm, preferred_element_type=f32)
            dx = x - mean
            var = jnp.dot(bf(dx * dx), gm, preferred_element_type=f32)
            return dx * jax.lax.rsqrt(var + EPS) * vec(gname) + vec(bname)

        def vec_gn(v, gname, n):
            # TODO(synk): VecGroupNorm reconstructed as RMS-of-norm per channel
            #             group (no mean subtraction -> equivariance preserved).
            sq = v[0:n] ** 2 + v[n:2 * n] ** 2 + v[2 * n:3 * n] ** 2
            ms = jnp.dot(bf(sq), d['gm_v'][...],
                         preferred_element_type=f32) * (1.0 / 3.0)
            scale = jax.lax.rsqrt(ms + EPS) * vec(gname)
            return v * rep3(scale)

        # ---- load per-batch activations ----------------------------------- #
        a_n = d['a_node'][...]            # (Np, Apad)   f32
        a_e = d['a_edge'][...]            # (Ep, Apad)
        v_n = d['v_node'][...]            # (3*Np, Vpad) xyz-major slab
        v_e = d['v_edge'][...]            # (3*Ep, Vpad)
        N = a_n.shape[0]
        E = a_e.shape[0]

        a_n_bf = bf(a_n)
        v_n_bf = bf(v_n)

        # ---- nodes conv 0 --------------------------------------------------
        # TODO(synk): Scal/VecNodesConv reconstructed: self-mix + neighbor-mix.
        x_a_node = (mm(a_n_bf, 'w_anc0_s')
                    + mm(bf(gmm('adj', a_n_bf)), 'w_anc0_n') + vec('b_anc0'))
        x_v_node = (mm(v_n_bf, 'w_vnc0_s')
                    + mm(bf(gmm3('adj', v_n_bf, N)), 'w_vnc0_n'))
        x_a_node_bf = bf(x_a_node)
        x_v_node_bf = bf(x_v_node)

        # ---- edges read (before temb is added, matching the reference) -----
        # TODO(synk): Scal/VecEdgesRead reconstructed as endpoint gather + mix.
        x_a_edge = a_e + (mm(bf(gmm('gsrc', x_a_node_bf)), 'w_aer_s')
                          + mm(bf(gmm('gdst', x_a_node_bf)), 'w_aer_d')
                          + vec('b_aer'))
        x_v_edge = v_e + (mm(bf(gmm3('gsrc', x_v_node_bf, N)), 'w_ver_s')
                          + mm(bf(gmm3('gdst', x_v_node_bf, N)), 'w_ver_d'))

        # ---- time embedding (fused linear + broadcast add) -----------------
        temb = mm(bf(d['tfeat'][...]), 'w_temb') + vec('b_temb')   # (1, Apad)
        x_a_node = x_a_node + temb
        x_a_node_bf = bf(x_a_node)
        x_a_edge_bf = bf(x_a_edge)
        x_v_edge_bf = bf(x_v_edge)

        # ---- scalar / vector MLPs ------------------------------------------
        y_a_node = mlp3(x_a_node_bf, 'w_an1', 'b_an1', 'w_an2', 'b_an2',
                        'w_an3', 'b_an3')
        y_a_edge = mlp3(x_a_edge_bf, 'w_ae1', 'b_ae1', 'w_ae2', 'b_ae2',
                        'w_ae3', 'b_ae3')
        y_v_node = vec_mlp(x_v_node_bf, 'w_vn1', 'w_vn2', N)
        y_v_edge = vec_mlp(x_v_edge_bf, 'w_ve1', 'w_ve2', E)

        # ---- scalar<->vector products (reference reuses av_node_prod twice) -
        pa_n, pv_n = av_prod(x_a_node_bf, x_v_node_bf, N)
        pa_e, pv_e = av_prod(x_a_edge_bf, x_v_edge_bf, E)

        z_a_node = y_a_node + pa_n
        z_v_node = y_v_node + pv_n
        z_a_edge = y_a_edge + pa_e
        z_v_edge = y_v_edge + pv_e

        z_a_edge_bf = bf(z_a_edge)
        z_v_edge_bf = bf(z_v_edge)

        # ---- edges write (scatter-add back to nodes) ------------------------
        z_a_node = z_a_node + (mm(bf(gmm('gsrcT', z_a_edge_bf)), 'w_aew_s')
                               + mm(bf(gmm('gdstT', z_a_edge_bf)), 'w_aew_d')
                               + vec('b_aew'))
        z_v_node = z_v_node + (mm(bf(gmm3('gsrcT', z_v_edge_bf, E)), 'w_vew_s')
                               + mm(bf(gmm3('gdstT', z_v_edge_bf, E)), 'w_vew_d'))
        z_a_node_bf = bf(z_a_node)
        z_v_node_bf = bf(z_v_node)

        # ---- nodes conv 1 ----------------------------------------------------
        z_a_node = (mm(z_a_node_bf, 'w_anc1_s')
                    + mm(bf(gmm('adj', z_a_node_bf)), 'w_anc1_n') + vec('b_anc1'))
        z_v_node = (mm(z_v_node_bf, 'w_vnc1_s')
                    + mm(bf(gmm3('adj', z_v_node_bf, N)), 'w_vnc1_n'))

        # ---- group norms -----------------------------------------------------
        z_a_node = scal_gn(z_a_node, 'g_an', 'bt_an')
        z_a_edge = scal_gn(z_a_edge, 'g_ae', 'bt_ae')
        z_v_node = vec_gn(z_v_node, 'g_vn', N)
        z_v_edge = vec_gn(z_v_edge, 'g_ve', E)

        # ---- residual + lane-dense stores ------------------------------------
        oan_ref[...] = a_n + z_a_node
        ovn_ref[...] = v_n + z_v_node
        oae_ref[...] = a_e + z_a_edge
        ove_ref[...] = v_e + z_v_edge

    return kernel


# --------------------------------------------------------------------------- #
# Parameters (deterministic, synthetic) — padded to lane width, bf16 weights  #
# --------------------------------------------------------------------------- #
def init_params(key, adim, vdim, rank, time_hdim):
    apad = _round_up(adim, 128)
    vpad = _round_up(vdim, 128)
    rpad = _round_up(rank, 128)          # rank padded to 128 -> lane-dense
    tpad = _round_up(2 * time_hdim, 128)
    keys = iter(jax.random.split(key, 64))

    def w(din, dout, rp, cp):
        s = 1.0 / (din ** 0.5)
        m = jax.random.uniform(next(keys), (din, dout), jnp.float32, -s, s)
        return jnp.pad(m, ((0, rp - din), (0, cp - dout))).astype(jnp.bfloat16)

    def b(din, dout, cp):
        s = 1.0 / (din ** 0.5)
        m = jax.random.uniform(next(keys), (1, dout), jnp.float32, -s, s)
        return jnp.pad(m, ((0, 0), (0, cp - dout)))

    p = {}
    p['w_temb'] = w(2 * time_hdim, adim, tpad, apad)
    p['b_temb'] = b(2 * time_hdim, adim, apad)
    for nm in ('anc0', 'anc1'):
        p[f'w_{nm}_s'] = w(adim, adim, apad, apad)
        p[f'w_{nm}_n'] = w(adim, adim, apad, apad)
        p[f'b_{nm}'] = b(adim, adim, apad)
    for nm in ('vnc0', 'vnc1'):
        p[f'w_{nm}_s'] = w(vdim, vdim, vpad, vpad)
        p[f'w_{nm}_n'] = w(vdim, vdim, vpad, vpad)
    for nm in ('aer', 'aew'):
        p[f'w_{nm}_s'] = w(adim, adim, apad, apad)
        p[f'w_{nm}_d'] = w(adim, adim, apad, apad)
        p[f'b_{nm}'] = b(adim, adim, apad)
    for nm in ('ver', 'vew'):
        p[f'w_{nm}_s'] = w(vdim, vdim, vpad, vpad)
        p[f'w_{nm}_d'] = w(vdim, vdim, vpad, vpad)
    for nm in ('an', 'ae'):
        for i in (1, 2, 3):
            p[f'w_{nm}{i}'] = w(adim, adim, apad, apad)
            p[f'b_{nm}{i}'] = b(adim, adim, apad)
    for nm in ('vn', 've'):
        p[f'w_{nm}1'] = w(vdim, vdim, vpad, vpad)
        p[f'w_{nm}2'] = w(vdim, vdim, vpad, vpad)
    # ScalVecProducts (av_node_prod — reference forward reuses it for edges too)
    p['w_pa'] = w(adim, rank, apad, rpad)
    p['b_pa'] = b(adim, rank, rpad)
    s = 1.0 / (vdim ** 0.5)
    wl = jax.random.uniform(next(keys), (vdim, rank), jnp.float32, -s, s)
    wr = jax.random.uniform(next(keys), (vdim, rank), jnp.float32, -s, s)
    wl = jnp.pad(wl, ((0, vpad - vdim), (0, rpad - rank)))
    wr = jnp.pad(wr, ((0, vpad - vdim), (0, rpad - rank)))
    p['w_plr'] = jnp.concatenate([wl, wr], axis=1).astype(jnp.bfloat16)  # fused
    p['w_pao'] = w(rank, adim, rpad, apad)
    p['b_pao'] = b(rank, adim, apad)
    p['w_pvo'] = w(rank, vdim, rpad, vpad)
    # group-norm affines (pads are zero -> padded lanes stay exactly zero)
    p['g_an'] = jnp.pad(jnp.ones((1, adim), jnp.float32), ((0, 0), (0, apad - adim)))
    p['bt_an'] = jnp.zeros((1, apad), jnp.float32)
    p['g_ae'] = jnp.pad(jnp.ones((1, adim), jnp.float32), ((0, 0), (0, apad - adim)))
    p['bt_ae'] = jnp.zeros((1, apad), jnp.float32)
    p['g_vn'] = jnp.pad(jnp.ones((1, vdim), jnp.float32), ((0, 0), (0, vpad - vdim)))
    p['g_ve'] = jnp.pad(jnp.ones((1, vdim), jnp.float32), ((0, 0), (0, vpad - vdim)))
    return p


def _group_avg_matrix(dim, groups, pad):
    """(pad, pad) bf16 matrix M with M[i,j]=1/gsize iff channels i,j share a group.

    Exact in bf16 for power-of-two group sizes; padded rows/cols are zero.
    """
    gsize = dim // groups
    gid = jnp.arange(dim) // gsize
    m = (gid[:, None] == gid[None, :]).astype(jnp.float32) / float(gsize)
    m = jnp.pad(m, ((0, pad - dim), (0, pad - dim)))
    return m.astype(jnp.bfloat16)


def _const_spec(arr):
    nd = arr.ndim
    return pl.BlockSpec(tuple(arr.shape), lambda b, _n=nd: (0,) * _n)


def _batched_spec(arr):
    nd = arr.ndim
    return pl.BlockSpec((None,) + tuple(arr.shape[1:]),
                        lambda b, _n=nd: (b,) + (0,) * (_n - 1))


def _nbytes(a):
    return int(a.size) * a.dtype.itemsize


# --------------------------------------------------------------------------- #
# Wrapper: layout plumbing + one fused pallas_call                            #
# --------------------------------------------------------------------------- #
def block_forward(params, a_node, v_node, a_edge, v_edge, graph, t, *,
                  agroups, vgroups, time_hdim):
    src, dst = graph
    B, N, adim = a_node.shape
    E = a_edge.shape[1]
    V = v_node.shape[2]
    APAD = _round_up(adim, 128)
    VPAD = _round_up(V, 128)
    NP = _round_up(N, 16)          # 16 so bf16 structural tiles are sublane-dense
    EP = _round_up(E, 16)
    TPAD = _round_up(2 * time_hdim, 128)
    RPAD = params['w_pa'].shape[1]

    # ---- pad + relayout activations (pure layout plumbing) ------------------
    a_n = jnp.pad(a_node.astype(jnp.float32), ((0, 0), (0, NP - N), (0, APAD - adim)))
    a_e = jnp.pad(a_edge.astype(jnp.float32), ((0, 0), (0, EP - E), (0, APAD - adim)))
    v_n = jnp.transpose(v_node.astype(jnp.float32), (0, 3, 1, 2))        # (B,3,N,V)
    v_n = jnp.pad(v_n, ((0, 0), (0, 0), (0, NP - N), (0, VPAD - V))).reshape(B, 3 * NP, VPAD)
    v_e = jnp.transpose(v_edge.astype(jnp.float32), (0, 3, 1, 2))
    v_e = jnp.pad(v_e, ((0, 0), (0, 0), (0, EP - E), (0, VPAD - V))).reshape(B, 3 * EP, VPAD)

    # ---- per-batch graph structure (bf16 — exact for 0/1 incidence) ---------
    gsrc_f = jnp.pad(jax.nn.one_hot(src, N, dtype=jnp.float32),
                     ((0, 0), (0, EP - E), (0, NP - N)))                 # (B,Ep,Np)
    gdst_f = jnp.pad(jax.nn.one_hot(dst, N, dtype=jnp.float32),
                     ((0, 0), (0, EP - E), (0, NP - N)))
    adj_f = (jnp.einsum('ben,bem->bnm', gsrc_f, gdst_f)
             + jnp.einsum('ben,bem->bnm', gdst_f, gsrc_f))
    adj_f = adj_f / jnp.maximum(adj_f.sum(-1, keepdims=True), 1.0)       # row-norm
    # TODO(synk): bf16 rounds the 1/deg normalization of adj (~2^-9 rel. err);
    #             the pure gathers / scatter-adds below stay exact in bf16.
    gsrc = gsrc_f.astype(jnp.bfloat16)
    gdst = gdst_f.astype(jnp.bfloat16)
    gsrcT = jnp.transpose(gsrc_f, (0, 2, 1)).astype(jnp.bfloat16)
    gdstT = jnp.transpose(gdst_f, (0, 2, 1)).astype(jnp.bfloat16)
    adj = adj_f.astype(jnp.bfloat16)

    # ---- time features (transcendentals in XLA; linear+add fused in kernel) -
    ang = jnp.exp(-jnp.arange(time_hdim, dtype=jnp.float32) / max(time_hdim - 1, 1))
    ph = t[:, None].astype(jnp.float32) * ang[None, :]
    tfeat = jnp.concatenate([jnp.sin(ph), jnp.cos(ph)], axis=1)[:, None, :]  # (B,1,2H)
    tfeat = jnp.pad(tfeat, ((0, 0), (0, 0), (0, TPAD - 2 * time_hdim)))

    data = dict(a_node=a_n, a_edge=a_e, v_node=v_n, v_edge=v_e,
                gsrc=gsrc, gdst=gdst, gsrcT=gsrcT, gdstT=gdstT,
                adj=adj, tfeat=tfeat)
    consts = dict(params)
    consts['gm_a'] = _group_avg_matrix(adim, agroups, APAD)
    consts['gm_v'] = _group_avg_matrix(V, vgroups, VPAD)

    arg_names = list(_DATA_NAMES) + sorted(consts.keys())
    arrays = [data[k] if k in data else consts[k] for k in arg_names]
    in_specs = [_batched_spec(arr) if name in _DATA_NAMES else _const_spec(arr)
                for name, arr in zip(arg_names, arrays)]

    out_shape = (
        jax.ShapeDtypeStruct((B, NP, APAD), jnp.float32),
        jax.ShapeDtypeStruct((B, 3 * NP, VPAD), jnp.float32),
        jax.ShapeDtypeStruct((B, EP, APAD), jnp.float32),
        jax.ShapeDtypeStruct((B, 3 * EP, VPAD), jnp.float32),
    )
    out_specs = (
        pl.BlockSpec((None, NP, APAD), lambda b: (b, 0, 0)),
        pl.BlockSpec((None, 3 * NP, VPAD), lambda b: (b, 0, 0)),
        pl.BlockSpec((None, EP, APAD), lambda b: (b, 0, 0)),
        pl.BlockSpec((None, 3 * EP, VPAD), lambda b: (b, 0, 0)),
    )

    # ---- derive VMEM limit from actual resident bytes -----------------------
    const_bytes = sum(_nbytes(consts[k]) for k in consts)
    per_batch_in = sum(_nbytes(data[k]) // B for k in data)
    per_batch_out = (NP * APAD + 3 * NP * VPAD + EP * APAD + 3 * EP * VPAD) * 4
    vmem_limit = const_bytes + 2 * (per_batch_in + per_batch_out) + (4 << 20)
    vmem_limit = int(min(max(vmem_limit, 8 << 20), 48 << 20))

    kernel = _make_block_kernel(tuple(arg_names), RPAD)
    oan, ovn, oae, ove = pl.pallas_call(
        kernel,
        out_shape=out_shape,
        grid=(B,),
        in_specs=in_specs,
        out_specs=out_specs,
        compiler_params=pltpu.CompilerParams(
            dimension_semantics=("parallel",),
            vmem_limit_bytes=vmem_limit,
        ),
    )(*arrays)
    # TODO(synk): for production-scale graphs, swap the dense bf16 incidence
    #             matmuls for scalar-prefetched index tables (P2) and batch
    #             multiple graphs per grid step to fill the MXU rows.

    # ---- strip padding, restore PyTorch-facing layouts ----------------------
    out_a_node = oan[:, :N, :adim]
    out_a_edge = oae[:, :E, :adim]
    out_v_node = jnp.transpose(ovn.reshape(B, 3, NP, VPAD)[:, :, :N, :V], (0, 2, 3, 1))
    out_v_edge = jnp.transpose(ove.reshape(B, 3, EP, VPAD)[:, :, :E, :V], (0, 2, 3, 1))
    return out_a_node, out_v_node, out_a_edge, out_v_edge, graph, t


# --------------------------------------------------------------------------- #
if __name__ == "__main__":
    key = jax.random.PRNGKey(0)
    B, N, E = 2, 8, 12
    ADIM, VDIM = 32, 16
    AGROUPS, VGROUPS = 4, 4
    RANK, TIME_HDIM = 8, 16

    kp, ka, kv, kae, kve, ksrc, kdst, kt = jax.random.split(key, 8)
    params = init_params(kp, ADIM, VDIM, RANK, TIME_HDIM)

    a_node = jax.random.normal(ka, (B, N, ADIM), jnp.float32)
    v_node = jax.random.normal(kv, (B, N, VDIM, 3), jnp.float32)
    a_edge = jax.random.normal(kae, (B, E, ADIM), jnp.float32)
    v_edge = jax.random.normal(kve, (B, E, VDIM, 3), jnp.float32)
    src = jax.random.randint(ksrc, (B, E), 0, N)
    dst = jax.random.randint(kdst, (B, E), 0, N)
    t = jax.random.uniform(kt, (B,), jnp.float32) * 10.0

    fwd = jax.jit(functools.partial(block_forward, agroups=AGROUPS,
                                    vgroups=VGROUPS, time_hdim=TIME_HDIM))
    out = fwd(params, a_node, v_node, a_edge, v_edge, (src, dst), t)
    jax.block_until_ready(out)

    out_a_node, out_v_node, out_a_edge, out_v_edge, graph, t_out = out
    assert out_a_node.shape == (B, N, ADIM)
    assert out_v_node.shape == (B, N, VDIM, 3)
    assert out_a_edge.shape == (B, E, ADIM)
    assert out_v_edge.shape == (B, E, VDIM, 3)
    for o in (out_a_node, out_v_node, out_a_edge, out_v_edge):
        assert bool(jnp.all(jnp.isfinite(o)))
    print("KERNEL_OK")
</pallas_src>

<mosaic_0001>
module attributes {stable_mosaic.version = 11 : i64} {
  func.func @kernel(%arg0: i32, %arg1: memref<1x16x128xf32, #tpu.memory_space<vmem>>, %arg2: memref<1x16x128xf32, #tpu.memory_space<vmem>>, %arg3: memref<1x48x128xf32, #tpu.memory_space<vmem>>, %arg4: memref<1x48x128xf32, #tpu.memory_space<vmem>>, %arg5: memref<1x16x16xbf16, #tpu.memory_space<vmem>>, %arg6: memref<1x16x16xbf16, #tpu.memory_space<vmem>>, %arg7: memref<1x16x16xbf16, #tpu.memory_space<vmem>>, %arg8: memref<1x16x16xbf16, #tpu.memory_space<vmem>>, %arg9: memref<1x16x16xbf16, #tpu.memory_space<vmem>>, %arg10: memref<1x1x128xf32, #tpu.memory_space<vmem>>, %arg11: memref<1x128xf32, #tpu.memory_space<vmem>>, %arg12: memref<1x128xf32, #tpu.memory_space<vmem>>, %arg13: memref<1x128xf32, #tpu.memory_space<vmem>>, %arg14: memref<1x128xf32, #tpu.memory_space<vmem>>, %arg15: memref<1x128xf32, #tpu.memory_space<vmem>>, %arg16: memref<1x128xf32, #tpu.memory_space<vmem>>, %arg17: memref<1x128xf32, #tpu.memory_space<vmem>>, %arg18: memref<1x128xf32, #tpu.memory_space<vmem>>, %arg19: memref<1x128xf32, #tpu.memory_space<vmem>>, %arg20: memref<1x128xf32, #tpu.memory_space<vmem>>, %arg21: memref<1x128xf32, #tpu.memory_space<vmem>>, %arg22: memref<1x128xf32, #tpu.memory_space<vmem>>, %arg23: memref<1x128xf32, #tpu.memory_space<vmem>>, %arg24: memref<1x128xf32, #tpu.memory_space<vmem>>, %arg25: memref<1x128xf32, #tpu.memory_space<vmem>>, %arg26: memref<1x128xf32, #tpu.memory_space<vmem>>, %arg27: memref<1x128xf32, #tpu.memory_space<vmem>>, %arg28: memref<1x128xf32, #tpu.memory_space<vmem>>, %arg29: memref<1x128xf32, #tpu.memory_space<vmem>>, %arg30: memref<128x128xbf16, #tpu.memory_space<vmem>>, %arg31: memref<128x128xbf16, #tpu.memory_space<vmem>>, %arg32: memref<128x128xbf16, #tpu.memory_space<vmem>>, %arg33: memref<128x128xbf16, #tpu.memory_space<vmem>>, %arg34: memref<128x128xbf16, #tpu.memory_space<vmem>>, %arg35: memref<128x128xbf16, #tpu.memory_space<vmem>>, %arg36: memref<128x128xbf16, #tpu.memory_space<vmem>>, %arg37: memref<128x128xbf16, #tpu.memory_space<vmem>>, %arg38: memref<128x128xbf16, #tpu.memory_space<vmem>>, %arg39: memref<128x128xbf16, #tpu.memory_space<vmem>>, %arg40: memref<128x128xbf16, #tpu.memory_space<vmem>>, %arg41: memref<128x128xbf16, #tpu.memory_space<vmem>>, %arg42: memref<128x128xbf16, #tpu.memory_space<vmem>>, %arg43: memref<128x128xbf16, #tpu.memory_space<vmem>>, %arg44: memref<128x128xbf16, #tpu.memory_space<vmem>>, %arg45: memref<128x128xbf16, #tpu.memory_space<vmem>>, %arg46: memref<128x128xbf16, #tpu.memory_space<vmem>>, %arg47: memref<128x128xbf16, #tpu.memory_space<vmem>>, %arg48: memref<128x256xbf16, #tpu.memory_space<vmem>>, %arg49: memref<128x128xbf16, #tpu.memory_space<vmem>>, %arg50: memref<128x128xbf16, #tpu.memory_space<vmem>>, %arg51: memref<128x128xbf16, #tpu.memory_space<vmem>>, %arg52: memref<128x128xbf16, #tpu.memory_space<vmem>>, %arg53: memref<128x128xbf16, #tpu.memory_space<vmem>>, %arg54: memref<128x128xbf16, #tpu.memory_space<vmem>>, %arg55: memref<128x128xbf16, #tpu.memory_space<vmem>>, %arg56: memref<128x128xbf16, #tpu.memory_space<vmem>>, %arg57: memref<128x128xbf16, #tpu.memory_space<vmem>>, %arg58: memref<128x128xbf16, #tpu.memory_space<vmem>>, %arg59: memref<128x128xbf16, #tpu.memory_space<vmem>>, %arg60: memref<128x128xbf16, #tpu.memory_space<vmem>>, %arg61: memref<128x128xbf16, #tpu.memory_space<vmem>>, %arg62: memref<128x128xbf16, #tpu.memory_space<vmem>>, %arg63: memref<1x16x128xf32, #tpu.memory_space<vmem>>, %arg64: memref<1x48x128xf32, #tpu.memory_space<vmem>>, %arg65: memref<1x16x128xf32, #tpu.memory_space<vmem>>, %arg66: memref<1x48x128xf32, #tpu.memory_space<vmem>>) attributes {dimension_semantics = [#tpu.dimension_semantics<parallel>], iteration_bounds = array<i64: 2>, scalar_prefetch = 0 : i64, scratch_operands = 0 : i64, tpu.core_type = #tpu.core_type<tc>, window_params = [{transform_indices = @transform_0, window_bounds = array<i64: 1, 16, 128>}, {transform_indices = @transform_1, window_bounds = array<i64: 1, 16, 128>}, {transform_indices = @transform_2, window_bounds = array<i64: 1, 48, 128>}, {transform_indices = @transform_3, window_bounds = array<i64: 1, 48, 128>}, {transform_indices = @transform_4, window_bounds = array<i64: 1, 16, 16>}, {transform_indices = @transform_5, window_bounds = array<i64: 1, 16, 16>}, {transform_indices = @transform_6, window_bounds = array<i64: 1, 16, 16>}, {transform_indices = @transform_7, window_bounds = array<i64: 1, 16, 16>}, {transform_indices = @transform_8, window_bounds = array<i64: 1, 16, 16>}, {transform_indices = @transform_9, window_bounds = array<i64: 1, 1, 128>}, {pipeline_mode = #tpu.pipeline_mode<synchronous>, transform_indices = @transform_10, window_bounds = array<i64: 1, 128>}, {pipeline_mode = #tpu.pipeline_mode<synchronous>, transform_indices = @transform_11, window_bounds = array<i64: 1, 128>}, {pipeline_mode = #tpu.pipeline_mode<synchronous>, transform_indices = @transform_12, window_bounds = array<i64: 1, 128>}, {pipeline_mode = #tpu.pipeline_mode<synchronous>, transform_indices = @transform_13, window_bounds = array<i64: 1, 128>}, {pipeline_mode = #tpu.pipeline_mode<synchronous>, transform_indices = @transform_14, window_bounds = array<i64: 1, 128>}, {pipeline_mode = #tpu.pipeline_mode<synchronous>, transform_indices = @transform_15, window_bounds = array<i64: 1, 128>}, {pipeline_mode = #tpu.pipeline_mode<synchronous>, transform_indices = @transform_16, window_bounds = array<i64: 1, 128>}, {pipeline_mode = #tpu.pipeline_mode<synchronous>, transform_indices = @transform_17, window_bounds = array<i64: 1, 128>}, {pipeline_mode = #tpu.pipeline_mode<synchronous>, transform_indices = @transform_18, window_bounds = array<i64: 1, 128>}, {pipeline_mode = #tpu.pipeline_mode<synchronous>, transform_indices = @transform_19, window_bounds = array<i64: 1, 128>}, {pipeline_mode = #tpu.pipeline_mode<synchronous>, transform_indices = @transform_20, window_bounds = array<i64: 1, 128>}, {pipeline_mode = #tpu.pipeline_mode<synchronous>, transform_indices = @transform_21, window_bounds = array<i64: 1, 128>}, {pipeline_mode = #tpu.pipeline_mode<synchronous>, transform_indices = @transform_22, window_bounds = array<i64: 1, 128>}, {pipeline_mode = #tpu.pipeline_mode<synchronous>, transform_indices = @transform_23, window_bounds = array<i64: 1, 128>}, {pipeline_mode = #tpu.pipeline_mode<synchronous>, transform_indices = @transform_24, window_bounds = array<i64: 1, 128>}, {pipeline_mode = #tpu.pipeline_mode<synchronous>, transform_indices = @transform_25, window_bounds = array<i64: 1, 128>}, {pipeline_mode = #tpu.pipeline_mode<synchronous>, transform_indices = @transform_26, window_bounds = array<i64: 1, 128>}, {pipeline_mode = #tpu.pipeline_mode<synchronous>, transform_indices = @transform_27, window_bounds = array<i64: 1, 128>}, {pipeline_mode = #tpu.pipeline_mode<synchronous>, transform_indices = @transform_28, window_bounds = array<i64: 1, 128>}, {pipeline_mode = #tpu.pipeline_mode<synchronous>, transform_indices = @transform_29, window_bounds = array<i64: 128, 128>}, {pipeline_mode = #tpu.pipeline_mode<synchronous>, transform_indices = @transform_30, window_bounds = array<i64: 128, 128>}, {pipeline_mode = #tpu.pipeline_mode<synchronous>, transform_indices = @transform_31, window_bounds = array<i64: 128, 128>}, {pipeline_mode = #tpu.pipeline_mode<synchronous>, transform_indices = @transform_32, window_bounds = array<i64: 128, 128>}, {pipeline_mode = #tpu.pipeline_mode<synchronous>, transform_indices = @transform_33, window_bounds = array<i64: 128, 128>}, {pipeline_mode = #tpu.pipeline_mode<synchronous>, transform_indices = @transform_34, window_bounds = array<i64: 128, 128>}, {pipeline_mode = #tpu.pipeline_mode<synchronous>, transform_indices = @transform_35, window_bounds = array<i64: 128, 128>}, {pipeline_mode = #tpu.pipeline_mode<synchronous>, transform_indices = @transform_36, window_bounds = array<i64: 128, 128>}, {pipeline_mode = #tpu.pipeline_mode<synchronous>, transform_indices = @transform_37, window_bounds = array<i64: 128, 128>}, {pipeline_mode = #tpu.pipeline_mode<synchronous>, transform_indices = @transform_38, window_bounds = array<i64: 128, 128>}, {pipeline_mode = #tpu.pipeline_mode<synchronous>, transform_indices = @transform_39, window_bounds = array<i64: 128, 128>}, {pipeline_mode = #tpu.pipeline_mode<synchronous>, transform_indices = @transform_40, window_bounds = array<i64: 128, 128>}, {pipeline_mode = #tpu.pipeline_mode<synchronous>, transform_indices = @transform_41, window_bounds = array<i64: 128, 128>}, {pipeline_mode = #tpu.pipeline_mode<synchronous>, transform_indices = @transform_42, window_bounds = array<i64: 128, 128>}, {pipeline_mode = #tpu.pipeline_mode<synchronous>, transform_indices = @transform_43, window_bounds = array<i64: 128, 128>}, {pipeline_mode = #tpu.pipeline_mode<synchronous>, transform_indices = @transform_44, window_bounds = array<i64: 128, 128>}, {pipeline_mode = #tpu.pipeline_mode<synchronous>, transform_indices = @transform_45, window_bounds = array<i64: 128, 128>}, {pipeline_mode = #tpu.pipeline_mode<synchronous>, transform_indices = @transform_46, window_bounds = array<i64: 128, 128>}, {pipeline_mode = #tpu.pipeline_mode<synchronous>, transform_indices = @transform_47, window_bounds = array<i64: 128, 256>}, {pipeline_mode = #tpu.pipeline_mode<synchronous>, transform_indices = @transform_48, window_bounds = array<i64: 128, 128>}, {pipeline_mode = #tpu.pipeline_mode<synchronous>, transform_indices = @transform_49, window_bounds = array<i64: 128, 128>}, {pipeline_mode = #tpu.pipeline_mode<synchronous>, transform_indices = @transform_50, window_bounds = array<i64: 128, 128>}, {pipeline_mode = #tpu.pipeline_mode<synchronous>, transform_indices = @transform_51, window_bounds = array<i64: 128, 128>}, {pipeline_mode = #tpu.pipeline_mode<synchronous>, transform_indices = @transform_52, window_bounds = array<i64: 128, 128>}, {pipeline_mode = #tpu.pipeline_mode<synchronous>, transform_indices = @transform_53, window_bounds = array<i64: 128, 128>}, {pipeline_mode = #tpu.pipeline_mode<synchronous>, transform_indices = @transform_54, window_bounds = array<i64: 128, 128>}, {pipeline_mode = #tpu.pipeline_mode<synchronous>, transform_indices = @transform_55, window_bounds = array<i64: 128, 128>}, {pipeline_mode = #tpu.pipeline_mode<synchronous>, transform_indices = @transform_56, window_bounds = array<i64: 128, 128>}, {pipeline_mode = #tpu.pipeline_mode<synchronous>, transform_indices = @transform_57, window_bounds = array<i64: 128, 128>}, {pipeline_mode = #tpu.pipeline_mode<synchronous>, transform_indices = @transform_58, window_bounds = array<i64: 128, 128>}, {pipeline_mode = #tpu.pipeline_mode<synchronous>, transform_indices = @transform_59, window_bounds = array<i64: 128, 128>}, {pipeline_mode = #tpu.pipeline_mode<synchronous>, transform_indices = @transform_60, window_bounds = array<i64: 128, 128>}, {pipeline_mode = #tpu.pipeline_mode<synchronous>, transform_indices = @transform_61, window_bounds = array<i64: 128, 128>}, {transform_indices = @transform_62, window_bounds = array<i64: 1, 16, 128>}, {transform_indices = @transform_63, window_bounds = array<i64: 1, 48, 128>}, {transform_indices = @transform_64, window_bounds = array<i64: 1, 16, 128>}, {transform_indices = @transform_65, window_bounds = array<i64: 1, 48, 128>}]} {
    %c0 = arith.constant 0 : index
    %c0_0 = arith.constant 0 : index
    %c0_1 = arith.constant 0 : index
    %0 = vector.load %arg1[%c0, %c0_0, %c0_1] : memref<1x16x128xf32, #tpu.memory_space<vmem>>, vector<1x16x128xf32>
    %1 = vector.shape_cast %0 : vector<1x16x128xf32> to vector<16x128xf32>
    %c0_2 = arith.constant 0 : index
    %c0_3 = arith.constant 0 : index
    %c0_4 = arith.constant 0 : index
    %2 = vector.load %arg2[%c0_2, %c0_3, %c0_4] : memref<1x16x128xf32, #tpu.memory_space<vmem>>, vector<1x16x128xf32>
    %3 = vector.shape_cast %2 : vector<1x16x128xf32> to vector<16x128xf32>
    %c0_5 = arith.constant 0 : index
    %c0_6 = arith.constant 0 : index
    %c0_7 = arith.constant 0 : index
    %4 = vector.load %arg3[%c0_5, %c0_6, %c0_7] : memref<1x48x128xf32, #tpu.memory_space<vmem>>, vector<1x48x128xf32>
    %5 = vector.shape_cast %4 : vector<1x48x128xf32> to vector<48x128xf32>
    %c0_8 = arith.constant 0 : index
    %c0_9 = arith.constant 0 : index
    %c0_10 = arith.constant 0 : index
    %6 = vector.load %arg4[%c0_8, %c0_9, %c0_10] : memref<1x48x128xf32, #tpu.memory_space<vmem>>, vector<1x48x128xf32>
    %7 = vector.shape_cast %6 : vector<1x48x128xf32> to vector<48x128xf32>
    %8 = arith.truncf %1 : vector<16x128xf32> to vector<16x128xbf16>
    %9 = arith.truncf %5 : vector<48x128xf32> to vector<48x128xbf16>
    %c0_11 = arith.constant 0 : index
    %c0_12 = arith.constant 0 : index
    %10 = vector.load %arg43[%c0_11, %c0_12] : memref<128x128xbf16, #tpu.memory_space<vmem>>, vector<128x128xbf16>
    %cst = arith.constant dense<0.000000e+00> : vector<16x128xf32>
    %11 = tpu.matmul %8, %10, %cst {dimension_numbers = #tpu.dot_dimension_numbers<[1], [0], [0], [1], [0, 0, 1, 1], [], []>} : vector<16x128xbf16>, vector<128x128xbf16>, vector<16x128xf32> -> vector<16x128xf32>
    %c0_13 = arith.constant 0 : index
    %c0_14 = arith.constant 0 : index
    %c0_15 = arith.constant 0 : index
    %12 = vector.load %arg9[%c0_13, %c0_14, %c0_15] : memref<1x16x16xbf16, #tpu.memory_space<vmem>>, vector<1x16x16xbf16>
    %13 = vector.shape_cast %12 : vector<1x16x16xbf16> to vector<16x16xbf16>
    %cst_16 = arith.constant dense<0.000000e+00> : vector<16x128xf32>
    %14 = tpu.matmul %13, %8, %cst_16 {dimension_numbers = #tpu.dot_dimension_numbers<[1], [0], [0], [1], [0, 0, 1, 1], [], []>} : vector<16x16xbf16>, vector<16x128xbf16>, vector<16x128xf32> -> vector<16x128xf32>
    %15 = arith.truncf %14 : vector<16x128xf32> to vector<16x128xbf16>
    %c0_17 = arith.constant 0 : index
    %c0_18 = arith.constant 0 : index
    %16 = vector.load %arg42[%c0_17, %c0_18] : memref<128x128xbf16, #tpu.memory_space<vmem>>, vector<128x128xbf16>
    %cst_19 = arith.constant dense<0.000000e+00> : vector<16x128xf32>
    %17 = tpu.matmul %15, %16, %cst_19 {dimension_numbers = #tpu.dot_dimension_numbers<[1], [0], [0], [1], [0, 0, 1, 1], [], []>} : vector<16x128xbf16>, vector<128x128xbf16>, vector<16x128xf32> -> vector<16x128xf32>
    %18 = arith.addf %11, %17 : vector<16x128xf32>
    %c0_20 = arith.constant 0 : index
    %c0_21 = arith.constant 0 : index
    %19 = vector.load %arg19[%c0_20, %c0_21] : memref<1x128xf32, #tpu.memory_space<vmem>>, vector<1x128xf32>
    %20 = vector.broadcast %19 : vector<1x128xf32> to vector<16x128xf32>
    %21 = arith.addf %18, %20 : vector<16x128xf32>
    %c0_22 = arith.constant 0 : index
    %c0_23 = arith.constant 0 : index
    %22 = vector.load %arg60[%c0_22, %c0_23] : memref<128x128xbf16, #tpu.memory_space<vmem>>, vector<128x128xbf16>
    %cst_24 = arith.constant dense<0.000000e+00> : vector<48x128xf32>
    %23 = tpu.matmul %9, %22, %cst_24 {dimension_numbers = #tpu.dot_dimension_numbers<[1], [0], [0], [1], [0, 0, 1, 1], [], []>} : vector<48x128xbf16>, vector<128x128xbf16>, vector<48x128xf32> -> vector<48x128xf32>
    %c0_25 = arith.constant 0 : index
    %c0_26 = arith.constant 0 : index
    %c0_27 = arith.constant 0 : index
    %24 = vector.load %arg9[%c0_25, %c0_26, %c0_27] : memref<1x16x16xbf16, #tpu.memory_space<vmem>>, vector<1x16x16xbf16>
    %25 = vector.shape_cast %24 : vector<1x16x16xbf16> to vector<16x16xbf16>
    %26 = vector.extract_strided_slice %9 {offsets = [0, 0], sizes = [16, 128], strides = [1, 1]} : vector<48x128xbf16> to vector<16x128xbf16>
    %cst_28 = arith.constant dense<0.000000e+00> : vector<16x128xf32>
    %27 = tpu.matmul %25, %26, %cst_28 {dimension_numbers = #tpu.dot_dimension_numbers<[1], [0], [0], [1], [0, 0, 1, 1], [], []>} : vector<16x16xbf16>, vector<16x128xbf16>, vector<16x128xf32> -> vector<16x128xf32>
    %28 = vector.extract_strided_slice %9 {offsets = [16, 0], sizes = [16, 128], strides = [1, 1]} : vector<48x128xbf16> to vector<16x128xbf16>
    %cst_29 = arith.constant dense<0.000000e+00> : vector<16x128xf32>
    %29 = tpu.matmul %25, %28, %cst_29 {dimension_numbers = #tpu.dot_dimension_numbers<[1], [0], [0], [1], [0, 0, 1, 1], [], []>} : vector<16x16xbf16>, vector<16x128xbf16>, vector<16x128xf32> -> vector<16x128xf32>
    %30 = vector.extract_strided_slice %9 {offsets = [32, 0], sizes = [16, 128], strides = [1, 1]} : vector<48x128xbf16> to vector<16x128xbf16>
    %cst_30 = arith.constant dense<0.000000e+00> : vector<16x128xf32>
    %31 = tpu.matmul %25, %30, %cst_30 {dimension_numbers = #tpu.dot_dimension_numbers<[1], [0], [0], [1], [0, 0, 1, 1], [], []>} : vector<16x16xbf16>, vector<16x128xbf16>, vector<16x128xf32> -> vector<16x128xf32>
    %32 = tpu.concatenate %27, %29, %31 in 0 : vector<16x128xf32>, vector<16x128xf32>, vector<16x128xf32> -> vector<48x128xf32>
    %33 = arith.truncf %32 : vector<48x128xf32> to vector<48x128xbf16>
    %c0_31 = arith.constant 0 : index
    %c0_32 = arith.constant 0 : index
    %34 = vector.load %arg59[%c0_31, %c0_32] : memref<128x128xbf16, #tpu.memory_space<vmem>>, vector<128x128xbf16>
    %cst_33 = arith.constant dense<0.000000e+00> : vector<48x128xf32>
    %35 = tpu.matmul %33, %34, %cst_33 {dimension_numbers = #tpu.dot_dimension_numbers<[1], [0], [0], [1], [0, 0, 1, 1], [], []>} : vector<48x128xbf16>, vector<128x128xbf16>, vector<48x128xf32> -> vector<48x128xf32>
    %36 = arith.addf %23, %35 : vector<48x128xf32>
    %37 = arith.truncf %21 : vector<16x128xf32> to vector<16x128xbf16>
    %38 = arith.truncf %36 : vector<48x128xf32> to vector<48x128xbf16>
    %c0_34 = arith.constant 0 : index
    %c0_35 = arith.constant 0 : index
    %c0_36 = arith.constant 0 : index
    %39 = vector.load %arg5[%c0_34, %c0_35, %c0_36] : memref<1x16x16xbf16, #tpu.memory_space<vmem>>, vector<1x16x16xbf16>
    %40 = vector.shape_cast %39 : vector<1x16x16xbf16> to vector<16x16xbf16>
    %cst_37 = arith.constant dense<0.000000e+00> : vector<16x128xf32>
    %41 = tpu.matmul %40, %37, %cst_37 {dimension_numbers = #tpu.dot_dimension_numbers<[1], [0], [0], [1], [0, 0, 1, 1], [], []>} : vector<16x16xbf16>, vector<16x128xbf16>, vector<16x128xf32> -> vector<16x128xf32>
    %42 = arith.truncf %41 : vector<16x128xf32> to vector<16x128xbf16>
    %c0_38 = arith.constant 0 : index
    %c0_39 = arith.constant 0 : index
    %43 = vector.load %arg36[%c0_38, %c0_39] : memref<128x128xbf16, #tpu.memory_space<vmem>>, vector<128x128xbf16>
    %cst_40 = arith.constant dense<0.000000e+00> : vector<16x128xf32>
    %44 = tpu.matmul %42, %43, %cst_40 {dimension_numbers = #tpu.dot_dimension_numbers<[1], [0], [0], [1], [0, 0, 1, 1], [], []>} : vector<16x128xbf16>, vector<128x128xbf16>, vector<16x128xf32> -> vector<16x128xf32>
    %c0_41 = arith.constant 0 : index
    %c0_42 = arith.constant 0 : index
    %c0_43 = arith.constant 0 : index
    %45 = vector.load %arg6[%c0_41, %c0_42, %c0_43] : memref<1x16x16xbf16, #tpu.memory_space<vmem>>, vector<1x16x16xbf16>
    %46 = vector.shape_cast %45 : vector<1x16x16xbf16> to vector<16x16xbf16>
    %cst_44 = arith.constant dense<0.000000e+00> : vector<16x128xf32>
    %47 = tpu.matmul %46, %37, %cst_44 {dimension_numbers = #tpu.dot_dimension_numbers<[1], [0], [0], [1], [0, 0, 1, 1], [], []>} : vector<16x16xbf16>, vector<16x128xbf16>, vector<16x128xf32> -> vector<16x128xf32>
    %48 = arith.truncf %47 : vector<16x128xf32> to vector<16x128xbf16>
    %c0_45 = arith.constant 0 : index
    %c0_46 = arith.constant 0 : index
    %49 = vector.load %arg35[%c0_45, %c0_46] : memref<128x128xbf16, #tpu.memory_space<vmem>>, vector<128x128xbf16>
    %cst_47 = arith.constant dense<0.000000e+00> : vector<16x128xf32>
    %50 = tpu.matmul %48, %49, %cst_47 {dimension_numbers = #tpu.dot_dimension_numbers<[1], [0], [0], [1], [0, 0, 1, 1], [], []>} : vector<16x128xbf16>, vector<128x128xbf16>, vector<16x128xf32> -> vector<16x128xf32>
    %51 = arith.addf %44, %50 : vector<16x128xf32>
    %c0_48 = arith.constant 0 : index
    %c0_49 = arith.constant 0 : index
    %52 = vector.load %arg14[%c0_48, %c0_49] : memref<1x128xf32, #tpu.memory_space<vmem>>, vector<1x128xf32>
    %53 = vector.broadcast %52 : vector<1x128xf32> to vector<16x128xf32>
    %54 = arith.addf %51, %53 : vector<16x128xf32>
    %55 = arith.addf %3, %54 : vector<16x128xf32>
    %c0_50 = arith.constant 0 : index
    %c0_51 = arith.constant 0 : index
    %c0_52 = arith.constant 0 : index
    %56 = vector.load %arg5[%c0_50, %c0_51, %c0_52] : memref<1x16x16xbf16, #tpu.memory_space<vmem>>, vector<1x16x16xbf16>
    %57 = vector.shape_cast %56 : vector<1x16x16xbf16> to vector<16x16xbf16>
    %58 = vector.extract_strided_slice %38 {offsets = [0, 0], sizes = [16, 128], strides = [1, 1]} : vector<48x128xbf16> to vector<16x128xbf16>
    %cst_53 = arith.constant dense<0.000000e+00> : vector<16x128xf32>
    %59 = tpu.matmul %57, %58, %cst_53 {dimension_numbers = #tpu.dot_dimension_numbers<[1], [0], [0], [1], [0, 0, 1, 1], [], []>} : vector<16x16xbf16>, vector<16x128xbf16>, vector<16x128xf32> -> vector<16x128xf32>
    %60 = vector.extract_strided_slice %38 {offsets = [16, 0], sizes = [16, 128], strides = [1, 1]} : vector<48x128xbf16> to vector<16x128xbf16>
    %cst_54 = arith.constant dense<0.000000e+00> : vector<16x128xf32>
    %61 = tpu.matmul %57, %60, %cst_54 {dimension_numbers = #tpu.dot_dimension_numbers<[1], [0], [0], [1], [0, 0, 1, 1], [], []>} : vector<16x16xbf16>, vector<16x128xbf16>, vector<16x128xf32> -> vector<16x128xf32>
    %62 = vector.extract_strided_slice %38 {offsets = [32, 0], sizes = [16, 128], strides = [1, 1]} : vector<48x128xbf16> to vector<16x128xbf16>
    %cst_55 = arith.constant dense<0.000000e+00> : vector<16x128xf32>
    %63 = tpu.matmul %57, %62, %cst_55 {dimension_numbers = #tpu.dot_dimension_numbers<[1], [0], [0], [1], [0, 0, 1, 1], [], []>} : vector<16x16xbf16>, vector<16x128xbf16>, vector<16x128xf32> -> vector<16x128xf32>
    %64 = tpu.concatenate %59, %61, %63 in 0 : vector<16x128xf32>, vector<16x128xf32>, vector<16x128xf32> -> vector<48x128xf32>
    %65 = arith.truncf %64 : vector<48x128xf32> to vector<48x128xbf16>
    %c0_56 = arith.constant 0 : index
    %c0_57 = arith.constant 0 : index
    %66 = vector.load %arg54[%c0_56, %c0_57] : memref<128x128xbf16, #tpu.memory_space<vmem>>, vector<128x128xbf16>
    %cst_58 = arith.constant dense<0.000000e+00> : vector<48x128xf32>
    %67 = tpu.matmul %65, %66, %cst_58 {dimension_numbers = #tpu.dot_dimension_numbers<[1], [0], [0], [1], [0, 0, 1, 1], [], []>} : vector<48x128xbf16>, vector<128x128xbf16>, vector<48x128xf32> -> vector<48x128xf32>
    %c0_59 = arith.constant 0 : index
    %c0_60 = arith.constant 0 : index
    %c0_61 = arith.constant 0 : index
    %68 = vector.load %arg6[%c0_59, %c0_60, %c0_61] : memref<1x16x16xbf16, #tpu.memory_space<vmem>>, vector<1x16x16xbf16>
    %69 = vector.shape_cast %68 : vector<1x16x16xbf16> to vector<16x16xbf16>
    %70 = vector.extract_strided_slice %38 {offsets = [0, 0], sizes = [16, 128], strides = [1, 1]} : vector<48x128xbf16> to vector<16x128xbf16>
    %cst_62 = arith.constant dense<0.000000e+00> : vector<16x128xf32>
    %71 = tpu.matmul %69, %70, %cst_62 {dimension_numbers = #tpu.dot_dimension_numbers<[1], [0], [0], [1], [0, 0, 1, 1], [], []>} : vector<16x16xbf16>, vector<16x128xbf16>, vector<16x128xf32> -> vector<16x128xf32>
    %72 = vector.extract_strided_slice %38 {offsets = [16, 0], sizes = [16, 128], strides = [1, 1]} : vector<48x128xbf16> to vector<16x128xbf16>
    %cst_63 = arith.constant dense<0.000000e+00> : vector<16x128xf32>
    %73 = tpu.matmul %69, %72, %cst_63 {dimension_numbers = #tpu.dot_dimension_numbers<[1], [0], [0], [1], [0, 0, 1, 1], [], []>} : vector<16x16xbf16>, vector<16x128xbf16>, vector<16x128xf32> -> vector<16x128xf32>
    %74 = vector.extract_strided_slice %38 {offsets = [32, 0], sizes = [16, 128], strides = [1, 1]} : vector<48x128xbf16> to vector<16x128xbf16>
    %cst_64 = arith.constant dense<0.000000e+00> : vector<16x128xf32>
    %75 = tpu.matmul %69, %74, %cst_64 {dimension_numbers = #tpu.dot_dimension_numbers<[1], [0], [0], [1], [0, 0, 1, 1], [], []>} : vector<16x16xbf16>, vector<16x128xbf16>, vector<16x128xf32> -> vector<16x128xf32>
    %76 = tpu.concatenate %71, %73, %75 in 0 : vector<16x128xf32>, vector<16x128xf32>, vector<16x128xf32> -> vector<48x128xf32>
    %77 = arith.truncf %76 : vector<48x128xf32> to vector<48x128xbf16>
    %c0_65 = arith.constant 0 : index
    %c0_66 = arith.constant 0 : index
    %78 = vector.load %arg53[%c0_65, %c0_66] : memref<128x128xbf16, #tpu.memory_space<vmem>>, vector<128x128xbf16>
    %cst_67 = arith.constant dense<0.000000e+00> : vector<48x128xf32>
    %79 = tpu.matmul %77, %78, %cst_67 {dimension_numbers = #tpu.dot_dimension_numbers<[1], [0], [0], [1], [0, 0, 1, 1], [], []>} : vector<48x128xbf16>, vector<128x128xbf16>, vector<48x128xf32> -> vector<48x128xf32>
    %80 = arith.addf %67, %79 : vector<48x128xf32>
    %81 = arith.addf %7, %80 : vector<48x128xf32>
    %c0_68 = arith.constant 0 : index
    %c0_69 = arith.constant 0 : index
    %c0_70 = arith.constant 0 : index
    %82 = vector.load %arg10[%c0_68, %c0_69, %c0_70] : memref<1x1x128xf32, #tpu.memory_space<vmem>>, vector<1x1x128xf32>
    %83 = vector.shape_cast %82 : vector<1x1x128xf32> to vector<1x128xf32>
    %84 = arith.truncf %83 : vector<1x128xf32> to vector<1x128xbf16>
    %c0_71 = arith.constant 0 : index
    %c0_72 = arith.constant 0 : index
    %85 = vector.load %arg50[%c0_71, %c0_72] : memref<128x128xbf16, #tpu.memory_space<vmem>>, vector<128x128xbf16>
    %cst_73 = arith.constant dense<0.000000e+00> : vector<1x128xf32>
    %86 = tpu.matmul %84, %85, %cst_73 {dimension_numbers = #tpu.dot_dimension_numbers<[1], [0], [0], [1], [0, 0, 1, 1], [], []>} : vector<1x128xbf16>, vector<128x128xbf16>, vector<1x128xf32> -> vector<1x128xf32>
    %c0_74 = arith.constant 0 : index
    %c0_75 = arith.constant 0 : index
    %87 = vector.load %arg23[%c0_74, %c0_75] : memref<1x128xf32, #tpu.memory_space<vmem>>, vector<1x128xf32>
    %88 = arith.addf %86, %87 : vector<1x128xf32>
    %89 = vector.broadcast %88 : vector<1x128xf32> to vector<16x128xf32>
    %90 = arith.addf %21, %89 : vector<16x128xf32>
    %91 = arith.truncf %90 : vector<16x128xf32> to vector<16x128xbf16>
    %92 = arith.truncf %55 : vector<16x128xf32> to vector<16x128xbf16>
    %93 = arith.truncf %81 : vector<48x128xf32> to vector<48x128xbf16>
    %c0_76 = arith.constant 0 : index
    %c0_77 = arith.constant 0 : index
    %94 = vector.load %arg39[%c0_76, %c0_77] : memref<128x128xbf16, #tpu.memory_space<vmem>>, vector<128x128xbf16>
    %cst_78 = arith.constant dense<0.000000e+00> : vector<16x128xf32>
    %95 = tpu.matmul %91, %94, %cst_78 {dimension_numbers = #tpu.dot_dimension_numbers<[1], [0], [0], [1], [0, 0, 1, 1], [], []>} : vector<16x128xbf16>, vector<128x128xbf16>, vector<16x128xf32> -> vector<16x128xf32>
    %c0_79 = arith.constant 0 : index
    %c0_80 = arith.constant 0 : index
    %96 = vector.load %arg16[%c0_79, %c0_80] : memref<1x128xf32, #tpu.memory_space<vmem>>, vector<1x128xf32>
    %97 = vector.broadcast %96 : vector<1x128xf32> to vector<16x128xf32>
    %98 = arith.addf %95, %97 : vector<16x128xf32>
    %cst_81 = arith.constant 0.000000e+00 : f32
    %99 = vector.broadcast %cst_81 : f32 to vector<16x128xf32>
    %100 = arith.cmpf ogt, %98, %99 : vector<16x128xf32>
    %cst_82 = arith.constant 2.000000e-01 : f32
    %101 = vector.broadcast %cst_82 : f32 to vector<16x128xf32>
    %102 = arith.mulf %101, %98 : vector<16x128xf32>
    %103 = arith.select %100, %98, %102 : vector<16x128xi1>, vector<16x128xf32>
    %104 = arith.truncf %103 : vector<16x128xf32> to vector<16x128xbf16>
    %c0_83 = arith.constant 0 : index
    %c0_84 = arith.constant 0 : index
    %105 = vector.load %arg40[%c0_83, %c0_84] : memref<128x128xbf16, #tpu.memory_space<vmem>>, vector<128x128xbf16>
    %cst_85 = arith.constant dense<0.000000e+00> : vector<16x128xf32>
    %106 = tpu.matmul %104, %105, %cst_85 {dimension_numbers = #tpu.dot_dimension_numbers<[1], [0], [0], [1], [0, 0, 1, 1], [], []>} : vector<16x128xbf16>, vector<128x128xbf16>, vector<16x128xf32> -> vector<16x128xf32>
    %c0_86 = arith.constant 0 : index
    %c0_87 = arith.constant 0 : index
    %107 = vector.load %arg17[%c0_86, %c0_87] : memref<1x128xf32, #tpu.memory_space<vmem>>, vector<1x128xf32>
    %108 = vector.broadcast %107 : vector<1x128xf32> to vector<16x128xf32>
    %109 = arith.addf %106, %108 : vector<16x128xf32>
    %cst_88 = arith.constant 0.000000e+00 : f32
    %110 = vector.broadcast %cst_88 : f32 to vector<16x128xf32>
    %111 = arith.cmpf ogt, %109, %110 : vector<16x128xf32>
    %cst_89 = arith.constant 2.000000e-01 : f32
    %112 = vector.broadcast %cst_89 : f32 to vector<16x128xf32>
    %113 = arith.mulf %112, %109 : vector<16x128xf32>
    %114 = arith.select %111, %109, %113 : vector<16x128xi1>, vector<16x128xf32>
    %115 = arith.truncf %114 : vector<16x128xf32> to vector<16x128xbf16>
    %c0_90 = arith.constant 0 : index
    %c0_91 = arith.constant 0 : index
    %116 = vector.load %arg41[%c0_90, %c0_91] : memref<128x128xbf16, #tpu.memory_space<vmem>>, vector<128x128xbf16>
    %cst_92 = arith.constant dense<0.000000e+00> : vector<16x128xf32>
    %117 = tpu.matmul %115, %116, %cst_92 {dimension_numbers = #tpu.dot_dimension_numbers<[1], [0], [0], [1], [0, 0, 1, 1], [], []>} : vector<16x128xbf16>, vector<128x128xbf16>, vector<16x128xf32> -> vector<16x128xf32>
    %c0_93 = arith.constant 0 : index
    %c0_94 = arith.constant 0 : index
    %118 = vector.load %arg18[%c0_93, %c0_94] : memref<1x128xf32, #tpu.memory_space<vmem>>, vector<1x128xf32>
    %119 = vector.broadcast %118 : vector<1x128xf32> to vector<16x128xf32>
    %120 = arith.addf %117, %119 : vector<16x128xf32>
    %c0_95 = arith.constant 0 : index
    %c0_96 = arith.constant 0 : index
    %121 = vector.load %arg32[%c0_95, %c0_96] : memref<128x128xbf16, #tpu.memory_space<vmem>>, vector<128x128xbf16>
    %cst_97 = arith.constant dense<0.000000e+00> : vector<16x128xf32>
    %122 = tpu.matmul %92, %121, %cst_97 {dimension_numbers = #tpu.dot_dimension_numbers<[1], [0], [0], [1], [0, 0, 1, 1], [], []>} : vector<16x128xbf16>, vector<128x128xbf16>, vector<16x128xf32> -> vector<16x128xf32>
    %c0_98 = arith.constant 0 : index
    %c0_99 = arith.constant 0 : index
    %123 = vector.load %arg11[%c0_98, %c0_99] : memref<1x128xf32, #tpu.memory_space<vmem>>, vector<1x128xf32>
    %124 = vector.broadcast %123 : vector<1x128xf32> to vector<16x128xf32>
    %125 = arith.addf %122, %124 : vector<16x128xf32>
    %cst_100 = arith.constant 0.000000e+00 : f32
    %126 = vector.broadcast %cst_100 : f32 to vector<16x128xf32>
    %127 = arith.cmpf ogt, %125, %126 : vector<16x128xf32>
    %cst_101 = arith.constant 2.000000e-01 : f32
    %128 = vector.broadcast %cst_101 : f32 to vector<16x128xf32>
    %129 = arith.mulf %128, %125 : vector<16x128xf32>
    %130 = arith.select %127, %125, %129 : vector<16x128xi1>, vector<16x128xf32>
    %131 = arith.truncf %130 : vector<16x128xf32> to vector<16x128xbf16>
    %c0_102 = arith.constant 0 : index
    %c0_103 = arith.constant 0 : index
    %132 = vector.load %arg33[%c0_102, %c0_103] : memref<128x128xbf16, #tpu.memory_space<vmem>>, vector<128x128xbf16>
    %cst_104 = arith.constant dense<0.000000e+00> : vector<16x128xf32>
    %133 = tpu.matmul %131, %132, %cst_104 {dimension_numbers = #tpu.dot_dimension_numbers<[1], [0], [0], [1], [0, 0, 1, 1], [], []>} : vector<16x128xbf16>, vector<128x128xbf16>, vector<16x128xf32> -> vector<16x128xf32>
    %c0_105 = arith.constant 0 : index
    %c0_106 = arith.constant 0 : index
    %134 = vector.load %arg12[%c0_105, %c0_106] : memref<1x128xf32, #tpu.memory_space<vmem>>, vector<1x128xf32>
    %135 = vector.broadcast %134 : vector<1x128xf32> to vector<16x128xf32>
    %136 = arith.addf %133, %135 : vector<16x128xf32>
    %cst_107 = arith.constant 0.000000e+00 : f32
    %137 = vector.broadcast %cst_107 : f32 to vector<16x128xf32>
    %138 = arith.cmpf ogt, %136, %137 : vector<16x128xf32>
    %cst_108 = arith.constant 2.000000e-01 : f32
    %139 = vector.broadcast %cst_108 : f32 to vector<16x128xf32>
    %140 = arith.mulf %139, %136 : vector<16x128xf32>
    %141 = arith.select %138, %136, %140 : vector<16x128xi1>, vector<16x128xf32>
    %142 = arith.truncf %141 : vector<16x128xf32> to vector<16x128xbf16>
    %c0_109 = arith.constant 0 : index
    %c0_110 = arith.constant 0 : index
    %143 = vector.load %arg34[%c0_109, %c0_110] : memref<128x128xbf16, #tpu.memory_space<vmem>>, vector<128x128xbf16>
    %cst_111 = arith.constant dense<0.000000e+00> : vector<16x128xf32>
    %144 = tpu.matmul %142, %143, %cst_111 {dimension_numbers = #tpu.dot_dimension_numbers<[1], [0], [0], [1], [0, 0, 1, 1], [], []>} : vector<16x128xbf16>, vector<128x128xbf16>, vector<16x128xf32> -> vector<16x128xf32>
    %c0_112 = arith.constant 0 : index
    %c0_113 = arith.constant 0 : index
    %145 = vector.load %arg13[%c0_112, %c0_113] : memref<1x128xf32, #tpu.memory_space<vmem>>, vector<1x128xf32>
    %146 = vector.broadcast %145 : vector<1x128xf32> to vector<16x128xf32>
    %147 = arith.addf %144, %146 : vector<16x128xf32>
    %c0_114 = arith.constant 0 : index
    %c0_115 = arith.constant 0 : index
    %148 = vector.load %arg57[%c0_114, %c0_115] : memref<128x128xbf16, #tpu.memory_space<vmem>>, vector<128x128xbf16>
    %cst_116 = arith.constant dense<0.000000e+00> : vector<48x128xf32>
    %149 = tpu.matmul %38, %148, %cst_116 {dimension_numbers = #tpu.dot_dimension_numbers<[1], [0], [0], [1], [0, 0, 1, 1], [], []>} : vector<48x128xbf16>, vector<128x128xbf16>, vector<48x128xf32> -> vector<48x128xf32>
    %150 = vector.extract_strided_slice %149 {offsets = [0, 0], sizes = [16, 128], strides = [1, 1]} : vector<48x128xf32> to vector<16x128xf32>
    %151 = arith.mulf %150, %150 : vector<16x128xf32>
    %152 = vector.extract_strided_slice %149 {offsets = [16, 0], sizes = [16, 128], strides = [1, 1]} : vector<48x128xf32> to vector<16x128xf32>
    %153 = arith.mulf %152, %152 : vector<16x128xf32>
    %154 = arith.addf %151, %153 : vector<16x128xf32>
    %155 = vector.extract_strided_slice %149 {offsets = [32, 0], sizes = [16, 128], strides = [1, 1]} : vector<48x128xf32> to vector<16x128xf32>
    %156 = arith.mulf %155, %155 : vector<16x128xf32>
    %157 = arith.addf %154, %156 : vector<16x128xf32>
    %cst_117 = arith.constant 1.000000e+00 : f32
    %158 = vector.broadcast %cst_117 : f32 to vector<16x128xf32>
    %159 = arith.addf %158, %157 : vector<16x128xf32>
    %160 = math.sqrt %159 : vector<16x128xf32>
    %161 = math.rsqrt %160 : vector<16x128xf32>
    %162 = tpu.concatenate %161, %161, %161 in 0 : vector<16x128xf32>, vector<16x128xf32>, vector<16x128xf32> -> vector<48x128xf32>
    %163 = arith.mulf %149, %162 : vector<48x128xf32>
    %164 = arith.truncf %163 : vector<48x128xf32> to vector<48x128xbf16>
    %c0_118 = arith.constant 0 : index
    %c0_119 = arith.constant 0 : index
    %165 = vector.load %arg58[%c0_118, %c0_119] : memref<128x128xbf16, #tpu.memory_space<vmem>>, vector<128x128xbf16>
    %cst_120 = arith.constant dense<0.000000e+00> : vector<48x128xf32>
    %166 = tpu.matmul %164, %165, %cst_120 {dimension_numbers = #tpu.dot_dimension_numbers<[1], [0], [0], [1], [0, 0, 1, 1], [], []>} : vector<48x128xbf16>, vector<128x128xbf16>, vector<48x128xf32> -> vector<48x128xf32>
    %c0_121 = arith.constant 0 : index
    %c0_122 = arith.constant 0 : index
    %167 = vector.load %arg51[%c0_121, %c0_122] : memref<128x128xbf16, #tpu.memory_space<vmem>>, vector<128x128xbf16>
    %cst_123 = arith.constant dense<0.000000e+00> : vector<48x128xf32>
    %168 = tpu.matmul %93, %167, %cst_123 {dimension_numbers = #tpu.dot_dimension_numbers<[1], [0], [0], [1], [0, 0, 1, 1], [], []>} : vector<48x128xbf16>, vector<128x128xbf16>, vector<48x128xf32> -> vector<48x128xf32>
    %169 = vector.extract_strided_slice %168 {offsets = [0, 0], sizes = [16, 128], strides = [1, 1]} : vector<48x128xf32> to vector<16x128xf32>
    %170 = arith.mulf %169, %169 : vector<16x128xf32>
    %171 = vector.extract_strided_slice %168 {offsets = [16, 0], sizes = [16, 128], strides = [1, 1]} : vector<48x128xf32> to vector<16x128xf32>
    %172 = arith.mulf %171, %171 : vector<16x128xf32>
    %173 = arith.addf %170, %172 : vector<16x128xf32>
    %174 = vector.extract_strided_slice %168 {offsets = [32, 0], sizes = [16, 128], strides = [1, 1]} : vector<48x128xf32> to vector<16x128xf32>
    %175 = arith.mulf %174, %174 : vector<16x128xf32>
    %176 = arith.addf %173, %175 : vector<16x128xf32>
    %cst_124 = arith.constant 1.000000e+00 : f32
    %177 = vector.broadcast %cst_124 : f32 to vector<16x128xf32>
    %178 = arith.addf %177, %176 : vector<16x128xf32>
    %179 = math.sqrt %178 : vector<16x128xf32>
    %180 = math.rsqrt %179 : vector<16x128xf32>
    %181 = tpu.concatenate %180, %180, %180 in 0 : vector<16x128xf32>, vector<16x128xf32>, vector<16x128xf32> -> vector<48x128xf32>
    %182 = arith.mulf %168, %181 : vector<48x128xf32>
    %183 = arith.truncf %182 : vector<48x128xf32> to vector<48x128xbf16>
    %c0_125 = arith.constant 0 : index
    %c0_126 = arith.constant 0 : index
    %184 = vector.load %arg52[%c0_125, %c0_126] : memref<128x128xbf16, #tpu.memory_space<vmem>>, vector<128x128xbf16>
    %cst_127 = arith.constant dense<0.000000e+00> : vector<48x128xf32>
    %185 = tpu.matmul %183, %184, %cst_127 {dimension_numbers = #tpu.dot_dimension_numbers<[1], [0], [0], [1], [0, 0, 1, 1], [], []>} : vector<48x128xbf16>, vector<128x128xbf16>, vector<48x128xf32> -> vector<48x128xf32>
    %c0_128 = arith.constant 0 : index
    %c0_129 = arith.constant 0 : index
    %186 = vector.load %arg46[%c0_128, %c0_129] : memref<128x128xbf16, #tpu.memory_space<vmem>>, vector<128x128xbf16>
    %cst_130 = arith.constant dense<0.000000e+00> : vector<16x128xf32>
    %187 = tpu.matmul %91, %186, %cst_130 {dimension_numbers = #tpu.dot_dimension_numbers<[1], [0], [0], [1], [0, 0, 1, 1], [], []>} : vector<16x128xbf16>, vector<128x128xbf16>, vector<16x128xf32> -> vector<16x128xf32>
    %c0_131 = arith.constant 0 : index
    %c0_132 = arith.constant 0 : index
    %188 = vector.load %arg21[%c0_131, %c0_132] : memref<1x128xf32, #tpu.memory_space<vmem>>, vector<1x128xf32>
    %189 = vector.broadcast %188 : vector<1x128xf32> to vector<16x128xf32>
    %190 = arith.addf %187, %189 : vector<16x128xf32>
    %c0_133 = arith.constant 0 : index
    %c0_134 = arith.constant 0 : index
    %191 = vector.load %arg48[%c0_133, %c0_134] : memref<128x256xbf16, #tpu.memory_space<vmem>>, vector<128x256xbf16>
    %cst_135 = arith.constant dense<0.000000e+00> : vector<48x256xf32>
    %192 = tpu.matmul %38, %191, %cst_135 {dimension_numbers = #tpu.dot_dimension_numbers<[1], [0], [0], [1], [0, 0, 1, 1], [], []>} : vector<48x128xbf16>, vector<128x256xbf16>, vector<48x256xf32> -> vector<48x256xf32>
    %193 = vector.extract_strided_slice %192 {offsets = [0, 0], sizes = [48, 128], strides = [1, 1]} : vector<48x256xf32> to vector<48x128xf32>
    %194 = vector.extract_strided_slice %192 {offsets = [0, 128], sizes = [48, 128], strides = [1, 1]} : vector<48x256xf32> to vector<48x128xf32>
    %195 = vector.extract_strided_slice %193 {offsets = [0, 0], sizes = [16, 128], strides = [1, 1]} : vector<48x128xf32> to vector<16x128xf32>
    %196 = vector.extract_strided_slice %194 {offsets = [0, 0], sizes = [16, 128], strides = [1, 1]} : vector<48x128xf32> to vector<16x128xf32>
    %197 = arith.mulf %195, %196 : vector<16x128xf32>
    %198 = vector.extract_strided_slice %193 {offsets = [16, 0], sizes = [16, 128], strides = [1, 1]} : vector<48x128xf32> to vector<16x128xf32>
    %199 = vector.extract_strided_slice %194 {offsets = [16, 0], sizes = [16, 128], strides = [1, 1]} : vector<48x128xf32> to vector<16x128xf32>
    %200 = arith.mulf %198, %199 : vector<16x128xf32>
    %201 = arith.addf %197, %200 : vector<16x128xf32>
    %202 = vector.extract_strided_slice %193 {offsets = [32, 0], sizes = [16, 128], strides = [1, 1]} : vector<48x128xf32> to vector<16x128xf32>
    %203 = vector.extract_strided_slice %194 {offsets = [32, 0], sizes = [16, 128], strides = [1, 1]} : vector<48x128xf32> to vector<16x128xf32>
    %204 = arith.mulf %202, %203 : vector<16x128xf32>
    %205 = arith.addf %201, %204 : vector<16x128xf32>
    %206 = arith.truncf %205 : vector<16x128xf32> to vector<16x128xbf16>
    %c0_136 = arith.constant 0 : index
    %c0_137 = arith.constant 0 : index
    %207 = vector.load %arg47[%c0_136, %c0_137] : memref<128x128xbf16, #tpu.memory_space<vmem>>, vector<128x128xbf16>
    %cst_138 = arith.constant dense<0.000000e+00> : vector<16x128xf32>
    %208 = tpu.matmul %206, %207, %cst_138 {dimension_numbers = #tpu.dot_dimension_numbers<[1], [0], [0], [1], [0, 0, 1, 1], [], []>} : vector<16x128xbf16>, vector<128x128xbf16>, vector<16x128xf32> -> vector<16x128xf32>
    %c0_139 = arith.constant 0 : index
    %c0_140 = arith.constant 0 : index
    %209 = vector.load %arg22[%c0_139, %c0_140] : memref<1x128xf32, #tpu.memory_space<vmem>>, vector<1x128xf32>
    %210 = vector.broadcast %209 : vector<1x128xf32> to vector<16x128xf32>
    %211 = arith.addf %208, %210 : vector<16x128xf32>
    %212 = tpu.concatenate %190, %190, %190 in 0 : vector<16x128xf32>, vector<16x128xf32>, vector<16x128xf32> -> vector<48x128xf32>
    %213 = arith.mulf %212, %193 : vector<48x128xf32>
    %214 = arith.truncf %213 : vector<48x128xf32> to vector<48x128xbf16>
    %c0_141 = arith.constant 0 : index
    %c0_142 = arith.constant 0 : index
    %215 = vector.load %arg49[%c0_141, %c0_142] : memref<128x128xbf16, #tpu.memory_space<vmem>>, vector<128x128xbf16>
    %cst_143 = arith.constant dense<0.000000e+00> : vector<48x128xf32>
    %216 = tpu.matmul %214, %215, %cst_143 {dimension_numbers = #tpu.dot_dimension_numbers<[1], [0], [0], [1], [0, 0, 1, 1], [], []>} : vector<48x128xbf16>, vector<128x128xbf16>, vector<48x128xf32> -> vector<48x128xf32>
    %c0_144 = arith.constant 0 : index
    %c0_145 = arith.constant 0 : index
    %217 = vector.load %arg46[%c0_144, %c0_145] : memref<128x128xbf16, #tpu.memory_space<vmem>>, vector<128x128xbf16>
    %cst_146 = arith.constant dense<0.000000e+00> : vector<16x128xf32>
    %218 = tpu.matmul %92, %217, %cst_146 {dimension_numbers = #tpu.dot_dimension_numbers<[1], [0], [0], [1], [0, 0, 1, 1], [], []>} : vector<16x128xbf16>, vector<128x128xbf16>, vector<16x128xf32> -> vector<16x128xf32>
    %c0_147 = arith.constant 0 : index
    %c0_148 = arith.constant 0 : index
    %219 = vector.load %arg21[%c0_147, %c0_148] : memref<1x128xf32, #tpu.memory_space<vmem>>, vector<1x128xf32>
    %220 = vector.broadcast %219 : vector<1x128xf32> to vector<16x128xf32>
    %221 = arith.addf %218, %220 : vector<16x128xf32>
    %c0_149 = arith.constant 0 : index
    %c0_150 = arith.constant 0 : index
    %222 = vector.load %arg48[%c0_149, %c0_150] : memref<128x256xbf16, #tpu.memory_space<vmem>>, vector<128x256xbf16>
    %cst_151 = arith.constant dense<0.000000e+00> : vector<48x256xf32>
    %223 = tpu.matmul %93, %222, %cst_151 {dimension_numbers = #tpu.dot_dimension_numbers<[1], [0], [0], [1], [0, 0, 1, 1], [], []>} : vector<48x128xbf16>, vector<128x256xbf16>, vector<48x256xf32> -> vector<48x256xf32>
    %224 = vector.extract_strided_slice %223 {offsets = [0, 0], sizes = [48, 128], strides = [1, 1]} : vector<48x256xf32> to vector<48x128xf32>
    %225 = vector.extract_strided_slice %223 {offsets = [0, 128], sizes = [48, 128], strides = [1, 1]} : vector<48x256xf32> to vector<48x128xf32>
    %226 = vector.extract_strided_slice %224 {offsets = [0, 0], sizes = [16, 128], strides = [1, 1]} : vector<48x128xf32> to vector<16x128xf32>
    %227 = vector.extract_strided_slice %225 {offsets = [0, 0], sizes = [16, 128], strides = [1, 1]} : vector<48x128xf32> to vector<16x128xf32>
    %228 = arith.mulf %226, %227 : vector<16x128xf32>
    %229 = vector.extract_strided_slice %224 {offsets = [16, 0], sizes = [16, 128], strides = [1, 1]} : vector<48x128xf32> to vector<16x128xf32>
    %230 = vector.extract_strided_slice %225 {offsets = [16, 0], sizes = [16, 128], strides = [1, 1]} : vector<48x128xf32> to vector<16x128xf32>
    %231 = arith.mulf %229, %230 : vector<16x128xf32>
    %232 = arith.addf %228, %231 : vector<16x128xf32>
    %233 = vector.extract_strided_slice %224 {offsets = [32, 0], sizes = [16, 128], strides = [1, 1]} : vector<48x128xf32> to vector<16x128xf32>
    %234 = vector.extract_strided_slice %225 {offsets = [32, 0], sizes = [16, 128], strides = [1, 1]} : vector<48x128xf32> to vector<16x128xf32>
    %235 = arith.mulf %233, %234 : vector<16x128xf32>
    %236 = arith.addf %232, %235 : vector<16x128xf32>
    %237 = arith.truncf %236 : vector<16x128xf32> to vector<16x128xbf16>
    %c0_152 = arith.constant 0 : index
    %c0_153 = arith.constant 0 : index
    %238 = vector.load %arg47[%c0_152, %c0_153] : memref<128x128xbf16, #tpu.memory_space<vmem>>, vector<128x128xbf16>
    %cst_154 = arith.constant dense<0.000000e+00> : vector<16x128xf32>
    %239 = tpu.matmul %237, %238, %cst_154 {dimension_numbers = #tpu.dot_dimension_numbers<[1], [0], [0], [1], [0, 0, 1, 1], [], []>} : vector<16x128xbf16>, vector<128x128xbf16>, vector<16x128xf32> -> vector<16x128xf32>
    %c0_155 = arith.constant 0 : index
    %c0_156 = arith.constant 0 : index
    %240 = vector.load %arg22[%c0_155, %c0_156] : memref<1x128xf32, #tpu.memory_space<vmem>>, vector<1x128xf32>
    %241 = vector.broadcast %240 : vector<1x128xf32> to vector<16x128xf32>
    %242 = arith.addf %239, %241 : vector<16x128xf32>
    %243 = tpu.concatenate %221, %221, %221 in 0 : vector<16x128xf32>, vector<16x128xf32>, vector<16x128xf32> -> vector<48x128xf32>
    %244 = arith.mulf %243, %224 : vector<48x128xf32>
    %245 = arith.truncf %244 : vector<48x128xf32> to vector<48x128xbf16>
    %c0_157 = arith.constant 0 : index
    %c0_158 = arith.constant 0 : index
    %246 = vector.load %arg49[%c0_157, %c0_158] : memref<128x128xbf16, #tpu.memory_space<vmem>>, vector<128x128xbf16>
    %cst_159 = arith.constant dense<0.000000e+00> : vector<48x128xf32>
    %247 = tpu.matmul %245, %246, %cst_159 {dimension_numbers = #tpu.dot_dimension_numbers<[1], [0], [0], [1], [0, 0, 1, 1], [], []>} : vector<48x128xbf16>, vector<128x128xbf16>, vector<48x128xf32> -> vector<48x128xf32>
    %248 = arith.addf %120, %211 : vector<16x128xf32>
    %249 = arith.addf %166, %216 : vector<48x128xf32>
    %250 = arith.addf %147, %242 : vector<16x128xf32>
    %251 = arith.addf %185, %247 : vector<48x128xf32>
    %252 = arith.truncf %250 : vector<16x128xf32> to vector<16x128xbf16>
    %253 = arith.truncf %251 : vector<48x128xf32> to vector<48x128xbf16>
    %c0_160 = arith.constant 0 : index
    %c0_161 = arith.constant 0 : index
    %c0_162 = arith.constant 0 : index
    %254 = vector.load %arg7[%c0_160, %c0_161, %c0_162] : memref<1x16x16xbf16, #tpu.memory_space<vmem>>, vector<1x16x16xbf16>
    %255 = vector.shape_cast %254 : vector<1x16x16xbf16> to vector<16x16xbf16>
    %cst_163 = arith.constant dense<0.000000e+00> : vector<16x128xf32>
    %256 = tpu.matmul %255, %252, %cst_163 {dimension_numbers = #tpu.dot_dimension_numbers<[1], [0], [0], [1], [0, 0, 1, 1], [], []>} : vector<16x16xbf16>, vector<16x128xbf16>, vector<16x128xf32> -> vector<16x128xf32>
    %257 = arith.truncf %256 : vector<16x128xf32> to vector<16x128xbf16>
    %c0_164 = arith.constant 0 : index
    %c0_165 = arith.constant 0 : index
    %258 = vector.load %arg38[%c0_164, %c0_165] : memref<128x128xbf16, #tpu.memory_space<vmem>>, vector<128x128xbf16>
    %cst_166 = arith.constant dense<0.000000e+00> : vector<16x128xf32>
    %259 = tpu.matmul %257, %258, %cst_166 {dimension_numbers = #tpu.dot_dimension_numbers<[1], [0], [0], [1], [0, 0, 1, 1], [], []>} : vector<16x128xbf16>, vector<128x128xbf16>, vector<16x128xf32> -> vector<16x128xf32>
    %c0_167 = arith.constant 0 : index
    %c0_168 = arith.constant 0 : index
    %c0_169 = arith.constant 0 : index
    %260 = vector.load %arg8[%c0_167, %c0_168, %c0_169] : memref<1x16x16xbf16, #tpu.memory_space<vmem>>, vector<1x16x16xbf16>
    %261 = vector.shape_cast %260 : vector<1x16x16xbf16> to vector<16x16xbf16>
    %cst_170 = arith.constant dense<0.000000e+00> : vector<16x128xf32>
    %262 = tpu.matmul %261, %252, %cst_170 {dimension_numbers = #tpu.dot_dimension_numbers<[1], [0], [0], [1], [0, 0, 1, 1], [], []>} : vector<16x16xbf16>, vector<16x128xbf16>, vector<16x128xf32> -> vector<16x128xf32>
    %263 = arith.truncf %262 : vector<16x128xf32> to vector<16x128xbf16>
    %c0_171 = arith.constant 0 : index
    %c0_172 = arith.constant 0 : index
    %264 = vector.load %arg37[%c0_171, %c0_172] : memref<128x128xbf16, #tpu.memory_space<vmem>>, vector<128x128xbf16>
    %cst_173 = arith.constant dense<0.000000e+00> : vector<16x128xf32>
    %265 = tpu.matmul %263, %264, %cst_173 {dimension_numbers = #tpu.dot_dimension_numbers<[1], [0], [0], [1], [0, 0, 1, 1], [], []>} : vector<16x128xbf16>, vector<128x128xbf16>, vector<16x128xf32> -> vector<16x128xf32>
    %266 = arith.addf %259, %265 : vector<16x128xf32>
    %c0_174 = arith.constant 0 : index
    %c0_175 = arith.constant 0 : index
    %267 = vector.load %arg15[%c0_174, %c0_175] : memref<1x128xf32, #tpu.memory_space<vmem>>, vector<1x128xf32>
    %268 = vector.broadcast %267 : vector<1x128xf32> to vector<16x128xf32>
    %269 = arith.addf %266, %268 : vector<16x128xf32>
    %270 = arith.addf %248, %269 : vector<16x128xf32>
    %c0_176 = arith.constant 0 : index
    %c0_177 = arith.constant 0 : index
    %c0_178 = arith.constant 0 : index
    %271 = vector.load %arg7[%c0_176, %c0_177, %c0_178] : memref<1x16x16xbf16, #tpu.memory_space<vmem>>, vector<1x16x16xbf16>
    %272 = vector.shape_cast %271 : vector<1x16x16xbf16> to vector<16x16xbf16>
    %273 = vector.extract_strided_slice %253 {offsets = [0, 0], sizes = [16, 128], strides = [1, 1]} : vector<48x128xbf16> to vector<16x128xbf16>
    %cst_179 = arith.constant dense<0.000000e+00> : vector<16x128xf32>
    %274 = tpu.matmul %272, %273, %cst_179 {dimension_numbers = #tpu.dot_dimension_numbers<[1], [0], [0], [1], [0, 0, 1, 1], [], []>} : vector<16x16xbf16>, vector<16x128xbf16>, vector<16x128xf32> -> vector<16x128xf32>
    %275 = vector.extract_strided_slice %253 {offsets = [16, 0], sizes = [16, 128], strides = [1, 1]} : vector<48x128xbf16> to vector<16x128xbf16>
    %cst_180 = arith.constant dense<0.000000e+00> : vector<16x128xf32>
    %276 = tpu.matmul %272, %275, %cst_180 {dimension_numbers = #tpu.dot_dimension_numbers<[1], [0], [0], [1], [0, 0, 1, 1], [], []>} : vector<16x16xbf16>, vector<16x128xbf16>, vector<16x128xf32> -> vector<16x128xf32>
    %277 = vector.extract_strided_slice %253 {offsets = [32, 0], sizes = [16, 128], strides = [1, 1]} : vector<48x128xbf16> to vector<16x128xbf16>
    %cst_181 = arith.constant dense<0.000000e+00> : vector<16x128xf32>
    %278 = tpu.matmul %272, %277, %cst_181 {dimension_numbers = #tpu.dot_dimension_numbers<[1], [0], [0], [1], [0, 0, 1, 1], [], []>} : vector<16x16xbf16>, vector<16x128xbf16>, vector<16x128xf32> -> vector<16x128xf32>
    %279 = tpu.concatenate %274, %276, %278 in 0 : vector<16x128xf32>, vector<16x128xf32>, vector<16x128xf32> -> vector<48x128xf32>
    %280 = arith.truncf %279 : vector<48x128xf32> to vector<48x128xbf16>
    %c0_182 = arith.constant 0 : index
    %c0_183 = arith.constant 0 : index
    %281 = vector.load %arg56[%c0_182, %c0_183] : memref<128x128xbf16, #tpu.memory_space<vmem>>, vector<128x128xbf16>
    %cst_184 = arith.constant dense<0.000000e+00> : vector<48x128xf32>
    %282 = tpu.matmul %280, %281, %cst_184 {dimension_numbers = #tpu.dot_dimension_numbers<[1], [0], [0], [1], [0, 0, 1, 1], [], []>} : vector<48x128xbf16>, vector<128x128xbf16>, vector<48x128xf32> -> vector<48x128xf32>
    %c0_185 = arith.constant 0 : index
    %c0_186 = arith.constant 0 : index
    %c0_187 = arith.constant 0 : index
    %283 = vector.load %arg8[%c0_185, %c0_186, %c0_187] : memref<1x16x16xbf16, #tpu.memory_space<vmem>>, vector<1x16x16xbf16>
    %284 = vector.shape_cast %283 : vector<1x16x16xbf16> to vector<16x16xbf16>
    %285 = vector.extract_strided_slice %253 {offsets = [0, 0], sizes = [16, 128], strides = [1, 1]} : vector<48x128xbf16> to vector<16x128xbf16>
    %cst_188 = arith.constant dense<0.000000e+00> : vector<16x128xf32>
    %286 = tpu.matmul %284, %285, %cst_188 {dimension_numbers = #tpu.dot_dimension_numbers<[1], [0], [0], [1], [0, 0, 1, 1], [], []>} : vector<16x16xbf16>, vector<16x128xbf16>, vector<16x128xf32> -> vector<16x128xf32>
    %287 = vector.extract_strided_slice %253 {offsets = [16, 0], sizes = [16, 128], strides = [1, 1]} : vector<48x128xbf16> to vector<16x128xbf16>
    %cst_189 = arith.constant dense<0.000000e+00> : vector<16x128xf32>
    %288 = tpu.matmul %284, %287, %cst_189 {dimension_numbers = #tpu.dot_dimension_numbers<[1], [0], [0], [1], [0, 0, 1, 1], [], []>} : vector<16x16xbf16>, vector<16x128xbf16>, vector<16x128xf32> -> vector<16x128xf32>
    %289 = vector.extract_strided_slice %253 {offsets = [32, 0], sizes = [16, 128], strides = [1, 1]} : vector<48x128xbf16> to vector<16x128xbf16>
    %cst_190 = arith.constant dense<0.000000e+00> : vector<16x128xf32>
    %290 = tpu.matmul %284, %289, %cst_190 {dimension_numbers = #tpu.dot_dimension_numbers<[1], [0], [0], [1], [0, 0, 1, 1], [], []>} : vector<16x16xbf16>, vector<16x128xbf16>, vector<16x128xf32> -> vector<16x128xf32>
    %291 = tpu.concatenate %286, %288, %290 in 0 : vector<16x128xf32>, vector<16x128xf32>, vector<16x128xf32> -> vector<48x128xf32>
    %292 = arith.truncf %291 : vector<48x128xf32> to vector<48x128xbf16>
    %c0_191 = arith.constant 0 : index
    %c0_192 = arith.constant 0 : index
    %293 = vector.load %arg55[%c0_191, %c0_192] : memref<128x128xbf16, #tpu.memory_space<vmem>>, vector<128x128xbf16>
    %cst_193 = arith.constant dense<0.000000e+00> : vector<48x128xf32>
    %294 = tpu.matmul %292, %293, %cst_193 {dimension_numbers = #tpu.dot_dimension_numbers<[1], [0], [0], [1], [0, 0, 1, 1], [], []>} : vector<48x128xbf16>, vector<128x128xbf16>, vector<48x128xf32> -> vector<48x128xf32>
    %295 = arith.addf %282, %294 : vector<48x128xf32>
    %296 = arith.addf %249, %295 : vector<48x128xf32>
    %297 = arith.truncf %270 : vector<16x128xf32> to vector<16x128xbf16>
    %298 = arith.truncf %296 : vector<48x128xf32> to vector<48x128xbf16>
    %c0_194 = arith.constant 0 : index
    %c0_195 = arith.constant 0 : index
    %299 = vector.load %arg45[%c0_194, %c0_195] : memref<128x128xbf16, #tpu.memory_space<vmem>>, vector<128x128xbf16>
    %cst_196 = arith.constant dense<0.000000e+00> : vector<16x128xf32>
    %300 = tpu.matmul %297, %299, %cst_196 {dimension_numbers = #tpu.dot_dimension_numbers<[1], [0], [0], [1], [0, 0, 1, 1], [], []>} : vector<16x128xbf16>, vector<128x128xbf16>, vector<16x128xf32> -> vector<16x128xf32>
    %c0_197 = arith.constant 0 : index
    %c0_198 = arith.constant 0 : index
    %c0_199 = arith.constant 0 : index
    %301 = vector.load %arg9[%c0_197, %c0_198, %c0_199] : memref<1x16x16xbf16, #tpu.memory_space<vmem>>, vector<1x16x16xbf16>
    %302 = vector.shape_cast %301 : vector<1x16x16xbf16> to vector<16x16xbf16>
    %cst_200 = arith.constant dense<0.000000e+00> : vector<16x128xf32>
    %303 = tpu.matmul %302, %297, %cst_200 {dimension_numbers = #tpu.dot_dimension_numbers<[1], [0], [0], [1], [0, 0, 1, 1], [], []>} : vector<16x16xbf16>, vector<16x128xbf16>, vector<16x128xf32> -> vector<16x128xf32>
    %304 = arith.truncf %303 : vector<16x128xf32> to vector<16x128xbf16>
    %c0_201 = arith.constant 0 : index
    %c0_202 = arith.constant 0 : index
    %305 = vector.load %arg44[%c0_201, %c0_202] : memref<128x128xbf16, #tpu.memory_space<vmem>>, vector<128x128xbf16>
    %cst_203 = arith.constant dense<0.000000e+00> : vector<16x128xf32>
    %306 = tpu.matmul %304, %305, %cst_203 {dimension_numbers = #tpu.dot_dimension_numbers<[1], [0], [0], [1], [0, 0, 1, 1], [], []>} : vector<16x128xbf16>, vector<128x128xbf16>, vector<16x128xf32> -> vector<16x128xf32>
    %307 = arith.addf %300, %306 : vector<16x128xf32>
    %c0_204 = arith.constant 0 : index
    %c0_205 = arith.constant 0 : index
    %308 = vector.load %arg20[%c0_204, %c0_205] : memref<1x128xf32, #tpu.memory_space<vmem>>, vector<1x128xf32>
    %309 = vector.broadcast %308 : vector<1x128xf32> to vector<16x128xf32>
    %310 = arith.addf %307, %309 : vector<16x128xf32>
    %c0_206 = arith.constant 0 : index
    %c0_207 = arith.constant 0 : index
    %311 = vector.load %arg62[%c0_206, %c0_207] : memref<128x128xbf16, #tpu.memory_space<vmem>>, vector<128x128xbf16>
    %cst_208 = arith.constant dense<0.000000e+00> : vector<48x128xf32>
    %312 = tpu.matmul %298, %311, %cst_208 {dimension_numbers = #tpu.dot_dimension_numbers<[1], [0], [0], [1], [0, 0, 1, 1], [], []>} : vector<48x128xbf16>, vector<128x128xbf16>, vector<48x128xf32> -> vector<48x128xf32>
    %c0_209 = arith.constant 0 : index
    %c0_210 = arith.constant 0 : index
    %c0_211 = arith.constant 0 : index
    %313 = vector.load %arg9[%c0_209, %c0_210, %c0_211] : memref<1x16x16xbf16, #tpu.memory_space<vmem>>, vector<1x16x16xbf16>
    %314 = vector.shape_cast %313 : vector<1x16x16xbf16> to vector<16x16xbf16>
    %315 = vector.extract_strided_slice %298 {offsets = [0, 0], sizes = [16, 128], strides = [1, 1]} : vector<48x128xbf16> to vector<16x128xbf16>
    %cst_212 = arith.constant dense<0.000000e+00> : vector<16x128xf32>
    %316 = tpu.matmul %314, %315, %cst_212 {dimension_numbers = #tpu.dot_dimension_numbers<[1], [0], [0], [1], [0, 0, 1, 1], [], []>} : vector<16x16xbf16>, vector<16x128xbf16>, vector<16x128xf32> -> vector<16x128xf32>
    %317 = vector.extract_strided_slice %298 {offsets = [16, 0], sizes = [16, 128], strides = [1, 1]} : vector<48x128xbf16> to vector<16x128xbf16>
    %cst_213 = arith.constant dense<0.000000e+00> : vector<16x128xf32>
    %318 = tpu.matmul %314, %317, %cst_213 {dimension_numbers = #tpu.dot_dimension_numbers<[1], [0], [0], [1], [0, 0, 1, 1], [], []>} : vector<16x16xbf16>, vector<16x128xbf16>, vector<16x128xf32> -> vector<16x128xf32>
    %319 = vector.extract_strided_slice %298 {offsets = [32, 0], sizes = [16, 128], strides = [1, 1]} : vector<48x128xbf16> to vector<16x128xbf16>
    %cst_214 = arith.constant dense<0.000000e+00> : vector<16x128xf32>
    %320 = tpu.matmul %314, %319, %cst_214 {dimension_numbers = #tpu.dot_dimension_numbers<[1], [0], [0], [1], [0, 0, 1, 1], [], []>} : vector<16x16xbf16>, vector<16x128xbf16>, vector<16x128xf32> -> vector<16x128xf32>
    %321 = tpu.concatenate %316, %318, %320 in 0 : vector<16x128xf32>, vector<16x128xf32>, vector<16x128xf32> -> vector<48x128xf32>
    %322 = arith.truncf %321 : vector<48x128xf32> to vector<48x128xbf16>
    %c0_215 = arith.constant 0 : index
    %c0_216 = arith.constant 0 : index
    %323 = vector.load %arg61[%c0_215, %c0_216] : memref<128x128xbf16, #tpu.memory_space<vmem>>, vector<128x128xbf16>
    %cst_217 = arith.constant dense<0.000000e+00> : vector<48x128xf32>
    %324 = tpu.matmul %322, %323, %cst_217 {dimension_numbers = #tpu.dot_dimension_numbers<[1], [0], [0], [1], [0, 0, 1, 1], [], []>} : vector<48x128xbf16>, vector<128x128xbf16>, vector<48x128xf32> -> vector<48x128xf32>
    %325 = arith.addf %312, %324 : vector<48x128xf32>
    %c0_218 = arith.constant 0 : index
    %c0_219 = arith.constant 0 : index
    %326 = vector.load %arg30[%c0_218, %c0_219] : memref<128x128xbf16, #tpu.memory_space<vmem>>, vector<128x128xbf16>
    %327 = arith.truncf %310 : vector<16x128xf32> to vector<16x128xbf16>
    %cst_220 = arith.constant dense<0.000000e+00> : vector<16x128xf32>
    %328 = tpu.matmul %327, %326, %cst_220 {dimension_numbers = #tpu.dot_dimension_numbers<[1], [0], [0], [1], [0, 0, 1, 1], [], []>} : vector<16x128xbf16>, vector<128x128xbf16>, vector<16x128xf32> -> vector<16x128xf32>
    %329 = arith.subf %310, %328 : vector<16x128xf32>
    %330 = arith.mulf %329, %329 : vector<16x128xf32>
    %331 = arith.truncf %330 : vector<16x128xf32> to vector<16x128xbf16>
    %cst_221 = arith.constant dense<0.000000e+00> : vector<16x128xf32>
    %332 = tpu.matmul %331, %326, %cst_221 {dimension_numbers = #tpu.dot_dimension_numbers<[1], [0], [0], [1], [0, 0, 1, 1], [], []>} : vector<16x128xbf16>, vector<128x128xbf16>, vector<16x128xf32> -> vector<16x128xf32>
    %cst_222 = arith.constant 9.99999974E-6 : f32
    %333 = vector.broadcast %cst_222 : f32 to vector<16x128xf32>
    %334 = arith.addf %332, %333 : vector<16x128xf32>
    %335 = math.rsqrt %334 : vector<16x128xf32>
    %336 = arith.mulf %329, %335 : vector<16x128xf32>
    %c0_223 = arith.constant 0 : index
    %c0_224 = arith.constant 0 : index
    %337 = vector.load %arg27[%c0_223, %c0_224] : memref<1x128xf32, #tpu.memory_space<vmem>>, vector<1x128xf32>
    %338 = vector.broadcast %337 : vector<1x128xf32> to vector<16x128xf32>
    %339 = arith.mulf %336, %338 : vector<16x128xf32>
    %c0_225 = arith.constant 0 : index
    %c0_226 = arith.constant 0 : index
    %340 = vector.load %arg25[%c0_225, %c0_226] : memref<1x128xf32, #tpu.memory_space<vmem>>, vector<1x128xf32>
    %341 = vector.broadcast %340 : vector<1x128xf32> to vector<16x128xf32>
    %342 = arith.addf %339, %341 : vector<16x128xf32>
    %c0_227 = arith.constant 0 : index
    %c0_228 = arith.constant 0 : index
    %343 = vector.load %arg30[%c0_227, %c0_228] : memref<128x128xbf16, #tpu.memory_space<vmem>>, vector<128x128xbf16>
    %344 = arith.truncf %250 : vector<16x128xf32> to vector<16x128xbf16>
    %cst_229 = arith.constant dense<0.000000e+00> : vector<16x128xf32>
    %345 = tpu.matmul %344, %343, %cst_229 {dimension_numbers = #tpu.dot_dimension_numbers<[1], [0], [0], [1], [0, 0, 1, 1], [], []>} : vector<16x128xbf16>, vector<128x128xbf16>, vector<16x128xf32> -> vector<16x128xf32>
    %346 = arith.subf %250, %345 : vector<16x128xf32>
    %347 = arith.mulf %346, %346 : vector<16x128xf32>
    %348 = arith.truncf %347 : vector<16x128xf32> to vector<16x128xbf16>
    %cst_230 = arith.constant dense<0.000000e+00> : vector<16x128xf32>
    %349 = tpu.matmul %348, %343, %cst_230 {dimension_numbers = #tpu.dot_dimension_numbers<[1], [0], [0], [1], [0, 0, 1, 1], [], []>} : vector<16x128xbf16>, vector<128x128xbf16>, vector<16x128xf32> -> vector<16x128xf32>
    %cst_231 = arith.constant 9.99999974E-6 : f32
    %350 = vector.broadcast %cst_231 : f32 to vector<16x128xf32>
    %351 = arith.addf %349, %350 : vector<16x128xf32>
    %352 = math.rsqrt %351 : vector<16x128xf32>
    %353 = arith.mulf %346, %352 : vector<16x128xf32>
    %c0_232 = arith.constant 0 : index
    %c0_233 = arith.constant 0 : index
    %354 = vector.load %arg26[%c0_232, %c0_233] : memref<1x128xf32, #tpu.memory_space<vmem>>, vector<1x128xf32>
    %355 = vector.broadcast %354 : vector<1x128xf32> to vector<16x128xf32>
    %356 = arith.mulf %353, %355 : vector<16x128xf32>
    %c0_234 = arith.constant 0 : index
    %c0_235 = arith.constant 0 : index
    %357 = vector.load %arg24[%c0_234, %c0_235] : memref<1x128xf32, #tpu.memory_space<vmem>>, vector<1x128xf32>
    %358 = vector.broadcast %357 : vector<1x128xf32> to vector<16x128xf32>
    %359 = arith.addf %356, %358 : vector<16x128xf32>
    %360 = vector.extract_strided_slice %325 {offsets = [0, 0], sizes = [16, 128], strides = [1, 1]} : vector<48x128xf32> to vector<16x128xf32>
    %361 = arith.mulf %360, %360 : vector<16x128xf32>
    %362 = vector.extract_strided_slice %325 {offsets = [16, 0], sizes = [16, 128], strides = [1, 1]} : vector<48x128xf32> to vector<16x128xf32>
    %363 = arith.mulf %362, %362 : vector<16x128xf32>
    %364 = arith.addf %361, %363 : vector<16x128xf32>
    %365 = vector.extract_strided_slice %325 {offsets = [32, 0], sizes = [16, 128], strides = [1, 1]} : vector<48x128xf32> to vector<16x128xf32>
    %366 = arith.mulf %365, %365 : vector<16x128xf32>
    %367 = arith.addf %364, %366 : vector<16x128xf32>
    %368 = arith.truncf %367 : vector<16x128xf32> to vector<16x128xbf16>
    %c0_236 = arith.constant 0 : index
    %c0_237 = arith.constant 0 : index
    %369 = vector.load %arg31[%c0_236, %c0_237] : memref<128x128xbf16, #tpu.memory_space<vmem>>, vector<128x128xbf16>
    %cst_238 = arith.constant dense<0.000000e+00> : vector<16x128xf32>
    %370 = tpu.matmul %368, %369, %cst_238 {dimension_numbers = #tpu.dot_dimension_numbers<[1], [0], [0], [1], [0, 0, 1, 1], [], []>} : vector<16x128xbf16>, vector<128x128xbf16>, vector<16x128xf32> -> vector<16x128xf32>
    %cst_239 = arith.constant 0.333333343 : f32
    %371 = vector.broadcast %cst_239 : f32 to vector<16x128xf32>
    %372 = arith.mulf %370, %371 : vector<16x128xf32>
    %cst_240 = arith.constant 9.99999974E-6 : f32
    %373 = vector.broadcast %cst_240 : f32 to vector<16x128xf32>
    %374 = arith.addf %372, %373 : vector<16x128xf32>
    %375 = math.rsqrt %374 : vector<16x128xf32>
    %c0_241 = arith.constant 0 : index
    %c0_242 = arith.constant 0 : index
    %376 = vector.load %arg29[%c0_241, %c0_242] : memref<1x128xf32, #tpu.memory_space<vmem>>, vector<1x128xf32>
    %377 = vector.broadcast %376 : vector<1x128xf32> to vector<16x128xf32>
    %378 = arith.mulf %375, %377 : vector<16x128xf32>
    %379 = tpu.concatenate %378, %378, %378 in 0 : vector<16x128xf32>, vector<16x128xf32>, vector<16x128xf32> -> vector<48x128xf32>
    %380 = arith.mulf %325, %379 : vector<48x128xf32>
    %381 = vector.extract_strided_slice %251 {offsets = [0, 0], sizes = [16, 128], strides = [1, 1]} : vector<48x128xf32> to vector<16x128xf32>
    %382 = arith.mulf %381, %381 : vector<16x128xf32>
    %383 = vector.extract_strided_slice %251 {offsets = [16, 0], sizes = [16, 128], strides = [1, 1]} : vector<48x128xf32> to vector<16x128xf32>
    %384 = arith.mulf %383, %383 : vector<16x128xf32>
    %385 = arith.addf %382, %384 : vector<16x128xf32>
    %386 = vector.extract_strided_slice %251 {offsets = [32, 0], sizes = [16, 128], strides = [1, 1]} : vector<48x128xf32> to vector<16x128xf32>
    %387 = arith.mulf %386, %386 : vector<16x128xf32>
    %388 = arith.addf %385, %387 : vector<16x128xf32>
    %389 = arith.truncf %388 : vector<16x128xf32> to vector<16x128xbf16>
    %c0_243 = arith.constant 0 : index
    %c0_244 = arith.constant 0 : index
    %390 = vector.load %arg31[%c0_243, %c0_244] : memref<128x128xbf16, #tpu.memory_space<vmem>>, vector<128x128xbf16>
    %cst_245 = arith.constant dense<0.000000e+00> : vector<16x128xf32>
    %391 = tpu.matmul %389, %390, %cst_245 {dimension_numbers = #tpu.dot_dimension_numbers<[1], [0], [0], [1], [0, 0, 1, 1], [], []>} : vector<16x128xbf16>, vector<128x128xbf16>, vector<16x128xf32> -> vector<16x128xf32>
    %cst_246 = arith.constant 0.333333343 : f32
    %392 = vector.broadcast %cst_246 : f32 to vector<16x128xf32>
    %393 = arith.mulf %391, %392 : vector<16x128xf32>
    %cst_247 = arith.constant 9.99999974E-6 : f32
    %394 = vector.broadcast %cst_247 : f32 to vector<16x128xf32>
    %395 = arith.addf %393, %394 : vector<16x128xf32>
    %396 = math.rsqrt %395 : vector<16x128xf32>
    %c0_248 = arith.constant 0 : index
    %c0_249 = arith.constant 0 : index
    %397 = vector.load %arg28[%c0_248, %c0_249] : memref<1x128xf32, #tpu.memory_space<vmem>>, vector<1x128xf32>
    %398 = vector.broadcast %397 : vector<1x128xf32> to vector<16x128xf32>
    %399 = arith.mulf %396, %398 : vector<16x128xf32>
    %400 = tpu.concatenate %399, %399, %399 in 0 : vector<16x128xf32>, vector<16x128xf32>, vector<16x128xf32> -> vector<48x128xf32>
    %401 = arith.mulf %251, %400 : vector<48x128xf32>
    %402 = arith.addf %1, %342 : vector<16x128xf32>
    %c0_250 = arith.constant 0 : index
    %c0_251 = arith.constant 0 : index
    %c0_252 = arith.constant 0 : index
    %403 = vector.load %arg63[%c0_250, %c0_251, %c0_252] : memref<1x16x128xf32, #tpu.memory_space<vmem>>, vector<1x16x128xf32>
    %404 = vector.shape_cast %403 : vector<1x16x128xf32> to vector<16x128xf32>
    %405 = vector.shape_cast %402 : vector<16x128xf32> to vector<1x16x128xf32>
    tpu.vector_store %arg63[%c0_250, %c0_251, %c0_252], %405 {strides = array<i32>} : memref<1x16x128xf32, #tpu.memory_space<vmem>>, vector<1x16x128xf32>,
    %406 = arith.addf %5, %380 : vector<48x128xf32>
    %c0_253 = arith.constant 0 : index
    %c0_254 = arith.constant 0 : index
    %c0_255 = arith.constant 0 : index
    %407 = vector.load %arg64[%c0_253, %c0_254, %c0_255] : memref<1x48x128xf32, #tpu.memory_space<vmem>>, vector<1x48x128xf32>
    %408 = vector.shape_cast %407 : vector<1x48x128xf32> to vector<48x128xf32>
    %409 = vector.shape_cast %406 : vector<48x128xf32> to vector<1x48x128xf32>
    tpu.vector_store %arg64[%c0_253, %c0_254, %c0_255], %409 {strides = array<i32>} : memref<1x48x128xf32, #tpu.memory_space<vmem>>, vector<1x48x128xf32>,
    %410 = arith.addf %3, %359 : vector<16x128xf32>
    %c0_256 = arith.constant 0 : index
    %c0_257 = arith.constant 0 : index
    %c0_258 = arith.constant 0 : index
    %411 = vector.load %arg65[%c0_256, %c0_257, %c0_258] : memref<1x16x128xf32, #tpu.memory_space<vmem>>, vector<1x16x128xf32>
    %412 = vector.shape_cast %411 : vector<1x16x128xf32> to vector<16x128xf32>
    %413 = vector.shape_cast %410 : vector<16x128xf32> to vector<1x16x128xf32>
    tpu.vector_store %arg65[%c0_256, %c0_257, %c0_258], %413 {strides = array<i32>} : memref<1x16x128xf32, #tpu.memory_space<vmem>>, vector<1x16x128xf32>,
    %414 = arith.addf %7, %401 : vector<48x128xf32>
    %c0_259 = arith.constant 0 : index
    %c0_260 = arith.constant 0 : index
    %c0_261 = arith.constant 0 : index
    %415 = vector.load %arg66[%c0_259, %c0_260, %c0_261] : memref<1x48x128xf32, #tpu.memory_space<vmem>>, vector<1x48x128xf32>
    %416 = vector.shape_cast %415 : vector<1x48x128xf32> to vector<48x128xf32>
    %417 = vector.shape_cast %414 : vector<48x128xf32> to vector<1x48x128xf32>
    tpu.vector_store %arg66[%c0_259, %c0_260, %c0_261], %417 {strides = array<i32>} : memref<1x48x128xf32, #tpu.memory_space<vmem>>, vector<1x48x128xf32>,
    return
  }
  func.func @transform_0(%arg0: i32) -> (i32, i32, i32) {
    %c0_i32 = arith.constant 0 : i32
    %c0_i32_0 = arith.constant 0 : i32
    %c0_i32_1 = arith.constant 0 : i32
    return %arg0, %c0_i32, %c0_i32_0 : i32, i32, i32
  }
  func.func @transform_1(%arg0: i32) -> (i32, i32, i32) {
    %c0_i32 = arith.constant 0 : i32
    %c0_i32_0 = arith.constant 0 : i32
    %c0_i32_1 = arith.constant 0 : i32
    return %arg0, %c0_i32, %c0_i32_0 : i32, i32, i32
  }
  func.func @transform_2(%arg0: i32) -> (i32, i32, i32) {
    %c0_i32 = arith.constant 0 : i32
    %c0_i32_0 = arith.constant 0 : i32
    %c0_i32_1 = arith.constant 0 : i32
    return %arg0, %c0_i32, %c0_i32_0 : i32, i32, i32
  }
  func.func @transform_3(%arg0: i32) -> (i32, i32, i32) {
    %c0_i32 = arith.constant 0 : i32
    %c0_i32_0 = arith.constant 0 : i32
    %c0_i32_1 = arith.constant 0 : i32
    return %arg0, %c0_i32, %c0_i32_0 : i32, i32, i32
  }
  func.func @transform_4(%arg0: i32) -> (i32, i32, i32) {
    %c0_i32 = arith.constant 0 : i32
    %c0_i32_0 = arith.constant 0 : i32
    %c0_i32_1 = arith.constant 0 : i32
    return %arg0, %c0_i32, %c0_i32_0 : i32, i32, i32
  }
  func.func @transform_5(%arg0: i32) -> (i32, i32, i32) {
    %c0_i32 = arith.constant 0 : i32
    %c0_i32_0 = arith.constant 0 : i32
    %c0_i32_1 = arith.constant 0 : i32
    return %arg0, %c0_i32, %c0_i32_0 : i32, i32, i32
  }
  func.func @transform_6(%arg0: i32) -> (i32, i32, i32) {
    %c0_i32 = arith.constant 0 : i32
    %c0_i32_0 = arith.constant 0 : i32
    %c0_i32_1 = arith.constant 0 : i32
    return %arg0, %c0_i32, %c0_i32_0 : i32, i32, i32
  }
  func.func @transform_7(%arg0: i32) -> (i32, i32, i32) {
    %c0_i32 = arith.constant 0 : i32
    %c0_i32_0 = arith.constant 0 : i32
    %c0_i32_1 = arith.constant 0 : i32
    return %arg0, %c0_i32, %c0_i32_0 : i32, i32, i32
  }
  func.func @transform_8(%arg0: i32) -> (i32, i32, i32) {
    %c0_i32 = arith.constant 0 : i32
    %c0_i32_0 = arith.constant 0 : i32
    %c0_i32_1 = arith.constant 0 : i32
    return %arg0, %c0_i32, %c0_i32_0 : i32, i32, i32
  }
  func.func @transform_9(%arg0: i32) -> (i32, i32, i32) {
    %c0_i32 = arith.constant 0 : i32
    %c0_i32_0 = arith.constant 0 : i32
    %c0_i32_1 = arith.constant 0 : i32
    return %arg0, %c0_i32, %c0_i32_0 : i32, i32, i32
  }
  func.func @transform_10(%arg0: i32) -> (i32, i32) {
    %c0_i32 = arith.constant 0 : i32
    %c0_i32_0 = arith.constant 0 : i32
    %c0_i32_1 = arith.constant 0 : i32
    return %c0_i32, %c0_i32_0 : i32, i32
  }
  func.func @transform_11(%arg0: i32) -> (i32, i32) {
    %c0_i32 = arith.constant 0 : i32
    %c0_i32_0 = arith.constant 0 : i32
    %c0_i32_1 = arith.constant 0 : i32
    return %c0_i32, %c0_i32_0 : i32, i32
  }
  func.func @transform_12(%arg0: i32) -> (i32, i32) {
    %c0_i32 = arith.constant 0 : i32
    %c0_i32_0 = arith.constant 0 : i32
    %c0_i32_1 = arith.constant 0 : i32
    return %c0_i32, %c0_i32_0 : i32, i32
  }
  func.func @transform_13(%arg0: i32) -> (i32, i32) {
    %c0_i32 = arith.constant 0 : i32
    %c0_i32_0 = arith.constant 0 : i32
    %c0_i32_1 = arith.constant 0 : i32
    return %c0_i32, %c0_i32_0 : i32, i32
  }
  func.func @transform_14(%arg0: i32) -> (i32, i32) {
    %c0_i32 = arith.constant 0 : i32
    %c0_i32_0 = arith.constant 0 : i32
    %c0_i32_1 = arith.constant 0 : i32
    return %c0_i32, %c0_i32_0 : i32, i32
  }
  func.func @transform_15(%arg0: i32) -> (i32, i32) {
    %c0_i32 = arith.constant 0 : i32
    %c0_i32_0 = arith.constant 0 : i32
    %c0_i32_1 = arith.constant 0 : i32
    return %c0_i32, %c0_i32_0 : i32, i32
  }
  func.func @transform_16(%arg0: i32) -> (i32, i32) {
    %c0_i32 = arith.constant 0 : i32
    %c0_i32_0 = arith.constant 0 : i32
    %c0_i32_1 = arith.constant 0 : i32
    return %c0_i32, %c0_i32_0 : i32, i32
  }
  func.func @transform_17(%arg0: i32) -> (i32, i32) {
    %c0_i32 = arith.constant 0 : i32
    %c0_i32_0 = arith.constant 0 : i32
    %c0_i32_1 = arith.constant 0 : i32
    return %c0_i32, %c0_i32_0 : i32, i32
  }
  func.func @transform_18(%arg0: i32) -> (i32, i32) {
    %c0_i32 = arith.constant 0 : i32
    %c0_i32_0 = arith.constant 0 : i32
    %c0_i32_1 = arith.constant 0 : i32
    return %c0_i32, %c0_i32_0 : i32, i32
  }
  func.func @transform_19(%arg0: i32) -> (i32, i32) {
    %c0_i32 = arith.constant 0 : i32
    %c0_i32_0 = arith.constant 0 : i32
    %c0_i32_1 = arith.constant 0 : i32
    return %c0_i32, %c0_i32_0 : i32, i32
  }
  func.func @transform_20(%arg0: i32) -> (i32, i32) {
    %c0_i32 = arith.constant 0 : i32
    %c0_i32_0 = arith.constant 0 : i32
    %c0_i32_1 = arith.constant 0 : i32
    return %c0_i32, %c0_i32_0 : i32, i32
  }
  func.func @transform_21(%arg0: i32) -> (i32, i32) {
    %c0_i32 = arith.constant 0 : i32
    %c0_i32_0 = arith.constant 0 : i32
    %c0_i32_1 = arith.constant 0 : i32
    return %c0_i32, %c0_i32_0 : i32, i32
  }
  func.func @transform_22(%arg0: i32) -> (i32, i32) {
    %c0_i32 = arith.constant 0 : i32
    %c0_i32_0 = arith.constant 0 : i32
    %c0_i32_1 = arith.constant 0 : i32
    return %c0_i32, %c0_i32_0 : i32, i32
  }
  func.func @transform_23(%arg0: i32) -> (i32, i32) {
    %c0_i32 = arith.constant 0 : i32
    %c0_i32_0 = arith.constant 0 : i32
    %c0_i32_1 = arith.constant 0 : i32
    return %c0_i32, %c0_i32_0 : i32, i32
  }
  func.func @transform_24(%arg0: i32) -> (i32, i32) {
    %c0_i32 = arith.constant 0 : i32
    %c0_i32_0 = arith.constant 0 : i32
    %c0_i32_1 = arith.constant 0 : i32
    return %c0_i32, %c0_i32_0 : i32, i32
  }
  func.func @transform_25(%arg0: i32) -> (i32, i32) {
    %c0_i32 = arith.constant 0 : i32
    %c0_i32_0 = arith.constant 0 : i32
    %c0_i32_1 = arith.constant 0 : i32
    return %c0_i32, %c0_i32_0 : i32, i32
  }
  func.func @transform_26(%arg0: i32) -> (i32, i32) {
    %c0_i32 = arith.constant 0 : i32
    %c0_i32_0 = arith.constant 0 : i32
    %c0_i32_1 = arith.constant 0 : i32
    return %c0_i32, %c0_i32_0 : i32, i32
  }
  func.func @transform_27(%arg0: i32) -> (i32, i32) {
    %c0_i32 = arith.constant 0 : i32
    %c0_i32_0 = arith.constant 0 : i32
    %c0_i32_1 = arith.constant 0 : i32
    return %c0_i32, %c0_i32_0 : i32, i32
  }
  func.func @transform_28(%arg0: i32) -> (i32, i32) {
    %c0_i32 = arith.constant 0 : i32
    %c0_i32_0 = arith.constant 0 : i32
    %c0_i32_1 = arith.constant 0 : i32
    return %c0_i32, %c0_i32_0 : i32, i32
  }
  func.func @transform_29(%arg0: i32) -> (i32, i32) {
    %c0_i32 = arith.constant 0 : i32
    %c0_i32_0 = arith.constant 0 : i32
    %c0_i32_1 = arith.constant 0 : i32
    return %c0_i32, %c0_i32_0 : i32, i32
  }
  func.func @transform_30(%arg0: i32) -> (i32, i32) {
    %c0_i32 = arith.constant 0 : i32
    %c0_i32_0 = arith.constant 0 : i32
    %c0_i32_1 = arith.constant 0 : i32
    return %c0_i32, %c0_i32_0 : i32, i32
  }
  func.func @transform_31(%arg0: i32) -> (i32, i32) {
    %c0_i32 = arith.constant 0 : i32
    %c0_i32_0 = arith.constant 0 : i32
    %c0_i32_1 = arith.constant 0 : i32
    return %c0_i32, %c0_i32_0 : i32, i32
  }
  func.func @transform_32(%arg0: i32) -> (i32, i32) {
    %c0_i32 = arith.constant 0 : i32
    %c0_i32_0 = arith.constant 0 : i32
    %c0_i32_1 = arith.constant 0 : i32
    return %c0_i32, %c0_i32_0 : i32, i32
  }
  func.func @transform_33(%arg0: i32) -> (i32, i32) {
    %c0_i32 = arith.constant 0 : i32
    %c0_i32_0 = arith.constant 0 : i32
    %c0_i32_1 = arith.constant 0 : i32
    return %c0_i32, %c0_i32_0 : i32, i32
  }
  func.func @transform_34(%arg0: i32) -> (i32, i32) {
    %c0_i32 = arith.constant 0 : i32
    %c0_i32_0 = arith.constant 0 : i32
    %c0_i32_1 = arith.constant 0 : i32
    return %c0_i32, %c0_i32_0 : i32, i32
  }
  func.func @transform_35(%arg0: i32) -> (i32, i32) {
    %c0_i32 = arith.constant 0 : i32
    %c0_i32_0 = arith.constant 0 : i32
    %c0_i32_1 = arith.constant 0 : i32
    return %c0_i32, %c0_i32_0 : i32, i32
  }
  func.func @transform_36(%arg0: i32) -> (i32, i32) {
    %c0_i32 = arith.constant 0 : i32
    %c0_i32_0 = arith.constant 0 : i32
    %c0_i32_1 = arith.constant 0 : i32
    return %c0_i32, %c0_i32_0 : i32, i32
  }
  func.func @transform_37(%arg0: i32) -> (i32, i32) {
    %c0_i32 = arith.constant 0 : i32
    %c0_i32_0 = arith.constant 0 : i32
    %c0_i32_1 = arith.constant 0 : i32
    return %c0_i32, %c0_i32_0 : i32, i32
  }
  func.func @transform_38(%arg0: i32) -> (i32, i32) {
    %c0_i32 = arith.constant 0 : i32
    %c0_i32_0 = arith.constant 0 : i32
    %c0_i32_1 = arith.constant 0 : i32
    return %c0_i32, %c0_i32_0 : i32, i32
  }
  func.func @transform_39(%arg0: i32) -> (i32, i32) {
    %c0_i32 = arith.constant 0 : i32
    %c0_i32_0 = arith.constant 0 : i32
    %c0_i32_1 = arith.constant 0 : i32
    return %c0_i32, %c0_i32_0 : i32, i32
  }
  func.func @transform_40(%arg0: i32) -> (i32, i32) {
    %c0_i32 = arith.constant 0 : i32
    %c0_i32_0 = arith.constant 0 : i32
    %c0_i32_1 = arith.constant 0 : i32
    return %c0_i32, %c0_i32_0 : i32, i32
  }
  func.func @transform_41(%arg0: i32) -> (i32, i32) {
    %c0_i32 = arith.constant 0 : i32
    %c0_i32_0 = arith.constant 0 : i32
    %c0_i32_1 = arith.constant 0 : i32
    return %c0_i32, %c0_i32_0 : i32, i32
  }
  func.func @transform_42(%arg0: i32) -> (i32, i32) {
    %c0_i32 = arith.constant 0 : i32
    %c0_i32_0 = arith.constant 0 : i32
    %c0_i32_1 = arith.constant 0 : i32
    return %c0_i32, %c0_i32_0 : i32, i32
  }
  func.func @transform_43(%arg0: i32) -> (i32, i32) {
    %c0_i32 = arith.constant 0 : i32
    %c0_i32_0 = arith.constant 0 : i32
    %c0_i32_1 = arith.constant 0 : i32
    return %c0_i32, %c0_i32_0 : i32, i32
  }
  func.func @transform_44(%arg0: i32) -> (i32, i32) {
    %c0_i32 = arith.constant 0 : i32
    %c0_i32_0 = arith.constant 0 : i32
    %c0_i32_1 = arith.constant 0 : i32
    return %c0_i32, %c0_i32_0 : i32, i32
  }
  func.func @transform_45(%arg0: i32) -> (i32, i32) {
    %c0_i32 = arith.constant 0 : i32
    %c0_i32_0 = arith.constant 0 : i32
    %c0_i32_1 = arith.constant 0 : i32
    return %c0_i32, %c0_i32_0 : i32, i32
  }
  func.func @transform_46(%arg0: i32) -> (i32, i32) {
    %c0_i32 = arith.constant 0 : i32
    %c0_i32_0 = arith.constant 0 : i32
    %c0_i32_1 = arith.constant 0 : i32
    return %c0_i32, %c0_i32_0 : i32, i32
  }
  func.func @transform_47(%arg0: i32) -> (i32, i32) {
    %c0_i32 = arith.constant 0 : i32
    %c0_i32_0 = arith.constant 0 : i32
    %c0_i32_1 = arith.constant 0 : i32
    return %c0_i32, %c0_i32_0 : i32, i32
  }
  func.func @transform_48(%arg0: i32) -> (i32, i32) {
    %c0_i32 = arith.constant 0 : i32
    %c0_i32_0 = arith.constant 0 : i32
    %c0_i32_1 = arith.constant 0 : i32
    return %c0_i32, %c0_i32_0 : i32, i32
  }
  func.func @transform_49(%arg0: i32) -> (i32, i32) {
    %c0_i32 = arith.constant 0 : i32
    %c0_i32_0 = arith.constant 0 : i32
    %c0_i32_1 = arith.constant 0 : i32
    return %c0_i32, %c0_i32_0 : i32, i32
  }
  func.func @transform_50(%arg0: i32) -> (i32, i32) {
    %c0_i32 = arith.constant 0 : i32
    %c0_i32_0 = arith.constant 0 : i32
    %c0_i32_1 = arith.constant 0 : i32
    return %c0_i32, %c0_i32_0 : i32, i32
  }
  func.func @transform_51(%arg0: i32) -> (i32, i32) {
    %c0_i32 = arith.constant 0 : i32
    %c0_i32_0 = arith.constant 0 : i32
    %c0_i32_1 = arith.constant 0 : i32
    return %c0_i32, %c0_i32_0 : i32, i32
  }
  func.func @transform_52(%arg0: i32) -> (i32, i32) {
    %c0_i32 = arith.constant 0 : i32
    %c0_i32_0 = arith.constant 0 : i32
    %c0_i32_1 = arith.constant 0 : i32
    return %c0_i32, %c0_i32_0 : i32, i32
  }
  func.func @transform_53(%arg0: i32) -> (i32, i32) {
    %c0_i32 = arith.constant 0 : i32
    %c0_i32_0 = arith.constant 0 : i32
    %c0_i32_1 = arith.constant 0 : i32
    return %c0_i32, %c0_i32_0 : i32, i32
  }
  func.func @transform_54(%arg0: i32) -> (i32, i32) {
    %c0_i32 = arith.constant 0 : i32
    %c0_i32_0 = arith.constant 0 : i32
    %c0_i32_1 = arith.constant 0 : i32
    return %c0_i32, %c0_i32_0 : i32, i32
  }
  func.func @transform_55(%arg0: i32) -> (i32, i32) {
    %c0_i32 = arith.constant 0 : i32
    %c0_i32_0 = arith.constant 0 : i32
    %c0_i32_1 = arith.constant 0 : i32
    return %c0_i32, %c0_i32_0 : i32, i32
  }
  func.func @transform_56(%arg0: i32) -> (i32, i32) {
    %c0_i32 = arith.constant 0 : i32
    %c0_i32_0 = arith.constant 0 : i32
    %c0_i32_1 = arith.constant 0 : i32
    return %c0_i32, %c0_i32_0 : i32, i32
  }
  func.func @transform_57(%arg0: i32) -> (i32, i32) {
    %c0_i32 = arith.constant 0 : i32
    %c0_i32_0 = arith.constant 0 : i32
    %c0_i32_1 = arith.constant 0 : i32
    return %c0_i32, %c0_i32_0 : i32, i32
  }
  func.func @transform_58(%arg0: i32) -> (i32, i32) {
    %c0_i32 = arith.constant 0 : i32
    %c0_i32_0 = arith.constant 0 : i32
    %c0_i32_1 = arith.constant 0 : i32
    return %c0_i32, %c0_i32_0 : i32, i32
  }
  func.func @transform_59(%arg0: i32) -> (i32, i32) {
    %c0_i32 = arith.constant 0 : i32
    %c0_i32_0 = arith.constant 0 : i32
    %c0_i32_1 = arith.constant 0 : i32
    return %c0_i32, %c0_i32_0 : i32, i32
  }
  func.func @transform_60(%arg0: i32) -> (i32, i32) {
    %c0_i32 = arith.constant 0 : i32
    %c0_i32_0 = arith.constant 0 : i32
    %c0_i32_1 = arith.constant 0 : i32
    return %c0_i32, %c0_i32_0 : i32, i32
  }
  func.func @transform_61(%arg0: i32) -> (i32, i32) {
    %c0_i32 = arith.constant 0 : i32
    %c0_i32_0 = arith.constant 0 : i32
    %c0_i32_1 = arith.constant 0 : i32
    return %c0_i32, %c0_i32_0 : i32, i32
  }
  func.func @transform_62(%arg0: i32) -> (i32, i32, i32) {
    %c0_i32 = arith.constant 0 : i32
    %c0_i32_0 = arith.constant 0 : i32
    %c0_i32_1 = arith.constant 0 : i32
    return %arg0, %c0_i32, %c0_i32_0 : i32, i32, i32
  }
  func.func @transform_63(%arg0: i32) -> (i32, i32, i32) {
    %c0_i32 = arith.constant 0 : i32
    %c0_i32_0 = arith.constant 0 : i32
    %c0_i32_1 = arith.constant 0 : i32
    return %arg0, %c0_i32, %c0_i32_0 : i32, i32, i32
  }
  func.func @transform_64(%arg0: i32) -> (i32, i32, i32) {
    %c0_i32 = arith.constant 0 : i32
    %c0_i32_0 = arith.constant 0 : i32
    %c0_i32_1 = arith.constant 0 : i32
    return %arg0, %c0_i32, %c0_i32_0 : i32, i32, i32
  }
  func.func @transform_65(%arg0: i32) -> (i32, i32, i32) {
    %c0_i32 = arith.constant 0 : i32
    %c0_i32_0 = arith.constant 0 : i32
    %c0_i32_1 = arith.constant 0 : i32
    return %arg0, %c0_i32, %c0_i32_0 : i32, i32, i32
  }
}

</mosaic_0001>

<llo_original>
// kernel: block_forward.1
$region0: #{block_forward.1}
  #allocation0 [shape = 'u32[]', space=smem, size = 0x4, offset = 0x4, fixed_abs, tag = 'smem constant byte address 0x4 - core index']
  #allocation1 [shape = 'u32[72,128]{1,0:T(1,128)}', space=vmem, size = 0x9000, scoped, tag = 'internal scratch']
  %s0 = inlined_call_operand.smem [shape: u32[66], index: -1, kind: input, shape index: {}]
  %s1 = sld [smem:[%s0]]
  %s2 = scalar_lea.smem %s0, 1
  %s3 = sld [smem:[%s2]]
  %s4 = scalar_lea.smem %s0, 2
  %s5 = sld [smem:[%s4]]
  %s6 = scalar_lea.smem %s0, 3
  %s7 = sld [smem:[%s6]]
  %s8 = scalar_lea.smem %s0, 4
  %s9 = sld [smem:[%s8]]
  %s10 = scalar_lea.smem %s0, 5
  %s11 = sld [smem:[%s10]]
  %s12 = scalar_lea.smem %s0, 6
  %s13 = sld [smem:[%s12]]
  %s14 = scalar_lea.smem %s0, 7
  %s15 = sld [smem:[%s14]]
  %s16 = scalar_lea.smem %s0, 8
  %s17 = sld [smem:[%s16]]
  %s18 = scalar_lea.smem %s0, 9
  %s19 = sld [smem:[%s18]]
  %s20 = scalar_lea.smem %s0, 10
  %s21 = sld [smem:[%s20]]
  %s22 = scalar_lea.smem %s0, 11
  %s23 = sld [smem:[%s22]]
  %s24 = scalar_lea.smem %s0, 12
  %s25 = sld [smem:[%s24]]
  %s26 = scalar_lea.smem %s0, 13
  %s27 = sld [smem:[%s26]]
  %s28 = scalar_lea.smem %s0, 14
  %s29 = sld [smem:[%s28]]
  %s30 = scalar_lea.smem %s0, 15
  %s31 = sld [smem:[%s30]]
  %s32 = scalar_lea.smem %s0, 16
  %s33 = sld [smem:[%s32]]
  %s34 = scalar_lea.smem %s0, 17
  %s35 = sld [smem:[%s34]]
  %s36 = scalar_lea.smem %s0, 18
  %s37 = sld [smem:[%s36]]
  %s38 = scalar_lea.smem %s0, 19
  %s39 = sld [smem:[%s38]]
  %s40 = scalar_lea.smem %s0, 20
  %s41 = sld [smem:[%s40]]
  %s42 = scalar_lea.smem %s0, 21
  %s43 = sld [smem:[%s42]]
  %s44 = scalar_lea.smem %s0, 22
  %s45 = sld [smem:[%s44]]
  %s46 = scalar_lea.smem %s0, 23
  %s47 = sld [smem:[%s46]]
  %s48 = scalar_lea.smem %s0, 24
  %s49 = sld [smem:[%s48]]
  %s50 = scalar_lea.smem %s0, 25
  %s51 = sld [smem:[%s50]]
  %s52 = scalar_lea.smem %s0, 26
  %s53 = sld [smem:[%s52]]
  %s54 = scalar_lea.smem %s0, 27
  %s55 = sld [smem:[%s54]]
  %s56 = scalar_lea.smem %s0, 28
  %s57 = sld [smem:[%s56]]
  %s58 = scalar_lea.smem %s0, 29
  %s59 = sld [smem:[%s58]]
  %s60 = scalar_lea.smem %s0, 30
  %s61 = sld [smem:[%s60]]
  %s62 = scalar_lea.smem %s0, 31
  %s63 = sld [smem:[%s62]]
  %s64 = scalar_lea.smem %s0, 32
  %s65 = sld [smem:[%s64]]
  %s66 = scalar_lea.smem %s0, 33
  %s67 = sld [smem:[%s66]]
  %s68 = scalar_lea.smem %s0, 34
  %s69 = sld [smem:[%s68]]
  %s70 = scalar_lea.smem %s0, 35
  %s71 = sld [smem:[%s70]]
  %s72 = scalar_lea.smem %s0, 36
  %s73 = sld [smem:[%s72]]
  %s74 = scalar_lea.smem %s0, 37
  %s75 = sld [smem:[%s74]]
  %s76 = scalar_lea.smem %s0, 38
  %s77 = sld [smem:[%s76]]
  %s78 = scalar_lea.smem %s0, 39
  %s79 = sld [smem:[%s78]]
  %s80 = scalar_lea.smem %s0, 40
  %s81 = sld [smem:[%s80]]
  %s82 = scalar_lea.smem %s0, 41
  %s83 = sld [smem:[%s82]]
  %s84 = scalar_lea.smem %s0, 42
  %s85 = sld [smem:[%s84]]
  %s86 = scalar_lea.smem %s0, 43
  %s87 = sld [smem:[%s86]]
  %s88 = scalar_lea.smem %s0, 44
  %s89 = sld [smem:[%s88]]
  %s90 = scalar_lea.smem %s0, 45
  %s91 = sld [smem:[%s90]]
  %s92 = scalar_lea.smem %s0, 46
  %s93 = sld [smem:[%s92]]
  %s94 = scalar_lea.smem %s0, 47
  %s95 = sld [smem:[%s94]]
  %s96 = scalar_lea.smem %s0, 48
  %s97 = sld [smem:[%s96]]
  %s98 = scalar_lea.smem %s0, 49
  %s99 = sld [smem:[%s98]]
  %s100 = scalar_lea.smem %s0, 50
  %s101 = sld [smem:[%s100]]
  %s102 = scalar_lea.smem %s0, 51
  %s103 = sld [smem:[%s102]]
  %s104 = scalar_lea.smem %s0, 52
  %s105 = sld [smem:[%s104]]
  %s106 = scalar_lea.smem %s0, 53
  %s107 = sld [smem:[%s106]]
  %s108 = scalar_lea.smem %s0, 54
  %s109 = sld [smem:[%s108]]
  %s110 = scalar_lea.smem %s0, 55
  %s111 = sld [smem:[%s110]]
  %s112 = scalar_lea.smem %s0, 56
  %s113 = sld [smem:[%s112]]
  %s114 = scalar_lea.smem %s0, 57
  %s115 = sld [smem:[%s114]]
  %s116 = scalar_lea.smem %s0, 58
  %s117 = sld [smem:[%s116]]
  %s118 = scalar_lea.smem %s0, 59
  %s119 = sld [smem:[%s118]]
  %s120 = scalar_lea.smem %s0, 60
  %s121 = sld [smem:[%s120]]
  %s122 = scalar_lea.smem %s0, 61
  %s123 = sld [smem:[%s122]]
  %s124 = scalar_lea.smem %s0, 62
  %s125 = sld [smem:[%s124]]
  %s126 = scalar_lea.smem %s0, 63
  %s127 = sld [smem:[%s126]]
  %s128 = scalar_lea.smem %s0, 64
  %s129 = sld [smem:[%s128]]
  %s130 = scalar_lea.smem %s0, 65
  %s131 = sld [smem:[%s130]]
  %132 = xla_tuple %s125, %s127, %s129, %s131
  %s133 = sld [smem:[#allocation0]]
  $region377: #{block_forward.1} parent=0
    _
  %s135 = ssub.s32 1, %s133
  %s136 = scalar_select 0, %s135, %s133
  $region1: #{block_forward.1} parent=0
    #allocation2 [shape = 'u8[32768]{0}', space=vmem, size = 0x8000, scoped, tag = 'input window, operand 43, single buffered']
    #allocation3 [shape = 's32[2]{0}', space=sflag, size = 0x8, scoped, tag = 'scoped memory for block_forward.1']
    #allocation4 [shape = 'u8[32768]{0}', space=vmem, size = 0x8000, scoped, tag = 'input window, operand 44, single buffered']
    #allocation5 [shape = 's32[1]{0}', space=sflag, size = 0x4, scoped, tag = 'scoped memory for block_forward.1']
    #allocation6 [shape = 'u8[32768]{0}', space=vmem, size = 0x8000, scoped, tag = 'input window, operand 45, single buffered']
    #allocation7 [shape = 'u8[32768]{0}', space=vmem, size = 0x8000, scoped, tag = 'input window, operand 46, single buffered']
    #allocation8 [shape = 's32[1]{0}', space=sflag, size = 0x4, scoped, tag = 'scoped memory for block_forward.1']
    #allocation9 [shape = 'u8[32768]{0}', space=vmem, size = 0x8000, scoped, tag = 'input window, operand 48, single buffered']
    #allocation10 [shape = 'u8[32768]{0}', space=vmem, size = 0x8000, scoped, tag = 'input window, operand 49, single buffered']
    #allocation11 [shape = 's32[1]{0}', space=sflag, size = 0x4, scoped, tag = 'scoped memory for block_forward.1']
    #allocation12 [shape = 'u8[32768]{0}', space=vmem, size = 0x8000, scoped, tag = 'input window, operand 50, single buffered']
    #allocation13 [shape = 'u8[32768]{0}', space=vmem, size = 0x8000, scoped, tag = 'input window, operand 51, single buffered']
    #allocation14 [shape = 's32[1]{0}', space=sflag, size = 0x4, scoped, tag = 'scoped memory for block_forward.1']
    #allocation15 [shape = 'u8[32768]{0}', space=vmem, size = 0x8000, scoped, tag = 'input window, operand 52, single buffered']
    #allocation16 [shape = 'u8[32768]{0}', space=vmem, size = 0x8000, scoped, tag = 'input window, operand 53, single buffered']
    #allocation17 [shape = 's32[1]{0}', space=sflag, size = 0x4, scoped, tag = 'scoped memory for block_forward.1']
    #allocation18 [shape = 'u8[32768]{0}', space=vmem, size = 0x8000, scoped, tag = 'input window, operand 54, single buffered']
    #allocation19 [shape = 'u8[32768]{0}', space=vmem, size = 0x8000, scoped, tag = 'input window, operand 55, single buffered']
    #allocation20 [shape = 's32[1]{0}', space=sflag, size = 0x4, scoped, tag = 'scoped memory for block_forward.1']
    #allocation21 [shape = 'u8[32768]{0}', space=vmem, size = 0x8000, scoped, tag = 'input window, operand 56, single buffered']
    #allocation22 [shape = 'u8[32768]{0}', space=vmem, size = 0x8000, scoped, tag = 'input window, operand 57, single buffered']
    #allocation23 [shape = 's32[1]{0}', space=sflag, size = 0x4, scoped, tag = 'scoped memory for block_forward.1']
    #allocation24 [shape = 'u8[32768]{0}', space=vmem, size = 0x8000, scoped, tag = 'input window, operand 58, single buffered']
    #allocation25 [shape = 'u8[32768]{0}', space=vmem, size = 0x8000, scoped, tag = 'input window, operand 59, single buffered']
    #allocation26 [shape = 's32[1]{0}', space=sflag, size = 0x4, scoped, tag = 'scoped memory for block_forward.1']
    #allocation27 [shape = 'u8[32768]{0}', space=vmem, size = 0x8000, scoped, tag = 'input window, operand 60, single buffered']
    #allocation28 [shape = 'u8[32768]{0}', space=vmem, size = 0x8000, scoped, tag = 'input window, operand 61, single buffered']
    #allocation29 [shape = 's32[1]{0}', space=sflag, size = 0x4, scoped, tag = 'scoped memory for block_forward.1']
    %137 = vsyncpa [#allocation3], 0
    %138 = vsyncpa [#allocation5], 0
    %139 = vsyncpa [#allocation8], 0
    %140 = vsyncpa [#allocation11], 0
    %141 = vsyncpa [#allocation14], 0
    %142 = vsyncpa [#allocation17], 0
    %143 = vsyncpa [#allocation20], 0
    %144 = vsyncpa [#allocation23], 0
    %145 = vsyncpa [#allocation26], 0
    %146 = vsyncpa [#allocation29], 0
    loop: start=0, step=1, limit=4
    $region2: #{block_forward.1} parent=1 // loop_pre_header
      _
    $region3: #{block_forward.1} parent=1 // loop_header
      %s148 = sphi 0, %s152
      %p149 = scmp.ge.s32.totalorder %s148, 4
      %s158 = sphi 0, %s160
      %s161 = sphi 0, %s158
      %s162 = sphi 0, %s161
      %s178 = sphi 0, %s162
      %s184 = sphi 0, %s186
      %s187 = sphi 0, %s184
      %s188 = sphi 0, %s187
      %s204 = sphi 0, %s188
      %s210 = sphi 0, %s212
      %s213 = sphi 0, %s210
      %s214 = sphi 0, %s213
      %s230 = sphi 0, %s214
      %s236 = sphi 0, %s238
      %s239 = sphi 0, %s236
      %s240 = sphi 0, %s239
      %s256 = sphi 0, %s240
      %s262 = sphi 0, %s264
      %s265 = sphi 0, %s262
      %s266 = sphi 0, %s265
      %s282 = sphi 0, %s266
      %s288 = sphi 0, %s290
      %s291 = sphi 0, %s288
      %s292 = sphi 0, %s291
      %s308 = sphi 0, %s292
      %s314 = sphi 0, %s316
      %s317 = sphi 0, %s314
      %s318 = sphi 0, %s317
      %s334 = sphi 0, %s318
      %s340 = sphi 0, %s342
      %s343 = sphi 0, %s340
      %s344 = sphi 0, %s343
      %s360 = sphi 0, %s344
      %s366 = sphi 0, %s368
      %s369 = sphi 0, %s366
      %s370 = sphi 0, %s369
      %s386 = sphi 0, %s370
      %s392 = sphi 0, %s394
      %s395 = sphi 0, %s392
      %s396 = sphi 0, %s395
      %s412 = sphi 0, %s396
      %s416 = sphi 0, %s416
      %s418 = sphi 0, %s416
      %s419 = sphi 0, %s418
      %s433 = sphi 0, %s419
      %s437 = sphi 0, %s437
      %s439 = sphi 0, %s437
      %s440 = sphi 0, %s439
      %s454 = sphi 0, %s440
      %s458 = sphi 0, %s458
      %s460 = sphi 0, %s458
      %s461 = sphi 0, %s460
      %s475 = sphi 0, %s461
      %s479 = sphi 0, %s479
      %s481 = sphi 0, %s479
      %s482 = sphi 0, %s481
      %s496 = sphi 0, %s482
      %s500 = sphi 0, %s500
      %s502 = sphi 0, %s500
      %s503 = sphi 0, %s502
      %s517 = sphi 0, %s503
      %s521 = sphi 0, %s521
      %s523 = sphi 0, %s521
      %s524 = sphi 0, %s523
      %s538 = sphi 0, %s524
      %s542 = sphi 0, %s542
      %s544 = sphi 0, %s542
      %s545 = sphi 0, %s544
      %s559 = sphi 0, %s545
      %s563 = sphi 0, %s563
      %s565 = sphi 0, %s563
      %s566 = sphi 0, %s565
      %s580 = sphi 0, %s566
      %s584 = sphi 0, %s584
      %s586 = sphi 0, %s584
      %s587 = sphi 0, %s586
      %s601 = sphi 0, %s587
      %s605 = sphi 0, %s605
      %s607 = sphi 0, %s605
      %s608 = sphi 0, %s607
      %s622 = sphi 0, %s608
      %s626 = sphi 0, %s626
      %s628 = sphi 0, %s626
      %s629 = sphi 0, %s628
      %s643 = sphi 0, %s629
      %s647 = sphi 0, %s647
      %s649 = sphi 0, %s647
      %s650 = sphi 0, %s649
      %s664 = sphi 0, %s650
      %s668 = sphi 0, %s668
      %s670 = sphi 0, %s668
      %s671 = sphi 0, %s670
      %s685 = sphi 0, %s671
      %s689 = sphi 0, %s689
      %s691 = sphi 0, %s689
      %s692 = sphi 0, %s691
      %s706 = sphi 0, %s692
      %s710 = sphi 0, %s710
      %s712 = sphi 0, %s710
      %s713 = sphi 0, %s712
      %s727 = sphi 0, %s713
      %s731 = sphi 0, %s731
      %s733 = sphi 0, %s731
      %s734 = sphi 0, %s733
      %s748 = sphi 0, %s734
      %s752 = sphi 0, %s752
      %s754 = sphi 0, %s752
      %s755 = sphi 0, %s754
      %s769 = sphi 0, %s755
      %s773 = sphi 0, %s773
      %s775 = sphi 0, %s773
      %s776 = sphi 0, %s775
      %s790 = sphi 0, %s776
      %s794 = sphi 0, %s794
      %s796 = sphi 0, %s794
      %s797 = sphi 0, %s796
      %s811 = sphi 0, %s797
      %s815 = sphi 0, %s815
      %s817 = sphi 0, %s815
      %s818 = sphi 0, %s817
      %s832 = sphi 0, %s818
      %s836 = sphi 0, %s836
      %s838 = sphi 0, %s836
      %s839 = sphi 0, %s838
      %s853 = sphi 0, %s839
      %s857 = sphi 0, %s857
      %s859 = sphi 0, %s857
      %s860 = sphi 0, %s859
      %s874 = sphi 0, %s860
      %s878 = sphi 0, %s878
      %s880 = sphi 0, %s878
      %s881 = sphi 0, %s880
      %s895 = sphi 0, %s881
      %s899 = sphi 0, %s899
      %s901 = sphi 0, %s899
      %s902 = sphi 0, %s901
      %s916 = sphi 0, %s902
      %s920 = sphi 0, %s920
      %s922 = sphi 0, %s920
      %s923 = sphi 0, %s922
      %s937 = sphi 0, %s923
      %s941 = sphi 0, %s941
      %s943 = sphi 0, %s941
      %s944 = sphi 0, %s943
      %s958 = sphi 0, %s944
      %s962 = sphi 0, %s962
      %s964 = sphi 0, %s962
      %s965 = sphi 0, %s964
      %s979 = sphi 0, %s965
      %s983 = sphi 0, %s983
      %s985 = sphi 0, %s983
      %s986 = sphi 0, %s985
      %s1000 = sphi 0, %s986
      %s1004 = sphi 0, %s1004
      %s1006 = sphi 0, %s1004
      %s1007 = sphi 0, %s1006
      %s1021 = sphi 0, %s1007
      %s1025 = sphi 0, %s1025
      %s1027 = sphi 0, %s1025
      %s1028 = sphi 0, %s1027
      %s1042 = sphi 0, %s1028
      %s1046 = sphi 0, %s1046
      %s1048 = sphi 0, %s1046
      %s1049 = sphi 0, %s1048
      %s1063 = sphi 0, %s1049
      %s1067 = sphi 0, %s1067
      %s1069 = sphi 0, %s1067
      %s1070 = sphi 0, %s1069
      %s1084 = sphi 0, %s1070
      %s1088 = sphi 0, %s1088
      %s1090 = sphi 0, %s1088
      %s1091 = sphi 0, %s1090
      %s1105 = sphi 0, %s1091
      %s1109 = sphi 0, %s1109
      %s1111 = sphi 0, %s1109
      %s1112 = sphi 0, %s1111
      %s1126 = sphi 0, %s1112
      %s1130 = sphi 0, %s1130
      %s1132 = sphi 0, %s1130
      %s1133 = sphi 0, %s1132
      %s1147 = sphi 0, %s1133
      %s1151 = sphi 0, %s1151
      %s1153 = sphi 0, %s1151
      %s1154 = sphi 0, %s1153
      %s1168 = sphi 0, %s1154
      %s1172 = sphi 0, %s1172
      %s1174 = sphi 0, %s1172
      %s1175 = sphi 0, %s1174
      %s1189 = sphi 0, %s1175
      %s1193 = sphi 0, %s1193
      %s1195 = sphi 0, %s1193
      %s1196 = sphi 0, %s1195
      %s1210 = sphi 0, %s1196
      %s1214 = sphi 0, %s1214
      %s1216 = sphi 0, %s1214
      %s1217 = sphi 0, %s1216
      %s1231 = sphi 0, %s1217
      %s1235 = sphi 0, %s1235
      %s1237 = sphi 0, %s1235
      %s1238 = sphi 0, %s1237
      %s1252 = sphi 0, %s1238
      %s1256 = sphi 0, %s1256
      %s1258 = sphi 0, %s1256
      %s1259 = sphi 0, %s1258
      %s1273 = sphi 0, %s1259
      %s1277 = sphi 0, %s1277
      %s1279 = sphi 0, %s1277
      %s1280 = sphi 0, %s1279
      %s1294 = sphi 0, %s1280
      %s1298 = sphi 0, %s1298
      %s1300 = sphi 0, %s1298
      %s1301 = sphi 0, %s1300
      %s1315 = sphi 0, %s1301
      %s1319 = sphi 0, %s1319
      %s1321 = sphi 0, %s1319
      %s1322 = sphi 0, %s1321
      %s1336 = sphi 0, %s1322
      %s1340 = sphi 0, %s1340
      %s1342 = sphi 0, %s1340
      %s1343 = sphi 0, %s1342
      %s1357 = sphi 0, %s1343
      %s1361 = sphi 0, %s1361
      %s1363 = sphi 0, %s1361
      %s1364 = sphi 0, %s1363
      %s1378 = sphi 0, %s1364
      %s1382 = sphi 0, %s1382
      %s1384 = sphi 0, %s1382
      %s1385 = sphi 0, %s1384
      %s1399 = sphi 0, %s1385
      %s1403 = sphi 0, %s1403
      %s1405 = sphi 0, %s1403
      %s1406 = sphi 0, %s1405
      %s1420 = sphi 0, %s1406
      %s1424 = sphi 0, %s1424
      %s1426 = sphi 0, %s1424
      %s1427 = sphi 0, %s1426
      %s1441 = sphi 0, %s1427
      %s1445 = sphi 0, %s1445
      %s1447 = sphi 0, %s1445
      %s1448 = sphi 0, %s1447
      %s1462 = sphi 0, %s1448
      %s1466 = sphi 0, %s1466
      %s1468 = sphi 0, %s1466
      %s1469 = sphi 0, %s1468
      %s1483 = sphi 0, %s1469
      %s1487 = sphi 0, %s1487
      %s1489 = sphi 0, %s1487
      %s1490 = sphi 0, %s1489
      %s1504 = sphi 0, %s1490
      %s1510 = sphi 0, %s1512
      %s1513 = sphi 0, %s1510
      %s1514 = sphi 0, %s1513
      %s1530 = sphi 0, %s1514
      %s1536 = sphi 0, %s1538
      %s1539 = sphi 0, %s1536
      %s1540 = sphi 0, %s1539
      %s1556 = sphi 0, %s1540
      %s1562 = sphi 0, %s1564
      %s1565 = sphi 0, %s1562
      %s1566 = sphi 0, %s1565
      %s1582 = sphi 0, %s1566
      %s1588 = sphi 0, %s1590
      %s1591 = sphi 0, %s1588
      %s1592 = sphi 0, %s1591
      %s1608 = sphi 0, %s1592
    $region4: #{block_forward.1} parent=1 // loop_header_branch
      %151 = sbr.rel (%p149) target = $region8
    $region5: #{block_forward.1} parent=1 // loop_body
      %s153 = ssub.s32 %s148, 1
      %s154 = ssub.s32 %s148, 2
      %s155 = sadd.s32 %s148, 1
      %s156 = ssub.s32 %s148, %s155
      %p157 = scmp.eq.s32.totalorder %s156, 0
      %s159 = sadd.s32 %s158, 1
      %s160 = scalar_select %p157, %s158, %s159
      %p163 = pneg %p157
      %p164 = scmp.eq.s32.totalorder %s148, 1
      %p165 = por %p163, %p164
      %p166 = scmp.ne.s32.totalorder %s158, %s161
      %p167 = scmp.eq.s32.totalorder %s148, 0
      %p168 = por %p166, %p167
      %p169 = scmp.ne.s32.totalorder %s158, %s161
      %p170 = scmp.eq.s32.totalorder %s153, 1
      %p171 = por %p169, %p170
      %p172 = scmp.ne.s32.totalorder %s161, %s162
      %p173 = scmp.eq.s32.totalorder %s153, 0
      %p174 = por %p172, %p173
      %p175 = scmp.ne.s32.totalorder %s161, %s162
      %p176 = scmp.eq.s32.totalorder %s154, 1
      %p177 = por %p175, %p176
      %p179 = scmp.ne.s32.totalorder %s162, %s178
      %p180 = scmp.eq.s32.totalorder %s154, 0
      %p181 = por %p179, %p180
      %s182 = ssub.s32 %s148, %s155
      %p183 = scmp.eq.s32.totalorder %s182, 0
      %s185 = sadd.s32 %s184, 1
      %s186 = scalar_select %p183, %s184, %s185
      %p189 = pneg %p183
      %p190 = scmp.eq.s32.totalorder %s148, 1
      %p191 = por %p189, %p190
      %p192 = scmp.ne.s32.totalorder %s184, %s187
      %p193 = scmp.eq.s32.totalorder %s148, 0
      %p194 = por %p192, %p193
      %p195 = scmp.ne.s32.totalorder %s184, %s187
      %p196 = scmp.eq.s32.totalorder %s153, 1
      %p197 = por %p195, %p196
      %p198 = scmp.ne.s32.totalorder %s187, %s188
      %p199 = scmp.eq.s32.totalorder %s153, 0
      %p200 = por %p198, %p199
      %p201 = scmp.ne.s32.totalorder %s187, %s188
      %p202 = scmp.eq.s32.totalorder %s154, 1
      %p203 = por %p201, %p202
      %p205 = scmp.ne.s32.totalorder %s188, %s204
      %p206 = scmp.eq.s32.totalorder %s154, 0
      %p207 = por %p205, %p206
      %s208 = ssub.s32 %s148, %s155
      %p209 = scmp.eq.s32.totalorder %s208, 0
      %s211 = sadd.s32 %s210, 1
      %s212 = scalar_select %p209, %s210, %s211
      %p215 = pneg %p209
      %p216 = scmp.eq.s32.totalorder %s148, 1
      %p217 = por %p215, %p216
      %p218 = scmp.ne.s32.totalorder %s210, %s213
      %p219 = scmp.eq.s32.totalorder %s148, 0
      %p220 = por %p218, %p219
      %p221 = scmp.ne.s32.totalorder %s210, %s213
      %p222 = scmp.eq.s32.totalorder %s153, 1
      %p223 = por %p221, %p222
      %p224 = scmp.ne.s32.totalorder %s213, %s214
      %p225 = scmp.eq.s32.totalorder %s153, 0
      %p226 = por %p224, %p225
      %p227 = scmp.ne.s32.totalorder %s213, %s214
      %p228 = scmp.eq.s32.totalorder %s154, 1
      %p229 = por %p227, %p228
      %p231 = scmp.ne.s32.totalorder %s214, %s230
      %p232 = scmp.eq.s32.totalorder %s154, 0
      %p233 = por %p231, %p232
      %s234 = ssub.s32 %s148, %s155
      %p235 = scmp.eq.s32.totalorder %s234, 0
      %s237 = sadd.s32 %s236, 1
      %s238 = scalar_select %p235, %s236, %s237
      %p241 = pneg %p235
      %p242 = scmp.eq.s32.totalorder %s148, 1
      %p243 = por %p241, %p242
      %p244 = scmp.ne.s32.totalorder %s236, %s239
      %p245 = scmp.eq.s32.totalorder %s148, 0
      %p246 = por %p244, %p245
      %p247 = scmp.ne.s32.totalorder %s236, %s239
      %p248 = scmp.eq.s32.totalorder %s153, 1
      %p249 = por %p247, %p248
      %p250 = scmp.ne.s32.totalorder %s239, %s240
      %p251 = scmp.eq.s32.totalorder %s153, 0
      %p252 = por %p250, %p251
      %p253 = scmp.ne.s32.totalorder %s239, %s240
      %p254 = scmp.eq.s32.totalorder %s154, 1
      %p255 = por %p253, %p254
      %p257 = scmp.ne.s32.totalorder %s240, %s256
      %p258 = scmp.eq.s32.totalorder %s154, 0
      %p259 = por %p257, %p258
      %s260 = ssub.s32 %s148, %s155
      %p261 = scmp.eq.s32.totalorder %s260, 0
      %s263 = sadd.s32 %s262, 1
      %s264 = scalar_select %p261, %s262, %s263
      %p267 = pneg %p261
      %p268 = scmp.eq.s32.totalorder %s148, 1
      %p269 = por %p267, %p268
      %p270 = scmp.ne.s32.totalorder %s262, %s265
      %p271 = scmp.eq.s32.totalorder %s148, 0
      %p272 = por %p270, %p271
      %p273 = scmp.ne.s32.totalorder %s262, %s265
      %p274 = scmp.eq.s32.totalorder %s153, 1
      %p275 = por %p273, %p274
      %p276 = scmp.ne.s32.totalorder %s265, %s266
      %p277 = scmp.eq.s32.totalorder %s153, 0
      %p278 = por %p276, %p277
      %p279 = scmp.ne.s32.totalorder %s265, %s266
      %p280 = scmp.eq.s32.totalorder %s154, 1
      %p281 = por %p279, %p280
      %p283 = scmp.ne.s32.totalorder %s266, %s282
      %p284 = scmp.eq.s32.totalorder %s154, 0
      %p285 = por %p283, %p284
      %s286 = ssub.s32 %s148, %s155
      %p287 = scmp.eq.s32.totalorder %s286, 0
      %s289 = sadd.s32 %s288, 1
      %s290 = scalar_select %p287, %s288, %s289
      %p293 = pneg %p287
      %p294 = scmp.eq.s32.totalorder %s148, 1
      %p295 = por %p293, %p294
      %p296 = scmp.ne.s32.totalorder %s288, %s291
      %p297 = scmp.eq.s32.totalorder %s148, 0
      %p298 = por %p296, %p297
      %p299 = scmp.ne.s32.totalorder %s288, %s291
      %p300 = scmp.eq.s32.totalorder %s153, 1
      %p301 = por %p299, %p300
      %p302 = scmp.ne.s32.totalorder %s291, %s292
      %p303 = scmp.eq.s32.totalorder %s153, 0
      %p304 = por %p302, %p303
      %p305 = scmp.ne.s32.totalorder %s291, %s292
      %p306 = scmp.eq.s32.totalorder %s154, 1
      %p307 = por %p305, %p306
      %p309 = scmp.ne.s32.totalorder %s292, %s308
      %p310 = scmp.eq.s32.totalorder %s154, 0
      %p311 = por %p309, %p310
      %s312 = ssub.s32 %s148, %s155
      %p313 = scmp.eq.s32.totalorder %s312, 0
      %s315 = sadd.s32 %s314, 1
      %s316 = scalar_select %p313, %s314, %s315
      %p319 = pneg %p313
      %p320 = scmp.eq.s32.totalorder %s148, 1
      %p321 = por %p319, %p320
      %p322 = scmp.ne.s32.totalorder %s314, %s317
      %p323 = scmp.eq.s32.totalorder %s148, 0
      %p324 = por %p322, %p323
      %p325 = scmp.ne.s32.totalorder %s314, %s317
      %p326 = scmp.eq.s32.totalorder %s153, 1
      %p327 = por %p325, %p326
      %p328 = scmp.ne.s32.totalorder %s317, %s318
      %p329 = scmp.eq.s32.totalorder %s153, 0
      %p330 = por %p328, %p329
      %p331 = scmp.ne.s32.totalorder %s317, %s318
      %p332 = scmp.eq.s32.totalorder %s154, 1
      %p333 = por %p331, %p332
      %p335 = scmp.ne.s32.totalorder %s318, %s334
      %p336 = scmp.eq.s32.totalorder %s154, 0
      %p337 = por %p335, %p336
      %s338 = ssub.s32 %s148, %s155
      %p339 = scmp.eq.s32.totalorder %s338, 0
      %s341 = sadd.s32 %s340, 1
      %s342 = scalar_select %p339, %s340, %s341
      %p345 = pneg %p339
      %p346 = scmp.eq.s32.totalorder %s148, 1
      %p347 = por %p345, %p346
      %p348 = scmp.ne.s32.totalorder %s340, %s343
      %p349 = scmp.eq.s32.totalorder %s148, 0
      %p350 = por %p348, %p349
      %p351 = scmp.ne.s32.totalorder %s340, %s343
      %p352 = scmp.eq.s32.totalorder %s153, 1
      %p353 = por %p351, %p352
      %p354 = scmp.ne.s32.totalorder %s343, %s344
      %p355 = scmp.eq.s32.totalorder %s153, 0
      %p356 = por %p354, %p355
      %p357 = scmp.ne.s32.totalorder %s343, %s344
      %p358 = scmp.eq.s32.totalorder %s154, 1
      %p359 = por %p357, %p358
      %p361 = scmp.ne.s32.totalorder %s344, %s360
      %p362 = scmp.eq.s32.totalorder %s154, 0
      %p363 = por %p361, %p362
      %s364 = ssub.s32 %s148, %s155
      %p365 = scmp.eq.s32.totalorder %s364, 0
      %s367 = sadd.s32 %s366, 1
      %s368 = scalar_select %p365, %s366, %s367
      %p371 = pneg %p365
      %p372 = scmp.eq.s32.totalorder %s148, 1
      %p373 = por %p371, %p372
      %p374 = scmp.ne.s32.totalorder %s366, %s369
      %p375 = scmp.eq.s32.totalorder %s148, 0
      %p376 = por %p374, %p375
      %p377 = scmp.ne.s32.totalorder %s366, %s369
      %p378 = scmp.eq.s32.totalorder %s153, 1
      %p379 = por %p377, %p378
      %p380 = scmp.ne.s32.totalorder %s369, %s370
      %p381 = scmp.eq.s32.totalorder %s153, 0
      %p382 = por %p380, %p381
      %p383 = scmp.ne.s32.totalorder %s369, %s370
      %p384 = scmp.eq.s32.totalorder %s154, 1
      %p385 = por %p383, %p384
      %p387 = scmp.ne.s32.totalorder %s370, %s386
      %p388 = scmp.eq.s32.totalorder %s154, 0
      %p389 = por %p387, %p388
      %s390 = ssub.s32 %s148, %s155
      %p391 = scmp.eq.s32.totalorder %s390, 0
      %s393 = sadd.s32 %s392, 1
      %s394 = scalar_select %p391, %s392, %s393
      %p397 = pneg %p391
      %p398 = scmp.eq.s32.totalorder %s148, 1
      %p399 = por %p397, %p398
      %p400 = scmp.ne.s32.totalorder %s392, %s395
      %p401 = scmp.eq.s32.totalorder %s148, 0
      %p402 = por %p400, %p401
      %p403 = scmp.ne.s32.totalorder %s392, %s395
      %p404 = scmp.eq.s32.totalorder %s153, 1
      %p405 = por %p403, %p404
      %p406 = scmp.ne.s32.totalorder %s395, %s396
      %p407 = scmp.eq.s32.totalorder %s153, 0
      %p408 = por %p406, %p407
      %p409 = scmp.ne.s32.totalorder %s395, %s396
      %p410 = scmp.eq.s32.totalorder %s154, 1
      %p411 = por %p409, %p410
      %p413 = scmp.ne.s32.totalorder %s396, %s412
      %p414 = scmp.eq.s32.totalorder %s154, 0
      %p415 = por %p413, %p414
      %s417 = sadd.s32 %s416, 1
      %p420 = scmp.eq.s32.totalorder %s148, 1
      %p421 = scmp.ne.s32.totalorder %s416, %s418
      %p422 = scmp.eq.s32.totalorder %s148, 0
      %p423 = por %p421, %p422
      %p424 = scmp.ne.s32.totalorder %s416, %s418
      %p425 = scmp.eq.s32.totalorder %s153, 1
      %p426 = por %p424, %p425
      %p427 = scmp.ne.s32.totalorder %s418, %s419
      %p428 = scmp.eq.s32.totalorder %s153, 0
      %p429 = por %p427, %p428
      %p430 = scmp.ne.s32.totalorder %s418, %s419
      %p431 = scmp.eq.s32.totalorder %s154, 1
      %p432 = por %p430, %p431
      %p434 = scmp.ne.s32.totalorder %s419, %s433
      %p435 = scmp.eq.s32.totalorder %s154, 0
      %p436 = por %p434, %p435
      %s438 = sadd.s32 %s437, 1
      %p441 = scmp.eq.s32.totalorder %s148, 1
      %p442 = scmp.ne.s32.totalorder %s437, %s439
      %p443 = scmp.eq.s32.totalorder %s148, 0
      %p444 = por %p442, %p443
      %p445 = scmp.ne.s32.totalorder %s437, %s439
      %p446 = scmp.eq.s32.totalorder %s153, 1
      %p447 = por %p445, %p446
      %p448 = scmp.ne.s32.totalorder %s439, %s440
      %p449 = scmp.eq.s32.totalorder %s153, 0
      %p450 = por %p448, %p449
      %p451 = scmp.ne.s32.totalorder %s439, %s440
      %p452 = scmp.eq.s32.totalorder %s154, 1
      %p453 = por %p451, %p452
      %p455 = scmp.ne.s32.totalorder %s440, %s454
      %p456 = scmp.eq.s32.totalorder %s154, 0
      %p457 = por %p455, %p456
      %s459 = sadd.s32 %s458, 1
      %p462 = scmp.eq.s32.totalorder %s148, 1
      %p463 = scmp.ne.s32.totalorder %s458, %s460
      %p464 = scmp.eq.s32.totalorder %s148, 0
      %p465 = por %p463, %p464
      %p466 = scmp.ne.s32.totalorder %s458, %s460
      %p467 = scmp.eq.s32.totalorder %s153, 1
      %p468 = por %p466, %p467
      %p469 = scmp.ne.s32.totalorder %s460, %s461
      %p470 = scmp.eq.s32.totalorder %s153, 0
      %p471 = por %p469, %p470
      %p472 = scmp.ne.s32.totalorder %s460, %s461
      %p473 = scmp.eq.s32.totalorder %s154, 1
      %p474 = por %p472, %p473
      %p476 = scmp.ne.s32.totalorder %s461, %s475
      %p477 = scmp.eq.s32.totalorder %s154, 0
      %p478 = por %p476, %p477
      %s480 = sadd.s32 %s479, 1
      %p483 = scmp.eq.s32.totalorder %s148, 1
      %p484 = scmp.ne.s32.totalorder %s479, %s481
      %p485 = scmp.eq.s32.totalorder %s148, 0
      %p486 = por %p484, %p485
      %p487 = scmp.ne.s32.totalorder %s479, %s481
      %p488 = scmp.eq.s32.totalorder %s153, 1
      %p489 = por %p487, %p488
      %p490 = scmp.ne.s32.totalorder %s481, %s482
      %p491 = scmp.eq.s32.totalorder %s153, 0
      %p492 = por %p490, %p491
      %p493 = scmp.ne.s32.totalorder %s481, %s482
      %p494 = scmp.eq.s32.totalorder %s154, 1
      %p495 = por %p493, %p494
      %p497 = scmp.ne.s32.totalorder %s482, %s496
      %p498 = scmp.eq.s32.totalorder %s154, 0
      %p499 = por %p497, %p498
      %s501 = sadd.s32 %s500, 1
      %p504 = scmp.eq.s32.totalorder %s148, 1
      %p505 = scmp.ne.s32.totalorder %s500, %s502
      %p506 = scmp.eq.s32.totalorder %s148, 0
      %p507 = por %p505, %p506
      %p508 = scmp.ne.s32.totalorder %s500, %s502
      %p509 = scmp.eq.s32.totalorder %s153, 1
      %p510 = por %p508, %p509
      %p511 = scmp.ne.s32.totalorder %s502, %s503
      %p512 = scmp.eq.s32.totalorder %s153, 0
      %p513 = por %p511, %p512
      %p514 = scmp.ne.s32.totalorder %s502, %s503
      %p515 = scmp.eq.s32.totalorder %s154, 1
      %p516 = por %p514, %p515
      %p518 = scmp.ne.s32.totalorder %s503, %s517
      %p519 = scmp.eq.s32.totalorder %s154, 0
      %p520 = por %p518, %p519
      %s522 = sadd.s32 %s521, 1
      %p525 = scmp.eq.s32.totalorder %s148, 1
      %p526 = scmp.ne.s32.totalorder %s521, %s523
      %p527 = scmp.eq.s32.totalorder %s148, 0
      %p528 = por %p526, %p527
      %p529 = scmp.ne.s32.totalorder %s521, %s523
      %p530 = scmp.eq.s32.totalorder %s153, 1
      %p531 = por %p529, %p530
      %p532 = scmp.ne.s32.totalorder %s523, %s524
      %p533 = scmp.eq.s32.totalorder %s153, 0
      %p534 = por %p532, %p533
      %p535 = scmp.ne.s32.totalorder %s523, %s524
      %p536 = scmp.eq.s32.totalorder %s154, 1
      %p537 = por %p535, %p536
      %p539 = scmp.ne.s32.totalorder %s524, %s538
      %p540 = scmp.eq.s32.totalorder %s154, 0
      %p541 = por %p539, %p540
      %s543 = sadd.s32 %s542, 1
      %p546 = scmp.eq.s32.totalorder %s148, 1
      %p547 = scmp.ne.s32.totalorder %s542, %s544
      %p548 = scmp.eq.s32.totalorder %s148, 0
      %p549 = por %p547, %p548
      %p550 = scmp.ne.s32.totalorder %s542, %s544
      %p551 = scmp.eq.s32.totalorder %s153, 1
      %p552 = por %p550, %p551
      %p553 = scmp.ne.s32.totalorder %s544, %s545
      %p554 = scmp.eq.s32.totalorder %s153, 0
      %p555 = por %p553, %p554
      %p556 = scmp.ne.s32.totalorder %s544, %s545
      %p557 = scmp.eq.s32.totalorder %s154, 1
      %p558 = por %p556, %p557
      %p560 = scmp.ne.s32.totalorder %s545, %s559
      %p561 = scmp.eq.s32.totalorder %s154, 0
      %p562 = por %p560, %p561
      %s564 = sadd.s32 %s563, 1
      %p567 = scmp.eq.s32.totalorder %s148, 1
      %p568 = scmp.ne.s32.totalorder %s563, %s565
      %p569 = scmp.eq.s32.totalorder %s148, 0
      %p570 = por %p568, %p569
      %p571 = scmp.ne.s32.totalorder %s563, %s565
      %p572 = scmp.eq.s32.totalorder %s153, 1
      %p573 = por %p571, %p572
      %p574 = scmp.ne.s32.totalorder %s565, %s566
      %p575 = scmp.eq.s32.totalorder %s153, 0
      %p576 = por %p574, %p575
      %p577 = scmp.ne.s32.totalorder %s565, %s566
      %p578 = scmp.eq.s32.totalorder %s154, 1
      %p579 = por %p577, %p578
      %p581 = scmp.ne.s32.totalorder %s566, %s580
      %p582 = scmp.eq.s32.totalorder %s154, 0
      %p583 = por %p581, %p582
      %s585 = sadd.s32 %s584, 1
      %p588 = scmp.eq.s32.totalorder %s148, 1
      %p589 = scmp.ne.s32.totalorder %s584, %s586
      %p590 = scmp.eq.s32.totalorder %s148, 0
      %p591 = por %p589, %p590
      %p592 = scmp.ne.s32.totalorder %s584, %s586
      %p593 = scmp.eq.s32.totalorder %s153, 1
      %p594 = por %p592, %p593
      %p595 = scmp.ne.s32.totalorder %s586, %s587
      %p596 = scmp.eq.s32.totalorder %s153, 0
      %p597 = por %p595, %p596
      %p598 = scmp.ne.s32.totalorder %s586, %s587
      %p599 = scmp.eq.s32.totalorder %s154, 1
      %p600 = por %p598, %p599
      %p602 = scmp.ne.s32.totalorder %s587, %s601
      %p603 = scmp.eq.s32.totalorder %s154, 0
      %p604 = por %p602, %p603
      %s606 = sadd.s32 %s605, 1
      %p609 = scmp.eq.s32.totalorder %s148, 1
      %p610 = scmp.ne.s32.totalorder %s605, %s607
      %p611 = scmp.eq.s32.totalorder %s148, 0
      %p612 = por %p610, %p611
      %p613 = scmp.ne.s32.totalorder %s605, %s607
      %p614 = scmp.eq.s32.totalorder %s153, 1
      %p615 = por %p613, %p614
      %p616 = scmp.ne.s32.totalorder %s607, %s608
      %p617 = scmp.eq.s32.totalorder %s153, 0
      %p618 = por %p616, %p617
      %p619 = scmp.ne.s32.totalorder %s607, %s608
      %p620 = scmp.eq.s32.totalorder %s154, 1
      %p621 = por %p619, %p620
      %p623 = scmp.ne.s32.totalorder %s608, %s622
      %p624 = scmp.eq.s32.totalorder %s154, 0
      %p625 = por %p623, %p624
      %s627 = sadd.s32 %s626, 1
      %p630 = scmp.eq.s32.totalorder %s148, 1
      %p631 = scmp.ne.s32.totalorder %s626, %s628
      %p632 = scmp.eq.s32.totalorder %s148, 0
      %p633 = por %p631, %p632
      %p634 = scmp.ne.s32.totalorder %s626, %s628
      %p635 = scmp.eq.s32.totalorder %s153, 1
      %p636 = por %p634, %p635
      %p637 = scmp.ne.s32.totalorder %s628, %s629
      %p638 = scmp.eq.s32.totalorder %s153, 0
      %p639 = por %p637, %p638
      %p640 = scmp.ne.s32.totalorder %s628, %s629
      %p641 = scmp.eq.s32.totalorder %s154, 1
      %p642 = por %p640, %p641
      %p644 = scmp.ne.s32.totalorder %s629, %s643
      %p645 = scmp.eq.s32.totalorder %s154, 0
      %p646 = por %p644, %p645
      %s648 = sadd.s32 %s647, 1
      %p651 = scmp.eq.s32.totalorder %s148, 1
      %p652 = scmp.ne.s32.totalorder %s647, %s649
      %p653 = scmp.eq.s32.totalorder %s148, 0
      %p654 = por %p652, %p653
      %p655 = scmp.ne.s32.totalorder %s647, %s649
      %p656 = scmp.eq.s32.totalorder %s153, 1
      %p657 = por %p655, %p656
      %p658 = scmp.ne.s32.totalorder %s649, %s650
      %p659 = scmp.eq.s32.totalorder %s153, 0
      %p660 = por %p658, %p659
      %p661 = scmp.ne.s32.totalorder %s649, %s650
      %p662 = scmp.eq.s32.totalorder %s154, 1
      %p663 = por %p661, %p662
      %p665 = scmp.ne.s32.totalorder %s650, %s664
      %p666 = scmp.eq.s32.totalorder %s154, 0
      %p667 = por %p665, %p666
      %s669 = sadd.s32 %s668, 1
      %p672 = scmp.eq.s32.totalorder %s148, 1
      %p673 = scmp.ne.s32.totalorder %s668, %s670
      %p674 = scmp.eq.s32.totalorder %s148, 0
      %p675 = por %p673, %p674
      %p676 = scmp.ne.s32.totalorder %s668, %s670
      %p677 = scmp.eq.s32.totalorder %s153, 1
      %p678 = por %p676, %p677
      %p679 = scmp.ne.s32.totalorder %s670, %s671
      %p680 = scmp.eq.s32.totalorder %s153, 0
      %p681 = por %p679, %p680
      %p682 = scmp.ne.s32.totalorder %s670, %s671
      %p683 = scmp.eq.s32.totalorder %s154, 1
      %p684 = por %p682, %p683
      %p686 = scmp.ne.s32.totalorder %s671, %s685
      %p687 = scmp.eq.s32.totalorder %s154, 0
      %p688 = por %p686, %p687
      %s690 = sadd.s32 %s689, 1
      %p693 = scmp.eq.s32.totalorder %s148, 1
      %p694 = scmp.ne.s32.totalorder %s689, %s691
      %p695 = scmp.eq.s32.totalorder %s148, 0
      %p696 = por %p694, %p695
      %p697 = scmp.ne.s32.totalorder %s689, %s691
      %p698 = scmp.eq.s32.totalorder %s153, 1
      %p699 = por %p697, %p698
      %p700 = scmp.ne.s32.totalorder %s691, %s692
      %p701 = scmp.eq.s32.totalorder %s153, 0
      %p702 = por %p700, %p701
      %p703 = scmp.ne.s32.totalorder %s691, %s692
      %p704 = scmp.eq.s32.totalorder %s154, 1
      %p705 = por %p703, %p704
      %p707 = scmp.ne.s32.totalorder %s692, %s706
      %p708 = scmp.eq.s32.totalorder %s154, 0
      %p709 = por %p707, %p708
      %s711 = sadd.s32 %s710, 1
      %p714 = scmp.eq.s32.totalorder %s148, 1
      %p715 = scmp.ne.s32.totalorder %s710, %s712
      %p716 = scmp.eq.s32.totalorder %s148, 0
      %p717 = por %p715, %p716
      %p718 = scmp.ne.s32.totalorder %s710, %s712
      %p719 = scmp.eq.s32.totalorder %s153, 1
      %p720 = por %p718, %p719
      %p721 = scmp.ne.s32.totalorder %s712, %s713
      %p722 = scmp.eq.s32.totalorder %s153, 0
      %p723 = por %p721, %p722
      %p724 = scmp.ne.s32.totalorder %s712, %s713
      %p725 = scmp.eq.s32.totalorder %s154, 1
      %p726 = por %p724, %p725
      %p728 = scmp.ne.s32.totalorder %s713, %s727
      %p729 = scmp.eq.s32.totalorder %s154, 0
      %p730 = por %p728, %p729
      %s732 = sadd.s32 %s731, 1
      %p735 = scmp.eq.s32.totalorder %s148, 1
      %p736 = scmp.ne.s32.totalorder %s731, %s733
      %p737 = scmp.eq.s32.totalorder %s148, 0
      %p738 = por %p736, %p737
      %p739 = scmp.ne.s32.totalorder %s731, %s733
      %p740 = scmp.eq.s32.totalorder %s153, 1
      %p741 = por %p739, %p740
      %p742 = scmp.ne.s32.totalorder %s733, %s734
      %p743 = scmp.eq.s32.totalorder %s153, 0
      %p744 = por %p742, %p743
      %p745 = scmp.ne.s32.totalorder %s733, %s734
      %p746 = scmp.eq.s32.totalorder %s154, 1
      %p747 = por %p745, %p746
      %p749 = scmp.ne.s32.totalorder %s734, %s748
      %p750 = scmp.eq.s32.totalorder %s154, 0
      %p751 = por %p749, %p750
      %s753 = sadd.s32 %s752, 1
      %p756 = scmp.eq.s32.totalorder %s148, 1
      %p757 = scmp.ne.s32.totalorder %s752, %s754
      %p758 = scmp.eq.s32.totalorder %s148, 0
      %p759 = por %p757, %p758
      %p760 = scmp.ne.s32.totalorder %s752, %s754
      %p761 = scmp.eq.s32.totalorder %s153, 1
      %p762 = por %p760, %p761
      %p763 = scmp.ne.s32.totalorder %s754, %s755
      %p764 = scmp.eq.s32.totalorder %s153, 0
      %p765 = por %p763, %p764
      %p766 = scmp.ne.s32.totalorder %s754, %s755
      %p767 = scmp.eq.s32.totalorder %s154, 1
      %p768 = por %p766, %p767
      %p770 = scmp.ne.s32.totalorder %s755, %s769
      %p771 = scmp.eq.s32.totalorder %s154, 0
      %p772 = por %p770, %p771
      %s774 = sadd.s32 %s773, 1
      %p777 = scmp.eq.s32.totalorder %s148, 1
      %p778 = scmp.ne.s32.totalorder %s773, %s775
      %p779 = scmp.eq.s32.totalorder %s148, 0
      %p780 = por %p778, %p779
      %p781 = scmp.ne.s32.totalorder %s773, %s775
      %p782 = scmp.eq.s32.totalorder %s153, 1
      %p783 = por %p781, %p782
      %p784 = scmp.ne.s32.totalorder %s775, %s776
      %p785 = scmp.eq.s32.totalorder %s153, 0
      %p786 = por %p784, %p785
      %p787 = scmp.ne.s32.totalorder %s775, %s776
      %p788 = scmp.eq.s32.totalorder %s154, 1
      %p789 = por %p787, %p788
      %p791 = scmp.ne.s32.totalorder %s776, %s790
      %p792 = scmp.eq.s32.totalorder %s154, 0
      %p793 = por %p791, %p792
      %s795 = sadd.s32 %s794, 1
      %p798 = scmp.eq.s32.totalorder %s148, 1
      %p799 = scmp.ne.s32.totalorder %s794, %s796
      %p800 = scmp.eq.s32.totalorder %s148, 0
      %p801 = por %p799, %p800
      %p802 = scmp.ne.s32.totalorder %s794, %s796
      %p803 = scmp.eq.s32.totalorder %s153, 1
      %p804 = por %p802, %p803
      %p805 = scmp.ne.s32.totalorder %s796, %s797
      %p806 = scmp.eq.s32.totalorder %s153, 0
      %p807 = por %p805, %p806
      %p808 = scmp.ne.s32.totalorder %s796, %s797
      %p809 = scmp.eq.s32.totalorder %s154, 1
      %p810 = por %p808, %p809
      %p812 = scmp.ne.s32.totalorder %s797, %s811
      %p813 = scmp.eq.s32.totalorder %s154, 0
      %p814 = por %p812, %p813
      %s816 = sadd.s32 %s815, 1
      %p819 = scmp.eq.s32.totalorder %s148, 1
      %p820 = scmp.ne.s32.totalorder %s815, %s817
      %p821 = scmp.eq.s32.totalorder %s148, 0
      %p822 = por %p820, %p821
      %p823 = scmp.ne.s32.totalorder %s815, %s817
      %p824 = scmp.eq.s32.totalorder %s153, 1
      %p825 = por %p823, %p824
      %p826 = scmp.ne.s32.totalorder %s817, %s818
      %p827 = scmp.eq.s32.totalorder %s153, 0
      %p828 = por %p826, %p827
      %p829 = scmp.ne.s32.totalorder %s817, %s818
      %p830 = scmp.eq.s32.totalorder %s154, 1
      %p831 = por %p829, %p830
      %p833 = scmp.ne.s32.totalorder %s818, %s832
      %p834 = scmp.eq.s32.totalorder %s154, 0
      %p835 = por %p833, %p834
      %s837 = sadd.s32 %s836, 1
      %p840 = scmp.eq.s32.totalorder %s148, 1
      %p841 = scmp.ne.s32.totalorder %s836, %s838
      %p842 = scmp.eq.s32.totalorder %s148, 0
      %p843 = por %p841, %p842
      %p844 = scmp.ne.s32.totalorder %s836, %s838
      %p845 = scmp.eq.s32.totalorder %s153, 1
      %p846 = por %p844, %p845
      %p847 = scmp.ne.s32.totalorder %s838, %s839
      %p848 = scmp.eq.s32.totalorder %s153, 0
      %p849 = por %p847, %p848
      %p850 = scmp.ne.s32.totalorder %s838, %s839
      %p851 = scmp.eq.s32.totalorder %s154, 1
      %p852 = por %p850, %p851
      %p854 = scmp.ne.s32.totalorder %s839, %s853
      %p855 = scmp.eq.s32.totalorder %s154, 0
      %p856 = por %p854, %p855
      %s858 = sadd.s32 %s857, 1
      %p861 = scmp.eq.s32.totalorder %s148, 1
      %p862 = scmp.ne.s32.totalorder %s857, %s859
      %p863 = scmp.eq.s32.totalorder %s148, 0
      %p864 = por %p862, %p863
      %p865 = scmp.ne.s32.totalorder %s857, %s859
      %p866 = scmp.eq.s32.totalorder %s153, 1
      %p867 = por %p865, %p866
      %p868 = scmp.ne.s32.totalorder %s859, %s860
      %p869 = scmp.eq.s32.totalorder %s153, 0
      %p870 = por %p868, %p869
      %p871 = scmp.ne.s32.totalorder %s859, %s860
      %p872 = scmp.eq.s32.totalorder %s154, 1
      %p873 = por %p871, %p872
      %p875 = scmp.ne.s32.totalorder %s860, %s874
      %p876 = scmp.eq.s32.totalorder %s154, 0
      %p877 = por %p875, %p876
      %s879 = sadd.s32 %s878, 1
      %p882 = scmp.eq.s32.totalorder %s148, 1
      %p883 = scmp.ne.s32.totalorder %s878, %s880
      %p884 = scmp.eq.s32.totalorder %s148, 0
      %p885 = por %p883, %p884
      %p886 = scmp.ne.s32.totalorder %s878, %s880
      %p887 = scmp.eq.s32.totalorder %s153, 1
      %p888 = por %p886, %p887
      %p889 = scmp.ne.s32.totalorder %s880, %s881
      %p890 = scmp.eq.s32.totalorder %s153, 0
      %p891 = por %p889, %p890
      %p892 = scmp.ne.s32.totalorder %s880, %s881
      %p893 = scmp.eq.s32.totalorder %s154, 1
      %p894 = por %p892, %p893
      %p896 = scmp.ne.s32.totalorder %s881, %s895
      %p897 = scmp.eq.s32.totalorder %s154, 0
      %p898 = por %p896, %p897
      %s900 = sadd.s32 %s899, 1
      %p903 = scmp.eq.s32.totalorder %s148, 1
      %p904 = scmp.ne.s32.totalorder %s899, %s901
      %p905 = scmp.eq.s32.totalorder %s148, 0
      %p906 = por %p904, %p905
      %p907 = scmp.ne.s32.totalorder %s899, %s901
      %p908 = scmp.eq.s32.totalorder %s153, 1
      %p909 = por %p907, %p908
      %p910 = scmp.ne.s32.totalorder %s901, %s902
      %p911 = scmp.eq.s32.totalorder %s153, 0
      %p912 = por %p910, %p911
      %p913 = scmp.ne.s32.totalorder %s901, %s902
      %p914 = scmp.eq.s32.totalorder %s154, 1
      %p915 = por %p913, %p914
      %p917 = scmp.ne.s32.totalorder %s902, %s916
      %p918 = scmp.eq.s32.totalorder %s154, 0
      %p919 = por %p917, %p918
      %s921 = sadd.s32 %s920, 1
      %p924 = scmp.eq.s32.totalorder %s148, 1
      %p925 = scmp.ne.s32.totalorder %s920, %s922
      %p926 = scmp.eq.s32.totalorder %s148, 0
      %p927 = por %p925, %p926
      %p928 = scmp.ne.s32.totalorder %s920, %s922
      %p929 = scmp.eq.s32.totalorder %s153, 1
      %p930 = por %p928, %p929
      %p931 = scmp.ne.s32.totalorder %s922, %s923
      %p932 = scmp.eq.s32.totalorder %s153, 0
      %p933 = por %p931, %p932
      %p934 = scmp.ne.s32.totalorder %s922, %s923
      %p935 = scmp.eq.s32.totalorder %s154, 1
      %p936 = por %p934, %p935
      %p938 = scmp.ne.s32.totalorder %s923, %s937
      %p939 = scmp.eq.s32.totalorder %s154, 0
      %p940 = por %p938, %p939
      %s942 = sadd.s32 %s941, 1
      %p945 = scmp.eq.s32.totalorder %s148, 1
      %p946 = scmp.ne.s32.totalorder %s941, %s943
      %p947 = scmp.eq.s32.totalorder %s148, 0
      %p948 = por %p946, %p947
      %p949 = scmp.ne.s32.totalorder %s941, %s943
      %p950 = scmp.eq.s32.totalorder %s153, 1
      %p951 = por %p949, %p950
      %p952 = scmp.ne.s32.totalorder %s943, %s944
      %p953 = scmp.eq.s32.totalorder %s153, 0
      %p954 = por %p952, %p953
      %p955 = scmp.ne.s32.totalorder %s943, %s944
      %p956 = scmp.eq.s32.totalorder %s154, 1
      %p957 = por %p955, %p956
      %p959 = scmp.ne.s32.totalorder %s944, %s958
      %p960 = scmp.eq.s32.totalorder %s154, 0
      %p961 = por %p959, %p960
      %s963 = sadd.s32 %s962, 1
      %p966 = scmp.eq.s32.totalorder %s148, 1
      %p967 = scmp.ne.s32.totalorder %s962, %s964
      %p968 = scmp.eq.s32.totalorder %s148, 0
      %p969 = por %p967, %p968
      %p970 = scmp.ne.s32.totalorder %s962, %s964
      %p971 = scmp.eq.s32.totalorder %s153, 1
      %p972 = por %p970, %p971
      %p973 = scmp.ne.s32.totalorder %s964, %s965
      %p974 = scmp.eq.s32.totalorder %s153, 0
      %p975 = por %p973, %p974
      %p976 = scmp.ne.s32.totalorder %s964, %s965
      %p977 = scmp.eq.s32.totalorder %s154, 1
      %p978 = por %p976, %p977
      %p980 = scmp.ne.s32.totalorder %s965, %s979
      %p981 = scmp.eq.s32.totalorder %s154, 0
      %p982 = por %p980, %p981
      %s984 = sadd.s32 %s983, 1
      %p987 = scmp.eq.s32.totalorder %s148, 1
      %p988 = scmp.ne.s32.totalorder %s983, %s985
      %p989 = scmp.eq.s32.totalorder %s148, 0
      %p990 = por %p988, %p989
      %p991 = scmp.ne.s32.totalorder %s983, %s985
      %p992 = scmp.eq.s32.totalorder %s153, 1
      %p993 = por %p991, %p992
      %p994 = scmp.ne.s32.totalorder %s985, %s986
      %p995 = scmp.eq.s32.totalorder %s153, 0
      %p996 = por %p994, %p995
      %p997 = scmp.ne.s32.totalorder %s985, %s986
      %p998 = scmp.eq.s32.totalorder %s154, 1
      %p999 = por %p997, %p998
      %p1001 = scmp.ne.s32.totalorder %s986, %s1000
      %p1002 = scmp.eq.s32.totalorder %s154, 0
      %p1003 = por %p1001, %p1002
      %s1005 = sadd.s32 %s1004, 1
      %p1008 = scmp.eq.s32.totalorder %s148, 1
      %p1009 = scmp.ne.s32.totalorder %s1004, %s1006
      %p1010 = scmp.eq.s32.totalorder %s148, 0
      %p1011 = por %p1009, %p1010
      %p1012 = scmp.ne.s32.totalorder %s1004, %s1006
      %p1013 = scmp.eq.s32.totalorder %s153, 1
      %p1014 = por %p1012, %p1013
      %p1015 = scmp.ne.s32.totalorder %s1006, %s1007
      %p1016 = scmp.eq.s32.totalorder %s153, 0
      %p1017 = por %p1015, %p1016
      %p1018 = scmp.ne.s32.totalorder %s1006, %s1007
      %p1019 = scmp.eq.s32.totalorder %s154, 1
      %p1020 = por %p1018, %p1019
      %p1022 = scmp.ne.s32.totalorder %s1007, %s1021
      %p1023 = scmp.eq.s32.totalorder %s154, 0
      %p1024 = por %p1022, %p1023
      %s1026 = sadd.s32 %s1025, 1
      %p1029 = scmp.eq.s32.totalorder %s148, 1
      %p1030 = scmp.ne.s32.totalorder %s1025, %s1027
      %p1031 = scmp.eq.s32.totalorder %s148, 0
      %p1032 = por %p1030, %p1031
      %p1033 = scmp.ne.s32.totalorder %s1025, %s1027
      %p1034 = scmp.eq.s32.totalorder %s153, 1
      %p1035 = por %p1033, %p1034
      %p1036 = scmp.ne.s32.totalorder %s1027, %s1028
      %p1037 = scmp.eq.s32.totalorder %s153, 0
      %p1038 = por %p1036, %p1037
      %p1039 = scmp.ne.s32.totalorder %s1027, %s1028
      %p1040 = scmp.eq.s32.totalorder %s154, 1
      %p1041 = por %p1039, %p1040
      %p1043 = scmp.ne.s32.totalorder %s1028, %s1042
      %p1044 = scmp.eq.s32.totalorder %s154, 0
      %p1045 = por %p1043, %p1044
      %s1047 = sadd.s32 %s1046, 1
      %p1050 = scmp.eq.s32.totalorder %s148, 1
      %p1051 = scmp.ne.s32.totalorder %s1046, %s1048
      %p1052 = scmp.eq.s32.totalorder %s148, 0
      %p1053 = por %p1051, %p1052
      %p1054 = scmp.ne.s32.totalorder %s1046, %s1048
      %p1055 = scmp.eq.s32.totalorder %s153, 1
      %p1056 = por %p1054, %p1055
      %p1057 = scmp.ne.s32.totalorder %s1048, %s1049
      %p1058 = scmp.eq.s32.totalorder %s153, 0
      %p1059 = por %p1057, %p1058
      %p1060 = scmp.ne.s32.totalorder %s1048, %s1049
      %p1061 = scmp.eq.s32.totalorder %s154, 1
      %p1062 = por %p1060, %p1061
      %p1064 = scmp.ne.s32.totalorder %s1049, %s1063
      %p1065 = scmp.eq.s32.totalorder %s154, 0
      %p1066 = por %p1064, %p1065
      %s1068 = sadd.s32 %s1067, 1
      %p1071 = scmp.eq.s32.totalorder %s148, 1
      %p1072 = scmp.ne.s32.totalorder %s1067, %s1069
      %p1073 = scmp.eq.s32.totalorder %s148, 0
      %p1074 = por %p1072, %p1073
      %p1075 = scmp.ne.s32.totalorder %s1067, %s1069
      %p1076 = scmp.eq.s32.totalorder %s153, 1
      %p1077 = por %p1075, %p1076
      %p1078 = scmp.ne.s32.totalorder %s1069, %s1070
      %p1079 = scmp.eq.s32.totalorder %s153, 0
      %p1080 = por %p1078, %p1079
      %p1081 = scmp.ne.s32.totalorder %s1069, %s1070
      %p1082 = scmp.eq.s32.totalorder %s154, 1
      %p1083 = por %p1081, %p1082
      %p1085 = scmp.ne.s32.totalorder %s1070, %s1084
      %p1086 = scmp.eq.s32.totalorder %s154, 0
      %p1087 = por %p1085, %p1086
      %s1089 = sadd.s32 %s1088, 1
      %p1092 = scmp.eq.s32.totalorder %s148, 1
      %p1093 = scmp.ne.s32.totalorder %s1088, %s1090
      %p1094 = scmp.eq.s32.totalorder %s148, 0
      %p1095 = por %p1093, %p1094
      %p1096 = scmp.ne.s32.totalorder %s1088, %s1090
      %p1097 = scmp.eq.s32.totalorder %s153, 1
      %p1098 = por %p1096, %p1097
      %p1099 = scmp.ne.s32.totalorder %s1090, %s1091
      %p1100 = scmp.eq.s32.totalorder %s153, 0
      %p1101 = por %p1099, %p1100
      %p1102 = scmp.ne.s32.totalorder %s1090, %s1091
      %p1103 = scmp.eq.s32.totalorder %s154, 1
      %p1104 = por %p1102, %p1103
      %p1106 = scmp.ne.s32.totalorder %s1091, %s1105
      %p1107 = scmp.eq.s32.totalorder %s154, 0
      %p1108 = por %p1106, %p1107
      %s1110 = sadd.s32 %s1109, 1
      %p1113 = scmp.eq.s32.totalorder %s148, 1
      %p1114 = scmp.ne.s32.totalorder %s1109, %s1111
      %p1115 = scmp.eq.s32.totalorder %s148, 0
      %p1116 = por %p1114, %p1115
      %p1117 = scmp.ne.s32.totalorder %s1109, %s1111
      %p1118 = scmp.eq.s32.totalorder %s153, 1
      %p1119 = por %p1117, %p1118
      %p1120 = scmp.ne.s32.totalorder %s1111, %s1112
      %p1121 = scmp.eq.s32.totalorder %s153, 0
      %p1122 = por %p1120, %p1121
      %p1123 = scmp.ne.s32.totalorder %s1111, %s1112
      %p1124 = scmp.eq.s32.totalorder %s154, 1
      %p1125 = por %p1123, %p1124
      %p1127 = scmp.ne.s32.totalorder %s1112, %s1126
      %p1128 = scmp.eq.s32.totalorder %s154, 0
      %p1129 = por %p1127, %p1128
      %s1131 = sadd.s32 %s1130, 1
      %p1134 = scmp.eq.s32.totalorder %s148, 1
      %p1135 = scmp.ne.s32.totalorder %s1130, %s1132
      %p1136 = scmp.eq.s32.totalorder %s148, 0
      %p1137 = por %p1135, %p1136
      %p1138 = scmp.ne.s32.totalorder %s1130, %s1132
      %p1139 = scmp.eq.s32.totalorder %s153, 1
      %p1140 = por %p1138, %p1139
      %p1141 = scmp.ne.s32.totalorder %s1132, %s1133
      %p1142 = scmp.eq.s32.totalorder %s153, 0
      %p1143 = por %p1141, %p1142
      %p1144 = scmp.ne.s32.totalorder %s1132, %s1133
      %p1145 = scmp.eq.s32.totalorder %s154, 1
      %p1146 = por %p1144, %p1145
      %p1148 = scmp.ne.s32.totalorder %s1133, %s1147
      %p1149 = scmp.eq.s32.totalorder %s154, 0
      %p1150 = por %p1148, %p1149
      %s1152 = sadd.s32 %s1151, 1
      %p1155 = scmp.eq.s32.totalorder %s148, 1
      %p1156 = scmp.ne.s32.totalorder %s1151, %s1153
      %p1157 = scmp.eq.s32.totalorder %s148, 0
      %p1158 = por %p1156, %p1157
      %p1159 = scmp.ne.s32.totalorder %s1151, %s1153
      %p1160 = scmp.eq.s32.totalorder %s153, 1
      %p1161 = por %p1159, %p1160
      %p1162 = scmp.ne.s32.totalorder %s1153, %s1154
      %p1163 = scmp.eq.s32.totalorder %s153, 0
      %p1164 = por %p1162, %p1163
      %p1165 = scmp.ne.s32.totalorder %s1153, %s1154
      %p1166 = scmp.eq.s32.totalorder %s154, 1
      %p1167 = por %p1165, %p1166
      %p1169 = scmp.ne.s32.totalorder %s1154, %s1168
      %p1170 = scmp.eq.s32.totalorder %s154, 0
      %p1171 = por %p1169, %p1170
      %s1173 = sadd.s32 %s1172, 1
      %p1176 = scmp.eq.s32.totalorder %s148, 1
      %p1177 = scmp.ne.s32.totalorder %s1172, %s1174
      %p1178 = scmp.eq.s32.totalorder %s148, 0
      %p1179 = por %p1177, %p1178
      %p1180 = scmp.ne.s32.totalorder %s1172, %s1174
      %p1181 = scmp.eq.s32.totalorder %s153, 1
      %p1182 = por %p1180, %p1181
      %p1183 = scmp.ne.s32.totalorder %s1174, %s1175
      %p1184 = scmp.eq.s32.totalorder %s153, 0
      %p1185 = por %p1183, %p1184
      %p1186 = scmp.ne.s32.totalorder %s1174, %s1175
      %p1187 = scmp.eq.s32.totalorder %s154, 1
      %p1188 = por %p1186, %p1187
      %p1190 = scmp.ne.s32.totalorder %s1175, %s1189
      %p1191 = scmp.eq.s32.totalorder %s154, 0
      %p1192 = por %p1190, %p1191
      %s1194 = sadd.s32 %s1193, 1
      %p1197 = scmp.eq.s32.totalorder %s148, 1
      %p1198 = scmp.ne.s32.totalorder %s1193, %s1195
      %p1199 = scmp.eq.s32.totalorder %s148, 0
      %p1200 = por %p1198, %p1199
      %p1201 = scmp.ne.s32.totalorder %s1193, %s1195
      %p1202 = scmp.eq.s32.totalorder %s153, 1
      %p1203 = por %p1201, %p1202
      %p1204 = scmp.ne.s32.totalorder %s1195, %s1196
      %p1205 = scmp.eq.s32.totalorder %s153, 0
      %p1206 = por %p1204, %p1205
      %p1207 = scmp.ne.s32.totalorder %s1195, %s1196
      %p1208 = scmp.eq.s32.totalorder %s154, 1
      %p1209 = por %p1207, %p1208
      %p1211 = scmp.ne.s32.totalorder %s1196, %s1210
      %p1212 = scmp.eq.s32.totalorder %s154, 0
      %p1213 = por %p1211, %p1212
      %s1215 = sadd.s32 %s1214, 1
      %p1218 = scmp.eq.s32.totalorder %s148, 1
      %p1219 = scmp.ne.s32.totalorder %s1214, %s1216
      %p1220 = scmp.eq.s32.totalorder %s148, 0
      %p1221 = por %p1219, %p1220
      %p1222 = scmp.ne.s32.totalorder %s1214, %s1216
      %p1223 = scmp.eq.s32.totalorder %s153, 1
      %p1224 = por %p1222, %p1223
      %p1225 = scmp.ne.s32.totalorder %s1216, %s1217
      %p1226 = scmp.eq.s32.totalorder %s153, 0
      %p1227 = por %p1225, %p1226
      %p1228 = scmp.ne.s32.totalorder %s1216, %s1217
      %p1229 = scmp.eq.s32.totalorder %s154, 1
      %p1230 = por %p1228, %p1229
      %p1232 = scmp.ne.s32.totalorder %s1217, %s1231
      %p1233 = scmp.eq.s32.totalorder %s154, 0
      %p1234 = por %p1232, %p1233
      %s1236 = sadd.s32 %s1235, 1
      %p1239 = scmp.eq.s32.totalorder %s148, 1
      %p1240 = scmp.ne.s32.totalorder %s1235, %s1237
      %p1241 = scmp.eq.s32.totalorder %s148, 0
      %p1242 = por %p1240, %p1241
      %p1243 = scmp.ne.s32.totalorder %s1235, %s1237
      %p1244 = scmp.eq.s32.totalorder %s153, 1
      %p1245 = por %p1243, %p1244
      %p1246 = scmp.ne.s32.totalorder %s1237, %s1238
      %p1247 = scmp.eq.s32.totalorder %s153, 0
      %p1248 = por %p1246, %p1247
      %p1249 = scmp.ne.s32.totalorder %s1237, %s1238
      %p1250 = scmp.eq.s32.totalorder %s154, 1
      %p1251 = por %p1249, %p1250
      %p1253 = scmp.ne.s32.totalorder %s1238, %s1252
      %p1254 = scmp.eq.s32.totalorder %s154, 0
      %p1255 = por %p1253, %p1254
      %s1257 = sadd.s32 %s1256, 1
      %p1260 = scmp.eq.s32.totalorder %s148, 1
      %p1261 = scmp.ne.s32.totalorder %s1256, %s1258
      %p1262 = scmp.eq.s32.totalorder %s148, 0
      %p1263 = por %p1261, %p1262
      %p1264 = scmp.ne.s32.totalorder %s1256, %s1258
      %p1265 = scmp.eq.s32.totalorder %s153, 1
      %p1266 = por %p1264, %p1265
      %p1267 = scmp.ne.s32.totalorder %s1258, %s1259
      %p1268 = scmp.eq.s32.totalorder %s153, 0
      %p1269 = por %p1267, %p1268
      %p1270 = scmp.ne.s32.totalorder %s1258, %s1259
      %p1271 = scmp.eq.s32.totalorder %s154, 1
      %p1272 = por %p1270, %p1271
      %p1274 = scmp.ne.s32.totalorder %s1259, %s1273
      %p1275 = scmp.eq.s32.totalorder %s154, 0
      %p1276 = por %p1274, %p1275
      %s1278 = sadd.s32 %s1277, 1
      %p1281 = scmp.eq.s32.totalorder %s148, 1
      %p1282 = scmp.ne.s32.totalorder %s1277, %s1279
      %p1283 = scmp.eq.s32.totalorder %s148, 0
      %p1284 = por %p1282, %p1283
      %p1285 = scmp.ne.s32.totalorder %s1277, %s1279
      %p1286 = scmp.eq.s32.totalorder %s153, 1
      %p1287 = por %p1285, %p1286
      %p1288 = scmp.ne.s32.totalorder %s1279, %s1280
      %p1289 = scmp.eq.s32.totalorder %s153, 0
      %p1290 = por %p1288, %p1289
      %p1291 = scmp.ne.s32.totalorder %s1279, %s1280
      %p1292 = scmp.eq.s32.totalorder %s154, 1
      %p1293 = por %p1291, %p1292
      %p1295 = scmp.ne.s32.totalorder %s1280, %s1294
      %p1296 = scmp.eq.s32.totalorder %s154, 0
      %p1297 = por %p1295, %p1296
      %s1299 = sadd.s32 %s1298, 1
      %p1302 = scmp.eq.s32.totalorder %s148, 1
      %p1303 = scmp.ne.s32.totalorder %s1298, %s1300
      %p1304 = scmp.eq.s32.totalorder %s148, 0
      %p1305 = por %p1303, %p1304
      %p1306 = scmp.ne.s32.totalorder %s1298, %s1300
      %p1307 = scmp.eq.s32.totalorder %s153, 1
      %p1308 = por %p1306, %p1307
      %p1309 = scmp.ne.s32.totalorder %s1300, %s1301
      %p1310 = scmp.eq.s32.totalorder %s153, 0
      %p1311 = por %p1309, %p1310
      %p1312 = scmp.ne.s32.totalorder %s1300, %s1301
      %p1313 = scmp.eq.s32.totalorder %s154, 1
      %p1314 = por %p1312, %p1313
      %p1316 = scmp.ne.s32.totalorder %s1301, %s1315
      %p1317 = scmp.eq.s32.totalorder %s154, 0
      %p1318 = por %p1316, %p1317
      %s1320 = sadd.s32 %s1319, 1
      %p1323 = scmp.eq.s32.totalorder %s148, 1
      %p1324 = scmp.ne.s32.totalorder %s1319, %s1321
      %p1325 = scmp.eq.s32.totalorder %s148, 0
      %p1326 = por %p1324, %p1325
      %p1327 = scmp.ne.s32.totalorder %s1319, %s1321
      %p1328 = scmp.eq.s32.totalorder %s153, 1
      %p1329 = por %p1327, %p1328
      %p1330 = scmp.ne.s32.totalorder %s1321, %s1322
      %p1331 = scmp.eq.s32.totalorder %s153, 0
      %p1332 = por %p1330, %p1331
      %p1333 = scmp.ne.s32.totalorder %s1321, %s1322
      %p1334 = scmp.eq.s32.totalorder %s154, 1
      %p1335 = por %p1333, %p1334
      %p1337 = scmp.ne.s32.totalorder %s1322, %s1336
      %p1338 = scmp.eq.s32.totalorder %s154, 0
      %p1339 = por %p1337, %p1338
      %s1341 = sadd.s32 %s1340, 1
      %p1344 = scmp.eq.s32.totalorder %s148, 1
      %p1345 = scmp.ne.s32.totalorder %s1340, %s1342
      %p1346 = scmp.eq.s32.totalorder %s148, 0
      %p1347 = por %p1345, %p1346
      %p1348 = scmp.ne.s32.totalorder %s1340, %s1342
      %p1349 = scmp.eq.s32.totalorder %s153, 1
      %p1350 = por %p1348, %p1349
      %p1351 = scmp.ne.s32.totalorder %s1342, %s1343
      %p1352 = scmp.eq.s32.totalorder %s153, 0
      %p1353 = por %p1351, %p1352
      %p1354 = scmp.ne.s32.totalorder %s1342, %s1343
      %p1355 = scmp.eq.s32.totalorder %s154, 1
      %p1356 = por %p1354, %p1355
      %p1358 = scmp.ne.s32.totalorder %s1343, %s1357
      %p1359 = scmp.eq.s32.totalorder %s154, 0
      %p1360 = por %p1358, %p1359
      %s1362 = sadd.s32 %s1361, 1
      %p1365 = scmp.eq.s32.totalorder %s148, 1
      %p1366 = scmp.ne.s32.totalorder %s1361, %s1363
      %p1367 = scmp.eq.s32.totalorder %s148, 0
      %p1368 = por %p1366, %p1367
      %p1369 = scmp.ne.s32.totalorder %s1361, %s1363
      %p1370 = scmp.eq.s32.totalorder %s153, 1
      %p1371 = por %p1369, %p1370
      %p1372 = scmp.ne.s32.totalorder %s1363, %s1364
      %p1373 = scmp.eq.s32.totalorder %s153, 0
      %p1374 = por %p1372, %p1373
      %p1375 = scmp.ne.s32.totalorder %s1363, %s1364
      %p1376 = scmp.eq.s32.totalorder %s154, 1
      %p1377 = por %p1375, %p1376
      %p1379 = scmp.ne.s32.totalorder %s1364, %s1378
      %p1380 = scmp.eq.s32.totalorder %s154, 0
      %p1381 = por %p1379, %p1380
      %s1383 = sadd.s32 %s1382, 1
      %p1386 = scmp.eq.s32.totalorder %s148, 1
      %p1387 = scmp.ne.s32.totalorder %s1382, %s1384
      %p1388 = scmp.eq.s32.totalorder %s148, 0
      %p1389 = por %p1387, %p1388
      %p1390 = scmp.ne.s32.totalorder %s1382, %s1384
      %p1391 = scmp.eq.s32.totalorder %s153, 1
      %p1392 = por %p1390, %p1391
      %p1393 = scmp.ne.s32.totalorder %s1384, %s1385
      %p1394 = scmp.eq.s32.totalorder %s153, 0
      %p1395 = por %p1393, %p1394
      %p1396 = scmp.ne.s32.totalorder %s1384, %s1385
      %p1397 = scmp.eq.s32.totalorder %s154, 1
      %p1398 = por %p1396, %p1397
      %p1400 = scmp.ne.s32.totalorder %s1385, %s1399
      %p1401 = scmp.eq.s32.totalorder %s154, 0
      %p1402 = por %p1400, %p1401
      %s1404 = sadd.s32 %s1403, 1
      %p1407 = scmp.eq.s32.totalorder %s148, 1
      %p1408 = scmp.ne.s32.totalorder %s1403, %s1405
      %p1409 = scmp.eq.s32.totalorder %s148, 0
      %p1410 = por %p1408, %p1409
      %p1411 = scmp.ne.s32.totalorder %s1403, %s1405
      %p1412 = scmp.eq.s32.totalorder %s153, 1
      %p1413 = por %p1411, %p1412
      %p1414 = scmp.ne.s32.totalorder %s1405, %s1406
      %p1415 = scmp.eq.s32.totalorder %s153, 0
      %p1416 = por %p1414, %p1415
      %p1417 = scmp.ne.s32.totalorder %s1405, %s1406
      %p1418 = scmp.eq.s32.totalorder %s154, 1
      %p1419 = por %p1417, %p1418
      %p1421 = scmp.ne.s32.totalorder %s1406, %s1420
      %p1422 = scmp.eq.s32.totalorder %s154, 0
      %p1423 = por %p1421, %p1422
      %s1425 = sadd.s32 %s1424, 1
      %p1428 = scmp.eq.s32.totalorder %s148, 1
      %p1429 = scmp.ne.s32.totalorder %s1424, %s1426
      %p1430 = scmp.eq.s32.totalorder %s148, 0
      %p1431 = por %p1429, %p1430
      %p1432 = scmp.ne.s32.totalorder %s1424, %s1426
      %p1433 = scmp.eq.s32.totalorder %s153, 1
      %p1434 = por %p1432, %p1433
      %p1435 = scmp.ne.s32.totalorder %s1426, %s1427
      %p1436 = scmp.eq.s32.totalorder %s153, 0
      %p1437 = por %p1435, %p1436
      %p1438 = scmp.ne.s32.totalorder %s1426, %s1427
      %p1439 = scmp.eq.s32.totalorder %s154, 1
      %p1440 = por %p1438, %p1439
      %p1442 = scmp.ne.s32.totalorder %s1427, %s1441
      %p1443 = scmp.eq.s32.totalorder %s154, 0
      %p1444 = por %p1442, %p1443
      %s1446 = sadd.s32 %s1445, 1
      %p1449 = scmp.eq.s32.totalorder %s148, 1
      %p1450 = scmp.ne.s32.totalorder %s1445, %s1447
      %p1451 = scmp.eq.s32.totalorder %s148, 0
      %p1452 = por %p1450, %p1451
      %p1453 = scmp.ne.s32.totalorder %s1445, %s1447
      %p1454 = scmp.eq.s32.totalorder %s153, 1
      %p1455 = por %p1453, %p1454
      %p1456 = scmp.ne.s32.totalorder %s1447, %s1448
      %p1457 = scmp.eq.s32.totalorder %s153, 0
      %p1458 = por %p1456, %p1457
      %p1459 = scmp.ne.s32.totalorder %s1447, %s1448
      %p1460 = scmp.eq.s32.totalorder %s154, 1
      %p1461 = por %p1459, %p1460
      %p1463 = scmp.ne.s32.totalorder %s1448, %s1462
      %p1464 = scmp.eq.s32.totalorder %s154, 0
      %p1465 = por %p1463, %p1464
      %s1467 = sadd.s32 %s1466, 1
      %p1470 = scmp.eq.s32.totalorder %s148, 1
      %p1471 = scmp.ne.s32.totalorder %s1466, %s1468
      %p1472 = scmp.eq.s32.totalorder %s148, 0
      %p1473 = por %p1471, %p1472
      %p1474 = scmp.ne.s32.totalorder %s1466, %s1468
      %p1475 = scmp.eq.s32.totalorder %s153, 1
      %p1476 = por %p1474, %p1475
      %p1477 = scmp.ne.s32.totalorder %s1468, %s1469
      %p1478 = scmp.eq.s32.totalorder %s153, 0
      %p1479 = por %p1477, %p1478
      %p1480 = scmp.ne.s32.totalorder %s1468, %s1469
      %p1481 = scmp.eq.s32.totalorder %s154, 1
      %p1482 = por %p1480, %p1481
      %p1484 = scmp.ne.s32.totalorder %s1469, %s1483
      %p1485 = scmp.eq.s32.totalorder %s154, 0
      %p1486 = por %p1484, %p1485
      %s1488 = sadd.s32 %s1487, 1
      %p1491 = scmp.eq.s32.totalorder %s148, 1
      %p1492 = scmp.ne.s32.totalorder %s1487, %s1489
      %p1493 = scmp.eq.s32.totalorder %s148, 0
      %p1494 = por %p1492, %p1493
      %p1495 = scmp.ne.s32.totalorder %s1487, %s1489
      %p1496 = scmp.eq.s32.totalorder %s153, 1
      %p1497 = por %p1495, %p1496
      %p1498 = scmp.ne.s32.totalorder %s1489, %s1490
      %p1499 = scmp.eq.s32.totalorder %s153, 0
      %p1500 = por %p1498, %p1499
      %p1501 = scmp.ne.s32.totalorder %s1489, %s1490
      %p1502 = scmp.eq.s32.totalorder %s154, 1
      %p1503 = por %p1501, %p1502
      %p1505 = scmp.ne.s32.totalorder %s1490, %s1504
      %p1506 = scmp.eq.s32.totalorder %s154, 0
      %p1507 = por %p1505, %p1506
      %s1508 = ssub.s32 %s148, %s155
      %p1509 = scmp.eq.s32.totalorder %s1508, 0
      %s1511 = sadd.s32 %s1510, 1
      %s1512 = scalar_select %p1509, %s1510, %s1511
      %p1515 = pneg %p1509
      %p1516 = scmp.eq.s32.totalorder %s148, 1
      %p1517 = por %p1515, %p1516
      %p1518 = scmp.ne.s32.totalorder %s1510, %s1513
      %p1519 = scmp.eq.s32.totalorder %s148, 0
      %p1520 = por %p1518, %p1519
      %p1521 = scmp.ne.s32.totalorder %s1510, %s1513
      %p1522 = scmp.eq.s32.totalorder %s153, 1
      %p1523 = por %p1521, %p1522
      %p1524 = scmp.ne.s32.totalorder %s1513, %s1514
      %p1525 = scmp.eq.s32.totalorder %s153, 0
      %p1526 = por %p1524, %p1525
      %p1527 = scmp.ne.s32.totalorder %s1513, %s1514
      %p1528 = scmp.eq.s32.totalorder %s154, 1
      %p1529 = por %p1527, %p1528
      %p1531 = scmp.ne.s32.totalorder %s1514, %s1530
      %p1532 = scmp.eq.s32.totalorder %s154, 0
      %p1533 = por %p1531, %p1532
      %s1534 = ssub.s32 %s148, %s155
      %p1535 = scmp.eq.s32.totalorder %s1534, 0
      %s1537 = sadd.s32 %s1536, 1
      %s1538 = scalar_select %p1535, %s1536, %s1537
      %p1541 = pneg %p1535
      %p1542 = scmp.eq.s32.totalorder %s148, 1
      %p1543 = por %p1541, %p1542
      %p1544 = scmp.ne.s32.totalorder %s1536, %s1539
      %p1545 = scmp.eq.s32.totalorder %s148, 0
      %p1546 = por %p1544, %p1545
      %p1547 = scmp.ne.s32.totalorder %s1536, %s1539
      %p1548 = scmp.eq.s32.totalorder %s153, 1
      %p1549 = por %p1547, %p1548
      %p1550 = scmp.ne.s32.totalorder %s1539, %s1540
      %p1551 = scmp.eq.s32.totalorder %s153, 0
      %p1552 = por %p1550, %p1551
      %p1553 = scmp.ne.s32.totalorder %s1539, %s1540
      %p1554 = scmp.eq.s32.totalorder %s154, 1
      %p1555 = por %p1553, %p1554
      %p1557 = scmp.ne.s32.totalorder %s1540, %s1556
      %p1558 = scmp.eq.s32.totalorder %s154, 0
      %p1559 = por %p1557, %p1558
      %s1560 = ssub.s32 %s148, %s155
      %p1561 = scmp.eq.s32.totalorder %s1560, 0
      %s1563 = sadd.s32 %s1562, 1
      %s1564 = scalar_select %p1561, %s1562, %s1563
      %p1567 = pneg %p1561
      %p1568 = scmp.eq.s32.totalorder %s148, 1
      %p1569 = por %p1567, %p1568
      %p1570 = scmp.ne.s32.totalorder %s1562, %s1565
      %p1571 = scmp.eq.s32.totalorder %s148, 0
      %p1572 = por %p1570, %p1571
      %p1573 = scmp.ne.s32.totalorder %s1562, %s1565
      %p1574 = scmp.eq.s32.totalorder %s153, 1
      %p1575 = por %p1573, %p1574
      %p1576 = scmp.ne.s32.totalorder %s1565, %s1566
      %p1577 = scmp.eq.s32.totalorder %s153, 0
      %p1578 = por %p1576, %p1577
      %p1579 = scmp.ne.s32.totalorder %s1565, %s1566
      %p1580 = scmp.eq.s32.totalorder %s154, 1
      %p1581 = por %p1579, %p1580
      %p1583 = scmp.ne.s32.totalorder %s1566, %s1582
      %p1584 = scmp.eq.s32.totalorder %s154, 0
      %p1585 = por %p1583, %p1584
      %s1586 = ssub.s32 %s148, %s155
      %p1587 = scmp.eq.s32.totalorder %s1586, 0
      %s1589 = sadd.s32 %s1588, 1
      %s1590 = scalar_select %p1587, %s1588, %s1589
      %p1593 = pneg %p1587
      %p1594 = scmp.eq.s32.totalorder %s148, 1
      %p1595 = por %p1593, %p1594
      %p1596 = scmp.ne.s32.totalorder %s1588, %s1591
      %p1597 = scmp.eq.s32.totalorder %s148, 0
      %p1598 = por %p1596, %p1597
      %p1599 = scmp.ne.s32.totalorder %s1588, %s1591
      %p1600 = scmp.eq.s32.totalorder %s153, 1
      %p1601 = por %p1599, %p1600
      %p1602 = scmp.ne.s32.totalorder %s1591, %s1592
      %p1603 = scmp.eq.s32.totalorder %s153, 0
      %p1604 = por %p1602, %p1603
      %p1605 = scmp.ne.s32.totalorder %s1591, %s1592
      %p1606 = scmp.eq.s32.totalorder %s154, 1
      %p1607 = por %p1605, %p1606
      %p1609 = scmp.ne.s32.totalorder %s1592, %s1608
      %p1610 = scmp.eq.s32.totalorder %s154, 0
      %p1611 = por %p1609, %p1610
      %p1612 = scmp.le.s32.totalorder 1, %s148
      %p1613 = scmp.lt.s32.totalorder %s148, 3
      %p1614 = pnand %p1612, %p1613
      %p1615 = pneg %p1614
      // Predicated region
      $region9: #{block_forward.1} parent=5 // pred_check
        _
      $region10: #{block_forward.1} parent=5 // pred_check_branch
        %1617 = sbr.rel (%p1614) target = $region12
      $region11: #{block_forward.1} parent=5 // pred_region
        %s1618 = ssub.s32 %s148, 1
        // Predicated region
        $region13: #{block_forward.1} parent=11 // pred_check
          %p1619 = pneg %p429
        $region14: #{block_forward.1} parent=11 // pred_check_branch
          %1621 = sbr.rel (%p1619) target = $region16
        $region15: #{block_forward.1} parent=11 // pred_region
          _
        $region16: #{block_forward.1} parent=11 // pred_fallthru
          _
        // Predicated region
        $region17: #{block_forward.1} parent=11 // pred_check
          %p1622 = pneg %p450
        $region18: #{block_forward.1} parent=11 // pred_check_branch
          %1624 = sbr.rel (%p1622) target = $region20
        $region19: #{block_forward.1} parent=11 // pred_region
          _
        $region20: #{block_forward.1} parent=11 // pred_fallthru
          _
        // Predicated region
        $region21: #{block_forward.1} parent=11 // pred_check
          %p1625 = pneg %p471
        $region22: #{block_forward.1} parent=11 // pred_check_branch
          %1627 = sbr.rel (%p1625) target = $region24
        $region23: #{block_forward.1} parent=11 // pred_region
          _
        $region24: #{block_forward.1} parent=11 // pred_fallthru
          _
        // Predicated region
        $region25: #{block_forward.1} parent=11 // pred_check
          %p1628 = pneg %p492
        $region26: #{block_forward.1} parent=11 // pred_check_branch
          %1630 = sbr.rel (%p1628) target = $region28
        $region27: #{block_forward.1} parent=11 // pred_region
          _
        $region28: #{block_forward.1} parent=11 // pred_fallthru
          _
        // Predicated region
        $region29: #{block_forward.1} parent=11 // pred_check
          %p1631 = pneg %p513
        $region30: #{block_forward.1} parent=11 // pred_check_branch
          %1633 = sbr.rel (%p1631) target = $region32
        $region31: #{block_forward.1} parent=11 // pred_region
          _
        $region32: #{block_forward.1} parent=11 // pred_fallthru
          _
        // Predicated region
        $region33: #{block_forward.1} parent=11 // pred_check
          %p1634 = pneg %p534
        $region34: #{block_forward.1} parent=11 // pred_check_branch
          %1636 = sbr.rel (%p1634) target = $region36
        $region35: #{block_forward.1} parent=11 // pred_region
          _
        $region36: #{block_forward.1} parent=11 // pred_fallthru
          _
        // Predicated region
        $region37: #{block_forward.1} parent=11 // pred_check
          %p1637 = pneg %p555
        $region38: #{block_forward.1} parent=11 // pred_check_branch
          %1639 = sbr.rel (%p1637) target = $region40
        $region39: #{block_forward.1} parent=11 // pred_region
          _
        $region40: #{block_forward.1} parent=11 // pred_fallthru
          _
        // Predicated region
        $region41: #{block_forward.1} parent=11 // pred_check
          %p1640 = pneg %p576
        $region42: #{block_forward.1} parent=11 // pred_check_branch
          %1642 = sbr.rel (%p1640) target = $region44
        $region43: #{block_forward.1} parent=11 // pred_region
          _
        $region44: #{block_forward.1} parent=11 // pred_fallthru
          _
        // Predicated region
        $region45: #{block_forward.1} parent=11 // pred_check
          %p1643 = pneg %p597
        $region46: #{block_forward.1} parent=11 // pred_check_branch
          %1645 = sbr.rel (%p1643) target = $region48
        $region47: #{block_forward.1} parent=11 // pred_region
          _
        $region48: #{block_forward.1} parent=11 // pred_fallthru
          _
        // Predicated region
        $region49: #{block_forward.1} parent=11 // pred_check
          %p1646 = pneg %p618
        $region50: #{block_forward.1} parent=11 // pred_check_branch
          %1648 = sbr.rel (%p1646) target = $region52
        $region51: #{block_forward.1} parent=11 // pred_region
          _
        $region52: #{block_forward.1} parent=11 // pred_fallthru
          _
        // Predicated region
        $region53: #{block_forward.1} parent=11 // pred_check
          %p1649 = pneg %p639
        $region54: #{block_forward.1} parent=11 // pred_check_branch
          %1651 = sbr.rel (%p1649) target = $region56
        $region55: #{block_forward.1} parent=11 // pred_region
          _
        $region56: #{block_forward.1} parent=11 // pred_fallthru
          _
        // Predicated region
        $region57: #{block_forward.1} parent=11 // pred_check
          %p1652 = pneg %p660
        $region58: #{block_forward.1} parent=11 // pred_check_branch
          %1654 = sbr.rel (%p1652) target = $region60
        $region59: #{block_forward.1} parent=11 // pred_region
          _
        $region60: #{block_forward.1} parent=11 // pred_fallthru
          _
        // Predicated region
        $region61: #{block_forward.1} parent=11 // pred_check
          %p1655 = pneg %p681
        $region62: #{block_forward.1} parent=11 // pred_check_branch
          %1657 = sbr.rel (%p1655) target = $region64
        $region63: #{block_forward.1} parent=11 // pred_region
          _
        $region64: #{block_forward.1} parent=11 // pred_fallthru
          _
        // Predicated region
        $region65: #{block_forward.1} parent=11 // pred_check
          %p1658 = pneg %p702
        $region66: #{block_forward.1} parent=11 // pred_check_branch
          %1660 = sbr.rel (%p1658) target = $region68
        $region67: #{block_forward.1} parent=11 // pred_region
          _
        $region68: #{block_forward.1} parent=11 // pred_fallthru
          _
        // Predicated region
        $region69: #{block_forward.1} parent=11 // pred_check
          %p1661 = pneg %p723
        $region70: #{block_forward.1} parent=11 // pred_check_branch
          %1663 = sbr.rel (%p1661) target = $region72
        $region71: #{block_forward.1} parent=11 // pred_region
          _
        $region72: #{block_forward.1} parent=11 // pred_fallthru
          _
        // Predicated region
        $region73: #{block_forward.1} parent=11 // pred_check
          %p1664 = pneg %p744
        $region74: #{block_forward.1} parent=11 // pred_check_branch
          %1666 = sbr.rel (%p1664) target = $region76
        $region75: #{block_forward.1} parent=11 // pred_region
          _
        $region76: #{block_forward.1} parent=11 // pred_fallthru
          _
        // Predicated region
        $region77: #{block_forward.1} parent=11 // pred_check
          %p1667 = pneg %p765
        $region78: #{block_forward.1} parent=11 // pred_check_branch
          %1669 = sbr.rel (%p1667) target = $region80
        $region79: #{block_forward.1} parent=11 // pred_region
          _
        $region80: #{block_forward.1} parent=11 // pred_fallthru
          _
        // Predicated region
        $region81: #{block_forward.1} parent=11 // pred_check
          %p1670 = pneg %p786
        $region82: #{block_forward.1} parent=11 // pred_check_branch
          %1672 = sbr.rel (%p1670) target = $region84
        $region83: #{block_forward.1} parent=11 // pred_region
          _
        $region84: #{block_forward.1} parent=11 // pred_fallthru
          _
        // Predicated region
        $region85: #{block_forward.1} parent=11 // pred_check
          %p1673 = pneg %p807
        $region86: #{block_forward.1} parent=11 // pred_check_branch
          %1675 = sbr.rel (%p1673) target = $region88
        $region87: #{block_forward.1} parent=11 // pred_region
          _
        $region88: #{block_forward.1} parent=11 // pred_fallthru
          _
        // Predicated region
        $region89: #{block_forward.1} parent=11 // pred_check
          %p1676 = pneg %p828
        $region90: #{block_forward.1} parent=11 // pred_check_branch
          %1678 = sbr.rel (%p1676) target = $region92
        $region91: #{block_forward.1} parent=11 // pred_region
          _
        $region92: #{block_forward.1} parent=11 // pred_fallthru
          _
        // Predicated region
        $region93: #{block_forward.1} parent=11 // pred_check
          %p1679 = pneg %p849
        $region94: #{block_forward.1} parent=11 // pred_check_branch
          %1681 = sbr.rel (%p1679) target = $region96
        $region95: #{block_forward.1} parent=11 // pred_region
          _
        $region96: #{block_forward.1} parent=11 // pred_fallthru
          _
        // Predicated region
        $region97: #{block_forward.1} parent=11 // pred_check
          %p1682 = pneg %p870
        $region98: #{block_forward.1} parent=11 // pred_check_branch
          %1684 = sbr.rel (%p1682) target = $region100
        $region99: #{block_forward.1} parent=11 // pred_region
          _
        $region100: #{block_forward.1} parent=11 // pred_fallthru
          _
        // Predicated region
        $region101: #{block_forward.1} parent=11 // pred_check
          %p1685 = pneg %p891
        $region102: #{block_forward.1} parent=11 // pred_check_branch
          %1687 = sbr.rel (%p1685) target = $region104
        $region103: #{block_forward.1} parent=11 // pred_region
          _
        $region104: #{block_forward.1} parent=11 // pred_fallthru
          _
        // Predicated region
        $region105: #{block_forward.1} parent=11 // pred_check
          %p1688 = pneg %p912
        $region106: #{block_forward.1} parent=11 // pred_check_branch
          %1690 = sbr.rel (%p1688) target = $region108
        $region107: #{block_forward.1} parent=11 // pred_region
          _
        $region108: #{block_forward.1} parent=11 // pred_fallthru
          _
        // Predicated region
        $region109: #{block_forward.1} parent=11 // pred_check
          %p1691 = pneg %p933
        $region110: #{block_forward.1} parent=11 // pred_check_branch
          %1693 = sbr.rel (%p1691) target = $region112
        $region111: #{block_forward.1} parent=11 // pred_region
          _
        $region112: #{block_forward.1} parent=11 // pred_fallthru
          _
        // Predicated region
        $region113: #{block_forward.1} parent=11 // pred_check
          %p1694 = pneg %p954
        $region114: #{block_forward.1} parent=11 // pred_check_branch
          %1696 = sbr.rel (%p1694) target = $region116
        $region115: #{block_forward.1} parent=11 // pred_region
          _
        $region116: #{block_forward.1} parent=11 // pred_fallthru
          _
        // Predicated region
        $region117: #{block_forward.1} parent=11 // pred_check
          %p1697 = pneg %p975
        $region118: #{block_forward.1} parent=11 // pred_check_branch
          %1699 = sbr.rel (%p1697) target = $region120
        $region119: #{block_forward.1} parent=11 // pred_region
          _
        $region120: #{block_forward.1} parent=11 // pred_fallthru
          _
        // Predicated region
        $region121: #{block_forward.1} parent=11 // pred_check
          %p1700 = pneg %p996
        $region122: #{block_forward.1} parent=11 // pred_check_branch
          %1702 = sbr.rel (%p1700) target = $region124
        $region123: #{block_forward.1} parent=11 // pred_region
          _
        $region124: #{block_forward.1} parent=11 // pred_fallthru
          _
        // Predicated region
        $region125: #{block_forward.1} parent=11 // pred_check
          %p1703 = pneg %p1017
        $region126: #{block_forward.1} parent=11 // pred_check_branch
          %1705 = sbr.rel (%p1703) target = $region128
        $region127: #{block_forward.1} parent=11 // pred_region
          _
        $region128: #{block_forward.1} parent=11 // pred_fallthru
          _
        // Predicated region
        $region129: #{block_forward.1} parent=11 // pred_check
          %p1706 = pneg %p1038
        $region130: #{block_forward.1} parent=11 // pred_check_branch
          %1708 = sbr.rel (%p1706) target = $region132
        $region131: #{block_forward.1} parent=11 // pred_region
          _
        $region132: #{block_forward.1} parent=11 // pred_fallthru
          _
        // Predicated region
        $region133: #{block_forward.1} parent=11 // pred_check
          %p1709 = pneg %p1059
        $region134: #{block_forward.1} parent=11 // pred_check_branch
          %1711 = sbr.rel (%p1709) target = $region136
        $region135: #{block_forward.1} parent=11 // pred_region
          _
        $region136: #{block_forward.1} parent=11 // pred_fallthru
          _
        // Predicated region
        $region137: #{block_forward.1} parent=11 // pred_check
          %p1712 = pneg %p1080
        $region138: #{block_forward.1} parent=11 // pred_check_branch
          %1714 = sbr.rel (%p1712) target = $region140
        $region139: #{block_forward.1} parent=11 // pred_region
          _
        $region140: #{block_forward.1} parent=11 // pred_fallthru
          _
        // Predicated region
        $region141: #{block_forward.1} parent=11 // pred_check
          %p1715 = pneg %p1101
        $region142: #{block_forward.1} parent=11 // pred_check_branch
          %1717 = sbr.rel (%p1715) target = $region144
        $region143: #{block_forward.1} parent=11 // pred_region
          _
        $region144: #{block_forward.1} parent=11 // pred_fallthru
          _
        // Predicated region
        $region145: #{block_forward.1} parent=11 // pred_check
          %p1718 = pneg %p1122
        $region146: #{block_forward.1} parent=11 // pred_check_branch
          %1720 = sbr.rel (%p1718) target = $region148
        $region147: #{block_forward.1} parent=11 // pred_region
          %1722 = vsyncadd [#allocation3], 0
          %s1723 = sshll.u32 %s87, 4
          %s1724 = int_to_ptr.hbm [resolvable:$true] %s1723
          %s1725 = sshll.u32 [#allocation2], 4
          %s1726 = int_to_ptr.vmem [resolvable:$true] %s1725
          %1731 = dma.hbm_to_vmem [thread:$0]  %s1724, 1024, %s1726, [#allocation3], 64, 64, 4
        $region148: #{block_forward.1} parent=11 // pred_fallthru
          _
        // Predicated region
        $region149: #{block_forward.1} parent=11 // pred_check
          %p1732 = pneg %p1143
        $region150: #{block_forward.1} parent=11 // pred_check_branch
          %1734 = sbr.rel (%p1732) target = $region152
        $region151: #{block_forward.1} parent=11 // pred_region
          %1736 = vsyncadd [#allocation5], 0
          %s1737 = sshll.u32 %s89, 4
          %s1738 = int_to_ptr.hbm [resolvable:$true] %s1737
          %s1739 = sshll.u32 [#allocation4], 4
          %s1740 = int_to_ptr.vmem [resolvable:$true] %s1739
          %1745 = dma.hbm_to_vmem [thread:$0]  %s1738, 1024, %s1740, [#allocation5], 64, 64, 4
        $region152: #{block_forward.1} parent=11 // pred_fallthru
          _
        // Predicated region
        $region153: #{block_forward.1} parent=11 // pred_check
          %p1746 = pneg %p1164
        $region154: #{block_forward.1} parent=11 // pred_check_branch
          %1748 = sbr.rel (%p1746) target = $region156
        $region155: #{block_forward.1} parent=11 // pred_region
          %1750 = vsyncadd [#allocation5], 0
          %s1751 = sshll.u32 %s91, 4
          %s1752 = int_to_ptr.hbm [resolvable:$true] %s1751
          %s1753 = sshll.u32 [#allocation6], 4
          %s1754 = int_to_ptr.vmem [resolvable:$true] %s1753
          %1759 = dma.hbm_to_vmem [thread:$0]  %s1752, 1024, %s1754, [#allocation5], 64, 64, 4
        $region156: #{block_forward.1} parent=11 // pred_fallthru
          _
        // Predicated region
        $region157: #{block_forward.1} parent=11 // pred_check
          %p1760 = pneg %p1185
        $region158: #{block_forward.1} parent=11 // pred_check_branch
          %1762 = sbr.rel (%p1760) target = $region160
        $region159: #{block_forward.1} parent=11 // pred_region
          %1764 = vsyncadd [#allocation8], 0
          %s1765 = sshll.u32 %s93, 4
          %s1766 = int_to_ptr.hbm [resolvable:$true] %s1765
          %s1767 = sshll.u32 [#allocation7], 4
          %s1768 = int_to_ptr.vmem [resolvable:$true] %s1767
          %1773 = dma.hbm_to_vmem [thread:$0]  %s1766, 1024, %s1768, [#allocation8], 64, 64, 4
        $region160: #{block_forward.1} parent=11 // pred_fallthru
          _
        // Predicated region
        $region161: #{block_forward.1} parent=11 // pred_check
          %p1774 = pneg %p1206
        $region162: #{block_forward.1} parent=11 // pred_check_branch
          %1776 = sbr.rel (%p1774) target = $region164
        $region163: #{block_forward.1} parent=11 // pred_region
          _
        $region164: #{block_forward.1} parent=11 // pred_fallthru
          _
        // Predicated region
        $region165: #{block_forward.1} parent=11 // pred_check
          %p1777 = pneg %p1227
        $region166: #{block_forward.1} parent=11 // pred_check_branch
          %1779 = sbr.rel (%p1777) target = $region168
        $region167: #{block_forward.1} parent=11 // pred_region
          %1781 = vsyncadd [#allocation8], 0
          %s1782 = sshll.u32 %s97, 4
          %s1783 = int_to_ptr.hbm [resolvable:$true] %s1782
          %s1784 = sshll.u32 [#allocation9], 4
          %s1785 = int_to_ptr.vmem [resolvable:$true] %s1784
          %1790 = dma.hbm_to_vmem [thread:$0]  %s1783, 1024, %s1785, [#allocation8], 64, 64, 4
        $region168: #{block_forward.1} parent=11 // pred_fallthru
          _
        // Predicated region
        $region169: #{block_forward.1} parent=11 // pred_check
          %p1791 = pneg %p1248
        $region170: #{block_forward.1} parent=11 // pred_check_branch
          %1793 = sbr.rel (%p1791) target = $region172
        $region171: #{block_forward.1} parent=11 // pred_region
          %1795 = vsyncadd [#allocation11], 0
          %s1796 = sshll.u32 %s99, 4
          %s1797 = int_to_ptr.hbm [resolvable:$true] %s1796
          %s1798 = sshll.u32 [#allocation10], 4
          %s1799 = int_to_ptr.vmem [resolvable:$true] %s1798
          %1804 = dma.hbm_to_vmem [thread:$0]  %s1797, 1024, %s1799, [#allocation11], 64, 64, 4
        $region172: #{block_forward.1} parent=11 // pred_fallthru
          _
        // Predicated region
        $region173: #{block_forward.1} parent=11 // pred_check
          %p1805 = pneg %p1269
        $region174: #{block_forward.1} parent=11 // pred_check_branch
          %1807 = sbr.rel (%p1805) target = $region176
        $region175: #{block_forward.1} parent=11 // pred_region
          %1809 = vsyncadd [#allocation11], 0
          %s1810 = sshll.u32 %s101, 4
          %s1811 = int_to_ptr.hbm [resolvable:$true] %s1810
          %s1812 = sshll.u32 [#allocation12], 4
          %s1813 = int_to_ptr.vmem [resolvable:$true] %s1812
          %1818 = dma.hbm_to_vmem [thread:$0]  %s1811, 1024, %s1813, [#allocation11], 64, 64, 4
        $region176: #{block_forward.1} parent=11 // pred_fallthru
          _
        // Predicated region
        $region177: #{block_forward.1} parent=11 // pred_check
          %p1819 = pneg %p1290
        $region178: #{block_forward.1} parent=11 // pred_check_branch
          %1821 = sbr.rel (%p1819) target = $region180
        $region179: #{block_forward.1} parent=11 // pred_region
          %1823 = vsyncadd [#allocation14], 0
          %s1824 = sshll.u32 %s103, 4
          %s1825 = int_to_ptr.hbm [resolvable:$true] %s1824
          %s1826 = sshll.u32 [#allocation13], 4
          %s1827 = int_to_ptr.vmem [resolvable:$true] %s1826
          %1832 = dma.hbm_to_vmem [thread:$0]  %s1825, 1024, %s1827, [#allocation14], 64, 64, 4
        $region180: #{block_forward.1} parent=11 // pred_fallthru
          _
        // Predicated region
        $region181: #{block_forward.1} parent=11 // pred_check
          %p1833 = pneg %p1311
        $region182: #{block_forward.1} parent=11 // pred_check_branch
          %1835 = sbr.rel (%p1833) target = $region184
        $region183: #{block_forward.1} parent=11 // pred_region
          %1837 = vsyncadd [#allocation14], 0
          %s1838 = sshll.u32 %s105, 4
          %s1839 = int_to_ptr.hbm [resolvable:$true] %s1838
          %s1840 = sshll.u32 [#allocation15], 4
          %s1841 = int_to_ptr.vmem [resolvable:$true] %s1840
          %1846 = dma.hbm_to_vmem [thread:$0]  %s1839, 1024, %s1841, [#allocation14], 64, 64, 4
        $region184: #{block_forward.1} parent=11 // pred_fallthru
          _
        // Predicated region
        $region185: #{block_forward.1} parent=11 // pred_check
          %p1847 = pneg %p1332
        $region186: #{block_forward.1} parent=11 // pred_check_branch
          %1849 = sbr.rel (%p1847) target = $region188
        $region187: #{block_forward.1} parent=11 // pred_region
          %1851 = vsyncadd [#allocation17], 0
          %s1852 = sshll.u32 %s107, 4
          %s1853 = int_to_ptr.hbm [resolvable:$true] %s1852
          %s1854 = sshll.u32 [#allocation16], 4
          %s1855 = int_to_ptr.vmem [resolvable:$true] %s1854
          %1860 = dma.hbm_to_vmem [thread:$0]  %s1853, 1024, %s1855, [#allocation17], 64, 64, 4
        $region188: #{block_forward.1} parent=11 // pred_fallthru
          _
        // Predicated region
        $region189: #{block_forward.1} parent=11 // pred_check
          %p1861 = pneg %p1353
        $region190: #{block_forward.1} parent=11 // pred_check_branch
          %1863 = sbr.rel (%p1861) target = $region192
        $region191: #{block_forward.1} parent=11 // pred_region
          %1865 = vsyncadd [#allocation17], 0
          %s1866 = sshll.u32 %s109, 4
          %s1867 = int_to_ptr.hbm [resolvable:$true] %s1866
          %s1868 = sshll.u32 [#allocation18], 4
          %s1869 = int_to_ptr.vmem [resolvable:$true] %s1868
          %1874 = dma.hbm_to_vmem [thread:$0]  %s1867, 1024, %s1869, [#allocation17], 64, 64, 4
        $region192: #{block_forward.1} parent=11 // pred_fallthru
          _
        // Predicated region
        $region193: #{block_forward.1} parent=11 // pred_check
          %p1875 = pneg %p1374
        $region194: #{block_forward.1} parent=11 // pred_check_branch
          %1877 = sbr.rel (%p1875) target = $region196
        $region195: #{block_forward.1} parent=11 // pred_region
          %1879 = vsyncadd [#allocation20], 0
          %s1880 = sshll.u32 %s111, 4
          %s1881 = int_to_ptr.hbm [resolvable:$true] %s1880
          %s1882 = sshll.u32 [#allocation19], 4
          %s1883 = int_to_ptr.vmem [resolvable:$true] %s1882
          %1888 = dma.hbm_to_vmem [thread:$0]  %s1881, 1024, %s1883, [#allocation20], 64, 64, 4
        $region196: #{block_forward.1} parent=11 // pred_fallthru
          _
        // Predicated region
        $region197: #{block_forward.1} parent=11 // pred_check
          %p1889 = pneg %p1395
        $region198: #{block_forward.1} parent=11 // pred_check_branch
          %1891 = sbr.rel (%p1889) target = $region200
        $region199: #{block_forward.1} parent=11 // pred_region
          %1893 = vsyncadd [#allocation20], 0
          %s1894 = sshll.u32 %s113, 4
          %s1895 = int_to_ptr.hbm [resolvable:$true] %s1894
          %s1896 = sshll.u32 [#allocation21], 4
          %s1897 = int_to_ptr.vmem [resolvable:$true] %s1896
          %1902 = dma.hbm_to_vmem [thread:$0]  %s1895, 1024, %s1897, [#allocation20], 64, 64, 4
        $region200: #{block_forward.1} parent=11 // pred_fallthru
          _
        // Predicated region
        $region201: #{block_forward.1} parent=11 // pred_check
          %p1903 = pneg %p1416
        $region202: #{block_forward.1} parent=11 // pred_check_branch
          %1905 = sbr.rel (%p1903) target = $region204
        $region203: #{block_forward.1} parent=11 // pred_region
          %1907 = vsyncadd [#allocation23], 0
          %s1908 = sshll.u32 %s115, 4
          %s1909 = int_to_ptr.hbm [resolvable:$true] %s1908
          %s1910 = sshll.u32 [#allocation22], 4
          %s1911 = int_to_ptr.vmem [resolvable:$true] %s1910
          %1916 = dma.hbm_to_vmem [thread:$0]  %s1909, 1024, %s1911, [#allocation23], 64, 64, 4
        $region204: #{block_forward.1} parent=11 // pred_fallthru
          _
        // Predicated region
        $region205: #{block_forward.1} parent=11 // pred_check
          %p1917 = pneg %p1437
        $region206: #{block_forward.1} parent=11 // pred_check_branch
          %1919 = sbr.rel (%p1917) target = $region208
        $region207: #{block_forward.1} parent=11 // pred_region
          %1921 = vsyncadd [#allocation23], 0
          %s1922 = sshll.u32 %s117, 4
          %s1923 = int_to_ptr.hbm [resolvable:$true] %s1922
          %s1924 = sshll.u32 [#allocation24], 4
          %s1925 = int_to_ptr.vmem [resolvable:$true] %s1924
          %1930 = dma.hbm_to_vmem [thread:$0]  %s1923, 1024, %s1925, [#allocation23], 64, 64, 4
        $region208: #{block_forward.1} parent=11 // pred_fallthru
          _
        // Predicated region
        $region209: #{block_forward.1} parent=11 // pred_check
          %p1931 = pneg %p1458
        $region210: #{block_forward.1} parent=11 // pred_check_branch
          %1933 = sbr.rel (%p1931) target = $region212
        $region211: #{block_forward.1} parent=11 // pred_region
          %1935 = vsyncadd [#allocation26], 0
          %s1936 = sshll.u32 %s119, 4
          %s1937 = int_to_ptr.hbm [resolvable:$true] %s1936
          %s1938 = sshll.u32 [#allocation25], 4
          %s1939 = int_to_ptr.vmem [resolvable:$true] %s1938
          %1944 = dma.hbm_to_vmem [thread:$0]  %s1937, 1024, %s1939, [#allocation26], 64, 64, 4
        $region212: #{block_forward.1} parent=11 // pred_fallthru
          _
        // Predicated region
        $region213: #{block_forward.1} parent=11 // pred_check
          %p1945 = pneg %p1479
        $region214: #{block_forward.1} parent=11 // pred_check_branch
          %1947 = sbr.rel (%p1945) target = $region216
        $region215: #{block_forward.1} parent=11 // pred_region
          %1949 = vsyncadd [#allocation26], 0
          %s1950 = sshll.u32 %s121, 4
          %s1951 = int_to_ptr.hbm [resolvable:$true] %s1950
          %s1952 = sshll.u32 [#allocation27], 4
          %s1953 = int_to_ptr.vmem [resolvable:$true] %s1952
          %1958 = dma.hbm_to_vmem [thread:$0]  %s1951, 1024, %s1953, [#allocation26], 64, 64, 4
        $region216: #{block_forward.1} parent=11 // pred_fallthru
          _
        // Predicated region
        $region217: #{block_forward.1} parent=11 // pred_check
          %p1959 = pneg %p1500
        $region218: #{block_forward.1} parent=11 // pred_check_branch
          %1961 = sbr.rel (%p1959) target = $region220
        $region219: #{block_forward.1} parent=11 // pred_region
          %1963 = vsyncadd [#allocation29], 0
          %s1964 = sshll.u32 %s123, 4
          %s1965 = int_to_ptr.hbm [resolvable:$true] %s1964
          %s1966 = sshll.u32 [#allocation28], 4
          %s1967 = int_to_ptr.vmem [resolvable:$true] %s1966
          %1972 = dma.hbm_to_vmem [thread:$0]  %s1965, 1024, %s1967, [#allocation29], 64, 64, 4
        $region220: #{block_forward.1} parent=11 // pred_fallthru
          _
      $region12: #{block_forward.1} parent=5 // pred_fallthru
        _
      %p1973 = scmp.lt.s32.totalorder %s148, 2
      // Predicated region
      $region221: #{block_forward.1} parent=5 // pred_check
        %p1974 = pneg %p1973
      $region222: #{block_forward.1} parent=5 // pred_check_branch
        %1976 = sbr.rel (%p1974) target = $region224
      $region223: #{block_forward.1} parent=5 // pred_region
        // Predicated region
        $region225: #{block_forward.1} parent=223 // pred_check
          %p1977 = pneg %p168
        $region226: #{block_forward.1} parent=223 // pred_check_branch
          %1979 = sbr.rel (%p1977) target = $region228
        $region227: #{block_forward.1} parent=223 // pred_region
          %p1980 = scmp.lt.s32.totalorder %s148, 1
          %s1981 = scalar_select %p1980, %s148, 1
          %s1982 = smul.addr %s1981, 2
          %s1983 = smul.addr %s1982, 8
          %s1984 = scalar_lea.vmem %s1, %s1983
        $region228: #{block_forward.1} parent=223 // pred_fallthru
          _
        // Predicated region
        $region229: #{block_forward.1} parent=223 // pred_check
          %p1985 = pneg %p194
        $region230: #{block_forward.1} parent=223 // pred_check_branch
          %1987 = sbr.rel (%p1985) target = $region232
        $region231: #{block_forward.1} parent=223 // pred_region
          %p1988 = scmp.lt.s32.totalorder %s148, 1
          %s1989 = scalar_select %p1988, %s148, 1
          %s1990 = smul.addr %s1989, 2
          %s1991 = smul.addr %s1990, 8
          %s1992 = scalar_lea.vmem %s3, %s1991
        $region232: #{block_forward.1} parent=223 // pred_fallthru
          _
        // Predicated region
        $region233: #{block_forward.1} parent=223 // pred_check
          %p1993 = pneg %p220
        $region234: #{block_forward.1} parent=223 // pred_check_branch
          %1995 = sbr.rel (%p1993) target = $region236
        $region235: #{block_forward.1} parent=223 // pred_region
          %p1996 = scmp.lt.s32.totalorder %s148, 1
          %s1997 = scalar_select %p1996, %s148, 1
          %s1998 = smul.addr %s1997, 6
          %s1999 = smul.addr %s1998, 8
          %s2000 = scalar_lea.vmem %s5, %s1999
        $region236: #{block_forward.1} parent=223 // pred_fallthru
          _
        // Predicated region
        $region237: #{block_forward.1} parent=223 // pred_check
          %p2001 = pneg %p246
        $region238: #{block_forward.1} parent=223 // pred_check_branch
          %2003 = sbr.rel (%p2001) target = $region240
        $region239: #{block_forward.1} parent=223 // pred_region
          %p2004 = scmp.lt.s32.totalorder %s148, 1
          %s2005 = scalar_select %p2004, %s148, 1
          %s2006 = smul.addr %s2005, 6
          %s2007 = smul.addr %s2006, 8
          %s2008 = scalar_lea.vmem %s7, %s2007
        $region240: #{block_forward.1} parent=223 // pred_fallthru
          _
        // Predicated region
        $region241: #{block_forward.1} parent=223 // pred_check
          %p2009 = pneg %p272
        $region242: #{block_forward.1} parent=223 // pred_check_branch
          %2011 = sbr.rel (%p2009) target = $region244
        $region243: #{block_forward.1} parent=223 // pred_region
          %p2012 = scmp.lt.s32.totalorder %s148, 1
          %s2013 = scalar_select %p2012, %s148, 1
          %s2014 = smul.addr %s2013, 2
          %s2015 = smul.addr %s2014, 4
          %s2016 = scalar_lea.vmem %s9, %s2015
        $region244: #{block_forward.1} parent=223 // pred_fallthru
          _
        // Predicated region
        $region245: #{block_forward.1} parent=223 // pred_check
          %p2017 = pneg %p298
        $region246: #{block_forward.1} parent=223 // pred_check_branch
          %2019 = sbr.rel (%p2017) target = $region248
        $region247: #{block_forward.1} parent=223 // pred_region
          %p2020 = scmp.lt.s32.totalorder %s148, 1
          %s2021 = scalar_select %p2020, %s148, 1
          %s2022 = smul.addr %s2021, 2
          %s2023 = smul.addr %s2022, 4
          %s2024 = scalar_lea.vmem %s11, %s2023
        $region248: #{block_forward.1} parent=223 // pred_fallthru
          _
        // Predicated region
        $region249: #{block_forward.1} parent=223 // pred_check
          %p2025 = pneg %p324
        $region250: #{block_forward.1} parent=223 // pred_check_branch
          %2027 = sbr.rel (%p2025) target = $region252
        $region251: #{block_forward.1} parent=223 // pred_region
          %p2028 = scmp.lt.s32.totalorder %s148, 1
          %s2029 = scalar_select %p2028, %s148, 1
          %s2030 = smul.addr %s2029, 2
          %s2031 = smul.addr %s2030, 4
          %s2032 = scalar_lea.vmem %s13, %s2031
        $region252: #{block_forward.1} parent=223 // pred_fallthru
          _
        // Predicated region
        $region253: #{block_forward.1} parent=223 // pred_check
          %p2033 = pneg %p350
        $region254: #{block_forward.1} parent=223 // pred_check_branch
          %2035 = sbr.rel (%p2033) target = $region256
        $region255: #{block_forward.1} parent=223 // pred_region
          %p2036 = scmp.lt.s32.totalorder %s148, 1
          %s2037 = scalar_select %p2036, %s148, 1
          %s2038 = smul.addr %s2037, 2
          %s2039 = smul.addr %s2038, 4
          %s2040 = scalar_lea.vmem %s15, %s2039
        $region256: #{block_forward.1} parent=223 // pred_fallthru
          _
        // Predicated region
        $region257: #{block_forward.1} parent=223 // pred_check
          %p2041 = pneg %p376
        $region258: #{block_forward.1} parent=223 // pred_check_branch
          %2043 = sbr.rel (%p2041) target = $region260
        $region259: #{block_forward.1} parent=223 // pred_region
          %p2044 = scmp.lt.s32.totalorder %s148, 1
          %s2045 = scalar_select %p2044, %s148, 1
          %s2046 = smul.addr %s2045, 2
          %s2047 = smul.addr %s2046, 4
          %s2048 = scalar_lea.vmem %s17, %s2047
        $region260: #{block_forward.1} parent=223 // pred_fallthru
          _
        // Predicated region
        $region261: #{block_forward.1} parent=223 // pred_check
          %p2049 = pneg %p402
        $region262: #{block_forward.1} parent=223 // pred_check_branch
          %2051 = sbr.rel (%p2049) target = $region264
        $region263: #{block_forward.1} parent=223 // pred_region
          %p2052 = scmp.lt.s32.totalorder %s148, 1
          %s2053 = scalar_select %p2052, %s148, 1
          %s2054 = scalar_lea.vmem %s19, %s2053
        $region264: #{block_forward.1} parent=223 // pred_fallthru
          _
      $region224: #{block_forward.1} parent=5 // pred_fallthru
        _
      %p2055 = scmp.le.s32.totalorder 1, %s148
      %p2056 = scmp.lt.s32.totalorder %s148, 3
      %p2057 = pnand %p2055, %p2056
      %p2058 = pneg %p2057
      // Predicated region
      $region265: #{block_forward.1} parent=5 // pred_check
        _
      $region266: #{block_forward.1} parent=5 // pred_check_branch
        %2060 = sbr.rel (%p2057) target = $region268
      $region267: #{block_forward.1} parent=5 // pred_region
        %s2061 = ssub.s32 %s148, 1
        // Predicated region
        $region269: #{block_forward.1} parent=267 // pred_check
          %p2062 = pneg %p1122
        $region270: #{block_forward.1} parent=267 // pred_check_branch
          %2064 = sbr.rel (%p2062) target = $region272
        $region271: #{block_forward.1} parent=267 // pred_region
          %2066 = dma.done [#allocation3], 1024
        $region272: #{block_forward.1} parent=267 // pred_fallthru
          _
        // Predicated region
        $region273: #{block_forward.1} parent=267 // pred_check
          %p2067 = pneg %p1143
        $region274: #{block_forward.1} parent=267 // pred_check_branch
          %2069 = sbr.rel (%p2067) target = $region276
        $region275: #{block_forward.1} parent=267 // pred_region
          %2071 = dma.done [#allocation5], 1024
        $region276: #{block_forward.1} parent=267 // pred_fallthru
          _
        // Predicated region
        $region277: #{block_forward.1} parent=267 // pred_check
          %p2072 = pneg %p1164
        $region278: #{block_forward.1} parent=267 // pred_check_branch
          %2074 = sbr.rel (%p2072) target = $region280
        $region279: #{block_forward.1} parent=267 // pred_region
          %2076 = dma.done [#allocation5], 1024
        $region280: #{block_forward.1} parent=267 // pred_fallthru
          _
        // Predicated region
        $region281: #{block_forward.1} parent=267 // pred_check
          %p2077 = pneg %p1185
        $region282: #{block_forward.1} parent=267 // pred_check_branch
          %2079 = sbr.rel (%p2077) target = $region284
        $region283: #{block_forward.1} parent=267 // pred_region
          %2081 = dma.done [#allocation8], 1024
        $region284: #{block_forward.1} parent=267 // pred_fallthru
          _
        // Predicated region
        $region285: #{block_forward.1} parent=267 // pred_check
          %p2082 = pneg %p1227
        $region286: #{block_forward.1} parent=267 // pred_check_branch
          %2084 = sbr.rel (%p2082) target = $region288
        $region287: #{block_forward.1} parent=267 // pred_region
          %2086 = dma.done [#allocation8], 1024
        $region288: #{block_forward.1} parent=267 // pred_fallthru
          _
        // Predicated region
        $region289: #{block_forward.1} parent=267 // pred_check
          %p2087 = pneg %p1248
        $region290: #{block_forward.1} parent=267 // pred_check_branch
          %2089 = sbr.rel (%p2087) target = $region292
        $region291: #{block_forward.1} parent=267 // pred_region
          %2091 = dma.done [#allocation11], 1024
        $region292: #{block_forward.1} parent=267 // pred_fallthru
          _
        // Predicated region
        $region293: #{block_forward.1} parent=267 // pred_check
          %p2092 = pneg %p1269
        $region294: #{block_forward.1} parent=267 // pred_check_branch
          %2094 = sbr.rel (%p2092) target = $region296
        $region295: #{block_forward.1} parent=267 // pred_region
          %2096 = dma.done [#allocation11], 1024
        $region296: #{block_forward.1} parent=267 // pred_fallthru
          _
        // Predicated region
        $region297: #{block_forward.1} parent=267 // pred_check
          %p2097 = pneg %p1290
        $region298: #{block_forward.1} parent=267 // pred_check_branch
          %2099 = sbr.rel (%p2097) target = $region300
        $region299: #{block_forward.1} parent=267 // pred_region
          %2101 = dma.done [#allocation14], 1024
        $region300: #{block_forward.1} parent=267 // pred_fallthru
          _
        // Predicated region
        $region301: #{block_forward.1} parent=267 // pred_check
          %p2102 = pneg %p1311
        $region302: #{block_forward.1} parent=267 // pred_check_branch
          %2104 = sbr.rel (%p2102) target = $region304
        $region303: #{block_forward.1} parent=267 // pred_region
          %2106 = dma.done [#allocation14], 1024
        $region304: #{block_forward.1} parent=267 // pred_fallthru
          _
        // Predicated region
        $region305: #{block_forward.1} parent=267 // pred_check
          %p2107 = pneg %p1332
        $region306: #{block_forward.1} parent=267 // pred_check_branch
          %2109 = sbr.rel (%p2107) target = $region308
        $region307: #{block_forward.1} parent=267 // pred_region
          %2111 = dma.done [#allocation17], 1024
        $region308: #{block_forward.1} parent=267 // pred_fallthru
          _
        // Predicated region
        $region309: #{block_forward.1} parent=267 // pred_check
          %p2112 = pneg %p1353
        $region310: #{block_forward.1} parent=267 // pred_check_branch
          %2114 = sbr.rel (%p2112) target = $region312
        $region311: #{block_forward.1} parent=267 // pred_region
          %2116 = dma.done [#allocation17], 1024
        $region312: #{block_forward.1} parent=267 // pred_fallthru
          _
        // Predicated region
        $region313: #{block_forward.1} parent=267 // pred_check
          %p2117 = pneg %p1374
        $region314: #{block_forward.1} parent=267 // pred_check_branch
          %2119 = sbr.rel (%p2117) target = $region316
        $region315: #{block_forward.1} parent=267 // pred_region
          %2121 = dma.done [#allocation20], 1024
        $region316: #{block_forward.1} parent=267 // pred_fallthru
          _
        // Predicated region
        $region317: #{block_forward.1} parent=267 // pred_check
          %p2122 = pneg %p1395
        $region318: #{block_forward.1} parent=267 // pred_check_branch
          %2124 = sbr.rel (%p2122) target = $region320
        $region319: #{block_forward.1} parent=267 // pred_region
          %2126 = dma.done [#allocation20], 1024
        $region320: #{block_forward.1} parent=267 // pred_fallthru
          _
        // Predicated region
        $region321: #{block_forward.1} parent=267 // pred_check
          %p2127 = pneg %p1416
        $region322: #{block_forward.1} parent=267 // pred_check_branch
          %2129 = sbr.rel (%p2127) target = $region324
        $region323: #{block_forward.1} parent=267 // pred_region
          %2131 = dma.done [#allocation23], 1024
        $region324: #{block_forward.1} parent=267 // pred_fallthru
          _
        // Predicated region
        $region325: #{block_forward.1} parent=267 // pred_check
          %p2132 = pneg %p1437
        $region326: #{block_forward.1} parent=267 // pred_check_branch
          %2134 = sbr.rel (%p2132) target = $region328
        $region327: #{block_forward.1} parent=267 // pred_region
          %2136 = dma.done [#allocation23], 1024
        $region328: #{block_forward.1} parent=267 // pred_fallthru
          _
        // Predicated region
        $region329: #{block_forward.1} parent=267 // pred_check
          %p2137 = pneg %p1458
        $region330: #{block_forward.1} parent=267 // pred_check_branch
          %2139 = sbr.rel (%p2137) target = $region332
        $region331: #{block_forward.1} parent=267 // pred_region
          %2141 = dma.done [#allocation26], 1024
        $region332: #{block_forward.1} parent=267 // pred_fallthru
          _
        // Predicated region
        $region333: #{block_forward.1} parent=267 // pred_check
          %p2142 = pneg %p1479
        $region334: #{block_forward.1} parent=267 // pred_check_branch
          %2144 = sbr.rel (%p2142) target = $region336
        $region335: #{block_forward.1} parent=267 // pred_region
          %2146 = dma.done [#allocation26], 1024
        $region336: #{block_forward.1} parent=267 // pred_fallthru
          _
        // Predicated region
        $region337: #{block_forward.1} parent=267 // pred_check
          %p2147 = pneg %p1500
        $region338: #{block_forward.1} parent=267 // pred_check_branch
          %2149 = sbr.rel (%p2147) target = $region340
        $region339: #{block_forward.1} parent=267 // pred_region
          %2151 = dma.done [#allocation29], 1024
        $region340: #{block_forward.1} parent=267 // pred_fallthru
          _
        %p2152 = scmp.lt.s32.totalorder %s153, 1
        %s2153 = scalar_select %p2152, %s153, 1
        %s2154 = smul.addr %s2153, 2
        %s2155 = smul.addr %s2154, 8
        %s2156 = scalar_lea.vmem %s1, %s2155
        %p2157 = pneg %p174
        %p2158 = pneg %p171
        %p2159 = scmp.lt.s32.totalorder %s153, 1
        %s2160 = scalar_select %p2159, %s153, 1
        %s2161 = smul.addr %s2160, 2
        %s2162 = smul.addr %s2161, 8
        %s2163 = scalar_lea.vmem %s3, %s2162
        %p2164 = pneg %p200
        %p2165 = pneg %p197
        %p2166 = scmp.lt.s32.totalorder %s153, 1
        %s2167 = scalar_select %p2166, %s153, 1
        %s2168 = smul.addr %s2167, 6
        %s2169 = smul.addr %s2168, 8
        %s2170 = scalar_lea.vmem %s5, %s2169
        %p2171 = pneg %p226
        %p2172 = pneg %p223
        %p2173 = scmp.lt.s32.totalorder %s153, 1
        %s2174 = scalar_select %p2173, %s153, 1
        %s2175 = smul.addr %s2174, 6
        %s2176 = smul.addr %s2175, 8
        %s2177 = scalar_lea.vmem %s7, %s2176
        %p2178 = pneg %p252
        %p2179 = pneg %p249
        %p2180 = scmp.lt.s32.totalorder %s153, 1
        %s2181 = scalar_select %p2180, %s153, 1
        %s2182 = smul.addr %s2181, 2
        %s2183 = smul.addr %s2182, 4
        %s2184 = scalar_lea.vmem %s9, %s2183
        %p2185 = pneg %p278
        %p2186 = pneg %p275
        %p2187 = scmp.lt.s32.totalorder %s153, 1
        %s2188 = scalar_select %p2187, %s153, 1
        %s2189 = smul.addr %s2188, 2
        %s2190 = smul.addr %s2189, 4
        %s2191 = scalar_lea.vmem %s11, %s2190
        %p2192 = pneg %p304
        %p2193 = pneg %p301
        %p2194 = scmp.lt.s32.totalorder %s153, 1
        %s2195 = scalar_select %p2194, %s153, 1
        %s2196 = smul.addr %s2195, 2
        %s2197 = smul.addr %s2196, 4
        %s2198 = scalar_lea.vmem %s13, %s2197
        %p2199 = pneg %p330
        %p2200 = pneg %p327
        %p2201 = scmp.lt.s32.totalorder %s153, 1
        %s2202 = scalar_select %p2201, %s153, 1
        %s2203 = smul.addr %s2202, 2
        %s2204 = smul.addr %s2203, 4
        %s2205 = scalar_lea.vmem %s15, %s2204
        %p2206 = pneg %p356
        %p2207 = pneg %p353
        %p2208 = scmp.lt.s32.totalorder %s153, 1
        %s2209 = scalar_select %p2208, %s153, 1
        %s2210 = smul.addr %s2209, 2
        %s2211 = smul.addr %s2210, 4
        %s2212 = scalar_lea.vmem %s17, %s2211
        %p2213 = pneg %p382
        %p2214 = pneg %p379
        %p2215 = scmp.lt.s32.totalorder %s153, 1
        %s2216 = scalar_select %p2215, %s153, 1
        %s2217 = scalar_lea.vmem %s19, %s2216
        %p2218 = pneg %p408
        %p2219 = pneg %p405
        %p2220 = pneg %p429
        %p2221 = pneg %p426
        %p2222 = pneg %p450
        %p2223 = pneg %p447
        %p2224 = pneg %p471
        %p2225 = pneg %p468
        %p2226 = pneg %p492
        %p2227 = pneg %p489
        %p2228 = pneg %p513
        %p2229 = pneg %p510
        %p2230 = pneg %p534
        %p2231 = pneg %p531
        %p2232 = pneg %p555
        %p2233 = pneg %p552
        %p2234 = pneg %p576
        %p2235 = pneg %p573
        %p2236 = pneg %p597
        %p2237 = pneg %p594
        %p2238 = pneg %p618
        %p2239 = pneg %p615
        %p2240 = pneg %p639
        %p2241 = pneg %p636
        %p2242 = pneg %p660
        %p2243 = pneg %p657
        %p2244 = pneg %p681
        %p2245 = pneg %p678
        %p2246 = pneg %p702
        %p2247 = pneg %p699
        %p2248 = pneg %p723
        %p2249 = pneg %p720
        %p2250 = pneg %p744
        %p2251 = pneg %p741
        %p2252 = pneg %p765
        %p2253 = pneg %p762
        %p2254 = pneg %p786
        %p2255 = pneg %p783
        %p2256 = pneg %p807
        %p2257 = pneg %p804
        %p2258 = pneg %p828
        %p2259 = pneg %p825
        %p2260 = pneg %p849
        %p2261 = pneg %p846
        %p2262 = pneg %p870
        %p2263 = pneg %p867
        %p2264 = pneg %p891
        %p2265 = pneg %p888
        %p2266 = pneg %p912
        %p2267 = pneg %p909
        %p2268 = pneg %p933
        %p2269 = pneg %p930
        %p2270 = pneg %p954
        %p2271 = pneg %p951
        %p2272 = pneg %p975
        %p2273 = pneg %p972
        %p2274 = pneg %p996
        %p2275 = pneg %p993
        %p2276 = pneg %p1017
        %p2277 = pneg %p1014
        %p2278 = pneg %p1038
        %p2279 = pneg %p1035
        %p2280 = pneg %p1059
        %p2281 = pneg %p1056
        %p2282 = pneg %p1080
        %p2283 = pneg %p1077
        %p2284 = pneg %p1101
        %p2285 = pneg %p1098
        %p2286 = pneg %p1122
        %p2287 = pneg %p1119
        %p2288 = pneg %p1143
        %p2289 = pneg %p1140
        %p2290 = pneg %p1164
        %p2291 = pneg %p1161
        %p2292 = pneg %p1185
        %p2293 = pneg %p1182
        %p2294 = pneg %p1206
        %p2295 = pneg %p1203
        %p2296 = pneg %p1227
        %p2297 = pneg %p1224
        %p2298 = pneg %p1248
        %p2299 = pneg %p1245
        %p2300 = pneg %p1269
        %p2301 = pneg %p1266
        %p2302 = pneg %p1290
        %p2303 = pneg %p1287
        %p2304 = pneg %p1311
        %p2305 = pneg %p1308
        %p2306 = pneg %p1332
        %p2307 = pneg %p1329
        %p2308 = pneg %p1353
        %p2309 = pneg %p1350
        %p2310 = pneg %p1374
        %p2311 = pneg %p1371
        %p2312 = pneg %p1395
        %p2313 = pneg %p1392
        %p2314 = pneg %p1416
        %p2315 = pneg %p1413
        %p2316 = pneg %p1437
        %p2317 = pneg %p1434
        %p2318 = pneg %p1458
        %p2319 = pneg %p1455
        %p2320 = pneg %p1479
        %p2321 = pneg %p1476
        %p2322 = pneg %p1500
        %p2323 = pneg %p1497
        %p2324 = pneg %p1526
        %p2325 = pneg %p1523
        %p2326 = scmp.lt.s32.totalorder %s153, 1
        %s2327 = scalar_select %p2326, %s153, 1
        %s2328 = smul.addr %s2327, 2
        %s2329 = smul.addr %s2328, 8
        %s2330 = scalar_lea.vmem %s125, %s2329
        %p2331 = pneg %p1552
        %p2332 = pneg %p1549
        %p2333 = scmp.lt.s32.totalorder %s153, 1
        %s2334 = scalar_select %p2333, %s153, 1
        %s2335 = smul.addr %s2334, 6
        %s2336 = smul.addr %s2335, 8
        %s2337 = scalar_lea.vmem %s127, %s2336
        %p2338 = pneg %p1578
        %p2339 = pneg %p1575
        %p2340 = scmp.lt.s32.totalorder %s153, 1
        %s2341 = scalar_select %p2340, %s153, 1
        %s2342 = smul.addr %s2341, 2
        %s2343 = smul.addr %s2342, 8
        %s2344 = scalar_lea.vmem %s129, %s2343
        %p2345 = pneg %p1604
        %p2346 = pneg %p1601
        %p2347 = scmp.lt.s32.totalorder %s153, 1
        %s2348 = scalar_select %p2347, %s153, 1
        %s2349 = smul.addr %s2348, 6
        %s2350 = smul.addr %s2349, 8
        %s2351 = scalar_lea.vmem %s131, %s2350
        %p2352 = scmp.lt.s32.totalorder %s153, 1
        %s2353 = scalar_select %p2352, %s153, 1
        %s2354 = smul.addr %s2353, 2
        %s2355 = smul.addr %s2354, 8
        %s2356 = scalar_lea.vmem %s1, %s2355
        %p2357 = scmp.lt.s32.totalorder %s153, 1
        %s2358 = scalar_select %p2357, %s153, 1
        %s2359 = smul.addr %s2358, 2
        %s2360 = smul.addr %s2359, 8
        %s2361 = scalar_lea.vmem %s3, %s2360
        %p2362 = scmp.lt.s32.totalorder %s153, 1
        %s2363 = scalar_select %p2362, %s153, 1
        %s2364 = smul.addr %s2363, 6
        %s2365 = smul.addr %s2364, 8
        %s2366 = scalar_lea.vmem %s5, %s2365
        %p2367 = scmp.lt.s32.totalorder %s153, 1
        %s2368 = scalar_select %p2367, %s153, 1
        %s2369 = smul.addr %s2368, 6
        %s2370 = smul.addr %s2369, 8
        %s2371 = scalar_lea.vmem %s7, %s2370
        %p2372 = scmp.lt.s32.totalorder %s153, 1
        %s2373 = scalar_select %p2372, %s153, 1
        %s2374 = smul.addr %s2373, 2
        %s2375 = smul.addr %s2374, 4
        %s2376 = scalar_lea.vmem %s9, %s2375
        %p2377 = scmp.lt.s32.totalorder %s153, 1
        %s2378 = scalar_select %p2377, %s153, 1
        %s2379 = smul.addr %s2378, 2
        %s2380 = smul.addr %s2379, 4
        %s2381 = scalar_lea.vmem %s11, %s2380
        %p2382 = scmp.lt.s32.totalorder %s153, 1
        %s2383 = scalar_select %p2382, %s153, 1
        %s2384 = smul.addr %s2383, 2
        %s2385 = smul.addr %s2384, 4
        %s2386 = scalar_lea.vmem %s13, %s2385
        %p2387 = scmp.lt.s32.totalorder %s153, 1
        %s2388 = scalar_select %p2387, %s153, 1
        %s2389 = smul.addr %s2388, 2
        %s2390 = smul.addr %s2389, 4
        %s2391 = scalar_lea.vmem %s15, %s2390
        %p2392 = scmp.lt.s32.totalorder %s153, 1
        %s2393 = scalar_select %p2392, %s153, 1
        %s2394 = smul.addr %s2393, 2
        %s2395 = smul.addr %s2394, 4
        %s2396 = scalar_lea.vmem %s17, %s2395
        %p2397 = scmp.lt.s32.totalorder %s153, 1
        %s2398 = scalar_select %p2397, %s153, 1
        %s2399 = scalar_lea.vmem %s19, %s2398
        %p2400 = scmp.lt.s32.totalorder %s153, 1
        %s2401 = scalar_select %p2400, %s153, 1
        %s2402 = smul.addr %s2401, 2
        %s2403 = smul.addr %s2402, 8
        %s2404 = scalar_lea.vmem %s125, %s2403
        %p2405 = scmp.lt.s32.totalorder %s153, 1
        %s2406 = scalar_select %p2405, %s153, 1
        %s2407 = smul.addr %s2406, 6
        %s2408 = smul.addr %s2407, 8
        %s2409 = scalar_lea.vmem %s127, %s2408
        %p2410 = scmp.lt.s32.totalorder %s153, 1
        %s2411 = scalar_select %p2410, %s153, 1
        %s2412 = smul.addr %s2411, 2
        %s2413 = smul.addr %s2412, 8
        %s2414 = scalar_lea.vmem %s129, %s2413
        %p2415 = scmp.lt.s32.totalorder %s153, 1
        %s2416 = scalar_select %p2415, %s153, 1
        %s2417 = smul.addr %s2416, 6
        %s2418 = smul.addr %s2417, 8
        %s2419 = scalar_lea.vmem %s131, %s2418
        %v2421 = vld [vmem:[%s2356] sm:$0xff]
        %v2422 = vld [vmem:[%s2356 + $0x8] sm:$0xff]
        %v2423 = vld [vmem:[%s2361] sm:$0xff]
        %v2424 = vld [vmem:[%s2361 + $0x8] sm:$0xff]
        %v2425 = vld [vmem:[%s2366] sm:$0xff]
        %v2426 = vld [vmem:[%s2366 + $0x8] sm:$0xff]
        %v2427 = vld [vmem:[%s2366 + $0x10] sm:$0xff]
        %v2428 = vld [vmem:[%s2366 + $0x18] sm:$0xff]
        %v2429 = vld [vmem:[%s2366 + $0x20] sm:$0xff]
        %v2430 = vld [vmem:[%s2366 + $0x28] sm:$0xff]
        %v2431 = vld [vmem:[%s2371] sm:$0xff]
        %v2432 = vld [vmem:[%s2371 + $0x8] sm:$0xff]
        %v2433 = vld [vmem:[%s2371 + $0x10] sm:$0xff]
        %v2434 = vld [vmem:[%s2371 + $0x18] sm:$0xff]
        %v2435 = vld [vmem:[%s2371 + $0x20] sm:$0xff]
        %v2436 = vld [vmem:[%s2371 + $0x28] sm:$0xff]
        %v2437 = vpack.c.bf16 %v2422, %v2421
        %v2438 = vpack.c.bf16 %v2425, %v2425
        %v2439 = vpack.c.bf16 %v2426, %v2426
        %v2440 = vpack.c.bf16 %v2427, %v2427
        %v2441 = vpack.c.bf16 %v2428, %v2428
        %v2442 = vpack.c.bf16 %v2429, %v2429
        %v2443 = vpack.c.bf16 %v2430, %v2430
        %v2444 = vld [vmem:[%s85] sm:$0xf]
        %v2445 = vld [vmem:[%s85 + $0x4] sm:$0xf]
        %v2446 = vld [vmem:[%s85 + $0x8] sm:$0xf]
        %v2447 = vld [vmem:[%s85 + $0xc] sm:$0xf]
        %v2448 = vld [vmem:[%s85 + $0x10] sm:$0xf]
        %v2449 = vld [vmem:[%s85 + $0x14] sm:$0xf]
        %v2450 = vld [vmem:[%s85 + $0x18] sm:$0xf]
        %v2451 = vld [vmem:[%s85 + $0x1c] sm:$0xf]
        %v2452 = vld [vmem:[%s85 + $0x20] sm:$0xf]
        %v2453 = vld [vmem:[%s85 + $0x24] sm:$0xf]
        %v2454 = vld [vmem:[%s85 + $0x28] sm:$0xf]
        %v2455 = vld [vmem:[%s85 + $0x2c] sm:$0xf]
        %v2456 = vld [vmem:[%s85 + $0x30] sm:$0xf]
        %v2457 = vld [vmem:[%s85 + $0x34] sm:$0xf]
        %v2458 = vld [vmem:[%s85 + $0x38] sm:$0xf]
        %v2459 = vld [vmem:[%s85 + $0x3c] sm:$0xf]
        %v2460 = vld [vmem:[%s2396] sm:$0xf]
        %v2461 = vld [vmem:[%s2396 + $0x4] sm:$0xf]
        %v2464 = vunpack.c.l.b16 %v2460
        %v2465 = vunpack.c.l.b16 %v2461
        %v2466 = vpack.c.b16 %v2465, %v2464
        %vm2467 = vcmask 130048
        %v2469 = vsel %vm2467, %v2466, 0
        %2471 = vmatpush.bf16.msra.mxu0 0
        %2472 = vmatpush.bf16.msra.mxu0 0
        %2473 = vmatpush.bf16.msra.mxu0 0
        %2474 = vmatpush.bf16.msra.mxu0 0
        %2475 = vmatpush.bf16.msra.mxu0 0
        %2476 = vmatpush.bf16.msra.mxu0 0
        %2477 = vmatpush.bf16.msra.mxu0 0
        %2478 = vmatpush.bf16.msra.mxu0 %v2437
        %2479 = vmatmul.bf16.gmra.mxu0 %v2469
        %v2480 = vpop.f32.mrf.mxu0
        %v2481 = vadd.f32 0.0, %v2480
        %v2482 = vpop.f32.mrf.mxu0
        %v2483 = vadd.f32 0.0, %v2482
        %2484 = vdwg.mxu0
        %v2485 = vpack.c.bf16 %v2483, %v2481
        %v2486 = vld [vmem:[%s83] sm:$0xf]
        %v2487 = vld [vmem:[%s83 + $0x4] sm:$0xf]
        %v2488 = vld [vmem:[%s83 + $0x8] sm:$0xf]
        %v2489 = vld [vmem:[%s83 + $0xc] sm:$0xf]
        %v2490 = vld [vmem:[%s83 + $0x10] sm:$0xf]
        %v2491 = vld [vmem:[%s83 + $0x14] sm:$0xf]
        %v2492 = vld [vmem:[%s83 + $0x18] sm:$0xf]
        %v2493 = vld [vmem:[%s83 + $0x1c] sm:$0xf]
        %v2494 = vld [vmem:[%s83 + $0x20] sm:$0xf]
        %v2495 = vld [vmem:[%s83 + $0x24] sm:$0xf]
        %v2496 = vld [vmem:[%s83 + $0x28] sm:$0xf]
        %v2497 = vld [vmem:[%s83 + $0x2c] sm:$0xf]
        %v2498 = vld [vmem:[%s83 + $0x30] sm:$0xf]
        %v2499 = vld [vmem:[%s83 + $0x34] sm:$0xf]
        %v2500 = vld [vmem:[%s83 + $0x38] sm:$0xf]
        %v2501 = vld [vmem:[%s83 + $0x3c] sm:$0xf]
        %v2518 = vunpack.c.l.b16 %v2486
        %v2519 = vunpack.c.l.b16 %v2487
        %v2520 = vunpack.c.l.b16 %v2488
        %v2521 = vunpack.c.l.b16 %v2489
        %v2522 = vunpack.c.l.b16 %v2490
        %v2523 = vunpack.c.l.b16 %v2491
        %v2524 = vunpack.c.l.b16 %v2492
        %v2525 = vunpack.c.l.b16 %v2493
        %v2526 = vunpack.c.l.b16 %v2494
        %v2527 = vunpack.c.l.b16 %v2495
        %v2528 = vunpack.c.l.b16 %v2496
        %v2529 = vunpack.c.l.b16 %v2497
        %v2530 = vunpack.c.l.b16 %v2498
        %v2531 = vunpack.c.l.b16 %v2499
        %v2532 = vunpack.c.l.b16 %v2500
        %v2533 = vunpack.c.l.b16 %v2501
        %v2534 = vpack.c.b16 %v2519, %v2518
        %v2535 = vpack.c.b16 %v2521, %v2520
        %v2536 = vpack.c.b16 %v2523, %v2522
        %v2537 = vpack.c.b16 %v2525, %v2524
        %v2538 = vpack.c.b16 %v2527, %v2526
        %v2539 = vpack.c.b16 %v2529, %v2528
        %v2540 = vpack.c.b16 %v2531, %v2530
        %v2541 = vpack.c.b16 %v2533, %v2532
        %2550 = vmatpush.bf16.msra.mxu0 %v2541
        %2551 = vmatpush.bf16.msra.mxu0 %v2540
        %2552 = vmatpush.bf16.msra.mxu0 %v2539
        %2553 = vmatpush.bf16.msra.mxu0 %v2538
        %2554 = vmatpush.bf16.msra.mxu0 %v2537
        %2555 = vmatpush.bf16.msra.mxu0 %v2536
        %2556 = vmatpush.bf16.msra.mxu0 %v2535
        %2557 = vmatpush.bf16.msra.mxu0 %v2534
        %2558 = vmatmul.bf16.gmra.mxu0 %v2485
        %v2559 = vpop.f32.mrf.mxu0
        %v2560 = vadd.f32 0.0, %v2559
        %v2561 = vpop.f32.mrf.mxu0
        %v2562 = vadd.f32 0.0, %v2561
        %2563 = vdwg.mxu0
        %v2580 = vunpack.c.l.b16 %v2444
        %v2581 = vunpack.c.l.b16 %v2445
        %v2582 = vunpack.c.l.b16 %v2446
        %v2583 = vunpack.c.l.b16 %v2447
        %v2584 = vunpack.c.l.b16 %v2448
        %v2585 = vunpack.c.l.b16 %v2449
        %v2586 = vunpack.c.l.b16 %v2450
        %v2587 = vunpack.c.l.b16 %v2451
        %v2588 = vunpack.c.l.b16 %v2452
        %v2589 = vunpack.c.l.b16 %v2453
        %v2590 = vunpack.c.l.b16 %v2454
        %v2591 = vunpack.c.l.b16 %v2455
        %v2592 = vunpack.c.l.b16 %v2456
        %v2593 = vunpack.c.l.b16 %v2457
        %v2594 = vunpack.c.l.b16 %v2458
        %v2595 = vunpack.c.l.b16 %v2459
        %v2596 = vpack.c.b16 %v2581, %v2580
        %v2597 = vpack.c.b16 %v2583, %v2582
        %v2598 = vpack.c.b16 %v2585, %v2584
        %v2599 = vpack.c.b16 %v2587, %v2586
        %v2600 = vpack.c.b16 %v2589, %v2588
        %v2601 = vpack.c.b16 %v2591, %v2590
        %v2602 = vpack.c.b16 %v2593, %v2592
        %v2603 = vpack.c.b16 %v2595, %v2594
        %2612 = vmatpush.bf16.msra.mxu0 %v2603
        %2613 = vmatpush.bf16.msra.mxu0 %v2602
        %2614 = vmatpush.bf16.msra.mxu0 %v2601
        %2615 = vmatpush.bf16.msra.mxu0 %v2600
        %2616 = vmatpush.bf16.msra.mxu0 %v2599
        %2617 = vmatpush.bf16.msra.mxu0 %v2598
        %2618 = vmatpush.bf16.msra.mxu0 %v2597
        %2619 = vmatpush.bf16.msra.mxu0 %v2596
        %2620 = vmatmul.bf16.gmra.mxu0 %v2437
        %v2621 = vpop.f32.mrf.mxu0
        %v2622 = vadd.f32 %v2560, %v2621
        %v2623 = vpop.f32.mrf.mxu0
        %v2624 = vadd.f32 %v2562, %v2623
        %2625 = vdwg.mxu0
        %v2626 = vld [vmem:[%s37] sm:$0x1]
        %v2628 = vperm.slane %v2626, 0
        %v2630 = vadd.f32 %v2622, %v2628
        %v2631 = vadd.f32 %v2624, %v2628
        %v2632 = vld [vmem:[#allocation25] sm:$0xf]
        %v2633 = vld [vmem:[#allocation25 + $0x4] sm:$0xf]
        %v2634 = vld [vmem:[#allocation25 + $0x8] sm:$0xf]
        %v2635 = vld [vmem:[#allocation25 + $0xc] sm:$0xf]
        %v2636 = vld [vmem:[#allocation25 + $0x10] sm:$0xf]
        %v2637 = vld [vmem:[#allocation25 + $0x14] sm:$0xf]
        %v2638 = vld [vmem:[#allocation25 + $0x18] sm:$0xf]
        %v2639 = vld [vmem:[#allocation25 + $0x1c] sm:$0xf]
        %v2640 = vld [vmem:[#allocation25 + $0x20] sm:$0xf]
        %v2641 = vld [vmem:[#allocation25 + $0x24] sm:$0xf]
        %v2642 = vld [vmem:[#allocation25 + $0x28] sm:$0xf]
        %v2643 = vld [vmem:[#allocation25 + $0x2c] sm:$0xf]
        %v2644 = vld [vmem:[#allocation25 + $0x30] sm:$0xf]
        %v2645 = vld [vmem:[#allocation25 + $0x34] sm:$0xf]
        %v2646 = vld [vmem:[#allocation25 + $0x38] sm:$0xf]
        %v2647 = vld [vmem:[#allocation25 + $0x3c] sm:$0xf]
        %v2650 = vunpack.c.l.b16 %v2438
        %v2651 = vunpack.c.l.b16 %v2439
        %v2652 = vpack.c.b16 %v2651, %v2650
        %2654 = vmatpush.bf16.msra.mxu0 0
        %2655 = vmatpush.bf16.msra.mxu0 0
        %2656 = vmatpush.bf16.msra.mxu0 0
        %2657 = vmatpush.bf16.msra.mxu0 0
        %2658 = vmatpush.bf16.msra.mxu0 0
        %2659 = vmatpush.bf16.msra.mxu0 0
        %2660 = vmatpush.bf16.msra.mxu0 0
        %2661 = vmatpush.bf16.msra.mxu0 %v2652
        %2662 = vmatmul.bf16.gmra.mxu0 %v2469
        %v2663 = vpop.f32.mrf.mxu0
        %v2664 = vadd.f32 0.0, %v2663
        %v2665 = vpop.f32.mrf.mxu0
        %v2666 = vadd.f32 0.0, %v2665
        %2667 = vdwg.mxu0
        %v2670 = vunpack.c.l.b16 %v2440
        %v2671 = vunpack.c.l.b16 %v2441
        %v2672 = vpack.c.b16 %v2671, %v2670
        %2674 = vmatpush.bf16.msra.mxu0 0
        %2675 = vmatpush.bf16.msra.mxu0 0
        %2676 = vmatpush.bf16.msra.mxu0 0
        %2677 = vmatpush.bf16.msra.mxu0 0
        %2678 = vmatpush.bf16.msra.mxu0 0
        %2679 = vmatpush.bf16.msra.mxu0 0
        %2680 = vmatpush.bf16.msra.mxu0 0
        %2681 = vmatpush.bf16.msra.mxu0 %v2672
        %2682 = vmatmul.bf16.gmra.mxu0 %v2469
        %v2683 = vpop.f32.mrf.mxu0
        %v2684 = vadd.f32 0.0, %v2683
        %v2685 = vpop.f32.mrf.mxu0
        %v2686 = vadd.f32 0.0, %v2685
        %2687 = vdwg.mxu0
        %v2690 = vunpack.c.l.b16 %v2442
        %v2691 = vunpack.c.l.b16 %v2443
        %v2692 = vpack.c.b16 %v2691, %v2690
        %2694 = vmatpush.bf16.msra.mxu0 0
        %2695 = vmatpush.bf16.msra.mxu0 0
        %2696 = vmatpush.bf16.msra.mxu0 0
        %2697 = vmatpush.bf16.msra.mxu0 0
        %2698 = vmatpush.bf16.msra.mxu0 0
        %2699 = vmatpush.bf16.msra.mxu0 0
        %2700 = vmatpush.bf16.msra.mxu0 0
        %2701 = vmatpush.bf16.msra.mxu0 %v2692
        %2702 = vmatmul.bf16.gmra.mxu0 %v2469
        %v2703 = vpop.f32.mrf.mxu0
        %v2704 = vadd.f32 0.0, %v2703
        %v2705 = vpop.f32.mrf.mxu0
        %v2706 = vadd.f32 0.0, %v2705
        %2707 = vdwg.mxu0
        %v2708 = vpack.c.bf16 %v2666, %v2664
        %v2709 = vpack.c.bf16 %v2686, %v2684
        %v2710 = vpack.c.bf16 %v2706, %v2704
        %v2711 = vld [vmem:[#allocation24] sm:$0xf]
        %v2712 = vld [vmem:[#allocation24 + $0x4] sm:$0xf]
        %v2713 = vld [vmem:[#allocation24 + $0x8] sm:$0xf]
        %v2714 = vld [vmem:[#allocation24 + $0xc] sm:$0xf]
        %v2715 = vld [vmem:[#allocation24 + $0x10] sm:$0xf]
        %v2716 = vld [vmem:[#allocation24 + $0x14] sm:$0xf]
        %v2717 = vld [vmem:[#allocation24 + $0x18] sm:$0xf]
        %v2718 = vld [vmem:[#allocation24 + $0x1c] sm:$0xf]
        %v2719 = vld [vmem:[#allocation24 + $0x20] sm:$0xf]
        %v2720 = vld [vmem:[#allocation24 + $0x24] sm:$0xf]
        %v2721 = vld [vmem:[#allocation24 + $0x28] sm:$0xf]
        %v2722 = vld [vmem:[#allocation24 + $0x2c] sm:$0xf]
        %v2723 = vld [vmem:[#allocation24 + $0x30] sm:$0xf]
        %v2724 = vld [vmem:[#allocation24 + $0x34] sm:$0xf]
        %v2725 = vld [vmem:[#allocation24 + $0x38] sm:$0xf]
        %v2726 = vld [vmem:[#allocation24 + $0x3c] sm:$0xf]
        %v2743 = vunpack.c.l.b16 %v2711
        %v2744 = vunpack.c.l.b16 %v2712
        %v2745 = vunpack.c.l.b16 %v2713
        %v2746 = vunpack.c.l.b16 %v2714
        %v2747 = vunpack.c.l.b16 %v2715
        %v2748 = vunpack.c.l.b16 %v2716
        %v2749 = vunpack.c.l.b16 %v2717
        %v2750 = vunpack.c.l.b16 %v2718
        %v2751 = vunpack.c.l.b16 %v2719
        %v2752 = vunpack.c.l.b16 %v2720
        %v2753 = vunpack.c.l.b16 %v2721
        %v2754 = vunpack.c.l.b16 %v2722
        %v2755 = vunpack.c.l.b16 %v2723
        %v2756 = vunpack.c.l.b16 %v2724
        %v2757 = vunpack.c.l.b16 %v2725
        %v2758 = vunpack.c.l.b16 %v2726
        %v2759 = vpack.c.b16 %v2744, %v2743
        %v2760 = vpack.c.b16 %v2746, %v2745
        %v2761 = vpack.c.b16 %v2748, %v2747
        %v2762 = vpack.c.b16 %v2750, %v2749
        %v2763 = vpack.c.b16 %v2752, %v2751
        %v2764 = vpack.c.b16 %v2754, %v2753
        %v2765 = vpack.c.b16 %v2756, %v2755
        %v2766 = vpack.c.b16 %v2758, %v2757
        %2775 = vmatpush.bf16.msra.mxu0 %v2766
        %2776 = vmatpush.bf16.msra.mxu0 %v2765
        %2777 = vmatpush.bf16.msra.mxu0 %v2764
        %2778 = vmatpush.bf16.msra.mxu0 %v2763
        %2779 = vmatpush.bf16.msra.mxu0 %v2762
        %2780 = vmatpush.bf16.msra.mxu0 %v2761
        %2781 = vmatpush.bf16.msra.mxu0 %v2760
        %2782 = vmatpush.bf16.msra.mxu0 %v2759
        %2783 = vmatmul.bf16.gmra.mxu0 %v2708
        %v2784 = vpop.f32.mrf.mxu0
        %v2785 = vadd.f32 0.0, %v2784
        %v2786 = vpop.f32.mrf.mxu0
        %v2787 = vadd.f32 0.0, %v2786
        %2788 = vmatmul.bf16.gmra.mxu0 %v2709
        %v2789 = vpop.f32.mrf.mxu0
        %v2790 = vadd.f32 0.0, %v2789
        %v2791 = vpop.f32.mrf.mxu0
        %v2792 = vadd.f32 0.0, %v2791
        %2793 = vmatmul.bf16.gmra.mxu0 %v2710
        %v2794 = vpop.f32.mrf.mxu0
        %v2795 = vadd.f32 0.0, %v2794
        %v2796 = vpop.f32.mrf.mxu0
        %v2797 = vadd.f32 0.0, %v2796
        %2798 = vdwg.mxu0
        %v2815 = vunpack.c.l.b16 %v2632
        %v2816 = vunpack.c.l.b16 %v2633
        %v2817 = vunpack.c.l.b16 %v2634
        %v2818 = vunpack.c.l.b16 %v2635
        %v2819 = vunpack.c.l.b16 %v2636
        %v2820 = vunpack.c.l.b16 %v2637
        %v2821 = vunpack.c.l.b16 %v2638
        %v2822 = vunpack.c.l.b16 %v2639
        %v2823 = vunpack.c.l.b16 %v2640
        %v2824 = vunpack.c.l.b16 %v2641
        %v2825 = vunpack.c.l.b16 %v2642
        %v2826 = vunpack.c.l.b16 %v2643
        %v2827 = vunpack.c.l.b16 %v2644
        %v2828 = vunpack.c.l.b16 %v2645
        %v2829 = vunpack.c.l.b16 %v2646
        %v2830 = vunpack.c.l.b16 %v2647
        %v2831 = vpack.c.b16 %v2816, %v2815
        %v2832 = vpack.c.b16 %v2818, %v2817
        %v2833 = vpack.c.b16 %v2820, %v2819
        %v2834 = vpack.c.b16 %v2822, %v2821
        %v2835 = vpack.c.b16 %v2824, %v2823
        %v2836 = vpack.c.b16 %v2826, %v2825
        %v2837 = vpack.c.b16 %v2828, %v2827
        %v2838 = vpack.c.b16 %v2830, %v2829
        %2847 = vmatpush.bf16.msra.mxu0 %v2838
        %2848 = vmatpush.bf16.msra.mxu0 %v2837
        %2849 = vmatpush.bf16.msra.mxu0 %v2836
        %2850 = vmatpush.bf16.msra.mxu0 %v2835
        %2851 = vmatpush.bf16.msra.mxu0 %v2834
        %2852 = vmatpush.bf16.msra.mxu0 %v2833
        %2853 = vmatpush.bf16.msra.mxu0 %v2832
        %2854 = vmatpush.bf16.msra.mxu0 %v2831
        %2855 = vmatmul.bf16.gmra.mxu0 %v2652
        %v2856 = vpop.f32.mrf.mxu0
        %v2857 = vadd.f32 %v2785, %v2856
        %v2858 = vpop.f32.mrf.mxu0
        %v2859 = vadd.f32 %v2787, %v2858
        %2860 = vmatmul.bf16.gmra.mxu0 %v2672
        %v2861 = vpop.f32.mrf.mxu0
        %v2862 = vadd.f32 %v2790, %v2861
        %v2863 = vpop.f32.mrf.mxu0
        %v2864 = vadd.f32 %v2792, %v2863
        %2865 = vmatmul.bf16.gmra.mxu0 %v2692
        %v2866 = vpop.f32.mrf.mxu0
        %v2867 = vadd.f32 %v2795, %v2866
        %v2868 = vpop.f32.mrf.mxu0
        %v2869 = vadd.f32 %v2797, %v2868
        %2870 = vdwg.mxu0
        %v2871 = vpack.c.bf16 %v2631, %v2630
        %v2872 = vpack.c.bf16 %v2857, %v2857
        %v2873 = vpack.c.bf16 %v2859, %v2859
        %v2874 = vpack.c.bf16 %v2862, %v2862
        %v2875 = vpack.c.bf16 %v2864, %v2864
        %v2876 = vpack.c.bf16 %v2867, %v2867
        %v2877 = vpack.c.bf16 %v2869, %v2869
        %v2878 = vld [vmem:[%s2376] sm:$0xf]
        %v2879 = vld [vmem:[%s2376 + $0x4] sm:$0xf]
        %v2882 = vunpack.c.l.b16 %v2878
        %v2883 = vunpack.c.l.b16 %v2879
        %v2884 = vpack.c.b16 %v2883, %v2882
        %v2886 = vsel %vm2467, %v2884, 0
        %2888 = vmatpush.bf16.msra.mxu0 0
        %2889 = vmatpush.bf16.msra.mxu0 0
        %2890 = vmatpush.bf16.msra.mxu0 0
        %2891 = vmatpush.bf16.msra.mxu0 0
        %2892 = vmatpush.bf16.msra.mxu0 0
        %2893 = vmatpush.bf16.msra.mxu0 0
        %2894 = vmatpush.bf16.msra.mxu0 0
        %2895 = vmatpush.bf16.msra.mxu0 %v2871
        %2896 = vmatmul.bf16.gmra.mxu0 %v2886
        %v2897 = vpop.f32.mrf.mxu0
        %v2898 = vadd.f32 0.0, %v2897
        %v2899 = vpop.f32.mrf.mxu0
        %v2900 = vadd.f32 0.0, %v2899
        %2901 = vdwg.mxu0
        %v2902 = vpack.c.bf16 %v2900, %v2898
        %v2903 = vld [vmem:[%s71] sm:$0xf]
        %v2904 = vld [vmem:[%s71 + $0x4] sm:$0xf]
        %v2905 = vld [vmem:[%s71 + $0x8] sm:$0xf]
        %v2906 = vld [vmem:[%s71 + $0xc] sm:$0xf]
        %v2907 = vld [vmem:[%s71 + $0x10] sm:$0xf]
        %v2908 = vld [vmem:[%s71 + $0x14] sm:$0xf]
        %v2909 = vld [vmem:[%s71 + $0x18] sm:$0xf]
        %v2910 = vld [vmem:[%s71 + $0x1c] sm:$0xf]
        %v2911 = vld [vmem:[%s71 + $0x20] sm:$0xf]
        %v2912 = vld [vmem:[%s71 + $0x24] sm:$0xf]
        %v2913 = vld [vmem:[%s71 + $0x28] sm:$0xf]
        %v2914 = vld [vmem:[%s71 + $0x2c] sm:$0xf]
        %v2915 = vld [vmem:[%s71 + $0x30] sm:$0xf]
        %v2916 = vld [vmem:[%s71 + $0x34] sm:$0xf]
        %v2917 = vld [vmem:[%s71 + $0x38] sm:$0xf]
        %v2918 = vld [vmem:[%s71 + $0x3c] sm:$0xf]
        %v2919 = vld [vmem:[%s2381] sm:$0xf]
        %v2920 = vld [vmem:[%s2381 + $0x4] sm:$0xf]
        %v2923 = vunpack.c.l.b16 %v2919
        %v2924 = vunpack.c.l.b16 %v2920
        %v2925 = vpack.c.b16 %v2924, %v2923
        %v2927 = vsel %vm2467, %v2925, 0
        %2929 = vmatpush.bf16.msra.mxu0 0
        %2930 = vmatpush.bf16.msra.mxu0 0
        %2931 = vmatpush.bf16.msra.mxu0 0
        %2932 = vmatpush.bf16.msra.mxu0 0
        %2933 = vmatpush.bf16.msra.mxu0 0
        %2934 = vmatpush.bf16.msra.mxu0 0
        %2935 = vmatpush.bf16.msra.mxu0 0
        %2936 = vmatpush.bf16.msra.mxu0 %v2871
        %2937 = vmatmul.bf16.gmra.mxu0 %v2927
        %v2938 = vpop.f32.mrf.mxu0
        %v2939 = vadd.f32 0.0, %v2938
        %v2940 = vpop.f32.mrf.mxu0
        %v2941 = vadd.f32 0.0, %v2940
        %2942 = vdwg.mxu0
        %v2943 = vpack.c.bf16 %v2941, %v2939
        %v2944 = vld [vmem:[%s69] sm:$0xf]
        %v2945 = vld [vmem:[%s69 + $0x4] sm:$0xf]
        %v2946 = vld [vmem:[%s69 + $0x8] sm:$0xf]
        %v2947 = vld [vmem:[%s69 + $0xc] sm:$0xf]
        %v2948 = vld [vmem:[%s69 + $0x10] sm:$0xf]
        %v2949 = vld [vmem:[%s69 + $0x14] sm:$0xf]
        %v2950 = vld [vmem:[%s69 + $0x18] sm:$0xf]
        %v2951 = vld [vmem:[%s69 + $0x1c] sm:$0xf]
        %v2952 = vld [vmem:[%s69 + $0x20] sm:$0xf]
        %v2953 = vld [vmem:[%s69 + $0x24] sm:$0xf]
        %v2954 = vld [vmem:[%s69 + $0x28] sm:$0xf]
        %v2955 = vld [vmem:[%s69 + $0x2c] sm:$0xf]
        %v2956 = vld [vmem:[%s69 + $0x30] sm:$0xf]
        %v2957 = vld [vmem:[%s69 + $0x34] sm:$0xf]
        %v2958 = vld [vmem:[%s69 + $0x38] sm:$0xf]
        %v2959 = vld [vmem:[%s69 + $0x3c] sm:$0xf]
        %v2976 = vunpack.c.l.b16 %v2944
        %v2977 = vunpack.c.l.b16 %v2945
        %v2978 = vunpack.c.l.b16 %v2946
        %v2979 = vunpack.c.l.b16 %v2947
        %v2980 = vunpack.c.l.b16 %v2948
        %v2981 = vunpack.c.l.b16 %v2949
        %v2982 = vunpack.c.l.b16 %v2950
        %v2983 = vunpack.c.l.b16 %v2951
        %v2984 = vunpack.c.l.b16 %v2952
        %v2985 = vunpack.c.l.b16 %v2953
        %v2986 = vunpack.c.l.b16 %v2954
        %v2987 = vunpack.c.l.b16 %v2955
        %v2988 = vunpack.c.l.b16 %v2956
        %v2989 = vunpack.c.l.b16 %v2957
        %v2990 = vunpack.c.l.b16 %v2958
        %v2991 = vunpack.c.l.b16 %v2959
        %v2992 = vpack.c.b16 %v2977, %v2976
        %v2993 = vpack.c.b16 %v2979, %v2978
        %v2994 = vpack.c.b16 %v2981, %v2980
        %v2995 = vpack.c.b16 %v2983, %v2982
        %v2996 = vpack.c.b16 %v2985, %v2984
        %v2997 = vpack.c.b16 %v2987, %v2986
        %v2998 = vpack.c.b16 %v2989, %v2988
        %v2999 = vpack.c.b16 %v2991, %v2990
        %3008 = vmatpush.bf16.msra.mxu0 %v2999
        %3009 = vmatpush.bf16.msra.mxu0 %v2998
        %3010 = vmatpush.bf16.msra.mxu0 %v2997
        %3011 = vmatpush.bf16.msra.mxu0 %v2996
        %3012 = vmatpush.bf16.msra.mxu0 %v2995
        %3013 = vmatpush.bf16.msra.mxu0 %v2994
        %3014 = vmatpush.bf16.msra.mxu0 %v2993
        %3015 = vmatpush.bf16.msra.mxu0 %v2992
        %3016 = vmatmul.bf16.gmra.mxu0 %v2943
        %v3017 = vpop.f32.mrf.mxu0
        %v3018 = vadd.f32 0.0, %v3017
        %v3019 = vpop.f32.mrf.mxu0
        %v3020 = vadd.f32 0.0, %v3019
        %3021 = vdwg.mxu0
        %v3038 = vunpack.c.l.b16 %v2903
        %v3039 = vunpack.c.l.b16 %v2904
        %v3040 = vunpack.c.l.b16 %v2905
        %v3041 = vunpack.c.l.b16 %v2906
        %v3042 = vunpack.c.l.b16 %v2907
        %v3043 = vunpack.c.l.b16 %v2908
        %v3044 = vunpack.c.l.b16 %v2909
        %v3045 = vunpack.c.l.b16 %v2910
        %v3046 = vunpack.c.l.b16 %v2911
        %v3047 = vunpack.c.l.b16 %v2912
        %v3048 = vunpack.c.l.b16 %v2913
        %v3049 = vunpack.c.l.b16 %v2914
        %v3050 = vunpack.c.l.b16 %v2915
        %v3051 = vunpack.c.l.b16 %v2916
        %v3052 = vunpack.c.l.b16 %v2917
        %v3053 = vunpack.c.l.b16 %v2918
        %v3054 = vpack.c.b16 %v3039, %v3038
        %v3055 = vpack.c.b16 %v3041, %v3040
        %v3056 = vpack.c.b16 %v3043, %v3042
        %v3057 = vpack.c.b16 %v3045, %v3044
        %v3058 = vpack.c.b16 %v3047, %v3046
        %v3059 = vpack.c.b16 %v3049, %v3048
        %v3060 = vpack.c.b16 %v3051, %v3050
        %v3061 = vpack.c.b16 %v3053, %v3052
        %3070 = vmatpush.bf16.msra.mxu0 %v3061
        %3071 = vmatpush.bf16.msra.mxu0 %v3060
        %3072 = vmatpush.bf16.msra.mxu0 %v3059
        %3073 = vmatpush.bf16.msra.mxu0 %v3058
        %3074 = vmatpush.bf16.msra.mxu0 %v3057
        %3075 = vmatpush.bf16.msra.mxu0 %v3056
        %3076 = vmatpush.bf16.msra.mxu0 %v3055
        %3077 = vmatpush.bf16.msra.mxu0 %v3054
        %3078 = vmatmul.bf16.gmra.mxu0 %v2902
        %v3079 = vpop.f32.mrf.mxu0
        %v3080 = vadd.f32 %v3018, %v3079
        %v3081 = vpop.f32.mrf.mxu0
        %v3082 = vadd.f32 %v3020, %v3081
        %3083 = vdwg.mxu0
        %v3084 = vld [vmem:[%s27] sm:$0x1]
        %v3086 = vperm.slane %v3084, 0
        %v3088 = vadd.f32 %v3080, %v3086
        %v3089 = vadd.f32 %v3082, %v3086
        %v3090 = vadd.f32 %v2423, %v3088
        %v3091 = vadd.f32 %v2424, %v3089
        %v3094 = vunpack.c.l.b16 %v2872
        %v3095 = vunpack.c.l.b16 %v2873
        %v3096 = vpack.c.b16 %v3095, %v3094
        %3098 = vmatpush.bf16.msra.mxu0 0
        %3099 = vmatpush.bf16.msra.mxu0 0
        %3100 = vmatpush.bf16.msra.mxu0 0
        %3101 = vmatpush.bf16.msra.mxu0 0
        %3102 = vmatpush.bf16.msra.mxu0 0
        %3103 = vmatpush.bf16.msra.mxu0 0
        %3104 = vmatpush.bf16.msra.mxu0 0
        %3105 = vmatpush.bf16.msra.mxu0 %v3096
        %3106 = vmatmul.bf16.gmra.mxu0 %v2886
        %v3107 = vpop.f32.mrf.mxu0
        %v3108 = vadd.f32 0.0, %v3107
        %v3109 = vpop.f32.mrf.mxu0
        %v3110 = vadd.f32 0.0, %v3109
        %3111 = vdwg.mxu0
        %v3114 = vunpack.c.l.b16 %v2874
        %v3115 = vunpack.c.l.b16 %v2875
        %v3116 = vpack.c.b16 %v3115, %v3114
        %3118 = vmatpush.bf16.msra.mxu0 0
        %3119 = vmatpush.bf16.msra.mxu0 0
        %3120 = vmatpush.bf16.msra.mxu0 0
        %3121 = vmatpush.bf16.msra.mxu0 0
        %3122 = vmatpush.bf16.msra.mxu0 0
        %3123 = vmatpush.bf16.msra.mxu0 0
        %3124 = vmatpush.bf16.msra.mxu0 0
        %3125 = vmatpush.bf16.msra.mxu0 %v3116
        %3126 = vmatmul.bf16.gmra.mxu0 %v2886
        %v3127 = vpop.f32.mrf.mxu0
        %v3128 = vadd.f32 0.0, %v3127
        %v3129 = vpop.f32.mrf.mxu0
        %v3130 = vadd.f32 0.0, %v3129
        %3131 = vdwg.mxu0
        %v3134 = vunpack.c.l.b16 %v2876
        %v3135 = vunpack.c.l.b16 %v2877
        %v3136 = vpack.c.b16 %v3135, %v3134
        %3138 = vmatpush.bf16.msra.mxu0 0
        %3139 = vmatpush.bf16.msra.mxu0 0
        %3140 = vmatpush.bf16.msra.mxu0 0
        %3141 = vmatpush.bf16.msra.mxu0 0
        %3142 = vmatpush.bf16.msra.mxu0 0
        %3143 = vmatpush.bf16.msra.mxu0 0
        %3144 = vmatpush.bf16.msra.mxu0 0
        %3145 = vmatpush.bf16.msra.mxu0 %v3136
        %3146 = vmatmul.bf16.gmra.mxu0 %v2886
        %v3147 = vpop.f32.mrf.mxu0
        %v3148 = vadd.f32 0.0, %v3147
        %v3149 = vpop.f32.mrf.mxu0
        %v3150 = vadd.f32 0.0, %v3149
        %3151 = vdwg.mxu0
        %v3152 = vpack.c.bf16 %v3110, %v3108
        %v3153 = vpack.c.bf16 %v3130, %v3128
        %v3154 = vpack.c.bf16 %v3150, %v3148
        %v3155 = vld [vmem:[#allocation16] sm:$0xf]
        %v3156 = vld [vmem:[#allocation16 + $0x4] sm:$0xf]
        %v3157 = vld [vmem:[#allocation16 + $0x8] sm:$0xf]
        %v3158 = vld [vmem:[#allocation16 + $0xc] sm:$0xf]
        %v3159 = vld [vmem:[#allocation16 + $0x10] sm:$0xf]
        %v3160 = vld [vmem:[#allocation16 + $0x14] sm:$0xf]
        %v3161 = vld [vmem:[#allocation16 + $0x18] sm:$0xf]
        %v3162 = vld [vmem:[#allocation16 + $0x1c] sm:$0xf]
        %v3163 = vld [vmem:[#allocation16 + $0x20] sm:$0xf]
        %v3164 = vld [vmem:[#allocation16 + $0x24] sm:$0xf]
        %v3165 = vld [vmem:[#allocation16 + $0x28] sm:$0xf]
        %v3166 = vld [vmem:[#allocation16 + $0x2c] sm:$0xf]
        %v3167 = vld [vmem:[#allocation16 + $0x30] sm:$0xf]
        %v3168 = vld [vmem:[#allocation16 + $0x34] sm:$0xf]
        %v3169 = vld [vmem:[#allocation16 + $0x38] sm:$0xf]
        %v3170 = vld [vmem:[#allocation16 + $0x3c] sm:$0xf]
        %3171 = vmatpush.bf16.msra.mxu0 0
        %3172 = vmatpush.bf16.msra.mxu0 0
        %3173 = vmatpush.bf16.msra.mxu0 0
        %3174 = vmatpush.bf16.msra.mxu0 0
        %3175 = vmatpush.bf16.msra.mxu0 0
        %3176 = vmatpush.bf16.msra.mxu0 0
        %3177 = vmatpush.bf16.msra.mxu0 0
        %3178 = vmatpush.bf16.msra.mxu0 %v3096
        %3179 = vmatmul.bf16.gmra.mxu0 %v2927
        %v3180 = vpop.f32.mrf.mxu0
        %v3181 = vadd.f32 0.0, %v3180
        %v3182 = vpop.f32.mrf.mxu0
        %v3183 = vadd.f32 0.0, %v3182
        %3184 = vdwg.mxu0
        %3185 = vmatpush.bf16.msra.mxu0 0
        %3186 = vmatpush.bf16.msra.mxu0 0
        %3187 = vmatpush.bf16.msra.mxu0 0
        %3188 = vmatpush.bf16.msra.mxu0 0
        %3189 = vmatpush.bf16.msra.mxu0 0
        %3190 = vmatpush.bf16.msra.mxu0 0
        %3191 = vmatpush.bf16.msra.mxu0 0
        %3192 = vmatpush.bf16.msra.mxu0 %v3116
        %3193 = vmatmul.bf16.gmra.mxu0 %v2927
        %v3194 = vpop.f32.mrf.mxu0
        %v3195 = vadd.f32 0.0, %v3194
        %v3196 = vpop.f32.mrf.mxu0
        %v3197 = vadd.f32 0.0, %v3196
        %3198 = vdwg.mxu0
        %3199 = vmatpush.bf16.msra.mxu0 0
        %3200 = vmatpush.bf16.msra.mxu0 0
        %3201 = vmatpush.bf16.msra.mxu0 0
        %3202 = vmatpush.bf16.msra.mxu0 0
        %3203 = vmatpush.bf16.msra.mxu0 0
        %3204 = vmatpush.bf16.msra.mxu0 0
        %3205 = vmatpush.bf16.msra.mxu0 0
        %3206 = vmatpush.bf16.msra.mxu0 %v3136
        %3207 = vmatmul.bf16.gmra.mxu0 %v2927
        %v3208 = vpop.f32.mrf.mxu0
        %v3209 = vadd.f32 0.0, %v3208
        %v3210 = vpop.f32.mrf.mxu0
        %v3211 = vadd.f32 0.0, %v3210
        %3212 = vdwg.mxu0
        %v3213 = vpack.c.bf16 %v3183, %v3181
        %v3214 = vpack.c.bf16 %v3197, %v3195
        %v3215 = vpack.c.bf16 %v3211, %v3209
        %v3216 = vld [vmem:[#allocation15] sm:$0xf]
        %v3217 = vld [vmem:[#allocation15 + $0x4] sm:$0xf]
        %v3218 = vld [vmem:[#allocation15 + $0x8] sm:$0xf]
        %v3219 = vld [vmem:[#allocation15 + $0xc] sm:$0xf]
        %v3220 = vld [vmem:[#allocation15 + $0x10] sm:$0xf]
        %v3221 = vld [vmem:[#allocation15 + $0x14] sm:$0xf]
        %v3222 = vld [vmem:[#allocation15 + $0x18] sm:$0xf]
        %v3223 = vld [vmem:[#allocation15 + $0x1c] sm:$0xf]
        %v3224 = vld [vmem:[#allocation15 + $0x20] sm:$0xf]
        %v3225 = vld [vmem:[#allocation15 + $0x24] sm:$0xf]
        %v3226 = vld [vmem:[#allocation15 + $0x28] sm:$0xf]
        %v3227 = vld [vmem:[#allocation15 + $0x2c] sm:$0xf]
        %v3228 = vld [vmem:[#allocation15 + $0x30] sm:$0xf]
        %v3229 = vld [vmem:[#allocation15 + $0x34] sm:$0xf]
        %v3230 = vld [vmem:[#allocation15 + $0x38] sm:$0xf]
        %v3231 = vld [vmem:[#allocation15 + $0x3c] sm:$0xf]
        %v3248 = vunpack.c.l.b16 %v3216
        %v3249 = vunpack.c.l.b16 %v3217
        %v3250 = vunpack.c.l.b16 %v3218
        %v3251 = vunpack.c.l.b16 %v3219
        %v3252 = vunpack.c.l.b16 %v3220
        %v3253 = vunpack.c.l.b16 %v3221
        %v3254 = vunpack.c.l.b16 %v3222
        %v3255 = vunpack.c.l.b16 %v3223
        %v3256 = vunpack.c.l.b16 %v3224
        %v3257 = vunpack.c.l.b16 %v3225
        %v3258 = vunpack.c.l.b16 %v3226
        %v3259 = vunpack.c.l.b16 %v3227
        %v3260 = vunpack.c.l.b16 %v3228
        %v3261 = vunpack.c.l.b16 %v3229
        %v3262 = vunpack.c.l.b16 %v3230
        %v3263 = vunpack.c.l.b16 %v3231
        %v3264 = vpack.c.b16 %v3249, %v3248
        %v3265 = vpack.c.b16 %v3251, %v3250
        %v3266 = vpack.c.b16 %v3253, %v3252
        %v3267 = vpack.c.b16 %v3255, %v3254
        %v3268 = vpack.c.b16 %v3257, %v3256
        %v3269 = vpack.c.b16 %v3259, %v3258
        %v3270 = vpack.c.b16 %v3261, %v3260
        %v3271 = vpack.c.b16 %v3263, %v3262
        %3280 = vmatpush.bf16.msra.mxu0 %v3271
        %3281 = vmatpush.bf16.msra.mxu0 %v3270
        %3282 = vmatpush.bf16.msra.mxu0 %v3269
        %3283 = vmatpush.bf16.msra.mxu0 %v3268
        %3284 = vmatpush.bf16.msra.mxu0 %v3267
        %3285 = vmatpush.bf16.msra.mxu0 %v3266
        %3286 = vmatpush.bf16.msra.mxu0 %v3265
        %3287 = vmatpush.bf16.msra.mxu0 %v3264
        %3288 = vmatmul.bf16.gmra.mxu0 %v3213
        %v3289 = vpop.f32.mrf.mxu0
        %v3290 = vadd.f32 0.0, %v3289
        %v3291 = vpop.f32.mrf.mxu0
        %v3292 = vadd.f32 0.0, %v3291
        %3293 = vmatmul.bf16.gmra.mxu0 %v3214
        %v3294 = vpop.f32.mrf.mxu0
        %v3295 = vadd.f32 0.0, %v3294
        %v3296 = vpop.f32.mrf.mxu0
        %v3297 = vadd.f32 0.0, %v3296
        %3298 = vmatmul.bf16.gmra.mxu0 %v3215
        %v3299 = vpop.f32.mrf.mxu0
        %v3300 = vadd.f32 0.0, %v3299
        %v3301 = vpop.f32.mrf.mxu0
        %v3302 = vadd.f32 0.0, %v3301
        %3303 = vdwg.mxu0
        %v3320 = vunpack.c.l.b16 %v3155
        %v3321 = vunpack.c.l.b16 %v3156
        %v3322 = vunpack.c.l.b16 %v3157
        %v3323 = vunpack.c.l.b16 %v3158
        %v3324 = vunpack.c.l.b16 %v3159
        %v3325 = vunpack.c.l.b16 %v3160
        %v3326 = vunpack.c.l.b16 %v3161
        %v3327 = vunpack.c.l.b16 %v3162
        %v3328 = vunpack.c.l.b16 %v3163
        %v3329 = vunpack.c.l.b16 %v3164
        %v3330 = vunpack.c.l.b16 %v3165
        %v3331 = vunpack.c.l.b16 %v3166
        %v3332 = vunpack.c.l.b16 %v3167
        %v3333 = vunpack.c.l.b16 %v3168
        %v3334 = vunpack.c.l.b16 %v3169
        %v3335 = vunpack.c.l.b16 %v3170
        %v3336 = vpack.c.b16 %v3321, %v3320
        %v3337 = vpack.c.b16 %v3323, %v3322
        %v3338 = vpack.c.b16 %v3325, %v3324
        %v3339 = vpack.c.b16 %v3327, %v3326
        %v3340 = vpack.c.b16 %v3329, %v3328
        %v3341 = vpack.c.b16 %v3331, %v3330
        %v3342 = vpack.c.b16 %v3333, %v3332
        %v3343 = vpack.c.b16 %v3335, %v3334
        %3352 = vmatpush.bf16.msra.mxu0 %v3343
        %3353 = vmatpush.bf16.msra.mxu0 %v3342
        %3354 = vmatpush.bf16.msra.mxu0 %v3341
        %3355 = vmatpush.bf16.msra.mxu0 %v3340
        %3356 = vmatpush.bf16.msra.mxu0 %v3339
        %3357 = vmatpush.bf16.msra.mxu0 %v3338
        %3358 = vmatpush.bf16.msra.mxu0 %v3337
        %3359 = vmatpush.bf16.msra.mxu0 %v3336
        %3360 = vmatmul.bf16.gmra.mxu0 %v3152
        %v3361 = vpop.f32.mrf.mxu0
        %v3362 = vadd.f32 %v3290, %v3361
        %v3363 = vpop.f32.mrf.mxu0
        %v3364 = vadd.f32 %v3292, %v3363
        %3365 = vmatmul.bf16.gmra.mxu0 %v3153
        %v3366 = vpop.f32.mrf.mxu0
        %v3367 = vadd.f32 %v3295, %v3366
        %v3368 = vpop.f32.mrf.mxu0
        %v3369 = vadd.f32 %v3297, %v3368
        %3370 = vmatmul.bf16.gmra.mxu0 %v3154
        %v3371 = vpop.f32.mrf.mxu0
        %v3372 = vadd.f32 %v3300, %v3371
        %v3373 = vpop.f32.mrf.mxu0
        %v3374 = vadd.f32 %v3302, %v3373
        %3375 = vdwg.mxu0
        %v3376 = vadd.f32 %v2431, %v3362
        %v3377 = vadd.f32 %v2432, %v3364
        %v3378 = vadd.f32 %v2433, %v3367
        %v3379 = vadd.f32 %v2434, %v3369
        %v3380 = vadd.f32 %v2435, %v3372
        %v3381 = vadd.f32 %v2436, %v3374
        %v3382 = vld [vmem:[%s2399] sm:$0x1]
        %v3383 = vpack.c.bf16 %v3382, %v3382
        %v3384 = vld [vmem:[#allocation10] sm:$0xf]
        %v3385 = vld [vmem:[#allocation10 + $0x4] sm:$0xf]
        %v3386 = vld [vmem:[#allocation10 + $0x8] sm:$0xf]
        %v3387 = vld [vmem:[#allocation10 + $0xc] sm:$0xf]
        %v3388 = vld [vmem:[#allocation10 + $0x10] sm:$0xf]
        %v3389 = vld [vmem:[#allocation10 + $0x14] sm:$0xf]
        %v3390 = vld [vmem:[#allocation10 + $0x18] sm:$0xf]
        %v3391 = vld [vmem:[#allocation10 + $0x1c] sm:$0xf]
        %v3392 = vld [vmem:[#allocation10 + $0x20] sm:$0xf]
        %v3393 = vld [vmem:[#allocation10 + $0x24] sm:$0xf]
        %v3394 = vld [vmem:[#allocation10 + $0x28] sm:$0xf]
        %v3395 = vld [vmem:[#allocation10 + $0x2c] sm:$0xf]
        %v3396 = vld [vmem:[#allocation10 + $0x30] sm:$0xf]
        %v3397 = vld [vmem:[#allocation10 + $0x34] sm:$0xf]
        %v3398 = vld [vmem:[#allocation10 + $0x38] sm:$0xf]
        %v3399 = vld [vmem:[#allocation10 + $0x3c] sm:$0xf]
        %v3400 = vld [vmem:[%s45] sm:$0x1]
        %v3417 = vunpack.c.l.b16 %v3384
        %v3418 = vunpack.c.l.b16 %v3385
        %v3419 = vunpack.c.l.b16 %v3386
        %v3420 = vunpack.c.l.b16 %v3387
        %v3421 = vunpack.c.l.b16 %v3388
        %v3422 = vunpack.c.l.b16 %v3389
        %v3423 = vunpack.c.l.b16 %v3390
        %v3424 = vunpack.c.l.b16 %v3391
        %v3425 = vunpack.c.l.b16 %v3392
        %v3426 = vunpack.c.l.b16 %v3393
        %v3427 = vunpack.c.l.b16 %v3394
        %v3428 = vunpack.c.l.b16 %v3395
        %v3429 = vunpack.c.l.b16 %v3396
        %v3430 = vunpack.c.l.b16 %v3397
        %v3431 = vunpack.c.l.b16 %v3398
        %v3432 = vunpack.c.l.b16 %v3399
        %v3433 = vpack.c.b16 %v3418, %v3417
        %v3434 = vpack.c.b16 %v3420, %v3419
        %v3435 = vpack.c.b16 %v3422, %v3421
        %v3436 = vpack.c.b16 %v3424, %v3423
        %v3437 = vpack.c.b16 %v3426, %v3425
        %v3438 = vpack.c.b16 %v3428, %v3427
        %v3439 = vpack.c.b16 %v3430, %v3429
        %v3440 = vpack.c.b16 %v3432, %v3431
        %3449 = vmatpush.bf16.msra.mxu0 %v3440
        %3450 = vmatpush.bf16.msra.mxu0 %v3439
        %3451 = vmatpush.bf16.msra.mxu0 %v3438
        %3452 = vmatpush.bf16.msra.mxu0 %v3437
        %3453 = vmatpush.bf16.msra.mxu0 %v3436
        %3454 = vmatpush.bf16.msra.mxu0 %v3435
        %3455 = vmatpush.bf16.msra.mxu0 %v3434
        %3456 = vmatpush.bf16.msra.mxu0 %v3433
        %3457 = vmatmul.bf16.gmra.mxu0 %v3383
        %v3458 = vpop.f32.mrf.mxu0
        %v3459 = vadd.f32 %v3400, %v3458
        %v3460 = vpop.f32.mrf.mxu0
        %3461 = vdwg.mxu0
        %v3462 = vperm.slane %v3459, 0
        %v3463 = vadd.f32 %v2630, %v3462
        %v3464 = vadd.f32 %v2631, %v3462
        %v3465 = vpack.c.bf16 %v3464, %v3463
        %v3466 = vpack.c.bf16 %v3091, %v3090
        %v3467 = vpack.c.bf16 %v3377, %v3376
        %v3468 = vpack.c.bf16 %v3379, %v3378
        %v3469 = vpack.c.bf16 %v3381, %v3380
        %v3470 = vld [vmem:[%s77] sm:$0xf]
        %v3471 = vld [vmem:[%s77 + $0x4] sm:$0xf]
        %v3472 = vld [vmem:[%s77 + $0x8] sm:$0xf]
        %v3473 = vld [vmem:[%s77 + $0xc] sm:$0xf]
        %v3474 = vld [vmem:[%s77 + $0x10] sm:$0xf]
        %v3475 = vld [vmem:[%s77 + $0x14] sm:$0xf]
        %v3476 = vld [vmem:[%s77 + $0x18] sm:$0xf]
        %v3477 = vld [vmem:[%s77 + $0x1c] sm:$0xf]
        %v3478 = vld [vmem:[%s77 + $0x20] sm:$0xf]
        %v3479 = vld [vmem:[%s77 + $0x24] sm:$0xf]
        %v3480 = vld [vmem:[%s77 + $0x28] sm:$0xf]
        %v3481 = vld [vmem:[%s77 + $0x2c] sm:$0xf]
        %v3482 = vld [vmem:[%s77 + $0x30] sm:$0xf]
        %v3483 = vld [vmem:[%s77 + $0x34] sm:$0xf]
        %v3484 = vld [vmem:[%s77 + $0x38] sm:$0xf]
        %v3485 = vld [vmem:[%s77 + $0x3c] sm:$0xf]
        %v3486 = vld [vmem:[%s31] sm:$0x1]
        %v3488 = vperm.slane %v3486, 0
        %v3506 = vunpack.c.l.b16 %v3470
        %v3507 = vunpack.c.l.b16 %v3471
        %v3508 = vunpack.c.l.b16 %v3472
        %v3509 = vunpack.c.l.b16 %v3473
        %v3510 = vunpack.c.l.b16 %v3474
        %v3511 = vunpack.c.l.b16 %v3475
        %v3512 = vunpack.c.l.b16 %v3476
        %v3513 = vunpack.c.l.b16 %v3477
        %v3514 = vunpack.c.l.b16 %v3478
        %v3515 = vunpack.c.l.b16 %v3479
        %v3516 = vunpack.c.l.b16 %v3480
        %v3517 = vunpack.c.l.b16 %v3481
        %v3518 = vunpack.c.l.b16 %v3482
        %v3519 = vunpack.c.l.b16 %v3483
        %v3520 = vunpack.c.l.b16 %v3484
        %v3521 = vunpack.c.l.b16 %v3485
        %v3522 = vpack.c.b16 %v3507, %v3506
        %v3523 = vpack.c.b16 %v3509, %v3508
        %v3524 = vpack.c.b16 %v3511, %v3510
        %v3525 = vpack.c.b16 %v3513, %v3512
        %v3526 = vpack.c.b16 %v3515, %v3514
        %v3527 = vpack.c.b16 %v3517, %v3516
        %v3528 = vpack.c.b16 %v3519, %v3518
        %v3529 = vpack.c.b16 %v3521, %v3520
        %3538 = vmatpush.bf16.msra.mxu0 %v3529
        %3539 = vmatpush.bf16.msra.mxu0 %v3528
        %3540 = vmatpush.bf16.msra.mxu0 %v3527
        %3541 = vmatpush.bf16.msra.mxu0 %v3526
        %3542 = vmatpush.bf16.msra.mxu0 %v3525
        %3543 = vmatpush.bf16.msra.mxu0 %v3524
        %3544 = vmatpush.bf16.msra.mxu0 %v3523
        %3545 = vmatpush.bf16.msra.mxu0 %v3522
        %3546 = vmatmul.bf16.gmra.mxu0 %v3465
        %v3547 = vpop.f32.mrf.mxu0
        %v3548 = vadd.f32 %v3488, %v3547
        %v3549 = vpop.f32.mrf.mxu0
        %v3550 = vadd.f32 %v3488, %v3549
        %3551 = vdwg.mxu0
        %vm3552 = vcmp.gt.f32.partialorder %v3548, 0.0
        %vm3553 = vcmp.gt.f32.partialorder %v3550, 0.0
        %v3554 = vmul.f32 %v3548, 0.2
        %v3555 = vmul.f32 %v3550, 0.2
        %v3556 = vsel %vm3552, %v3548, %v3554
        %v3557 = vsel %vm3553, %v3550, %v3555
        %v3558 = vpack.c.bf16 %v3557, %v3556
        %v3559 = vld [vmem:[%s79] sm:$0xf]
        %v3560 = vld [vmem:[%s79 + $0x4] sm:$0xf]
        %v3561 = vld [vmem:[%s79 + $0x8] sm:$0xf]
        %v3562 = vld [vmem:[%s79 + $0xc] sm:$0xf]
        %v3563 = vld [vmem:[%s79 + $0x10] sm:$0xf]
        %v3564 = vld [vmem:[%s79 + $0x14] sm:$0xf]
        %v3565 = vld [vmem:[%s79 + $0x18] sm:$0xf]
        %v3566 = vld [vmem:[%s79 + $0x1c] sm:$0xf]
        %v3567 = vld [vmem:[%s79 + $0x20] sm:$0xf]
        %v3568 = vld [vmem:[%s79 + $0x24] sm:$0xf]
        %v3569 = vld [vmem:[%s79 + $0x28] sm:$0xf]
        %v3570 = vld [vmem:[%s79 + $0x2c] sm:$0xf]
        %v3571 = vld [vmem:[%s79 + $0x30] sm:$0xf]
        %v3572 = vld [vmem:[%s79 + $0x34] sm:$0xf]
        %v3573 = vld [vmem:[%s79 + $0x38] sm:$0xf]
        %v3574 = vld [vmem:[%s79 + $0x3c] sm:$0xf]
        %v3575 = vld [vmem:[%s33] sm:$0x1]
        %v3577 = vperm.slane %v3575, 0
        %v3595 = vunpack.c.l.b16 %v3559
        %v3596 = vunpack.c.l.b16 %v3560
        %v3597 = vunpack.c.l.b16 %v3561
        %v3598 = vunpack.c.l.b16 %v3562
        %v3599 = vunpack.c.l.b16 %v3563
        %v3600 = vunpack.c.l.b16 %v3564
        %v3601 = vunpack.c.l.b16 %v3565
        %v3602 = vunpack.c.l.b16 %v3566
        %v3603 = vunpack.c.l.b16 %v3567
        %v3604 = vunpack.c.l.b16 %v3568
        %v3605 = vunpack.c.l.b16 %v3569
        %v3606 = vunpack.c.l.b16 %v3570
        %v3607 = vunpack.c.l.b16 %v3571
        %v3608 = vunpack.c.l.b16 %v3572
        %v3609 = vunpack.c.l.b16 %v3573
        %v3610 = vunpack.c.l.b16 %v3574
        %v3611 = vpack.c.b16 %v3596, %v3595
        %v3612 = vpack.c.b16 %v3598, %v3597
        %v3613 = vpack.c.b16 %v3600, %v3599
        %v3614 = vpack.c.b16 %v3602, %v3601
        %v3615 = vpack.c.b16 %v3604, %v3603
        %v3616 = vpack.c.b16 %v3606, %v3605
        %v3617 = vpack.c.b16 %v3608, %v3607
        %v3618 = vpack.c.b16 %v3610, %v3609
        %3627 = vmatpush.bf16.msra.mxu0 %v3618
        %3628 = vmatpush.bf16.msra.mxu0 %v3617
        %3629 = vmatpush.bf16.msra.mxu0 %v3616
        %3630 = vmatpush.bf16.msra.mxu0 %v3615
        %3631 = vmatpush.bf16.msra.mxu0 %v3614
        %3632 = vmatpush.bf16.msra.mxu0 %v3613
        %3633 = vmatpush.bf16.msra.mxu0 %v3612
        %3634 = vmatpush.bf16.msra.mxu0 %v3611
        %3635 = vmatmul.bf16.gmra.mxu0 %v3558
        %v3636 = vpop.f32.mrf.mxu0
        %v3637 = vadd.f32 %v3577, %v3636
        %v3638 = vpop.f32.mrf.mxu0
        %v3639 = vadd.f32 %v3577, %v3638
        %3640 = vdwg.mxu0
        %vm3641 = vcmp.gt.f32.partialorder %v3637, 0.0
        %vm3642 = vcmp.gt.f32.partialorder %v3639, 0.0
        %v3643 = vmul.f32 %v3637, 0.2
        %v3644 = vmul.f32 %v3639, 0.2
        %v3645 = vsel %vm3641, %v3637, %v3643
        %v3646 = vsel %vm3642, %v3639, %v3644
        %v3647 = vpack.c.bf16 %v3646, %v3645
        %v3648 = vld [vmem:[%s81] sm:$0xf]
        %v3649 = vld [vmem:[%s81 + $0x4] sm:$0xf]
        %v3650 = vld [vmem:[%s81 + $0x8] sm:$0xf]
        %v3651 = vld [vmem:[%s81 + $0xc] sm:$0xf]
        %v3652 = vld [vmem:[%s81 + $0x10] sm:$0xf]
        %v3653 = vld [vmem:[%s81 + $0x14] sm:$0xf]
        %v3654 = vld [vmem:[%s81 + $0x18] sm:$0xf]
        %v3655 = vld [vmem:[%s81 + $0x1c] sm:$0xf]
        %v3656 = vld [vmem:[%s81 + $0x20] sm:$0xf]
        %v3657 = vld [vmem:[%s81 + $0x24] sm:$0xf]
        %v3658 = vld [vmem:[%s81 + $0x28] sm:$0xf]
        %v3659 = vld [vmem:[%s81 + $0x2c] sm:$0xf]
        %v3660 = vld [vmem:[%s81 + $0x30] sm:$0xf]
        %v3661 = vld [vmem:[%s81 + $0x34] sm:$0xf]
        %v3662 = vld [vmem:[%s81 + $0x38] sm:$0xf]
        %v3663 = vld [vmem:[%s81 + $0x3c] sm:$0xf]
        %v3664 = vld [vmem:[%s35] sm:$0x1]
        %v3666 = vperm.slane %v3664, 0
        %v3684 = vunpack.c.l.b16 %v3648
        %v3685 = vunpack.c.l.b16 %v3649
        %v3686 = vunpack.c.l.b16 %v3650
        %v3687 = vunpack.c.l.b16 %v3651
        %v3688 = vunpack.c.l.b16 %v3652
        %v3689 = vunpack.c.l.b16 %v3653
        %v3690 = vunpack.c.l.b16 %v3654
        %v3691 = vunpack.c.l.b16 %v3655
        %v3692 = vunpack.c.l.b16 %v3656
        %v3693 = vunpack.c.l.b16 %v3657
        %v3694 = vunpack.c.l.b16 %v3658
        %v3695 = vunpack.c.l.b16 %v3659
        %v3696 = vunpack.c.l.b16 %v3660
        %v3697 = vunpack.c.l.b16 %v3661
        %v3698 = vunpack.c.l.b16 %v3662
        %v3699 = vunpack.c.l.b16 %v3663
        %v3700 = vpack.c.b16 %v3685, %v3684
        %v3701 = vpack.c.b16 %v3687, %v3686
        %v3702 = vpack.c.b16 %v3689, %v3688
        %v3703 = vpack.c.b16 %v3691, %v3690
        %v3704 = vpack.c.b16 %v3693, %v3692
        %v3705 = vpack.c.b16 %v3695, %v3694
        %v3706 = vpack.c.b16 %v3697, %v3696
        %v3707 = vpack.c.b16 %v3699, %v3698
        %3716 = vmatpush.bf16.msra.mxu0 %v3707
        %3717 = vmatpush.bf16.msra.mxu0 %v3706
        %3718 = vmatpush.bf16.msra.mxu0 %v3705
        %3719 = vmatpush.bf16.msra.mxu0 %v3704
        %3720 = vmatpush.bf16.msra.mxu0 %v3703
        %3721 = vmatpush.bf16.msra.mxu0 %v3702
        %3722 = vmatpush.bf16.msra.mxu0 %v3701
        %3723 = vmatpush.bf16.msra.mxu0 %v3700
        %3724 = vmatmul.bf16.gmra.mxu0 %v3647
        %v3725 = vpop.f32.mrf.mxu0
        %v3726 = vadd.f32 %v3666, %v3725
        %v3727 = vpop.f32.mrf.mxu0
        %v3728 = vadd.f32 %v3666, %v3727
        %3729 = vdwg.mxu0
        %v3730 = vld [vmem:[%s63] sm:$0xf]
        %v3731 = vld [vmem:[%s63 + $0x4] sm:$0xf]
        %v3732 = vld [vmem:[%s63 + $0x8] sm:$0xf]
        %v3733 = vld [vmem:[%s63 + $0xc] sm:$0xf]
        %v3734 = vld [vmem:[%s63 + $0x10] sm:$0xf]
        %v3735 = vld [vmem:[%s63 + $0x14] sm:$0xf]
        %v3736 = vld [vmem:[%s63 + $0x18] sm:$0xf]
        %v3737 = vld [vmem:[%s63 + $0x1c] sm:$0xf]
        %v3738 = vld [vmem:[%s63 + $0x20] sm:$0xf]
        %v3739 = vld [vmem:[%s63 + $0x24] sm:$0xf]
        %v3740 = vld [vmem:[%s63 + $0x28] sm:$0xf]
        %v3741 = vld [vmem:[%s63 + $0x2c] sm:$0xf]
        %v3742 = vld [vmem:[%s63 + $0x30] sm:$0xf]
        %v3743 = vld [vmem:[%s63 + $0x34] sm:$0xf]
        %v3744 = vld [vmem:[%s63 + $0x38] sm:$0xf]
        %v3745 = vld [vmem:[%s63 + $0x3c] sm:$0xf]
        %v3746 = vld [vmem:[%s21] sm:$0x1]
        %v3748 = vperm.slane %v3746, 0
        %v3766 = vunpack.c.l.b16 %v3730
        %v3767 = vunpack.c.l.b16 %v3731
        %v3768 = vunpack.c.l.b16 %v3732
        %v3769 = vunpack.c.l.b16 %v3733
        %v3770 = vunpack.c.l.b16 %v3734
        %v3771 = vunpack.c.l.b16 %v3735
        %v3772 = vunpack.c.l.b16 %v3736
        %v3773 = vunpack.c.l.b16 %v3737
        %v3774 = vunpack.c.l.b16 %v3738
        %v3775 = vunpack.c.l.b16 %v3739
        %v3776 = vunpack.c.l.b16 %v3740
        %v3777 = vunpack.c.l.b16 %v3741
        %v3778 = vunpack.c.l.b16 %v3742
        %v3779 = vunpack.c.l.b16 %v3743
        %v3780 = vunpack.c.l.b16 %v3744
        %v3781 = vunpack.c.l.b16 %v3745
        %v3782 = vpack.c.b16 %v3767, %v3766
        %v3783 = vpack.c.b16 %v3769, %v3768
        %v3784 = vpack.c.b16 %v3771, %v3770
        %v3785 = vpack.c.b16 %v3773, %v3772
        %v3786 = vpack.c.b16 %v3775, %v3774
        %v3787 = vpack.c.b16 %v3777, %v3776
        %v3788 = vpack.c.b16 %v3779, %v3778
        %v3789 = vpack.c.b16 %v3781, %v3780
        %3798 = vmatpush.bf16.msra.mxu0 %v3789
        %3799 = vmatpush.bf16.msra.mxu0 %v3788
        %3800 = vmatpush.bf16.msra.mxu0 %v3787
        %3801 = vmatpush.bf16.msra.mxu0 %v3786
        %3802 = vmatpush.bf16.msra.mxu0 %v3785
        %3803 = vmatpush.bf16.msra.mxu0 %v3784
        %3804 = vmatpush.bf16.msra.mxu0 %v3783
        %3805 = vmatpush.bf16.msra.mxu0 %v3782
        %3806 = vmatmul.bf16.gmra.mxu0 %v3466
        %v3807 = vpop.f32.mrf.mxu0
        %v3808 = vadd.f32 %v3748, %v3807
        %v3809 = vpop.f32.mrf.mxu0
        %v3810 = vadd.f32 %v3748, %v3809
        %3811 = vdwg.mxu0
        %vm3812 = vcmp.gt.f32.partialorder %v3808, 0.0
        %vm3813 = vcmp.gt.f32.partialorder %v3810, 0.0
        %v3814 = vmul.f32 %v3808, 0.2
        %v3815 = vmul.f32 %v3810, 0.2
        %v3816 = vsel %vm3812, %v3808, %v3814
        %v3817 = vsel %vm3813, %v3810, %v3815
        %v3818 = vpack.c.bf16 %v3817, %v3816
        %v3819 = vld [vmem:[%s65] sm:$0xf]
        %v3820 = vld [vmem:[%s65 + $0x4] sm:$0xf]
        %v3821 = vld [vmem:[%s65 + $0x8] sm:$0xf]
        %v3822 = vld [vmem:[%s65 + $0xc] sm:$0xf]
        %v3823 = vld [vmem:[%s65 + $0x10] sm:$0xf]
        %v3824 = vld [vmem:[%s65 + $0x14] sm:$0xf]
        %v3825 = vld [vmem:[%s65 + $0x18] sm:$0xf]
        %v3826 = vld [vmem:[%s65 + $0x1c] sm:$0xf]
        %v3827 = vld [vmem:[%s65 + $0x20] sm:$0xf]
        %v3828 = vld [vmem:[%s65 + $0x24] sm:$0xf]
        %v3829 = vld [vmem:[%s65 + $0x28] sm:$0xf]
        %v3830 = vld [vmem:[%s65 + $0x2c] sm:$0xf]
        %v3831 = vld [vmem:[%s65 + $0x30] sm:$0xf]
        %v3832 = vld [vmem:[%s65 + $0x34] sm:$0xf]
        %v3833 = vld [vmem:[%s65 + $0x38] sm:$0xf]
        %v3834 = vld [vmem:[%s65 + $0x3c] sm:$0xf]
        %v3835 = vld [vmem:[%s23] sm:$0x1]
        %v3837 = vperm.slane %v3835, 0
        %v3855 = vunpack.c.l.b16 %v3819
        %v3856 = vunpack.c.l.b16 %v3820
        %v3857 = vunpack.c.l.b16 %v3821
        %v3858 = vunpack.c.l.b16 %v3822
        %v3859 = vunpack.c.l.b16 %v3823
        %v3860 = vunpack.c.l.b16 %v3824
        %v3861 = vunpack.c.l.b16 %v3825
        %v3862 = vunpack.c.l.b16 %v3826
        %v3863 = vunpack.c.l.b16 %v3827
        %v3864 = vunpack.c.l.b16 %v3828
        %v3865 = vunpack.c.l.b16 %v3829
        %v3866 = vunpack.c.l.b16 %v3830
        %v3867 = vunpack.c.l.b16 %v3831
        %v3868 = vunpack.c.l.b16 %v3832
        %v3869 = vunpack.c.l.b16 %v3833
        %v3870 = vunpack.c.l.b16 %v3834
        %v3871 = vpack.c.b16 %v3856, %v3855
        %v3872 = vpack.c.b16 %v3858, %v3857
        %v3873 = vpack.c.b16 %v3860, %v3859
        %v3874 = vpack.c.b16 %v3862, %v3861
        %v3875 = vpack.c.b16 %v3864, %v3863
        %v3876 = vpack.c.b16 %v3866, %v3865
        %v3877 = vpack.c.b16 %v3868, %v3867
        %v3878 = vpack.c.b16 %v3870, %v3869
        %3887 = vmatpush.bf16.msra.mxu0 %v3878
        %3888 = vmatpush.bf16.msra.mxu0 %v3877
        %3889 = vmatpush.bf16.msra.mxu0 %v3876
        %3890 = vmatpush.bf16.msra.mxu0 %v3875
        %3891 = vmatpush.bf16.msra.mxu0 %v3874
        %3892 = vmatpush.bf16.msra.mxu0 %v3873
        %3893 = vmatpush.bf16.msra.mxu0 %v3872
        %3894 = vmatpush.bf16.msra.mxu0 %v3871
        %3895 = vmatmul.bf16.gmra.mxu0 %v3818
        %v3896 = vpop.f32.mrf.mxu0
        %v3897 = vadd.f32 %v3837, %v3896
        %v3898 = vpop.f32.mrf.mxu0
        %v3899 = vadd.f32 %v3837, %v3898
        %3900 = vdwg.mxu0
        %vm3901 = vcmp.gt.f32.partialorder %v3897, 0.0
        %vm3902 = vcmp.gt.f32.partialorder %v3899, 0.0
        %v3903 = vmul.f32 %v3897, 0.2
        %v3904 = vmul.f32 %v3899, 0.2
        %v3905 = vsel %vm3901, %v3897, %v3903
        %v3906 = vsel %vm3902, %v3899, %v3904
        %v3907 = vpack.c.bf16 %v3906, %v3905
        %v3908 = vld [vmem:[%s67] sm:$0xf]
        %v3909 = vld [vmem:[%s67 + $0x4] sm:$0xf]
        %v3910 = vld [vmem:[%s67 + $0x8] sm:$0xf]
        %v3911 = vld [vmem:[%s67 + $0xc] sm:$0xf]
        %v3912 = vld [vmem:[%s67 + $0x10] sm:$0xf]
        %v3913 = vld [vmem:[%s67 + $0x14] sm:$0xf]
        %v3914 = vld [vmem:[%s67 + $0x18] sm:$0xf]
        %v3915 = vld [vmem:[%s67 + $0x1c] sm:$0xf]
        %v3916 = vld [vmem:[%s67 + $0x20] sm:$0xf]
        %v3917 = vld [vmem:[%s67 + $0x24] sm:$0xf]
        %v3918 = vld [vmem:[%s67 + $0x28] sm:$0xf]
        %v3919 = vld [vmem:[%s67 + $0x2c] sm:$0xf]
        %v3920 = vld [vmem:[%s67 + $0x30] sm:$0xf]
        %v3921 = vld [vmem:[%s67 + $0x34] sm:$0xf]
        %v3922 = vld [vmem:[%s67 + $0x38] sm:$0xf]
        %v3923 = vld [vmem:[%s67 + $0x3c] sm:$0xf]
        %v3924 = vld [vmem:[%s25] sm:$0x1]
        %v3926 = vperm.slane %v3924, 0
        %v3944 = vunpack.c.l.b16 %v3908
        %v3945 = vunpack.c.l.b16 %v3909
        %v3946 = vunpack.c.l.b16 %v3910
        %v3947 = vunpack.c.l.b16 %v3911
        %v3948 = vunpack.c.l.b16 %v3912
        %v3949 = vunpack.c.l.b16 %v3913
        %v3950 = vunpack.c.l.b16 %v3914
        %v3951 = vunpack.c.l.b16 %v3915
        %v3952 = vunpack.c.l.b16 %v3916
        %v3953 = vunpack.c.l.b16 %v3917
        %v3954 = vunpack.c.l.b16 %v3918
        %v3955 = vunpack.c.l.b16 %v3919
        %v3956 = vunpack.c.l.b16 %v3920
        %v3957 = vunpack.c.l.b16 %v3921
        %v3958 = vunpack.c.l.b16 %v3922
        %v3959 = vunpack.c.l.b16 %v3923
        %v3960 = vpack.c.b16 %v3945, %v3944
        %v3961 = vpack.c.b16 %v3947, %v3946
        %v3962 = vpack.c.b16 %v3949, %v3948
        %v3963 = vpack.c.b16 %v3951, %v3950
        %v3964 = vpack.c.b16 %v3953, %v3952
        %v3965 = vpack.c.b16 %v3955, %v3954
        %v3966 = vpack.c.b16 %v3957, %v3956
        %v3967 = vpack.c.b16 %v3959, %v3958
        %3976 = vmatpush.bf16.msra.mxu0 %v3967
        %3977 = vmatpush.bf16.msra.mxu0 %v3966
        %3978 = vmatpush.bf16.msra.mxu0 %v3965
        %3979 = vmatpush.bf16.msra.mxu0 %v3964
        %3980 = vmatpush.bf16.msra.mxu0 %v3963
        %3981 = vmatpush.bf16.msra.mxu0 %v3962
        %3982 = vmatpush.bf16.msra.mxu0 %v3961
        %3983 = vmatpush.bf16.msra.mxu0 %v3960
        %3984 = vmatmul.bf16.gmra.mxu0 %v3907
        %v3985 = vpop.f32.mrf.mxu0
        %v3986 = vadd.f32 %v3926, %v3985
        %v3987 = vpop.f32.mrf.mxu0
        %v3988 = vadd.f32 %v3926, %v3987
        %3989 = vdwg.mxu0
        %v3990 = vld [vmem:[#allocation21] sm:$0xf]
        %v3991 = vld [vmem:[#allocation21 + $0x4] sm:$0xf]
        %v3992 = vld [vmem:[#allocation21 + $0x8] sm:$0xf]
        %v3993 = vld [vmem:[#allocation21 + $0xc] sm:$0xf]
        %v3994 = vld [vmem:[#allocation21 + $0x10] sm:$0xf]
        %v3995 = vld [vmem:[#allocation21 + $0x14] sm:$0xf]
        %v3996 = vld [vmem:[#allocation21 + $0x18] sm:$0xf]
        %v3997 = vld [vmem:[#allocation21 + $0x1c] sm:$0xf]
        %v3998 = vld [vmem:[#allocation21 + $0x20] sm:$0xf]
        %v3999 = vld [vmem:[#allocation21 + $0x24] sm:$0xf]
        %v4000 = vld [vmem:[#allocation21 + $0x28] sm:$0xf]
        %v4001 = vld [vmem:[#allocation21 + $0x2c] sm:$0xf]
        %v4002 = vld [vmem:[#allocation21 + $0x30] sm:$0xf]
        %v4003 = vld [vmem:[#allocation21 + $0x34] sm:$0xf]
        %v4004 = vld [vmem:[#allocation21 + $0x38] sm:$0xf]
        %v4005 = vld [vmem:[#allocation21 + $0x3c] sm:$0xf]
        %v4022 = vunpack.c.l.b16 %v3990
        %v4023 = vunpack.c.l.b16 %v3991
        %v4024 = vunpack.c.l.b16 %v3992
        %v4025 = vunpack.c.l.b16 %v3993
        %v4026 = vunpack.c.l.b16 %v3994
        %v4027 = vunpack.c.l.b16 %v3995
        %v4028 = vunpack.c.l.b16 %v3996
        %v4029 = vunpack.c.l.b16 %v3997
        %v4030 = vunpack.c.l.b16 %v3998
        %v4031 = vunpack.c.l.b16 %v3999
        %v4032 = vunpack.c.l.b16 %v4000
        %v4033 = vunpack.c.l.b16 %v4001
        %v4034 = vunpack.c.l.b16 %v4002
        %v4035 = vunpack.c.l.b16 %v4003
        %v4036 = vunpack.c.l.b16 %v4004
        %v4037 = vunpack.c.l.b16 %v4005
        %v4038 = vpack.c.b16 %v4023, %v4022
        %v4039 = vpack.c.b16 %v4025, %v4024
        %v4040 = vpack.c.b16 %v4027, %v4026
        %v4041 = vpack.c.b16 %v4029, %v4028
        %v4042 = vpack.c.b16 %v4031, %v4030
        %v4043 = vpack.c.b16 %v4033, %v4032
        %v4044 = vpack.c.b16 %v4035, %v4034
        %v4045 = vpack.c.b16 %v4037, %v4036
        %4054 = vmatpush.bf16.msra.mxu0 %v4045
        %4055 = vmatpush.bf16.msra.mxu0 %v4044
        %4056 = vmatpush.bf16.msra.mxu0 %v4043
        %4057 = vmatpush.bf16.msra.mxu0 %v4042
        %4058 = vmatpush.bf16.msra.mxu0 %v4041
        %4059 = vmatpush.bf16.msra.mxu0 %v4040
        %4060 = vmatpush.bf16.msra.mxu0 %v4039
        %4061 = vmatpush.bf16.msra.mxu0 %v4038
        %4062 = vmatmul.bf16.gmra.mxu0 %v3096
        %v4063 = vpop.f32.mrf.mxu0
        %v4064 = vadd.f32 0.0, %v4063
        %v4065 = vpop.f32.mrf.mxu0
        %v4066 = vadd.f32 0.0, %v4065
        %4067 = vmatmul.bf16.gmra.mxu0 %v3116
        %v4068 = vpop.f32.mrf.mxu0
        %v4069 = vadd.f32 0.0, %v4068
        %v4070 = vpop.f32.mrf.mxu0
        %v4071 = vadd.f32 0.0, %v4070
        %4072 = vmatmul.bf16.gmra.mxu0 %v3136
        %v4073 = vpop.f32.mrf.mxu0
        %v4074 = vadd.f32 0.0, %v4073
        %v4075 = vpop.f32.mrf.mxu0
        %v4076 = vadd.f32 0.0, %v4075
        %4077 = vdwg.mxu0
        %v4078 = vmul.f32 %v4064, %v4064
        %v4079 = vmul.f32 %v4066, %v4066
        %v4080 = vmul.f32 %v4069, %v4069
        %v4081 = vmul.f32 %v4071, %v4071
        %v4082 = vadd.f32 %v4078, %v4080
        %v4083 = vadd.f32 %v4079, %v4081
        %v4084 = vmul.f32 %v4074, %v4074
        %v4085 = vmul.f32 %v4076, %v4076
        %v4086 = vadd.f32 %v4082, %v4084
        %v4087 = vadd.f32 %v4083, %v4085
        %v4088 = vadd.f32 %v4086, 1.0
        %v4089 = vadd.f32 %v4087, 1.0
        %v4090 = vrsqrt.pop %v4088
        %v4091 = vmul.f32 %v4090, %v4088
        %v4092 = vmul.f32 %v4091, %v4090
        %v4093 = vmul.f32 0.5, %v4092
        %v4094 = vsub.f32 1.5, %v4093
        %v4095 = vmul.f32 %v4090, %v4094
        %v4096 = vmul.f32 %v4088, %v4095
        %vm4097 = vcmp.eq.f32.partialorder %v4088, inf
        %v4098 = vsel %vm4097, %v4088, %v4096
        %vm4099 = vcmp.eq.f32.partialorder %v4088, 0.0
        %v4100 = vand.u32 %v4088, 2147483648
        %v4101 = vsel %vm4099, %v4100, %v4098
        %v4102 = vrsqrt.pop %v4089
        %v4103 = vmul.f32 %v4102, %v4089
        %v4104 = vmul.f32 %v4103, %v4102
        %v4105 = vmul.f32 0.5, %v4104
        %v4106 = vsub.f32 1.5, %v4105
        %v4107 = vmul.f32 %v4102, %v4106
        %v4108 = vmul.f32 %v4089, %v4107
        %vm4109 = vcmp.eq.f32.partialorder %v4089, inf
        %v4110 = vsel %vm4109, %v4089, %v4108
        %vm4111 = vcmp.eq.f32.partialorder %v4089, 0.0
        %v4112 = vand.u32 %v4089, 2147483648
        %v4113 = vsel %vm4111, %v4112, %v4110
        %v4114 = vrsqrt.pop %v4101
        %v4115 = vmul.f32 %v4114, %v4101
        %v4116 = vmul.f32 %v4115, %v4114
        %v4117 = vmul.f32 0.5, %v4116
        %v4118 = vsub.f32 1.5, %v4117
        %v4119 = vmul.f32 %v4114, %v4118
        %vm4120 = vweird.f32 %v4101
        %vm4121 = vweird.f32 %v4114
        %vm4122 = vmor %vm4120, %vm4121
        %v4123 = vsel %vm4122, %v4114, %v4119
        %v4124 = vrsqrt.pop %v4113
        %v4125 = vmul.f32 %v4124, %v4113
        %v4126 = vmul.f32 %v4125, %v4124
        %v4127 = vmul.f32 0.5, %v4126
        %v4128 = vsub.f32 1.5, %v4127
        %v4129 = vmul.f32 %v4124, %v4128
        %vm4130 = vweird.f32 %v4113
        %vm4131 = vweird.f32 %v4124
        %vm4132 = vmor %vm4130, %vm4131
        %v4133 = vsel %vm4132, %v4124, %v4129
        %v4134 = vmul.f32 %v4064, %v4123
        %v4135 = vmul.f32 %v4066, %v4133
        %v4136 = vmul.f32 %v4069, %v4123
        %v4137 = vmul.f32 %v4071, %v4133
        %v4138 = vmul.f32 %v4074, %v4123
        %v4139 = vmul.f32 %v4076, %v4133
        %v4140 = vpack.c.bf16 %v4135, %v4134
        %v4141 = vpack.c.bf16 %v4137, %v4136
        %v4142 = vpack.c.bf16 %v4139, %v4138
        %v4143 = vld [vmem:[#allocation22] sm:$0xf]
        %v4144 = vld [vmem:[#allocation22 + $0x4] sm:$0xf]
        %v4145 = vld [vmem:[#allocation22 + $0x8] sm:$0xf]
        %v4146 = vld [vmem:[#allocation22 + $0xc] sm:$0xf]
        %v4147 = vld [vmem:[#allocation22 + $0x10] sm:$0xf]
        %v4148 = vld [vmem:[#allocation22 + $0x14] sm:$0xf]
        %v4149 = vld [vmem:[#allocation22 + $0x18] sm:$0xf]
        %v4150 = vld [vmem:[#allocation22 + $0x1c] sm:$0xf]
        %v4151 = vld [vmem:[#allocation22 + $0x20] sm:$0xf]
        %v4152 = vld [vmem:[#allocation22 + $0x24] sm:$0xf]
        %v4153 = vld [vmem:[#allocation22 + $0x28] sm:$0xf]
        %v4154 = vld [vmem:[#allocation22 + $0x2c] sm:$0xf]
        %v4155 = vld [vmem:[#allocation22 + $0x30] sm:$0xf]
        %v4156 = vld [vmem:[#allocation22 + $0x34] sm:$0xf]
        %v4157 = vld [vmem:[#allocation22 + $0x38] sm:$0xf]
        %v4158 = vld [vmem:[#allocation22 + $0x3c] sm:$0xf]
        %v4159 = vld [vmem:[#allocation12] sm:$0xf]
        %v4160 = vld [vmem:[#allocation12 + $0x4] sm:$0xf]
        %v4161 = vld [vmem:[#allocation12 + $0x8] sm:$0xf]
        %v4162 = vld [vmem:[#allocation12 + $0xc] sm:$0xf]
        %v4163 = vld [vmem:[#allocation12 + $0x10] sm:$0xf]
        %v4164 = vld [vmem:[#allocation12 + $0x14] sm:$0xf]
        %v4165 = vld [vmem:[#allocation12 + $0x18] sm:$0xf]
        %v4166 = vld [vmem:[#allocation12 + $0x1c] sm:$0xf]
        %v4167 = vld [vmem:[#allocation12 + $0x20] sm:$0xf]
        %v4168 = vld [vmem:[#allocation12 + $0x24] sm:$0xf]
        %v4169 = vld [vmem:[#allocation12 + $0x28] sm:$0xf]
        %v4170 = vld [vmem:[#allocation12 + $0x2c] sm:$0xf]
        %v4171 = vld [vmem:[#allocation12 + $0x30] sm:$0xf]
        %v4172 = vld [vmem:[#allocation12 + $0x34] sm:$0xf]
        %v4173 = vld [vmem:[#allocation12 + $0x38] sm:$0xf]
        %v4174 = vld [vmem:[#allocation12 + $0x3c] sm:$0xf]
        %v4191 = vunpack.c.l.b16 %v4159
        %v4192 = vunpack.c.l.b16 %v4160
        %v4193 = vunpack.c.l.b16 %v4161
        %v4194 = vunpack.c.l.b16 %v4162
        %v4195 = vunpack.c.l.b16 %v4163
        %v4196 = vunpack.c.l.b16 %v4164
        %v4197 = vunpack.c.l.b16 %v4165
        %v4198 = vunpack.c.l.b16 %v4166
        %v4199 = vunpack.c.l.b16 %v4167
        %v4200 = vunpack.c.l.b16 %v4168
        %v4201 = vunpack.c.l.b16 %v4169
        %v4202 = vunpack.c.l.b16 %v4170
        %v4203 = vunpack.c.l.b16 %v4171
        %v4204 = vunpack.c.l.b16 %v4172
        %v4205 = vunpack.c.l.b16 %v4173
        %v4206 = vunpack.c.l.b16 %v4174
        %v4207 = vpack.c.b16 %v4192, %v4191
        %v4208 = vpack.c.b16 %v4194, %v4193
        %v4209 = vpack.c.b16 %v4196, %v4195
        %v4210 = vpack.c.b16 %v4198, %v4197
        %v4211 = vpack.c.b16 %v4200, %v4199
        %v4212 = vpack.c.b16 %v4202, %v4201
        %v4213 = vpack.c.b16 %v4204, %v4203
        %v4214 = vpack.c.b16 %v4206, %v4205
        %4223 = vmatpush.bf16.msra.mxu0 %v4214
        %4224 = vmatpush.bf16.msra.mxu0 %v4213
        %4225 = vmatpush.bf16.msra.mxu0 %v4212
        %4226 = vmatpush.bf16.msra.mxu0 %v4211
        %4227 = vmatpush.bf16.msra.mxu0 %v4210
        %4228 = vmatpush.bf16.msra.mxu0 %v4209
        %4229 = vmatpush.bf16.msra.mxu0 %v4208
        %4230 = vmatpush.bf16.msra.mxu0 %v4207
        %4231 = vmatmul.bf16.gmra.mxu0 %v3467
        %v4232 = vpop.f32.mrf.mxu0
        %v4233 = vadd.f32 0.0, %v4232
        %v4234 = vpop.f32.mrf.mxu0
        %v4235 = vadd.f32 0.0, %v4234
        %4236 = vmatmul.bf16.gmra.mxu0 %v3468
        %v4237 = vpop.f32.mrf.mxu0
        %v4238 = vadd.f32 0.0, %v4237
        %v4239 = vpop.f32.mrf.mxu0
        %v4240 = vadd.f32 0.0, %v4239
        %4241 = vmatmul.bf16.gmra.mxu0 %v3469
        %v4242 = vpop.f32.mrf.mxu0
        %v4243 = vadd.f32 0.0, %v4242
        %v4244 = vpop.f32.mrf.mxu0
        %v4245 = vadd.f32 0.0, %v4244
        %4246 = vdwg.mxu0
        %v4247 = vmul.f32 %v4233, %v4233
        %v4248 = vmul.f32 %v4235, %v4235
        %v4249 = vmul.f32 %v4238, %v4238
        %v4250 = vmul.f32 %v4240, %v4240
        %v4251 = vadd.f32 %v4247, %v4249
        %v4252 = vadd.f32 %v4248, %v4250
        %v4253 = vmul.f32 %v4243, %v4243
        %v4254 = vmul.f32 %v4245, %v4245
        %v4255 = vadd.f32 %v4251, %v4253
        %v4256 = vadd.f32 %v4252, %v4254
        %v4257 = vadd.f32 %v4255, 1.0
        %v4258 = vadd.f32 %v4256, 1.0
        %v4259 = vrsqrt.pop %v4257
        %v4260 = vmul.f32 %v4259, %v4257
        %v4261 = vmul.f32 %v4260, %v4259
        %v4262 = vmul.f32 0.5, %v4261
        %v4263 = vsub.f32 1.5, %v4262
        %v4264 = vmul.f32 %v4259, %v4263
        %v4265 = vmul.f32 %v4257, %v4264
        %vm4266 = vcmp.eq.f32.partialorder %v4257, inf
        %v4267 = vsel %vm4266, %v4257, %v4265
        %vm4268 = vcmp.eq.f32.partialorder %v4257, 0.0
        %v4269 = vand.u32 %v4257, 2147483648
        %v4270 = vsel %vm4268, %v4269, %v4267
        %v4271 = vrsqrt.pop %v4258
        %v4272 = vmul.f32 %v4271, %v4258
        %v4273 = vmul.f32 %v4272, %v4271
        %v4274 = vmul.f32 0.5, %v4273
        %v4275 = vsub.f32 1.5, %v4274
        %v4276 = vmul.f32 %v4271, %v4275
        %v4277 = vmul.f32 %v4258, %v4276
        %vm4278 = vcmp.eq.f32.partialorder %v4258, inf
        %v4279 = vsel %vm4278, %v4258, %v4277
        %vm4280 = vcmp.eq.f32.partialorder %v4258, 0.0
        %v4281 = vand.u32 %v4258, 2147483648
        %v4282 = vsel %vm4280, %v4281, %v4279
        %v4283 = vrsqrt.pop %v4270
        %v4284 = vmul.f32 %v4283, %v4270
        %v4285 = vmul.f32 %v4284, %v4283
        %v4286 = vmul.f32 0.5, %v4285
        %v4287 = vsub.f32 1.5, %v4286
        %v4288 = vmul.f32 %v4283, %v4287
        %vm4289 = vweird.f32 %v4270
        %vm4290 = vweird.f32 %v4283
        %vm4291 = vmor %vm4289, %vm4290
        %v4292 = vsel %vm4291, %v4283, %v4288
        %v4293 = vrsqrt.pop %v4282
        %v4294 = vmul.f32 %v4293, %v4282
        %v4295 = vmul.f32 %v4294, %v4293
        %v4296 = vmul.f32 0.5, %v4295
        %v4297 = vsub.f32 1.5, %v4296
        %v4298 = vmul.f32 %v4293, %v4297
        %vm4299 = vweird.f32 %v4282
        %vm4300 = vweird.f32 %v4293
        %vm4301 = vmor %vm4299, %vm4300
        %v4302 = vsel %vm4301, %v4293, %v4298
        %v4303 = vmul.f32 %v4233, %v4292
        %v4304 = vmul.f32 %v4235, %v4302
        %v4305 = vmul.f32 %v4238, %v4292
        %v4306 = vmul.f32 %v4240, %v4302
        %v4307 = vmul.f32 %v4243, %v4292
        %v4308 = vmul.f32 %v4245, %v4302
        %v4309 = vpack.c.bf16 %v4304, %v4303
        %v4310 = vpack.c.bf16 %v4306, %v4305
        %v4311 = vpack.c.bf16 %v4308, %v4307
        %v4312 = vld [vmem:[#allocation13] sm:$0xf]
        %v4313 = vld [vmem:[#allocation13 + $0x4] sm:$0xf]
        %v4314 = vld [vmem:[#allocation13 + $0x8] sm:$0xf]
        %v4315 = vld [vmem:[#allocation13 + $0xc] sm:$0xf]
        %v4316 = vld [vmem:[#allocation13 + $0x10] sm:$0xf]
        %v4317 = vld [vmem:[#allocation13 + $0x14] sm:$0xf]
        %v4318 = vld [vmem:[#allocation13 + $0x18] sm:$0xf]
        %v4319 = vld [vmem:[#allocation13 + $0x1c] sm:$0xf]
        %v4320 = vld [vmem:[#allocation13 + $0x20] sm:$0xf]
        %v4321 = vld [vmem:[#allocation13 + $0x24] sm:$0xf]
        %v4322 = vld [vmem:[#allocation13 + $0x28] sm:$0xf]
        %v4323 = vld [vmem:[#allocation13 + $0x2c] sm:$0xf]
        %v4324 = vld [vmem:[#allocation13 + $0x30] sm:$0xf]
        %v4325 = vld [vmem:[#allocation13 + $0x34] sm:$0xf]
        %v4326 = vld [vmem:[#allocation13 + $0x38] sm:$0xf]
        %v4327 = vld [vmem:[#allocation13 + $0x3c] sm:$0xf]
        %v4328 = vld [vmem:[#allocation6] sm:$0xf]
        %v4329 = vld [vmem:[#allocation6 + $0x4] sm:$0xf]
        %v4330 = vld [vmem:[#allocation6 + $0x8] sm:$0xf]
        %v4331 = vld [vmem:[#allocation6 + $0xc] sm:$0xf]
        %v4332 = vld [vmem:[#allocation6 + $0x10] sm:$0xf]
        %v4333 = vld [vmem:[#allocation6 + $0x14] sm:$0xf]
        %v4334 = vld [vmem:[#allocation6 + $0x18] sm:$0xf]
        %v4335 = vld [vmem:[#allocation6 + $0x1c] sm:$0xf]
        %v4336 = vld [vmem:[#allocation6 + $0x20] sm:$0xf]
        %v4337 = vld [vmem:[#allocation6 + $0x24] sm:$0xf]
        %v4338 = vld [vmem:[#allocation6 + $0x28] sm:$0xf]
        %v4339 = vld [vmem:[#allocation6 + $0x2c] sm:$0xf]
        %v4340 = vld [vmem:[#allocation6 + $0x30] sm:$0xf]
        %v4341 = vld [vmem:[#allocation6 + $0x34] sm:$0xf]
        %v4342 = vld [vmem:[#allocation6 + $0x38] sm:$0xf]
        %v4343 = vld [vmem:[#allocation6 + $0x3c] sm:$0xf]
        %v4344 = vld [vmem:[%s41] sm:$0x1]
        %v4346 = vperm.slane %v4344, 0
        %v4364 = vunpack.c.l.b16 %v4328
        %v4365 = vunpack.c.l.b16 %v4329
        %v4366 = vunpack.c.l.b16 %v4330
        %v4367 = vunpack.c.l.b16 %v4331
        %v4368 = vunpack.c.l.b16 %v4332
        %v4369 = vunpack.c.l.b16 %v4333
        %v4370 = vunpack.c.l.b16 %v4334
        %v4371 = vunpack.c.l.b16 %v4335
        %v4372 = vunpack.c.l.b16 %v4336
        %v4373 = vunpack.c.l.b16 %v4337
        %v4374 = vunpack.c.l.b16 %v4338
        %v4375 = vunpack.c.l.b16 %v4339
        %v4376 = vunpack.c.l.b16 %v4340
        %v4377 = vunpack.c.l.b16 %v4341
        %v4378 = vunpack.c.l.b16 %v4342
        %v4379 = vunpack.c.l.b16 %v4343
        %v4380 = vpack.c.b16 %v4365, %v4364
        %v4381 = vpack.c.b16 %v4367, %v4366
        %v4382 = vpack.c.b16 %v4369, %v4368
        %v4383 = vpack.c.b16 %v4371, %v4370
        %v4384 = vpack.c.b16 %v4373, %v4372
        %v4385 = vpack.c.b16 %v4375, %v4374
        %v4386 = vpack.c.b16 %v4377, %v4376
        %v4387 = vpack.c.b16 %v4379, %v4378
        %4396 = vmatpush.bf16.msra.mxu0 %v4387
        %4397 = vmatpush.bf16.msra.mxu0 %v4386
        %4398 = vmatpush.bf16.msra.mxu0 %v4385
        %4399 = vmatpush.bf16.msra.mxu0 %v4384
        %4400 = vmatpush.bf16.msra.mxu0 %v4383
        %4401 = vmatpush.bf16.msra.mxu0 %v4382
        %4402 = vmatpush.bf16.msra.mxu0 %v4381
        %4403 = vmatpush.bf16.msra.mxu0 %v4380
        %4404 = vmatmul.bf16.gmra.mxu0 %v3465
        %v4405 = vpop.f32.mrf.mxu0
        %v4406 = vadd.f32 %v4346, %v4405
        %v4407 = vpop.f32.mrf.mxu0
        %v4408 = vadd.f32 %v4346, %v4407
        %4409 = vdwg.mxu0
        %v4410 = vld [vmem:[%s95] sm:$0xff]
        %v4411 = vld [vmem:[%s95 + $0x8] sm:$0xff]
        %v4412 = vld [vmem:[%s95 + $0x10] sm:$0xff]
        %v4413 = vld [vmem:[%s95 + $0x18] sm:$0xff]
        %v4414 = vld [vmem:[%s95 + $0x20] sm:$0xff]
        %v4415 = vld [vmem:[%s95 + $0x28] sm:$0xff]
        %v4416 = vld [vmem:[%s95 + $0x30] sm:$0xff]
        %v4417 = vld [vmem:[%s95 + $0x38] sm:$0xff]
        %v4418 = vld [vmem:[%s95 + $0x40] sm:$0xff]
        %v4419 = vld [vmem:[%s95 + $0x48] sm:$0xff]
        %v4420 = vld [vmem:[%s95 + $0x50] sm:$0xff]
        %v4421 = vld [vmem:[%s95 + $0x58] sm:$0xff]
        %v4422 = vld [vmem:[%s95 + $0x60] sm:$0xff]
        %v4423 = vld [vmem:[%s95 + $0x68] sm:$0xff]
        %v4424 = vld [vmem:[%s95 + $0x70] sm:$0xff]
        %v4425 = vld [vmem:[%s95 + $0x78] sm:$0xff]
        %v4442 = vunpack.c.l.b16 %v4410
        %v4443 = vunpack.c.h.b16 %v4410
        %v4444 = vunpack.c.l.b16 %v4411
        %v4445 = vunpack.c.h.b16 %v4411
        %v4446 = vunpack.c.l.b16 %v4412
        %v4447 = vunpack.c.h.b16 %v4412
        %v4448 = vunpack.c.l.b16 %v4413
        %v4449 = vunpack.c.h.b16 %v4413
        %v4450 = vunpack.c.l.b16 %v4414
        %v4451 = vunpack.c.h.b16 %v4414
        %v4452 = vunpack.c.l.b16 %v4415
        %v4453 = vunpack.c.h.b16 %v4415
        %v4454 = vunpack.c.l.b16 %v4416
        %v4455 = vunpack.c.h.b16 %v4416
        %v4456 = vunpack.c.l.b16 %v4417
        %v4457 = vunpack.c.h.b16 %v4417
        %v4458 = vunpack.c.l.b16 %v4418
        %v4459 = vunpack.c.h.b16 %v4418
        %v4460 = vunpack.c.l.b16 %v4419
        %v4461 = vunpack.c.h.b16 %v4419
        %v4462 = vunpack.c.l.b16 %v4420
        %v4463 = vunpack.c.h.b16 %v4420
        %v4464 = vunpack.c.l.b16 %v4421
        %v4465 = vunpack.c.h.b16 %v4421
        %v4466 = vunpack.c.l.b16 %v4422
        %v4467 = vunpack.c.h.b16 %v4422
        %v4468 = vunpack.c.l.b16 %v4423
        %v4469 = vunpack.c.h.b16 %v4423
        %v4470 = vunpack.c.l.b16 %v4424
        %v4471 = vunpack.c.h.b16 %v4424
        %v4472 = vunpack.c.l.b16 %v4425
        %v4473 = vunpack.c.h.b16 %v4425
        %v4474 = vpack.c.b16 %v4444, %v4442
        %v4475 = vpack.c.b16 %v4445, %v4443
        %v4476 = vpack.c.b16 %v4448, %v4446
        %v4477 = vpack.c.b16 %v4449, %v4447
        %v4478 = vpack.c.b16 %v4452, %v4450
        %v4479 = vpack.c.b16 %v4453, %v4451
        %v4480 = vpack.c.b16 %v4456, %v4454
        %v4481 = vpack.c.b16 %v4457, %v4455
        %v4482 = vpack.c.b16 %v4460, %v4458
        %v4483 = vpack.c.b16 %v4461, %v4459
        %v4484 = vpack.c.b16 %v4464, %v4462
        %v4485 = vpack.c.b16 %v4465, %v4463
        %v4486 = vpack.c.b16 %v4468, %v4466
        %v4487 = vpack.c.b16 %v4469, %v4467
        %v4488 = vpack.c.b16 %v4472, %v4470
        %v4489 = vpack.c.b16 %v4473, %v4471
        %4506 = vmatpush.bf16.msra.mxu0 %v4488
        %4507 = vmatpush.bf16.msra.mxu0 %v4486
        %4508 = vmatpush.bf16.msra.mxu0 %v4484
        %4509 = vmatpush.bf16.msra.mxu0 %v4482
        %4510 = vmatpush.bf16.msra.mxu0 %v4480
        %4511 = vmatpush.bf16.msra.mxu0 %v4478
        %4512 = vmatpush.bf16.msra.mxu0 %v4476
        %4513 = vmatpush.bf16.msra.mxu0 %v4474
        %4514 = vmatmul.bf16.gmra.mxu0 %v3096
        %v4515 = vpop.f32.mrf.mxu0
        %v4516 = vadd.f32 0.0, %v4515
        %v4517 = vpop.f32.mrf.mxu0
        %v4518 = vadd.f32 0.0, %v4517
        %4519 = vmatmul.bf16.gmra.mxu0 %v3116
        %v4520 = vpop.f32.mrf.mxu0
        %v4521 = vadd.f32 0.0, %v4520
        %v4522 = vpop.f32.mrf.mxu0
        %v4523 = vadd.f32 0.0, %v4522
        %4524 = vmatmul.bf16.gmra.mxu0 %v3136
        %v4525 = vpop.f32.mrf.mxu0
        %v4526 = vadd.f32 0.0, %v4525
        %v4527 = vpop.f32.mrf.mxu0
        %v4528 = vadd.f32 0.0, %v4527
        %4529 = vdwg.mxu0
        %4530 = vmatpush.bf16.msra.mxu0 %v4489
        %4531 = vmatpush.bf16.msra.mxu0 %v4487
        %4532 = vmatpush.bf16.msra.mxu0 %v4485
        %4533 = vmatpush.bf16.msra.mxu0 %v4483
        %4534 = vmatpush.bf16.msra.mxu0 %v4481
        %4535 = vmatpush.bf16.msra.mxu0 %v4479
        %4536 = vmatpush.bf16.msra.mxu0 %v4477
        %4537 = vmatpush.bf16.msra.mxu0 %v4475
        %4538 = vmatmul.bf16.gmra.mxu0 %v3096
        %v4539 = vpop.f32.mrf.mxu0
        %v4540 = vadd.f32 0.0, %v4539
        %v4541 = vpop.f32.mrf.mxu0
        %v4542 = vadd.f32 0.0, %v4541
        %4543 = vmatmul.bf16.gmra.mxu0 %v3116
        %v4544 = vpop.f32.mrf.mxu0
        %v4545 = vadd.f32 0.0, %v4544
        %v4546 = vpop.f32.mrf.mxu0
        %v4547 = vadd.f32 0.0, %v4546
        %4548 = vmatmul.bf16.gmra.mxu0 %v3136
        %v4549 = vpop.f32.mrf.mxu0
        %v4550 = vadd.f32 0.0, %v4549
        %v4551 = vpop.f32.mrf.mxu0
        %v4552 = vadd.f32 0.0, %v4551
        %4553 = vdwg.mxu0
        %v4554 = vmul.f32 %v4516, %v4540
        %v4555 = vmul.f32 %v4518, %v4542
        %v4556 = vmul.f32 %v4521, %v4545
        %v4557 = vmul.f32 %v4523, %v4547
        %v4558 = vadd.f32 %v4554, %v4556
        %v4559 = vadd.f32 %v4555, %v4557
        %v4560 = vmul.f32 %v4526, %v4550
        %v4561 = vmul.f32 %v4528, %v4552
        %v4562 = vadd.f32 %v4558, %v4560
        %v4563 = vadd.f32 %v4559, %v4561
        %v4564 = vpack.c.bf16 %v4563, %v4562
        %v4565 = vld [vmem:[#allocation7] sm:$0xf]
        %v4566 = vld [vmem:[#allocation7 + $0x4] sm:$0xf]
        %v4567 = vld [vmem:[#allocation7 + $0x8] sm:$0xf]
        %v4568 = vld [vmem:[#allocation7 + $0xc] sm:$0xf]
        %v4569 = vld [vmem:[#allocation7 + $0x10] sm:$0xf]
        %v4570 = vld [vmem:[#allocation7 + $0x14] sm:$0xf]
        %v4571 = vld [vmem:[#allocation7 + $0x18] sm:$0xf]
        %v4572 = vld [vmem:[#allocation7 + $0x1c] sm:$0xf]
        %v4573 = vld [vmem:[#allocation7 + $0x20] sm:$0xf]
        %v4574 = vld [vmem:[#allocation7 + $0x24] sm:$0xf]
        %v4575 = vld [vmem:[#allocation7 + $0x28] sm:$0xf]
        %v4576 = vld [vmem:[#allocation7 + $0x2c] sm:$0xf]
        %v4577 = vld [vmem:[#allocation7 + $0x30] sm:$0xf]
        %v4578 = vld [vmem:[#allocation7 + $0x34] sm:$0xf]
        %v4579 = vld [vmem:[#allocation7 + $0x38] sm:$0xf]
        %v4580 = vld [vmem:[#allocation7 + $0x3c] sm:$0xf]
        %v4581 = vld [vmem:[%s43] sm:$0x1]
        %v4583 = vperm.slane %v4581, 0
        %v4601 = vunpack.c.l.b16 %v4565
        %v4602 = vunpack.c.l.b16 %v4566
        %v4603 = vunpack.c.l.b16 %v4567
        %v4604 = vunpack.c.l.b16 %v4568
        %v4605 = vunpack.c.l.b16 %v4569
        %v4606 = vunpack.c.l.b16 %v4570
        %v4607 = vunpack.c.l.b16 %v4571
        %v4608 = vunpack.c.l.b16 %v4572
        %v4609 = vunpack.c.l.b16 %v4573
        %v4610 = vunpack.c.l.b16 %v4574
        %v4611 = vunpack.c.l.b16 %v4575
        %v4612 = vunpack.c.l.b16 %v4576
        %v4613 = vunpack.c.l.b16 %v4577
        %v4614 = vunpack.c.l.b16 %v4578
        %v4615 = vunpack.c.l.b16 %v4579
        %v4616 = vunpack.c.l.b16 %v4580
        %v4617 = vpack.c.b16 %v4602, %v4601
        %v4618 = vpack.c.b16 %v4604, %v4603
        %v4619 = vpack.c.b16 %v4606, %v4605
        %v4620 = vpack.c.b16 %v4608, %v4607
        %v4621 = vpack.c.b16 %v4610, %v4609
        %v4622 = vpack.c.b16 %v4612, %v4611
        %v4623 = vpack.c.b16 %v4614, %v4613
        %v4624 = vpack.c.b16 %v4616, %v4615
        %4633 = vmatpush.bf16.msra.mxu0 %v4624
        %4634 = vmatpush.bf16.msra.mxu0 %v4623
        %4635 = vmatpush.bf16.msra.mxu0 %v4622
        %4636 = vmatpush.bf16.msra.mxu0 %v4621
        %4637 = vmatpush.bf16.msra.mxu0 %v4620
        %4638 = vmatpush.bf16.msra.mxu0 %v4619
        %4639 = vmatpush.bf16.msra.mxu0 %v4618
        %4640 = vmatpush.bf16.msra.mxu0 %v4617
        %4641 = vmatmul.bf16.gmra.mxu0 %v4564
        %v4642 = vpop.f32.mrf.mxu0
        %v4643 = vadd.f32 %v4583, %v4642
        %v4644 = vpop.f32.mrf.mxu0
        %v4645 = vadd.f32 %v4583, %v4644
        %4646 = vdwg.mxu0
        %v4647 = vmul.f32 %v4406, %v4516
        %v4648 = vmul.f32 %v4408, %v4518
        %v4649 = vmul.f32 %v4406, %v4521
        %v4650 = vmul.f32 %v4408, %v4523
        %v4651 = vmul.f32 %v4406, %v4526
        %v4652 = vmul.f32 %v4408, %v4528
        %v4653 = vpack.c.bf16 %v4648, %v4647
        %v4654 = vpack.c.bf16 %v4650, %v4649
        %v4655 = vpack.c.bf16 %v4652, %v4651
        %v4656 = vld [vmem:[#allocation9] sm:$0xf]
        %v4657 = vld [vmem:[#allocation9 + $0x4] sm:$0xf]
        %v4658 = vld [vmem:[#allocation9 + $0x8] sm:$0xf]
        %v4659 = vld [vmem:[#allocation9 + $0xc] sm:$0xf]
        %v4660 = vld [vmem:[#allocation9 + $0x10] sm:$0xf]
        %v4661 = vld [vmem:[#allocation9 + $0x14] sm:$0xf]
        %v4662 = vld [vmem:[#allocation9 + $0x18] sm:$0xf]
        %v4663 = vld [vmem:[#allocation9 + $0x1c] sm:$0xf]
        %v4664 = vld [vmem:[#allocation9 + $0x20] sm:$0xf]
        %v4665 = vld [vmem:[#allocation9 + $0x24] sm:$0xf]
        %v4666 = vld [vmem:[#allocation9 + $0x28] sm:$0xf]
        %v4667 = vld [vmem:[#allocation9 + $0x2c] sm:$0xf]
        %v4668 = vld [vmem:[#allocation9 + $0x30] sm:$0xf]
        %v4669 = vld [vmem:[#allocation9 + $0x34] sm:$0xf]
        %v4670 = vld [vmem:[#allocation9 + $0x38] sm:$0xf]
        %v4671 = vld [vmem:[#allocation9 + $0x3c] sm:$0xf]
        %v4688 = vunpack.c.l.b16 %v4656
        %v4689 = vunpack.c.l.b16 %v4657
        %v4690 = vunpack.c.l.b16 %v4658
        %v4691 = vunpack.c.l.b16 %v4659
        %v4692 = vunpack.c.l.b16 %v4660
        %v4693 = vunpack.c.l.b16 %v4661
        %v4694 = vunpack.c.l.b16 %v4662
        %v4695 = vunpack.c.l.b16 %v4663
        %v4696 = vunpack.c.l.b16 %v4664
        %v4697 = vunpack.c.l.b16 %v4665
        %v4698 = vunpack.c.l.b16 %v4666
        %v4699 = vunpack.c.l.b16 %v4667
        %v4700 = vunpack.c.l.b16 %v4668
        %v4701 = vunpack.c.l.b16 %v4669
        %v4702 = vunpack.c.l.b16 %v4670
        %v4703 = vunpack.c.l.b16 %v4671
        %v4704 = vpack.c.b16 %v4689, %v4688
        %v4705 = vpack.c.b16 %v4691, %v4690
        %v4706 = vpack.c.b16 %v4693, %v4692
        %v4707 = vpack.c.b16 %v4695, %v4694
        %v4708 = vpack.c.b16 %v4697, %v4696
        %v4709 = vpack.c.b16 %v4699, %v4698
        %v4710 = vpack.c.b16 %v4701, %v4700
        %v4711 = vpack.c.b16 %v4703, %v4702
        %4720 = vmatpush.bf16.msra.mxu0 %v4711
        %4721 = vmatpush.bf16.msra.mxu0 %v4710
        %4722 = vmatpush.bf16.msra.mxu0 %v4709
        %4723 = vmatpush.bf16.msra.mxu0 %v4708
        %4724 = vmatpush.bf16.msra.mxu0 %v4707
        %4725 = vmatpush.bf16.msra.mxu0 %v4706
        %4726 = vmatpush.bf16.msra.mxu0 %v4705
        %4727 = vmatpush.bf16.msra.mxu0 %v4704
        %4728 = vmatmul.bf16.gmra.mxu0 %v4653
        %v4729 = vpop.f32.mrf.mxu0
        %v4730 = vadd.f32 0.0, %v4729
        %v4731 = vpop.f32.mrf.mxu0
        %v4732 = vadd.f32 0.0, %v4731
        %4733 = vmatmul.bf16.gmra.mxu0 %v4654
        %v4734 = vpop.f32.mrf.mxu0
        %v4735 = vadd.f32 0.0, %v4734
        %v4736 = vpop.f32.mrf.mxu0
        %v4737 = vadd.f32 0.0, %v4736
        %4738 = vmatmul.bf16.gmra.mxu0 %v4655
        %v4739 = vpop.f32.mrf.mxu0
        %v4740 = vadd.f32 0.0, %v4739
        %v4741 = vpop.f32.mrf.mxu0
        %v4742 = vadd.f32 0.0, %v4741
        %4743 = vdwg.mxu0
        %4744 = vmatpush.bf16.msra.mxu0 %v4387
        %4745 = vmatpush.bf16.msra.mxu0 %v4386
        %4746 = vmatpush.bf16.msra.mxu0 %v4385
        %4747 = vmatpush.bf16.msra.mxu0 %v4384
        %4748 = vmatpush.bf16.msra.mxu0 %v4383
        %4749 = vmatpush.bf16.msra.mxu0 %v4382
        %4750 = vmatpush.bf16.msra.mxu0 %v4381
        %4751 = vmatpush.bf16.msra.mxu0 %v4380
        %4752 = vmatmul.bf16.gmra.mxu0 %v3466
        %v4753 = vpop.f32.mrf.mxu0
        %v4754 = vadd.f32 %v4346, %v4753
        %v4755 = vpop.f32.mrf.mxu0
        %v4756 = vadd.f32 %v4346, %v4755
        %4757 = vdwg.mxu0
        %4758 = vmatpush.bf16.msra.mxu0 %v4488
        %4759 = vmatpush.bf16.msra.mxu0 %v4486
        %4760 = vmatpush.bf16.msra.mxu0 %v4484
        %4761 = vmatpush.bf16.msra.mxu0 %v4482
        %4762 = vmatpush.bf16.msra.mxu0 %v4480
        %4763 = vmatpush.bf16.msra.mxu0 %v4478
        %4764 = vmatpush.bf16.msra.mxu0 %v4476
        %4765 = vmatpush.bf16.msra.mxu0 %v4474
        %4766 = vmatmul.bf16.gmra.mxu0 %v3467
        %v4767 = vpop.f32.mrf.mxu0
        %v4768 = vadd.f32 0.0, %v4767
        %v4769 = vpop.f32.mrf.mxu0
        %v4770 = vadd.f32 0.0, %v4769
        %4771 = vmatmul.bf16.gmra.mxu0 %v3468
        %v4772 = vpop.f32.mrf.mxu0
        %v4773 = vadd.f32 0.0, %v4772
        %v4774 = vpop.f32.mrf.mxu0
        %v4775 = vadd.f32 0.0, %v4774
        %4776 = vmatmul.bf16.gmra.mxu0 %v3469
        %v4777 = vpop.f32.mrf.mxu0
        %v4778 = vadd.f32 0.0, %v4777
        %v4779 = vpop.f32.mrf.mxu0
        %v4780 = vadd.f32 0.0, %v4779
        %4781 = vdwg.mxu0
        %4782 = vmatpush.bf16.msra.mxu0 %v4489
        %4783 = vmatpush.bf16.msra.mxu0 %v4487
        %4784 = vmatpush.bf16.msra.mxu0 %v4485
        %4785 = vmatpush.bf16.msra.mxu0 %v4483
        %4786 = vmatpush.bf16.msra.mxu0 %v4481
        %4787 = vmatpush.bf16.msra.mxu0 %v4479
        %4788 = vmatpush.bf16.msra.mxu0 %v4477
        %4789 = vmatpush.bf16.msra.mxu0 %v4475
        %4790 = vmatmul.bf16.gmra.mxu0 %v3467
        %v4791 = vpop.f32.mrf.mxu0
        %v4792 = vadd.f32 0.0, %v4791
        %v4793 = vpop.f32.mrf.mxu0
        %v4794 = vadd.f32 0.0, %v4793
        %4795 = vmatmul.bf16.gmra.mxu0 %v3468
        %v4796 = vpop.f32.mrf.mxu0
        %v4797 = vadd.f32 0.0, %v4796
        %v4798 = vpop.f32.mrf.mxu0
        %v4799 = vadd.f32 0.0, %v4798
        %4800 = vmatmul.bf16.gmra.mxu0 %v3469
        %v4801 = vpop.f32.mrf.mxu0
        %v4802 = vadd.f32 0.0, %v4801
        %v4803 = vpop.f32.mrf.mxu0
        %v4804 = vadd.f32 0.0, %v4803
        %4805 = vdwg.mxu0
        %v4806 = vmul.f32 %v4768, %v4792
        %v4807 = vmul.f32 %v4770, %v4794
        %v4808 = vmul.f32 %v4773, %v4797
        %v4809 = vmul.f32 %v4775, %v4799
        %v4810 = vadd.f32 %v4806, %v4808
        %v4811 = vadd.f32 %v4807, %v4809
        %v4812 = vmul.f32 %v4778, %v4802
        %v4813 = vmul.f32 %v4780, %v4804
        %v4814 = vadd.f32 %v4810, %v4812
        %v4815 = vadd.f32 %v4811, %v4813
        %v4816 = vpack.c.bf16 %v4815, %v4814
        %4817 = vmatpush.bf16.msra.mxu0 %v4624
        %4818 = vmatpush.bf16.msra.mxu0 %v4623
        %4819 = vmatpush.bf16.msra.mxu0 %v4622
        %4820 = vmatpush.bf16.msra.mxu0 %v4621
        %4821 = vmatpush.bf16.msra.mxu0 %v4620
        %4822 = vmatpush.bf16.msra.mxu0 %v4619
        %4823 = vmatpush.bf16.msra.mxu0 %v4618
        %4824 = vmatpush.bf16.msra.mxu0 %v4617
        %4825 = vmatmul.bf16.gmra.mxu0 %v4816
        %v4826 = vpop.f32.mrf.mxu0
        %v4827 = vadd.f32 %v4583, %v4826
        %v4828 = vpop.f32.mrf.mxu0
        %v4829 = vadd.f32 %v4583, %v4828
        %4830 = vdwg.mxu0
        %v4831 = vmul.f32 %v4754, %v4768
        %v4832 = vmul.f32 %v4756, %v4770
        %v4833 = vmul.f32 %v4754, %v4773
        %v4834 = vmul.f32 %v4756, %v4775
        %v4835 = vmul.f32 %v4754, %v4778
        %v4836 = vmul.f32 %v4756, %v4780
        %v4837 = vpack.c.bf16 %v4832, %v4831
        %v4838 = vpack.c.bf16 %v4834, %v4833
        %v4839 = vpack.c.bf16 %v4836, %v4835
        %4840 = vmatpush.bf16.msra.mxu0 %v4711
        %4841 = vmatpush.bf16.msra.mxu0 %v4710
        %4842 = vmatpush.bf16.msra.mxu0 %v4709
        %4843 = vmatpush.bf16.msra.mxu0 %v4708
        %4844 = vmatpush.bf16.msra.mxu0 %v4707
        %4845 = vmatpush.bf16.msra.mxu0 %v4706
        %4846 = vmatpush.bf16.msra.mxu0 %v4705
        %4847 = vmatpush.bf16.msra.mxu0 %v4704
        %4848 = vmatmul.bf16.gmra.mxu0 %v4837
        %v4849 = vpop.f32.mrf.mxu0
        %v4850 = vadd.f32 0.0, %v4849
        %v4851 = vpop.f32.mrf.mxu0
        %v4852 = vadd.f32 0.0, %v4851
        %4853 = vmatmul.bf16.gmra.mxu0 %v4838
        %v4854 = vpop.f32.mrf.mxu0
        %v4855 = vadd.f32 0.0, %v4854
        %v4856 = vpop.f32.mrf.mxu0
        %v4857 = vadd.f32 0.0, %v4856
        %4858 = vmatmul.bf16.gmra.mxu0 %v4839
        %v4859 = vpop.f32.mrf.mxu0
        %v4860 = vadd.f32 0.0, %v4859
        %v4861 = vpop.f32.mrf.mxu0
        %v4862 = vadd.f32 0.0, %v4861
        %4863 = vdwg.mxu0
        %v4864 = vadd.f32 %v3726, %v4643
        %v4865 = vadd.f32 %v3728, %v4645
        %v4882 = vunpack.c.l.b16 %v4143
        %v4883 = vunpack.c.l.b16 %v4144
        %v4884 = vunpack.c.l.b16 %v4145
        %v4885 = vunpack.c.l.b16 %v4146
        %v4886 = vunpack.c.l.b16 %v4147
        %v4887 = vunpack.c.l.b16 %v4148
        %v4888 = vunpack.c.l.b16 %v4149
        %v4889 = vunpack.c.l.b16 %v4150
        %v4890 = vunpack.c.l.b16 %v4151
        %v4891 = vunpack.c.l.b16 %v4152
        %v4892 = vunpack.c.l.b16 %v4153
        %v4893 = vunpack.c.l.b16 %v4154
        %v4894 = vunpack.c.l.b16 %v4155
        %v4895 = vunpack.c.l.b16 %v4156
        %v4896 = vunpack.c.l.b16 %v4157
        %v4897 = vunpack.c.l.b16 %v4158
        %v4898 = vpack.c.b16 %v4883, %v4882
        %v4899 = vpack.c.b16 %v4885, %v4884
        %v4900 = vpack.c.b16 %v4887, %v4886
        %v4901 = vpack.c.b16 %v4889, %v4888
        %v4902 = vpack.c.b16 %v4891, %v4890
        %v4903 = vpack.c.b16 %v4893, %v4892
        %v4904 = vpack.c.b16 %v4895, %v4894
        %v4905 = vpack.c.b16 %v4897, %v4896
        %4914 = vmatpush.bf16.msra.mxu0 %v4905
        %4915 = vmatpush.bf16.msra.mxu0 %v4904
        %4916 = vmatpush.bf16.msra.mxu0 %v4903
        %4917 = vmatpush.bf16.msra.mxu0 %v4902
        %4918 = vmatpush.bf16.msra.mxu0 %v4901
        %4919 = vmatpush.bf16.msra.mxu0 %v4900
        %4920 = vmatpush.bf16.msra.mxu0 %v4899
        %4921 = vmatpush.bf16.msra.mxu0 %v4898
        %4922 = vmatmul.bf16.gmra.mxu0 %v4140
        %v4923 = vpop.f32.mrf.mxu0
        %v4924 = vadd.f32 %v4730, %v4923
        %v4925 = vpop.f32.mrf.mxu0
        %v4926 = vadd.f32 %v4732, %v4925
        %4927 = vmatmul.bf16.gmra.mxu0 %v4141
        %v4928 = vpop.f32.mrf.mxu0
        %v4929 = vadd.f32 %v4735, %v4928
        %v4930 = vpop.f32.mrf.mxu0
        %v4931 = vadd.f32 %v4737, %v4930
        %4932 = vmatmul.bf16.gmra.mxu0 %v4142
        %v4933 = vpop.f32.mrf.mxu0
        %v4934 = vadd.f32 %v4740, %v4933
        %v4935 = vpop.f32.mrf.mxu0
        %v4936 = vadd.f32 %v4742, %v4935
        %4937 = vdwg.mxu0
        %v4938 = vadd.f32 %v3986, %v4827
        %v4939 = vadd.f32 %v3988, %v4829
        %v4956 = vunpack.c.l.b16 %v4312
        %v4957 = vunpack.c.l.b16 %v4313
        %v4958 = vunpack.c.l.b16 %v4314
        %v4959 = vunpack.c.l.b16 %v4315
        %v4960 = vunpack.c.l.b16 %v4316
        %v4961 = vunpack.c.l.b16 %v4317
        %v4962 = vunpack.c.l.b16 %v4318
        %v4963 = vunpack.c.l.b16 %v4319
        %v4964 = vunpack.c.l.b16 %v4320
        %v4965 = vunpack.c.l.b16 %v4321
        %v4966 = vunpack.c.l.b16 %v4322
        %v4967 = vunpack.c.l.b16 %v4323
        %v4968 = vunpack.c.l.b16 %v4324
        %v4969 = vunpack.c.l.b16 %v4325
        %v4970 = vunpack.c.l.b16 %v4326
        %v4971 = vunpack.c.l.b16 %v4327
        %v4972 = vpack.c.b16 %v4957, %v4956
        %v4973 = vpack.c.b16 %v4959, %v4958
        %v4974 = vpack.c.b16 %v4961, %v4960
        %v4975 = vpack.c.b16 %v4963, %v4962
        %v4976 = vpack.c.b16 %v4965, %v4964
        %v4977 = vpack.c.b16 %v4967, %v4966
        %v4978 = vpack.c.b16 %v4969, %v4968
        %v4979 = vpack.c.b16 %v4971, %v4970
        %4988 = vmatpush.bf16.msra.mxu0 %v4979
        %4989 = vmatpush.bf16.msra.mxu0 %v4978
        %4990 = vmatpush.bf16.msra.mxu0 %v4977
        %4991 = vmatpush.bf16.msra.mxu0 %v4976
        %4992 = vmatpush.bf16.msra.mxu0 %v4975
        %4993 = vmatpush.bf16.msra.mxu0 %v4974
        %4994 = vmatpush.bf16.msra.mxu0 %v4973
        %4995 = vmatpush.bf16.msra.mxu0 %v4972
        %4996 = vmatmul.bf16.gmra.mxu0 %v4309
        %v4997 = vpop.f32.mrf.mxu0
        %v4998 = vadd.f32 %v4850, %v4997
        %v4999 = vpop.f32.mrf.mxu0
        %v5000 = vadd.f32 %v4852, %v4999
        %5001 = vmatmul.bf16.gmra.mxu0 %v4310
        %v5002 = vpop.f32.mrf.mxu0
        %v5003 = vadd.f32 %v4855, %v5002
        %v5004 = vpop.f32.mrf.mxu0
        %v5005 = vadd.f32 %v4857, %v5004
        %5006 = vmatmul.bf16.gmra.mxu0 %v4311
        %v5007 = vpop.f32.mrf.mxu0
        %v5008 = vadd.f32 %v4860, %v5007
        %v5009 = vpop.f32.mrf.mxu0
        %v5010 = vadd.f32 %v4862, %v5009
        %5011 = vdwg.mxu0
        %v5012 = vpack.c.bf16 %v4939, %v4938
        %v5013 = vpack.c.bf16 %v4998, %v4998
        %v5014 = vpack.c.bf16 %v5000, %v5000
        %v5015 = vpack.c.bf16 %v5003, %v5003
        %v5016 = vpack.c.bf16 %v5005, %v5005
        %v5017 = vpack.c.bf16 %v5008, %v5008
        %v5018 = vpack.c.bf16 %v5010, %v5010
        %v5019 = vld [vmem:[%s2386] sm:$0xf]
        %v5020 = vld [vmem:[%s2386 + $0x4] sm:$0xf]
        %v5023 = vunpack.c.l.b16 %v5019
        %v5024 = vunpack.c.l.b16 %v5020
        %v5025 = vpack.c.b16 %v5024, %v5023
        %v5027 = vsel %vm2467, %v5025, 0
        %5029 = vmatpush.bf16.msra.mxu0 0
        %5030 = vmatpush.bf16.msra.mxu0 0
        %5031 = vmatpush.bf16.msra.mxu0 0
        %5032 = vmatpush.bf16.msra.mxu0 0
        %5033 = vmatpush.bf16.msra.mxu0 0
        %5034 = vmatpush.bf16.msra.mxu0 0
        %5035 = vmatpush.bf16.msra.mxu0 0
        %5036 = vmatpush.bf16.msra.mxu0 %v5012
        %5037 = vmatmul.bf16.gmra.mxu0 %v5027
        %v5038 = vpop.f32.mrf.mxu0
        %v5039 = vadd.f32 0.0, %v5038
        %v5040 = vpop.f32.mrf.mxu0
        %v5041 = vadd.f32 0.0, %v5040
        %5042 = vdwg.mxu0
        %v5043 = vpack.c.bf16 %v5041, %v5039
        %v5044 = vld [vmem:[%s75] sm:$0xf]
        %v5045 = vld [vmem:[%s75 + $0x4] sm:$0xf]
        %v5046 = vld [vmem:[%s75 + $0x8] sm:$0xf]
        %v5047 = vld [vmem:[%s75 + $0xc] sm:$0xf]
        %v5048 = vld [vmem:[%s75 + $0x10] sm:$0xf]
        %v5049 = vld [vmem:[%s75 + $0x14] sm:$0xf]
        %v5050 = vld [vmem:[%s75 + $0x18] sm:$0xf]
        %v5051 = vld [vmem:[%s75 + $0x1c] sm:$0xf]
        %v5052 = vld [vmem:[%s75 + $0x20] sm:$0xf]
        %v5053 = vld [vmem:[%s75 + $0x24] sm:$0xf]
        %v5054 = vld [vmem:[%s75 + $0x28] sm:$0xf]
        %v5055 = vld [vmem:[%s75 + $0x2c] sm:$0xf]
        %v5056 = vld [vmem:[%s75 + $0x30] sm:$0xf]
        %v5057 = vld [vmem:[%s75 + $0x34] sm:$0xf]
        %v5058 = vld [vmem:[%s75 + $0x38] sm:$0xf]
        %v5059 = vld [vmem:[%s75 + $0x3c] sm:$0xf]
        %v5060 = vld [vmem:[%s2391] sm:$0xf]
        %v5061 = vld [vmem:[%s2391 + $0x4] sm:$0xf]
        %v5064 = vunpack.c.l.b16 %v5060
        %v5065 = vunpack.c.l.b16 %v5061
        %v5066 = vpack.c.b16 %v5065, %v5064
        %v5068 = vsel %vm2467, %v5066, 0
        %5070 = vmatpush.bf16.msra.mxu0 0
        %5071 = vmatpush.bf16.msra.mxu0 0
        %5072 = vmatpush.bf16.msra.mxu0 0
        %5073 = vmatpush.bf16.msra.mxu0 0
        %5074 = vmatpush.bf16.msra.mxu0 0
        %5075 = vmatpush.bf16.msra.mxu0 0
        %5076 = vmatpush.bf16.msra.mxu0 0
        %5077 = vmatpush.bf16.msra.mxu0 %v5012
        %5078 = vmatmul.bf16.gmra.mxu0 %v5068
        %v5079 = vpop.f32.mrf.mxu0
        %v5080 = vadd.f32 0.0, %v5079
        %v5081 = vpop.f32.mrf.mxu0
        %v5082 = vadd.f32 0.0, %v5081
        %5083 = vdwg.mxu0
        %v5084 = vpack.c.bf16 %v5082, %v5080
        %v5085 = vld [vmem:[%s73] sm:$0xf]
        %v5086 = vld [vmem:[%s73 + $0x4] sm:$0xf]
        %v5087 = vld [vmem:[%s73 + $0x8] sm:$0xf]
        %v5088 = vld [vmem:[%s73 + $0xc] sm:$0xf]
        %v5089 = vld [vmem:[%s73 + $0x10] sm:$0xf]
        %v5090 = vld [vmem:[%s73 + $0x14] sm:$0xf]
        %v5091 = vld [vmem:[%s73 + $0x18] sm:$0xf]
        %v5092 = vld [vmem:[%s73 + $0x1c] sm:$0xf]
        %v5093 = vld [vmem:[%s73 + $0x20] sm:$0xf]
        %v5094 = vld [vmem:[%s73 + $0x24] sm:$0xf]
        %v5095 = vld [vmem:[%s73 + $0x28] sm:$0xf]
        %v5096 = vld [vmem:[%s73 + $0x2c] sm:$0xf]
        %v5097 = vld [vmem:[%s73 + $0x30] sm:$0xf]
        %v5098 = vld [vmem:[%s73 + $0x34] sm:$0xf]
        %v5099 = vld [vmem:[%s73 + $0x38] sm:$0xf]
        %v5100 = vld [vmem:[%s73 + $0x3c] sm:$0xf]
        %v5117 = vunpack.c.l.b16 %v5085
        %v5118 = vunpack.c.l.b16 %v5086
        %v5119 = vunpack.c.l.b16 %v5087
        %v5120 = vunpack.c.l.b16 %v5088
        %v5121 = vunpack.c.l.b16 %v5089
        %v5122 = vunpack.c.l.b16 %v5090
        %v5123 = vunpack.c.l.b16 %v5091
        %v5124 = vunpack.c.l.b16 %v5092
        %v5125 = vunpack.c.l.b16 %v5093
        %v5126 = vunpack.c.l.b16 %v5094
        %v5127 = vunpack.c.l.b16 %v5095
        %v5128 = vunpack.c.l.b16 %v5096
        %v5129 = vunpack.c.l.b16 %v5097
        %v5130 = vunpack.c.l.b16 %v5098
        %v5131 = vunpack.c.l.b16 %v5099
        %v5132 = vunpack.c.l.b16 %v5100
        %v5133 = vpack.c.b16 %v5118, %v5117
        %v5134 = vpack.c.b16 %v5120, %v5119
        %v5135 = vpack.c.b16 %v5122, %v5121
        %v5136 = vpack.c.b16 %v5124, %v5123
        %v5137 = vpack.c.b16 %v5126, %v5125
        %v5138 = vpack.c.b16 %v5128, %v5127
        %v5139 = vpack.c.b16 %v5130, %v5129
        %v5140 = vpack.c.b16 %v5132, %v5131
        %5149 = vmatpush.bf16.msra.mxu0 %v5140
        %5150 = vmatpush.bf16.msra.mxu0 %v5139
        %5151 = vmatpush.bf16.msra.mxu0 %v5138
        %5152 = vmatpush.bf16.msra.mxu0 %v5137
        %5153 = vmatpush.bf16.msra.mxu0 %v5136
        %5154 = vmatpush.bf16.msra.mxu0 %v5135
        %5155 = vmatpush.bf16.msra.mxu0 %v5134
        %5156 = vmatpush.bf16.msra.mxu0 %v5133
        %5157 = vmatmul.bf16.gmra.mxu0 %v5084
        %v5158 = vpop.f32.mrf.mxu0
        %v5159 = vadd.f32 0.0, %v5158
        %v5160 = vpop.f32.mrf.mxu0
        %v5161 = vadd.f32 0.0, %v5160
        %5162 = vdwg.mxu0
        %v5179 = vunpack.c.l.b16 %v5044
        %v5180 = vunpack.c.l.b16 %v5045
        %v5181 = vunpack.c.l.b16 %v5046
        %v5182 = vunpack.c.l.b16 %v5047
        %v5183 = vunpack.c.l.b16 %v5048
        %v5184 = vunpack.c.l.b16 %v5049
        %v5185 = vunpack.c.l.b16 %v5050
        %v5186 = vunpack.c.l.b16 %v5051
        %v5187 = vunpack.c.l.b16 %v5052
        %v5188 = vunpack.c.l.b16 %v5053
        %v5189 = vunpack.c.l.b16 %v5054
        %v5190 = vunpack.c.l.b16 %v5055
        %v5191 = vunpack.c.l.b16 %v5056
        %v5192 = vunpack.c.l.b16 %v5057
        %v5193 = vunpack.c.l.b16 %v5058
        %v5194 = vunpack.c.l.b16 %v5059
        %v5195 = vpack.c.b16 %v5180, %v5179
        %v5196 = vpack.c.b16 %v5182, %v5181
        %v5197 = vpack.c.b16 %v5184, %v5183
        %v5198 = vpack.c.b16 %v5186, %v5185
        %v5199 = vpack.c.b16 %v5188, %v5187
        %v5200 = vpack.c.b16 %v5190, %v5189
        %v5201 = vpack.c.b16 %v5192, %v5191
        %v5202 = vpack.c.b16 %v5194, %v5193
        %5211 = vmatpush.bf16.msra.mxu0 %v5202
        %5212 = vmatpush.bf16.msra.mxu0 %v5201
        %5213 = vmatpush.bf16.msra.mxu0 %v5200
        %5214 = vmatpush.bf16.msra.mxu0 %v5199
        %5215 = vmatpush.bf16.msra.mxu0 %v5198
        %5216 = vmatpush.bf16.msra.mxu0 %v5197
        %5217 = vmatpush.bf16.msra.mxu0 %v5196
        %5218 = vmatpush.bf16.msra.mxu0 %v5195
        %5219 = vmatmul.bf16.gmra.mxu0 %v5043
        %v5220 = vpop.f32.mrf.mxu0
        %v5221 = vadd.f32 %v5159, %v5220
        %v5222 = vpop.f32.mrf.mxu0
        %v5223 = vadd.f32 %v5161, %v5222
        %5224 = vdwg.mxu0
        %v5225 = vld [vmem:[%s29] sm:$0x1]
        %v5227 = vperm.slane %v5225, 0
        %v5229 = vadd.f32 %v5221, %v5227
        %v5230 = vadd.f32 %v5223, %v5227
        %v5231 = vadd.f32 %v4864, %v5229
        %v5232 = vadd.f32 %v4865, %v5230
        %v5235 = vunpack.c.l.b16 %v5013
        %v5236 = vunpack.c.l.b16 %v5014
        %v5237 = vpack.c.b16 %v5236, %v5235
        %5239 = vmatpush.bf16.msra.mxu0 0
        %5240 = vmatpush.bf16.msra.mxu0 0
        %5241 = vmatpush.bf16.msra.mxu0 0
        %5242 = vmatpush.bf16.msra.mxu0 0
        %5243 = vmatpush.bf16.msra.mxu0 0
        %5244 = vmatpush.bf16.msra.mxu0 0
        %5245 = vmatpush.bf16.msra.mxu0 0
        %5246 = vmatpush.bf16.msra.mxu0 %v5237
        %5247 = vmatmul.bf16.gmra.mxu0 %v5027
        %v5248 = vpop.f32.mrf.mxu0
        %v5249 = vadd.f32 0.0, %v5248
        %v5250 = vpop.f32.mrf.mxu0
        %v5251 = vadd.f32 0.0, %v5250
        %5252 = vdwg.mxu0
        %v5255 = vunpack.c.l.b16 %v5015
        %v5256 = vunpack.c.l.b16 %v5016
        %v5257 = vpack.c.b16 %v5256, %v5255
        %5259 = vmatpush.bf16.msra.mxu0 0
        %5260 = vmatpush.bf16.msra.mxu0 0
        %5261 = vmatpush.bf16.msra.mxu0 0
        %5262 = vmatpush.bf16.msra.mxu0 0
        %5263 = vmatpush.bf16.msra.mxu0 0
        %5264 = vmatpush.bf16.msra.mxu0 0
        %5265 = vmatpush.bf16.msra.mxu0 0
        %5266 = vmatpush.bf16.msra.mxu0 %v5257
        %5267 = vmatmul.bf16.gmra.mxu0 %v5027
        %v5268 = vpop.f32.mrf.mxu0
        %v5269 = vadd.f32 0.0, %v5268
        %v5270 = vpop.f32.mrf.mxu0
        %v5271 = vadd.f32 0.0, %v5270
        %5272 = vdwg.mxu0
        %v5275 = vunpack.c.l.b16 %v5017
        %v5276 = vunpack.c.l.b16 %v5018
        %v5277 = vpack.c.b16 %v5276, %v5275
        %5279 = vmatpush.bf16.msra.mxu0 0
        %5280 = vmatpush.bf16.msra.mxu0 0
        %5281 = vmatpush.bf16.msra.mxu0 0
        %5282 = vmatpush.bf16.msra.mxu0 0
        %5283 = vmatpush.bf16.msra.mxu0 0
        %5284 = vmatpush.bf16.msra.mxu0 0
        %5285 = vmatpush.bf16.msra.mxu0 0
        %5286 = vmatpush.bf16.msra.mxu0 %v5277
        %5287 = vmatmul.bf16.gmra.mxu0 %v5027
        %v5288 = vpop.f32.mrf.mxu0
        %v5289 = vadd.f32 0.0, %v5288
        %v5290 = vpop.f32.mrf.mxu0
        %v5291 = vadd.f32 0.0, %v5290
        %5292 = vdwg.mxu0
        %v5293 = vpack.c.bf16 %v5251, %v5249
        %v5294 = vpack.c.bf16 %v5271, %v5269
        %v5295 = vpack.c.bf16 %v5291, %v5289
        %v5296 = vld [vmem:[#allocation19] sm:$0xf]
        %v5297 = vld [vmem:[#allocation19 + $0x4] sm:$0xf]
        %v5298 = vld [vmem:[#allocation19 + $0x8] sm:$0xf]
        %v5299 = vld [vmem:[#allocation19 + $0xc] sm:$0xf]
        %v5300 = vld [vmem:[#allocation19 + $0x10] sm:$0xf]
        %v5301 = vld [vmem:[#allocation19 + $0x14] sm:$0xf]
        %v5302 = vld [vmem:[#allocation19 + $0x18] sm:$0xf]
        %v5303 = vld [vmem:[#allocation19 + $0x1c] sm:$0xf]
        %v5304 = vld [vmem:[#allocation19 + $0x20] sm:$0xf]
        %v5305 = vld [vmem:[#allocation19 + $0x24] sm:$0xf]
        %v5306 = vld [vmem:[#allocation19 + $0x28] sm:$0xf]
        %v5307 = vld [vmem:[#allocation19 + $0x2c] sm:$0xf]
        %v5308 = vld [vmem:[#allocation19 + $0x30] sm:$0xf]
        %v5309 = vld [vmem:[#allocation19 + $0x34] sm:$0xf]
        %v5310 = vld [vmem:[#allocation19 + $0x38] sm:$0xf]
        %v5311 = vld [vmem:[#allocation19 + $0x3c] sm:$0xf]
        %5312 = vmatpush.bf16.msra.mxu0 0
        %5313 = vmatpush.bf16.msra.mxu0 0
        %5314 = vmatpush.bf16.msra.mxu0 0
        %5315 = vmatpush.bf16.msra.mxu0 0
        %5316 = vmatpush.bf16.msra.mxu0 0
        %5317 = vmatpush.bf16.msra.mxu0 0
        %5318 = vmatpush.bf16.msra.mxu0 0
        %5319 = vmatpush.bf16.msra.mxu0 %v5237
        %5320 = vmatmul.bf16.gmra.mxu0 %v5068
        %v5321 = vpop.f32.mrf.mxu0
        %v5322 = vadd.f32 0.0, %v5321
        %v5323 = vpop.f32.mrf.mxu0
        %v5324 = vadd.f32 0.0, %v5323
        %5325 = vdwg.mxu0
        %5326 = vmatpush.bf16.msra.mxu0 0
        %5327 = vmatpush.bf16.msra.mxu0 0
        %5328 = vmatpush.bf16.msra.mxu0 0
        %5329 = vmatpush.bf16.msra.mxu0 0
        %5330 = vmatpush.bf16.msra.mxu0 0
        %5331 = vmatpush.bf16.msra.mxu0 0
        %5332 = vmatpush.bf16.msra.mxu0 0
        %5333 = vmatpush.bf16.msra.mxu0 %v5257
        %5334 = vmatmul.bf16.gmra.mxu0 %v5068
        %v5335 = vpop.f32.mrf.mxu0
        %v5336 = vadd.f32 0.0, %v5335
        %v5337 = vpop.f32.mrf.mxu0
        %v5338 = vadd.f32 0.0, %v5337
        %5339 = vdwg.mxu0
        %5340 = vmatpush.bf16.msra.mxu0 0
        %5341 = vmatpush.bf16.msra.mxu0 0
        %5342 = vmatpush.bf16.msra.mxu0 0
        %5343 = vmatpush.bf16.msra.mxu0 0
        %5344 = vmatpush.bf16.msra.mxu0 0
        %5345 = vmatpush.bf16.msra.mxu0 0
        %5346 = vmatpush.bf16.msra.mxu0 0
        %5347 = vmatpush.bf16.msra.mxu0 %v5277
        %5348 = vmatmul.bf16.gmra.mxu0 %v5068
        %v5349 = vpop.f32.mrf.mxu0
        %v5350 = vadd.f32 0.0, %v5349
        %v5351 = vpop.f32.mrf.mxu0
        %v5352 = vadd.f32 0.0, %v5351
        %5353 = vdwg.mxu0
        %v5354 = vpack.c.bf16 %v5324, %v5322
        %v5355 = vpack.c.bf16 %v5338, %v5336
        %v5356 = vpack.c.bf16 %v5352, %v5350
        %v5357 = vld [vmem:[#allocation18] sm:$0xf]
        %v5358 = vld [vmem:[#allocation18 + $0x4] sm:$0xf]
        %v5359 = vld [vmem:[#allocation18 + $0x8] sm:$0xf]
        %v5360 = vld [vmem:[#allocation18 + $0xc] sm:$0xf]
        %v5361 = vld [vmem:[#allocation18 + $0x10] sm:$0xf]
        %v5362 = vld [vmem:[#allocation18 + $0x14] sm:$0xf]
        %v5363 = vld [vmem:[#allocation18 + $0x18] sm:$0xf]
        %v5364 = vld [vmem:[#allocation18 + $0x1c] sm:$0xf]
        %v5365 = vld [vmem:[#allocation18 + $0x20] sm:$0xf]
        %v5366 = vld [vmem:[#allocation18 + $0x24] sm:$0xf]
        %v5367 = vld [vmem:[#allocation18 + $0x28] sm:$0xf]
        %v5368 = vld [vmem:[#allocation18 + $0x2c] sm:$0xf]
        %v5369 = vld [vmem:[#allocation18 + $0x30] sm:$0xf]
        %v5370 = vld [vmem:[#allocation18 + $0x34] sm:$0xf]
        %v5371 = vld [vmem:[#allocation18 + $0x38] sm:$0xf]
        %v5372 = vld [vmem:[#allocation18 + $0x3c] sm:$0xf]
        %v5389 = vunpack.c.l.b16 %v5357
        %v5390 = vunpack.c.l.b16 %v5358
        %v5391 = vunpack.c.l.b16 %v5359
        %v5392 = vunpack.c.l.b16 %v5360
        %v5393 = vunpack.c.l.b16 %v5361
        %v5394 = vunpack.c.l.b16 %v5362
        %v5395 = vunpack.c.l.b16 %v5363
        %v5396 = vunpack.c.l.b16 %v5364
        %v5397 = vunpack.c.l.b16 %v5365
        %v5398 = vunpack.c.l.b16 %v5366
        %v5399 = vunpack.c.l.b16 %v5367
        %v5400 = vunpack.c.l.b16 %v5368
        %v5401 = vunpack.c.l.b16 %v5369
        %v5402 = vunpack.c.l.b16 %v5370
        %v5403 = vunpack.c.l.b16 %v5371
        %v5404 = vunpack.c.l.b16 %v5372
        %v5405 = vpack.c.b16 %v5390, %v5389
        %v5406 = vpack.c.b16 %v5392, %v5391
        %v5407 = vpack.c.b16 %v5394, %v5393
        %v5408 = vpack.c.b16 %v5396, %v5395
        %v5409 = vpack.c.b16 %v5398, %v5397
        %v5410 = vpack.c.b16 %v5400, %v5399
        %v5411 = vpack.c.b16 %v5402, %v5401
        %v5412 = vpack.c.b16 %v5404, %v5403
        %5421 = vmatpush.bf16.msra.mxu0 %v5412
        %5422 = vmatpush.bf16.msra.mxu0 %v5411
        %5423 = vmatpush.bf16.msra.mxu0 %v5410
        %5424 = vmatpush.bf16.msra.mxu0 %v5409
        %5425 = vmatpush.bf16.msra.mxu0 %v5408
        %5426 = vmatpush.bf16.msra.mxu0 %v5407
        %5427 = vmatpush.bf16.msra.mxu0 %v5406
        %5428 = vmatpush.bf16.msra.mxu0 %v5405
        %5429 = vmatmul.bf16.gmra.mxu0 %v5354
        %v5430 = vpop.f32.mrf.mxu0
        %v5431 = vadd.f32 0.0, %v5430
        %v5432 = vpop.f32.mrf.mxu0
        %v5433 = vadd.f32 0.0, %v5432
        %5434 = vmatmul.bf16.gmra.mxu0 %v5355
        %v5435 = vpop.f32.mrf.mxu0
        %v5436 = vadd.f32 0.0, %v5435
        %v5437 = vpop.f32.mrf.mxu0
        %v5438 = vadd.f32 0.0, %v5437
        %5439 = vmatmul.bf16.gmra.mxu0 %v5356
        %v5440 = vpop.f32.mrf.mxu0
        %v5441 = vadd.f32 0.0, %v5440
        %v5442 = vpop.f32.mrf.mxu0
        %v5443 = vadd.f32 0.0, %v5442
        %5444 = vdwg.mxu0
        %v5461 = vunpack.c.l.b16 %v5296
        %v5462 = vunpack.c.l.b16 %v5297
        %v5463 = vunpack.c.l.b16 %v5298
        %v5464 = vunpack.c.l.b16 %v5299
        %v5465 = vunpack.c.l.b16 %v5300
        %v5466 = vunpack.c.l.b16 %v5301
        %v5467 = vunpack.c.l.b16 %v5302
        %v5468 = vunpack.c.l.b16 %v5303
        %v5469 = vunpack.c.l.b16 %v5304
        %v5470 = vunpack.c.l.b16 %v5305
        %v5471 = vunpack.c.l.b16 %v5306
        %v5472 = vunpack.c.l.b16 %v5307
        %v5473 = vunpack.c.l.b16 %v5308
        %v5474 = vunpack.c.l.b16 %v5309
        %v5475 = vunpack.c.l.b16 %v5310
        %v5476 = vunpack.c.l.b16 %v5311
        %v5477 = vpack.c.b16 %v5462, %v5461
        %v5478 = vpack.c.b16 %v5464, %v5463
        %v5479 = vpack.c.b16 %v5466, %v5465
        %v5480 = vpack.c.b16 %v5468, %v5467
        %v5481 = vpack.c.b16 %v5470, %v5469
        %v5482 = vpack.c.b16 %v5472, %v5471
        %v5483 = vpack.c.b16 %v5474, %v5473
        %v5484 = vpack.c.b16 %v5476, %v5475
        %5493 = vmatpush.bf16.msra.mxu0 %v5484
        %5494 = vmatpush.bf16.msra.mxu0 %v5483
        %5495 = vmatpush.bf16.msra.mxu0 %v5482
        %5496 = vmatpush.bf16.msra.mxu0 %v5481
        %5497 = vmatpush.bf16.msra.mxu0 %v5480
        %5498 = vmatpush.bf16.msra.mxu0 %v5479
        %5499 = vmatpush.bf16.msra.mxu0 %v5478
        %5500 = vmatpush.bf16.msra.mxu0 %v5477
        %5501 = vmatmul.bf16.gmra.mxu0 %v5293
        %v5502 = vpop.f32.mrf.mxu0
        %v5503 = vadd.f32 %v5431, %v5502
        %v5504 = vpop.f32.mrf.mxu0
        %v5505 = vadd.f32 %v5433, %v5504
        %5506 = vmatmul.bf16.gmra.mxu0 %v5294
        %v5507 = vpop.f32.mrf.mxu0
        %v5508 = vadd.f32 %v5436, %v5507
        %v5509 = vpop.f32.mrf.mxu0
        %v5510 = vadd.f32 %v5438, %v5509
        %5511 = vmatmul.bf16.gmra.mxu0 %v5295
        %v5512 = vpop.f32.mrf.mxu0
        %v5513 = vadd.f32 %v5441, %v5512
        %v5514 = vpop.f32.mrf.mxu0
        %v5515 = vadd.f32 %v5443, %v5514
        %5516 = vdwg.mxu0
        %v5517 = vadd.f32 %v4924, %v5503
        %v5518 = vadd.f32 %v4926, %v5505
        %v5519 = vadd.f32 %v4929, %v5508
        %v5520 = vadd.f32 %v4931, %v5510
        %v5521 = vadd.f32 %v4934, %v5513
        %v5522 = vadd.f32 %v4936, %v5515
        %v5523 = vpack.c.bf16 %v5232, %v5231
        %v5524 = vpack.c.bf16 %v5517, %v5517
        %v5525 = vpack.c.bf16 %v5518, %v5518
        %v5526 = vpack.c.bf16 %v5519, %v5519
        %v5527 = vpack.c.bf16 %v5520, %v5520
        %v5528 = vpack.c.bf16 %v5521, %v5521
        %v5529 = vpack.c.bf16 %v5522, %v5522
        %v5530 = vld [vmem:[#allocation4] sm:$0xf]
        %v5531 = vld [vmem:[#allocation4 + $0x4] sm:$0xf]
        %v5532 = vld [vmem:[#allocation4 + $0x8] sm:$0xf]
        %v5533 = vld [vmem:[#allocation4 + $0xc] sm:$0xf]
        %v5534 = vld [vmem:[#allocation4 + $0x10] sm:$0xf]
        %v5535 = vld [vmem:[#allocation4 + $0x14] sm:$0xf]
        %v5536 = vld [vmem:[#allocation4 + $0x18] sm:$0xf]
        %v5537 = vld [vmem:[#allocation4 + $0x1c] sm:$0xf]
        %v5538 = vld [vmem:[#allocation4 + $0x20] sm:$0xf]
        %v5539 = vld [vmem:[#allocation4 + $0x24] sm:$0xf]
        %v5540 = vld [vmem:[#allocation4 + $0x28] sm:$0xf]
        %v5541 = vld [vmem:[#allocation4 + $0x2c] sm:$0xf]
        %v5542 = vld [vmem:[#allocation4 + $0x30] sm:$0xf]
        %v5543 = vld [vmem:[#allocation4 + $0x34] sm:$0xf]
        %v5544 = vld [vmem:[#allocation4 + $0x38] sm:$0xf]
        %v5545 = vld [vmem:[#allocation4 + $0x3c] sm:$0xf]
        %5546 = vmatpush.bf16.msra.mxu0 0
        %5547 = vmatpush.bf16.msra.mxu0 0
        %5548 = vmatpush.bf16.msra.mxu0 0
        %5549 = vmatpush.bf16.msra.mxu0 0
        %5550 = vmatpush.bf16.msra.mxu0 0
        %5551 = vmatpush.bf16.msra.mxu0 0
        %5552 = vmatpush.bf16.msra.mxu0 0
        %5553 = vmatpush.bf16.msra.mxu0 %v5523
        %5554 = vmatmul.bf16.gmra.mxu0 %v2469
        %v5555 = vpop.f32.mrf.mxu0
        %v5556 = vadd.f32 0.0, %v5555
        %v5557 = vpop.f32.mrf.mxu0
        %v5558 = vadd.f32 0.0, %v5557
        %5559 = vdwg.mxu0
        %v5560 = vpack.c.bf16 %v5558, %v5556
        %v5561 = vld [vmem:[#allocation2] sm:$0xf]
        %v5562 = vld [vmem:[#allocation2 + $0x4] sm:$0xf]
        %v5563 = vld [vmem:[#allocation2 + $0x8] sm:$0xf]
        %v5564 = vld [vmem:[#allocation2 + $0xc] sm:$0xf]
        %v5565 = vld [vmem:[#allocation2 + $0x10] sm:$0xf]
        %v5566 = vld [vmem:[#allocation2 + $0x14] sm:$0xf]
        %v5567 = vld [vmem:[#allocation2 + $0x18] sm:$0xf]
        %v5568 = vld [vmem:[#allocation2 + $0x1c] sm:$0xf]
        %v5569 = vld [vmem:[#allocation2 + $0x20] sm:$0xf]
        %v5570 = vld [vmem:[#allocation2 + $0x24] sm:$0xf]
        %v5571 = vld [vmem:[#allocation2 + $0x28] sm:$0xf]
        %v5572 = vld [vmem:[#allocation2 + $0x2c] sm:$0xf]
        %v5573 = vld [vmem:[#allocation2 + $0x30] sm:$0xf]
        %v5574 = vld [vmem:[#allocation2 + $0x34] sm:$0xf]
        %v5575 = vld [vmem:[#allocation2 + $0x38] sm:$0xf]
        %v5576 = vld [vmem:[#allocation2 + $0x3c] sm:$0xf]
        %v5593 = vunpack.c.l.b16 %v5561
        %v5594 = vunpack.c.l.b16 %v5562
        %v5595 = vunpack.c.l.b16 %v5563
        %v5596 = vunpack.c.l.b16 %v5564
        %v5597 = vunpack.c.l.b16 %v5565
        %v5598 = vunpack.c.l.b16 %v5566
        %v5599 = vunpack.c.l.b16 %v5567
        %v5600 = vunpack.c.l.b16 %v5568
        %v5601 = vunpack.c.l.b16 %v5569
        %v5602 = vunpack.c.l.b16 %v5570
        %v5603 = vunpack.c.l.b16 %v5571
        %v5604 = vunpack.c.l.b16 %v5572
        %v5605 = vunpack.c.l.b16 %v5573
        %v5606 = vunpack.c.l.b16 %v5574
        %v5607 = vunpack.c.l.b16 %v5575
        %v5608 = vunpack.c.l.b16 %v5576
        %v5609 = vpack.c.b16 %v5594, %v5593
        %v5610 = vpack.c.b16 %v5596, %v5595
        %v5611 = vpack.c.b16 %v5598, %v5597
        %v5612 = vpack.c.b16 %v5600, %v5599
        %v5613 = vpack.c.b16 %v5602, %v5601
        %v5614 = vpack.c.b16 %v5604, %v5603
        %v5615 = vpack.c.b16 %v5606, %v5605
        %v5616 = vpack.c.b16 %v5608, %v5607
        %5625 = vmatpush.bf16.msra.mxu0 %v5616
        %5626 = vmatpush.bf16.msra.mxu0 %v5615
        %5627 = vmatpush.bf16.msra.mxu0 %v5614
        %5628 = vmatpush.bf16.msra.mxu0 %v5613
        %5629 = vmatpush.bf16.msra.mxu0 %v5612
        %5630 = vmatpush.bf16.msra.mxu0 %v5611
        %5631 = vmatpush.bf16.msra.mxu0 %v5610
        %5632 = vmatpush.bf16.msra.mxu0 %v5609
        %5633 = vmatmul.bf16.gmra.mxu0 %v5560
        %v5634 = vpop.f32.mrf.mxu0
        %v5635 = vadd.f32 0.0, %v5634
        %v5636 = vpop.f32.mrf.mxu0
        %v5637 = vadd.f32 0.0, %v5636
        %5638 = vdwg.mxu0
        %v5655 = vunpack.c.l.b16 %v5530
        %v5656 = vunpack.c.l.b16 %v5531
        %v5657 = vunpack.c.l.b16 %v5532
        %v5658 = vunpack.c.l.b16 %v5533
        %v5659 = vunpack.c.l.b16 %v5534
        %v5660 = vunpack.c.l.b16 %v5535
        %v5661 = vunpack.c.l.b16 %v5536
        %v5662 = vunpack.c.l.b16 %v5537
        %v5663 = vunpack.c.l.b16 %v5538
        %v5664 = vunpack.c.l.b16 %v5539
        %v5665 = vunpack.c.l.b16 %v5540
        %v5666 = vunpack.c.l.b16 %v5541
        %v5667 = vunpack.c.l.b16 %v5542
        %v5668 = vunpack.c.l.b16 %v5543
        %v5669 = vunpack.c.l.b16 %v5544
        %v5670 = vunpack.c.l.b16 %v5545
        %v5671 = vpack.c.b16 %v5656, %v5655
        %v5672 = vpack.c.b16 %v5658, %v5657
        %v5673 = vpack.c.b16 %v5660, %v5659
        %v5674 = vpack.c.b16 %v5662, %v5661
        %v5675 = vpack.c.b16 %v5664, %v5663
        %v5676 = vpack.c.b16 %v5666, %v5665
        %v5677 = vpack.c.b16 %v5668, %v5667
        %v5678 = vpack.c.b16 %v5670, %v5669
        %5687 = vmatpush.bf16.msra.mxu0 %v5678
        %5688 = vmatpush.bf16.msra.mxu0 %v5677
        %5689 = vmatpush.bf16.msra.mxu0 %v5676
        %5690 = vmatpush.bf16.msra.mxu0 %v5675
        %5691 = vmatpush.bf16.msra.mxu0 %v5674
        %5692 = vmatpush.bf16.msra.mxu0 %v5673
        %5693 = vmatpush.bf16.msra.mxu0 %v5672
        %5694 = vmatpush.bf16.msra.mxu0 %v5671
        %5695 = vmatmul.bf16.gmra.mxu0 %v5523
        %v5696 = vpop.f32.mrf.mxu0
        %v5697 = vadd.f32 %v5635, %v5696
        %v5698 = vpop.f32.mrf.mxu0
        %v5699 = vadd.f32 %v5637, %v5698
        %5700 = vdwg.mxu0
        %v5701 = vld [vmem:[%s39] sm:$0x1]
        %v5703 = vperm.slane %v5701, 0
        %v5705 = vadd.f32 %v5697, %v5703
        %v5706 = vadd.f32 %v5699, %v5703
        %v5707 = vld [vmem:[#allocation28] sm:$0xf]
        %v5708 = vld [vmem:[#allocation28 + $0x4] sm:$0xf]
        %v5709 = vld [vmem:[#allocation28 + $0x8] sm:$0xf]
        %v5710 = vld [vmem:[#allocation28 + $0xc] sm:$0xf]
        %v5711 = vld [vmem:[#allocation28 + $0x10] sm:$0xf]
        %v5712 = vld [vmem:[#allocation28 + $0x14] sm:$0xf]
        %v5713 = vld [vmem:[#allocation28 + $0x18] sm:$0xf]
        %v5714 = vld [vmem:[#allocation28 + $0x1c] sm:$0xf]
        %v5715 = vld [vmem:[#allocation28 + $0x20] sm:$0xf]
        %v5716 = vld [vmem:[#allocation28 + $0x24] sm:$0xf]
        %v5717 = vld [vmem:[#allocation28 + $0x28] sm:$0xf]
        %v5718 = vld [vmem:[#allocation28 + $0x2c] sm:$0xf]
        %v5719 = vld [vmem:[#allocation28 + $0x30] sm:$0xf]
        %v5720 = vld [vmem:[#allocation28 + $0x34] sm:$0xf]
        %v5721 = vld [vmem:[#allocation28 + $0x38] sm:$0xf]
        %v5722 = vld [vmem:[#allocation28 + $0x3c] sm:$0xf]
        %v5725 = vunpack.c.l.b16 %v5524
        %v5726 = vunpack.c.l.b16 %v5525
        %v5727 = vpack.c.b16 %v5726, %v5725
        %5729 = vmatpush.bf16.msra.mxu0 0
        %5730 = vmatpush.bf16.msra.mxu0 0
        %5731 = vmatpush.bf16.msra.mxu0 0
        %5732 = vmatpush.bf16.msra.mxu0 0
        %5733 = vmatpush.bf16.msra.mxu0 0
        %5734 = vmatpush.bf16.msra.mxu0 0
        %5735 = vmatpush.bf16.msra.mxu0 0
        %5736 = vmatpush.bf16.msra.mxu0 %v5727
        %5737 = vmatmul.bf16.gmra.mxu0 %v2469
        %v5738 = vpop.f32.mrf.mxu0
        %v5739 = vadd.f32 0.0, %v5738
        %v5740 = vpop.f32.mrf.mxu0
        %v5741 = vadd.f32 0.0, %v5740
        %5742 = vdwg.mxu0
        %v5745 = vunpack.c.l.b16 %v5526
        %v5746 = vunpack.c.l.b16 %v5527
        %v5747 = vpack.c.b16 %v5746, %v5745
        %5749 = vmatpush.bf16.msra.mxu0 0
        %5750 = vmatpush.bf16.msra.mxu0 0
        %5751 = vmatpush.bf16.msra.mxu0 0
        %5752 = vmatpush.bf16.msra.mxu0 0
        %5753 = vmatpush.bf16.msra.mxu0 0
        %5754 = vmatpush.bf16.msra.mxu0 0
        %5755 = vmatpush.bf16.msra.mxu0 0
        %5756 = vmatpush.bf16.msra.mxu0 %v5747
        %5757 = vmatmul.bf16.gmra.mxu0 %v2469
        %v5758 = vpop.f32.mrf.mxu0
        %v5759 = vadd.f32 0.0, %v5758
        %v5760 = vpop.f32.mrf.mxu0
        %v5761 = vadd.f32 0.0, %v5760
        %5762 = vdwg.mxu0
        %v5765 = vunpack.c.l.b16 %v5528
        %v5766 = vunpack.c.l.b16 %v5529
        %v5767 = vpack.c.b16 %v5766, %v5765
        %5769 = vmatpush.bf16.msra.mxu0 0
        %5770 = vmatpush.bf16.msra.mxu0 0
        %5771 = vmatpush.bf16.msra.mxu0 0
        %5772 = vmatpush.bf16.msra.mxu0 0
        %5773 = vmatpush.bf16.msra.mxu0 0
        %5774 = vmatpush.bf16.msra.mxu0 0
        %5775 = vmatpush.bf16.msra.mxu0 0
        %5776 = vmatpush.bf16.msra.mxu0 %v5767
        %5777 = vmatmul.bf16.gmra.mxu0 %v2469
        %v5778 = vpop.f32.mrf.mxu0
        %v5779 = vadd.f32 0.0, %v5778
        %v5780 = vpop.f32.mrf.mxu0
        %v5781 = vadd.f32 0.0, %v5780
        %5782 = vdwg.mxu0
        %v5783 = vpack.c.bf16 %v5741, %v5739
        %v5784 = vpack.c.bf16 %v5761, %v5759
        %v5785 = vpack.c.bf16 %v5781, %v5779
        %v5786 = vld [vmem:[#allocation27] sm:$0xf]
        %v5787 = vld [vmem:[#allocation27 + $0x4] sm:$0xf]
        %v5788 = vld [vmem:[#allocation27 + $0x8] sm:$0xf]
        %v5789 = vld [vmem:[#allocation27 + $0xc] sm:$0xf]
        %v5790 = vld [vmem:[#allocation27 + $0x10] sm:$0xf]
        %v5791 = vld [vmem:[#allocation27 + $0x14] sm:$0xf]
        %v5792 = vld [vmem:[#allocation27 + $0x18] sm:$0xf]
        %v5793 = vld [vmem:[#allocation27 + $0x1c] sm:$0xf]
        %v5794 = vld [vmem:[#allocation27 + $0x20] sm:$0xf]
        %v5795 = vld [vmem:[#allocation27 + $0x24] sm:$0xf]
        %v5796 = vld [vmem:[#allocation27 + $0x28] sm:$0xf]
        %v5797 = vld [vmem:[#allocation27 + $0x2c] sm:$0xf]
        %v5798 = vld [vmem:[#allocation27 + $0x30] sm:$0xf]
        %v5799 = vld [vmem:[#allocation27 + $0x34] sm:$0xf]
        %v5800 = vld [vmem:[#allocation27 + $0x38] sm:$0xf]
        %v5801 = vld [vmem:[#allocation27 + $0x3c] sm:$0xf]
        %v5818 = vunpack.c.l.b16 %v5786
        %v5819 = vunpack.c.l.b16 %v5787
        %v5820 = vunpack.c.l.b16 %v5788
        %v5821 = vunpack.c.l.b16 %v5789
        %v5822 = vunpack.c.l.b16 %v5790
        %v5823 = vunpack.c.l.b16 %v5791
        %v5824 = vunpack.c.l.b16 %v5792
        %v5825 = vunpack.c.l.b16 %v5793
        %v5826 = vunpack.c.l.b16 %v5794
        %v5827 = vunpack.c.l.b16 %v5795
        %v5828 = vunpack.c.l.b16 %v5796
        %v5829 = vunpack.c.l.b16 %v5797
        %v5830 = vunpack.c.l.b16 %v5798
        %v5831 = vunpack.c.l.b16 %v5799
        %v5832 = vunpack.c.l.b16 %v5800
        %v5833 = vunpack.c.l.b16 %v5801
        %v5834 = vpack.c.b16 %v5819, %v5818
        %v5835 = vpack.c.b16 %v5821, %v5820
        %v5836 = vpack.c.b16 %v5823, %v5822
        %v5837 = vpack.c.b16 %v5825, %v5824
        %v5838 = vpack.c.b16 %v5827, %v5826
        %v5839 = vpack.c.b16 %v5829, %v5828
        %v5840 = vpack.c.b16 %v5831, %v5830
        %v5841 = vpack.c.b16 %v5833, %v5832
        %5850 = vmatpush.bf16.msra.mxu0 %v5841
        %5851 = vmatpush.bf16.msra.mxu0 %v5840
        %5852 = vmatpush.bf16.msra.mxu0 %v5839
        %5853 = vmatpush.bf16.msra.mxu0 %v5838
        %5854 = vmatpush.bf16.msra.mxu0 %v5837
        %5855 = vmatpush.bf16.msra.mxu0 %v5836
        %5856 = vmatpush.bf16.msra.mxu0 %v5835
        %5857 = vmatpush.bf16.msra.mxu0 %v5834
        %5858 = vmatmul.bf16.gmra.mxu0 %v5783
        %v5859 = vpop.f32.mrf.mxu0
        %v5860 = vadd.f32 0.0, %v5859
        %v5861 = vpop.f32.mrf.mxu0
        %v5862 = vadd.f32 0.0, %v5861
        %5863 = vmatmul.bf16.gmra.mxu0 %v5784
        %v5864 = vpop.f32.mrf.mxu0
        %v5865 = vadd.f32 0.0, %v5864
        %v5866 = vpop.f32.mrf.mxu0
        %v5867 = vadd.f32 0.0, %v5866
        %5868 = vmatmul.bf16.gmra.mxu0 %v5785
        %v5869 = vpop.f32.mrf.mxu0
        %v5870 = vadd.f32 0.0, %v5869
        %v5871 = vpop.f32.mrf.mxu0
        %v5872 = vadd.f32 0.0, %v5871
        %5873 = vdwg.mxu0
        %v5890 = vunpack.c.l.b16 %v5707
        %v5891 = vunpack.c.l.b16 %v5708
        %v5892 = vunpack.c.l.b16 %v5709
        %v5893 = vunpack.c.l.b16 %v5710
        %v5894 = vunpack.c.l.b16 %v5711
        %v5895 = vunpack.c.l.b16 %v5712
        %v5896 = vunpack.c.l.b16 %v5713
        %v5897 = vunpack.c.l.b16 %v5714
        %v5898 = vunpack.c.l.b16 %v5715
        %v5899 = vunpack.c.l.b16 %v5716
        %v5900 = vunpack.c.l.b16 %v5717
        %v5901 = vunpack.c.l.b16 %v5718
        %v5902 = vunpack.c.l.b16 %v5719
        %v5903 = vunpack.c.l.b16 %v5720
        %v5904 = vunpack.c.l.b16 %v5721
        %v5905 = vunpack.c.l.b16 %v5722
        %v5906 = vpack.c.b16 %v5891, %v5890
        %v5907 = vpack.c.b16 %v5893, %v5892
        %v5908 = vpack.c.b16 %v5895, %v5894
        %v5909 = vpack.c.b16 %v5897, %v5896
        %v5910 = vpack.c.b16 %v5899, %v5898
        %v5911 = vpack.c.b16 %v5901, %v5900
        %v5912 = vpack.c.b16 %v5903, %v5902
        %v5913 = vpack.c.b16 %v5905, %v5904
        %5922 = vmatpush.bf16.msra.mxu0 %v5913
        %5923 = vmatpush.bf16.msra.mxu0 %v5912
        %5924 = vmatpush.bf16.msra.mxu0 %v5911
        %5925 = vmatpush.bf16.msra.mxu0 %v5910
        %5926 = vmatpush.bf16.msra.mxu0 %v5909
        %5927 = vmatpush.bf16.msra.mxu0 %v5908
        %5928 = vmatpush.bf16.msra.mxu0 %v5907
        %5929 = vmatpush.bf16.msra.mxu0 %v5906
        %5930 = vmatmul.bf16.gmra.mxu0 %v5727
        %v5931 = vpop.f32.mrf.mxu0
        %v5932 = vadd.f32 %v5860, %v5931
        %v5933 = vpop.f32.mrf.mxu0
        %v5934 = vadd.f32 %v5862, %v5933
        %5935 = vmatmul.bf16.gmra.mxu0 %v5747
        %v5936 = vpop.f32.mrf.mxu0
        %v5937 = vadd.f32 %v5865, %v5936
        %v5938 = vpop.f32.mrf.mxu0
        %v5939 = vadd.f32 %v5867, %v5938
        %5940 = vmatmul.bf16.gmra.mxu0 %v5767
        %v5941 = vpop.f32.mrf.mxu0
        %v5942 = vadd.f32 %v5870, %v5941
        %v5943 = vpop.f32.mrf.mxu0
        %v5944 = vadd.f32 %v5872, %v5943
        %5945 = vdwg.mxu0
        %v5946 = vld [vmem:[%s59] sm:$0xf]
        %v5947 = vld [vmem:[%s59 + $0x4] sm:$0xf]
        %v5948 = vld [vmem:[%s59 + $0x8] sm:$0xf]
        %v5949 = vld [vmem:[%s59 + $0xc] sm:$0xf]
        %v5950 = vld [vmem:[%s59 + $0x10] sm:$0xf]
        %v5951 = vld [vmem:[%s59 + $0x14] sm:$0xf]
        %v5952 = vld [vmem:[%s59 + $0x18] sm:$0xf]
        %v5953 = vld [vmem:[%s59 + $0x1c] sm:$0xf]
        %v5954 = vld [vmem:[%s59 + $0x20] sm:$0xf]
        %v5955 = vld [vmem:[%s59 + $0x24] sm:$0xf]
        %v5956 = vld [vmem:[%s59 + $0x28] sm:$0xf]
        %v5957 = vld [vmem:[%s59 + $0x2c] sm:$0xf]
        %v5958 = vld [vmem:[%s59 + $0x30] sm:$0xf]
        %v5959 = vld [vmem:[%s59 + $0x34] sm:$0xf]
        %v5960 = vld [vmem:[%s59 + $0x38] sm:$0xf]
        %v5961 = vld [vmem:[%s59 + $0x3c] sm:$0xf]
        %v5962 = vpack.c.bf16 %v5706, %v5705
        %v5979 = vunpack.c.l.b16 %v5946
        %v5980 = vunpack.c.l.b16 %v5947
        %v5981 = vunpack.c.l.b16 %v5948
        %v5982 = vunpack.c.l.b16 %v5949
        %v5983 = vunpack.c.l.b16 %v5950
        %v5984 = vunpack.c.l.b16 %v5951
        %v5985 = vunpack.c.l.b16 %v5952
        %v5986 = vunpack.c.l.b16 %v5953
        %v5987 = vunpack.c.l.b16 %v5954
        %v5988 = vunpack.c.l.b16 %v5955
        %v5989 = vunpack.c.l.b16 %v5956
        %v5990 = vunpack.c.l.b16 %v5957
        %v5991 = vunpack.c.l.b16 %v5958
        %v5992 = vunpack.c.l.b16 %v5959
        %v5993 = vunpack.c.l.b16 %v5960
        %v5994 = vunpack.c.l.b16 %v5961
        %v5995 = vpack.c.b16 %v5980, %v5979
        %v5996 = vpack.c.b16 %v5982, %v5981
        %v5997 = vpack.c.b16 %v5984, %v5983
        %v5998 = vpack.c.b16 %v5986, %v5985
        %v5999 = vpack.c.b16 %v5988, %v5987
        %v6000 = vpack.c.b16 %v5990, %v5989
        %v6001 = vpack.c.b16 %v5992, %v5991
        %v6002 = vpack.c.b16 %v5994, %v5993
        %6011 = vmatpush.bf16.msra.mxu0 %v6002
        %6012 = vmatpush.bf16.msra.mxu0 %v6001
        %6013 = vmatpush.bf16.msra.mxu0 %v6000
        %6014 = vmatpush.bf16.msra.mxu0 %v5999
        %6015 = vmatpush.bf16.msra.mxu0 %v5998
        %6016 = vmatpush.bf16.msra.mxu0 %v5997
        %6017 = vmatpush.bf16.msra.mxu0 %v5996
        %6018 = vmatpush.bf16.msra.mxu0 %v5995
        %6019 = vmatmul.bf16.gmra.mxu0 %v5962
        %v6020 = vpop.f32.mrf.mxu0
        %v6021 = vadd.f32 0.0, %v6020
        %v6022 = vpop.f32.mrf.mxu0
        %v6023 = vadd.f32 0.0, %v6022
        %6024 = vdwg.mxu0
        %v6025 = vsub.f32 %v5705, %v6021
        %v6026 = vsub.f32 %v5706, %v6023
        %v6027 = vmul.f32 %v6025, %v6025
        %v6028 = vmul.f32 %v6026, %v6026
        %v6029 = vpack.c.bf16 %v6028, %v6027
        %6030 = vmatpush.bf16.msra.mxu0 %v6002
        %6031 = vmatpush.bf16.msra.mxu0 %v6001
        %6032 = vmatpush.bf16.msra.mxu0 %v6000
        %6033 = vmatpush.bf16.msra.mxu0 %v5999
        %6034 = vmatpush.bf16.msra.mxu0 %v5998
        %6035 = vmatpush.bf16.msra.mxu0 %v5997
        %6036 = vmatpush.bf16.msra.mxu0 %v5996
        %6037 = vmatpush.bf16.msra.mxu0 %v5995
        %6038 = vmatmul.bf16.gmra.mxu0 %v6029
        %v6039 = vpop.f32.mrf.mxu0
        %v6040 = vadd.f32 1e-05, %v6039
        %v6041 = vpop.f32.mrf.mxu0
        %v6042 = vadd.f32 1e-05, %v6041
        %6043 = vdwg.mxu0
        %v6044 = vrsqrt.pop %v6040
        %v6045 = vmul.f32 %v6044, %v6040
        %v6046 = vmul.f32 %v6045, %v6044
        %v6047 = vmul.f32 0.5, %v6046
        %v6048 = vsub.f32 1.5, %v6047
        %v6049 = vmul.f32 %v6044, %v6048
        %vm6050 = vweird.f32 %v6040
        %vm6051 = vweird.f32 %v6044
        %vm6052 = vmor %vm6050, %vm6051
        %v6053 = vsel %vm6052, %v6044, %v6049
        %v6054 = vrsqrt.pop %v6042
        %v6055 = vmul.f32 %v6054, %v6042
        %v6056 = vmul.f32 %v6055, %v6054
        %v6057 = vmul.f32 0.5, %v6056
        %v6058 = vsub.f32 1.5, %v6057
        %v6059 = vmul.f32 %v6054, %v6058
        %vm6060 = vweird.f32 %v6042
        %vm6061 = vweird.f32 %v6054
        %vm6062 = vmor %vm6060, %vm6061
        %v6063 = vsel %vm6062, %v6054, %v6059
        %v6064 = vmul.f32 %v6025, %v6053
        %v6065 = vmul.f32 %v6026, %v6063
        %v6066 = vld [vmem:[%s53] sm:$0x1]
        %v6068 = vperm.slane %v6066, 0
        %v6070 = vmul.f32 %v6064, %v6068
        %v6071 = vmul.f32 %v6065, %v6068
        %v6072 = vld [vmem:[%s49] sm:$0x1]
        %v6074 = vperm.slane %v6072, 0
        %v6076 = vadd.f32 %v6070, %v6074
        %v6077 = vadd.f32 %v6071, %v6074
        %6078 = vmatpush.bf16.msra.mxu0 %v6002
        %6079 = vmatpush.bf16.msra.mxu0 %v6001
        %6080 = vmatpush.bf16.msra.mxu0 %v6000
        %6081 = vmatpush.bf16.msra.mxu0 %v5999
        %6082 = vmatpush.bf16.msra.mxu0 %v5998
        %6083 = vmatpush.bf16.msra.mxu0 %v5997
        %6084 = vmatpush.bf16.msra.mxu0 %v5996
        %6085 = vmatpush.bf16.msra.mxu0 %v5995
        %6086 = vmatmul.bf16.gmra.mxu0 %v5012
        %v6087 = vpop.f32.mrf.mxu0
        %v6088 = vadd.f32 0.0, %v6087
        %v6089 = vpop.f32.mrf.mxu0
        %v6090 = vadd.f32 0.0, %v6089
        %6091 = vdwg.mxu0
        %v6092 = vsub.f32 %v4938, %v6088
        %v6093 = vsub.f32 %v4939, %v6090
        %v6094 = vmul.f32 %v6092, %v6092
        %v6095 = vmul.f32 %v6093, %v6093
        %v6096 = vpack.c.bf16 %v6095, %v6094
        %6097 = vmatpush.bf16.msra.mxu0 %v6002
        %6098 = vmatpush.bf16.msra.mxu0 %v6001
        %6099 = vmatpush.bf16.msra.mxu0 %v6000
        %6100 = vmatpush.bf16.msra.mxu0 %v5999
        %6101 = vmatpush.bf16.msra.mxu0 %v5998
        %6102 = vmatpush.bf16.msra.mxu0 %v5997
        %6103 = vmatpush.bf16.msra.mxu0 %v5996
        %6104 = vmatpush.bf16.msra.mxu0 %v5995
        %6105 = vmatmul.bf16.gmra.mxu0 %v6096
        %v6106 = vpop.f32.mrf.mxu0
        %v6107 = vadd.f32 1e-05, %v6106
        %v6108 = vpop.f32.mrf.mxu0
        %v6109 = vadd.f32 1e-05, %v6108
        %6110 = vdwg.mxu0
        %v6111 = vrsqrt.pop %v6107
        %v6112 = vmul.f32 %v6111, %v6107
        %v6113 = vmul.f32 %v6112, %v6111
        %v6114 = vmul.f32 0.5, %v6113
        %v6115 = vsub.f32 1.5, %v6114
        %v6116 = vmul.f32 %v6111, %v6115
        %vm6117 = vweird.f32 %v6107
        %vm6118 = vweird.f32 %v6111
        %vm6119 = vmor %vm6117, %vm6118
        %v6120 = vsel %vm6119, %v6111, %v6116
        %v6121 = vrsqrt.pop %v6109
        %v6122 = vmul.f32 %v6121, %v6109
        %v6123 = vmul.f32 %v6122, %v6121
        %v6124 = vmul.f32 0.5, %v6123
        %v6125 = vsub.f32 1.5, %v6124
        %v6126 = vmul.f32 %v6121, %v6125
        %vm6127 = vweird.f32 %v6109
        %vm6128 = vweird.f32 %v6121
        %vm6129 = vmor %vm6127, %vm6128
        %v6130 = vsel %vm6129, %v6121, %v6126
        %v6131 = vmul.f32 %v6092, %v6120
        %v6132 = vmul.f32 %v6093, %v6130
        %v6133 = vld [vmem:[%s51] sm:$0x1]
        %v6135 = vperm.slane %v6133, 0
        %v6137 = vmul.f32 %v6131, %v6135
        %v6138 = vmul.f32 %v6132, %v6135
        %v6139 = vld [vmem:[%s47] sm:$0x1]
        %v6141 = vperm.slane %v6139, 0
        %v6143 = vadd.f32 %v6137, %v6141
        %v6144 = vadd.f32 %v6138, %v6141
        %v6145 = vmul.f32 %v5932, %v5932
        %v6146 = vmul.f32 %v5934, %v5934
        %v6147 = vmul.f32 %v5937, %v5937
        %v6148 = vmul.f32 %v5939, %v5939
        %v6149 = vadd.f32 %v6145, %v6147
        %v6150 = vadd.f32 %v6146, %v6148
        %v6151 = vmul.f32 %v5942, %v5942
        %v6152 = vmul.f32 %v5944, %v5944
        %v6153 = vadd.f32 %v6149, %v6151
        %v6154 = vadd.f32 %v6150, %v6152
        %v6155 = vpack.c.bf16 %v6154, %v6153
        %v6156 = vld [vmem:[%s61] sm:$0xf]
        %v6157 = vld [vmem:[%s61 + $0x4] sm:$0xf]
        %v6158 = vld [vmem:[%s61 + $0x8] sm:$0xf]
        %v6159 = vld [vmem:[%s61 + $0xc] sm:$0xf]
        %v6160 = vld [vmem:[%s61 + $0x10] sm:$0xf]
        %v6161 = vld [vmem:[%s61 + $0x14] sm:$0xf]
        %v6162 = vld [vmem:[%s61 + $0x18] sm:$0xf]
        %v6163 = vld [vmem:[%s61 + $0x1c] sm:$0xf]
        %v6164 = vld [vmem:[%s61 + $0x20] sm:$0xf]
        %v6165 = vld [vmem:[%s61 + $0x24] sm:$0xf]
        %v6166 = vld [vmem:[%s61 + $0x28] sm:$0xf]
        %v6167 = vld [vmem:[%s61 + $0x2c] sm:$0xf]
        %v6168 = vld [vmem:[%s61 + $0x30] sm:$0xf]
        %v6169 = vld [vmem:[%s61 + $0x34] sm:$0xf]
        %v6170 = vld [vmem:[%s61 + $0x38] sm:$0xf]
        %v6171 = vld [vmem:[%s61 + $0x3c] sm:$0xf]
        %v6188 = vunpack.c.l.b16 %v6156
        %v6189 = vunpack.c.l.b16 %v6157
        %v6190 = vunpack.c.l.b16 %v6158
        %v6191 = vunpack.c.l.b16 %v6159
        %v6192 = vunpack.c.l.b16 %v6160
        %v6193 = vunpack.c.l.b16 %v6161
        %v6194 = vunpack.c.l.b16 %v6162
        %v6195 = vunpack.c.l.b16 %v6163
        %v6196 = vunpack.c.l.b16 %v6164
        %v6197 = vunpack.c.l.b16 %v6165
        %v6198 = vunpack.c.l.b16 %v6166
        %v6199 = vunpack.c.l.b16 %v6167
        %v6200 = vunpack.c.l.b16 %v6168
        %v6201 = vunpack.c.l.b16 %v6169
        %v6202 = vunpack.c.l.b16 %v6170
        %v6203 = vunpack.c.l.b16 %v6171
        %v6204 = vpack.c.b16 %v6189, %v6188
        %v6205 = vpack.c.b16 %v6191, %v6190
        %v6206 = vpack.c.b16 %v6193, %v6192
        %v6207 = vpack.c.b16 %v6195, %v6194
        %v6208 = vpack.c.b16 %v6197, %v6196
        %v6209 = vpack.c.b16 %v6199, %v6198
        %v6210 = vpack.c.b16 %v6201, %v6200
        %v6211 = vpack.c.b16 %v6203, %v6202
        %6220 = vmatpush.bf16.msra.mxu0 %v6211
        %6221 = vmatpush.bf16.msra.mxu0 %v6210
        %6222 = vmatpush.bf16.msra.mxu0 %v6209
        %6223 = vmatpush.bf16.msra.mxu0 %v6208
        %6224 = vmatpush.bf16.msra.mxu0 %v6207
        %6225 = vmatpush.bf16.msra.mxu0 %v6206
        %6226 = vmatpush.bf16.msra.mxu0 %v6205
        %6227 = vmatpush.bf16.msra.mxu0 %v6204
        %6228 = vmatmul.bf16.gmra.mxu0 %v6155
        %v6229 = vpop.f32.mrf.mxu0
        %v6230 = vadd.f32 0.0, %v6229
        %v6231 = vpop.f32.mrf.mxu0
        %v6232 = vadd.f32 0.0, %v6231
        %6233 = vdwg.mxu0
        %v6234 = vmul.f32 %v6230, 0.33333334
        %v6235 = vmul.f32 %v6232, 0.33333334
        %v6236 = vadd.f32 %v6234, 1e-05
        %v6237 = vadd.f32 %v6235, 1e-05
        %v6238 = vrsqrt.pop %v6236
        %v6239 = vmul.f32 %v6238, %v6236
        %v6240 = vmul.f32 %v6239, %v6238
        %v6241 = vmul.f32 0.5, %v6240
        %v6242 = vsub.f32 1.5, %v6241
        %v6243 = vmul.f32 %v6238, %v6242
        %vm6244 = vweird.f32 %v6236
        %vm6245 = vweird.f32 %v6238
        %vm6246 = vmor %vm6244, %vm6245
        %v6247 = vsel %vm6246, %v6238, %v6243
        %v6248 = vrsqrt.pop %v6237
        %v6249 = vmul.f32 %v6248, %v6237
        %v6250 = vmul.f32 %v6249, %v6248
        %v6251 = vmul.f32 0.5, %v6250
        %v6252 = vsub.f32 1.5, %v6251
        %v6253 = vmul.f32 %v6248, %v6252
        %vm6254 = vweird.f32 %v6237
        %vm6255 = vweird.f32 %v6248
        %vm6256 = vmor %vm6254, %vm6255
        %v6257 = vsel %vm6256, %v6248, %v6253
        %v6258 = vld [vmem:[%s57] sm:$0x1]
        %v6260 = vperm.slane %v6258, 0
        %v6262 = vmul.f32 %v6247, %v6260
        %v6263 = vmul.f32 %v6257, %v6260
        %v6264 = vmul.f32 %v5932, %v6262
        %v6265 = vmul.f32 %v5934, %v6263
        %v6266 = vmul.f32 %v5937, %v6262
        %v6267 = vmul.f32 %v5939, %v6263
        %v6268 = vmul.f32 %v5942, %v6262
        %v6269 = vmul.f32 %v5944, %v6263
        %v6270 = vmul.f32 %v4998, %v4998
        %v6271 = vmul.f32 %v5000, %v5000
        %v6272 = vmul.f32 %v5003, %v5003
        %v6273 = vmul.f32 %v5005, %v5005
        %v6274 = vadd.f32 %v6270, %v6272
        %v6275 = vadd.f32 %v6271, %v6273
        %v6276 = vmul.f32 %v5008, %v5008
        %v6277 = vmul.f32 %v5010, %v5010
        %v6278 = vadd.f32 %v6274, %v6276
        %v6279 = vadd.f32 %v6275, %v6277
        %v6280 = vpack.c.bf16 %v6279, %v6278
        %6281 = vmatpush.bf16.msra.mxu0 %v6211
        %6282 = vmatpush.bf16.msra.mxu0 %v6210
        %6283 = vmatpush.bf16.msra.mxu0 %v6209
        %6284 = vmatpush.bf16.msra.mxu0 %v6208
        %6285 = vmatpush.bf16.msra.mxu0 %v6207
        %6286 = vmatpush.bf16.msra.mxu0 %v6206
        %6287 = vmatpush.bf16.msra.mxu0 %v6205
        %6288 = vmatpush.bf16.msra.mxu0 %v6204
        %6289 = vmatmul.bf16.gmra.mxu0 %v6280
        %v6290 = vpop.f32.mrf.mxu0
        %v6291 = vadd.f32 0.0, %v6290
        %v6292 = vpop.f32.mrf.mxu0
        %v6293 = vadd.f32 0.0, %v6292
        %6294 = vdwg.mxu0
        %v6295 = vmul.f32 %v6291, 0.33333334
        %v6296 = vmul.f32 %v6293, 0.33333334
        %v6297 = vadd.f32 %v6295, 1e-05
        %v6298 = vadd.f32 %v6296, 1e-05
        %v6299 = vrsqrt.pop %v6297
        %v6300 = vmul.f32 %v6299, %v6297
        %v6301 = vmul.f32 %v6300, %v6299
        %v6302 = vmul.f32 0.5, %v6301
        %v6303 = vsub.f32 1.5, %v6302
        %v6304 = vmul.f32 %v6299, %v6303
        %vm6305 = vweird.f32 %v6297
        %vm6306 = vweird.f32 %v6299
        %vm6307 = vmor %vm6305, %vm6306
        %v6308 = vsel %vm6307, %v6299, %v6304
        %v6309 = vrsqrt.pop %v6298
        %v6310 = vmul.f32 %v6309, %v6298
        %v6311 = vmul.f32 %v6310, %v6309
        %v6312 = vmul.f32 0.5, %v6311
        %v6313 = vsub.f32 1.5, %v6312
        %v6314 = vmul.f32 %v6309, %v6313
        %vm6315 = vweird.f32 %v6298
        %vm6316 = vweird.f32 %v6309
        %vm6317 = vmor %vm6315, %vm6316
        %v6318 = vsel %vm6317, %v6309, %v6314
        %v6319 = vld [vmem:[%s55] sm:$0x1]
        %v6321 = vperm.slane %v6319, 0
        %v6323 = vmul.f32 %v6308, %v6321
        %v6324 = vmul.f32 %v6318, %v6321
        %v6325 = vmul.f32 %v4998, %v6323
        %v6326 = vmul.f32 %v5000, %v6324
        %v6327 = vmul.f32 %v5003, %v6323
        %v6328 = vmul.f32 %v5005, %v6324
        %v6329 = vmul.f32 %v5008, %v6323
        %v6330 = vmul.f32 %v5010, %v6324
        %v6331 = vadd.f32 %v2421, %v6076
        %v6332 = vadd.f32 %v2422, %v6077
        %6333 = vst [vmem:[%s2404] sm:$0xff] %v6331
        %6334 = vst [vmem:[%s2404 + $0x8] sm:$0xff] %v6332
        %v6335 = vadd.f32 %v2425, %v6264
        %v6336 = vadd.f32 %v2426, %v6265
        %v6337 = vadd.f32 %v2427, %v6266
        %v6338 = vadd.f32 %v2428, %v6267
        %v6339 = vadd.f32 %v2429, %v6268
        %v6340 = vadd.f32 %v2430, %v6269
        %6341 = vst [vmem:[%s2409] sm:$0xff] %v6335
        %6342 = vst [vmem:[%s2409 + $0x8] sm:$0xff] %v6336
        %6343 = vst [vmem:[%s2409 + $0x10] sm:$0xff] %v6337
        %6344 = vst [vmem:[%s2409 + $0x18] sm:$0xff] %v6338
        %6345 = vst [vmem:[%s2409 + $0x20] sm:$0xff] %v6339
        %6346 = vst [vmem:[%s2409 + $0x28] sm:$0xff] %v6340
        %v6347 = vadd.f32 %v2423, %v6143
        %v6348 = vadd.f32 %v2424, %v6144
        %6349 = vst [vmem:[%s2414] sm:$0xff] %v6347
        %6350 = vst [vmem:[%s2414 + $0x8] sm:$0xff] %v6348
        %v6351 = vadd.f32 %v2431, %v6325
        %v6352 = vadd.f32 %v2432, %v6326
        %v6353 = vadd.f32 %v2433, %v6327
        %v6354 = vadd.f32 %v2434, %v6328
        %v6355 = vadd.f32 %v2435, %v6329
        %v6356 = vadd.f32 %v2436, %v6330
        %6357 = vst [vmem:[%s2419] sm:$0xff] %v6351
        %6358 = vst [vmem:[%s2419 + $0x8] sm:$0xff] %v6352
        %6359 = vst [vmem:[%s2419 + $0x10] sm:$0xff] %v6353
        %6360 = vst [vmem:[%s2419 + $0x18] sm:$0xff] %v6354
        %6361 = vst [vmem:[%s2419 + $0x20] sm:$0xff] %v6355
        %6362 = vst [vmem:[%s2419 + $0x28] sm:$0xff] %v6356
        %p6363 = scmp.lt.s32.totalorder %s153, 1
        %s6364 = scalar_select %p6363, %s153, 1
        %s6365 = smul.addr %s6364, 2
        %s6366 = smul.addr %s6365, 8
        %s6367 = scalar_lea.vmem %s125, %s6366
        %p6368 = scmp.lt.s32.totalorder %s153, 1
        %s6369 = scalar_select %p6368, %s153, 1
        %s6370 = smul.addr %s6369, 6
        %s6371 = smul.addr %s6370, 8
        %s6372 = scalar_lea.vmem %s127, %s6371
        %p6373 = scmp.lt.s32.totalorder %s153, 1
        %s6374 = scalar_select %p6373, %s153, 1
        %s6375 = smul.addr %s6374, 2
        %s6376 = smul.addr %s6375, 8
        %s6377 = scalar_lea.vmem %s129, %s6376
        %p6378 = scmp.lt.s32.totalorder %s153, 1
        %s6379 = scalar_select %p6378, %s153, 1
        %s6380 = smul.addr %s6379, 6
        %s6381 = smul.addr %s6380, 8
        %s6382 = scalar_lea.vmem %s131, %s6381
        // Predicated region
        $region341: #{block_forward.1} parent=267 // pred_check
          %p6383 = pneg %p1523
        $region342: #{block_forward.1} parent=267 // pred_check_branch
          %6385 = sbr.rel (%p6383) target = $region344
        $region343: #{block_forward.1} parent=267 // pred_region
          _
        $region344: #{block_forward.1} parent=267 // pred_fallthru
          _
        // Predicated region
        $region345: #{block_forward.1} parent=267 // pred_check
          %p6386 = pneg %p1549
        $region346: #{block_forward.1} parent=267 // pred_check_branch
          %6388 = sbr.rel (%p6386) target = $region348
        $region347: #{block_forward.1} parent=267 // pred_region
          _
        $region348: #{block_forward.1} parent=267 // pred_fallthru
          _
        // Predicated region
        $region349: #{block_forward.1} parent=267 // pred_check
          %p6389 = pneg %p1575
        $region350: #{block_forward.1} parent=267 // pred_check_branch
          %6391 = sbr.rel (%p6389) target = $region352
        $region351: #{block_forward.1} parent=267 // pred_region
          _
        $region352: #{block_forward.1} parent=267 // pred_fallthru
          _
        // Predicated region
        $region353: #{block_forward.1} parent=267 // pred_check
          %p6392 = pneg %p1601
        $region354: #{block_forward.1} parent=267 // pred_check_branch
          %6394 = sbr.rel (%p6392) target = $region356
        $region355: #{block_forward.1} parent=267 // pred_region
          _
        $region356: #{block_forward.1} parent=267 // pred_fallthru
          _
      $region268: #{block_forward.1} parent=5 // pred_fallthru
        _
      %p6395 = scmp.le.s32.totalorder 2, %s148
      // Predicated region
      $region357: #{block_forward.1} parent=5 // pred_check
        %p6396 = pneg %p6395
      $region358: #{block_forward.1} parent=5 // pred_check_branch
        %6398 = sbr.rel (%p6396) target = $region360
      $region359: #{block_forward.1} parent=5 // pred_region
        %s6399 = ssub.s32 %s148, 2
        // Predicated region
        $region361: #{block_forward.1} parent=359 // pred_check
          %p6400 = pneg %p1529
        $region362: #{block_forward.1} parent=359 // pred_check_branch
          %6402 = sbr.rel (%p6400) target = $region364
        $region363: #{block_forward.1} parent=359 // pred_region
          %p6403 = scmp.lt.s32.totalorder %s154, 1
          %s6404 = scalar_select %p6403, %s154, 1
          %s6405 = smul.addr %s6404, 2
          %s6406 = smul.addr %s6405, 8
          %s6407 = scalar_lea.vmem %s125, %s6406
        $region364: #{block_forward.1} parent=359 // pred_fallthru
          _
        // Predicated region
        $region365: #{block_forward.1} parent=359 // pred_check
          %p6408 = pneg %p1555
        $region366: #{block_forward.1} parent=359 // pred_check_branch
          %6410 = sbr.rel (%p6408) target = $region368
        $region367: #{block_forward.1} parent=359 // pred_region
          %p6411 = scmp.lt.s32.totalorder %s154, 1
          %s6412 = scalar_select %p6411, %s154, 1
          %s6413 = smul.addr %s6412, 6
          %s6414 = smul.addr %s6413, 8
          %s6415 = scalar_lea.vmem %s127, %s6414
        $region368: #{block_forward.1} parent=359 // pred_fallthru
          _
        // Predicated region
        $region369: #{block_forward.1} parent=359 // pred_check
          %p6416 = pneg %p1581
        $region370: #{block_forward.1} parent=359 // pred_check_branch
          %6418 = sbr.rel (%p6416) target = $region372
        $region371: #{block_forward.1} parent=359 // pred_region
          %p6419 = scmp.lt.s32.totalorder %s154, 1
          %s6420 = scalar_select %p6419, %s154, 1
          %s6421 = smul.addr %s6420, 2
          %s6422 = smul.addr %s6421, 8
          %s6423 = scalar_lea.vmem %s129, %s6422
        $region372: #{block_forward.1} parent=359 // pred_fallthru
          _
        // Predicated region
        $region373: #{block_forward.1} parent=359 // pred_check
          %p6424 = pneg %p1607
        $region374: #{block_forward.1} parent=359 // pred_check_branch
          %6426 = sbr.rel (%p6424) target = $region376
        $region375: #{block_forward.1} parent=359 // pred_region
          %p6427 = scmp.lt.s32.totalorder %s154, 1
          %s6428 = scalar_select %p6427, %s154, 1
          %s6429 = smul.addr %s6428, 6
          %s6430 = smul.addr %s6429, 8
          %s6431 = scalar_lea.vmem %s131, %s6430
        $region376: #{block_forward.1} parent=359 // pred_fallthru
          _
      $region360: #{block_forward.1} parent=5 // pred_fallthru
        _
    $region6: #{block_forward.1} parent=1 // loop_footer
      %s152 = sadd.s32 1, %s148
    $region7: #{block_forward.1} parent=1 // loop_footer_branch
      %147 = sbr.rel target = $region3
    $region8: #{block_forward.1} parent=1 // loop_exit
      _
    %6432 = vsyncpa [#allocation3], 1
    %s6433 = scalar_lea.sflag [#allocation3], 1
    %6434 = vsyncpa %s6433, 1
    %6435 = vsyncpa [#allocation5], 1
    %6436 = vsyncpa [#allocation8], 1
    %6437 = vsyncpa [#allocation11], 1
    %6438 = vsyncpa [#allocation14], 1
    %6439 = vsyncpa [#allocation17], 1
    %6440 = vsyncpa [#allocation20], 1
    %6441 = vsyncpa [#allocation23], 1
    %6442 = vsyncpa [#allocation26], 1
    %6443 = vsyncpa [#allocation29], 1

</llo_original>
